<compile_context>
chip_gen: v5e
topology: v5e:2x2
jax: 0.10.0
libtpu: 0.0.40
codegen_flags: <defaults>
</compile_context>

<pallas_src>
import jax
import jax.numpy as jnp
from jax import lax
from jax.experimental import pallas as pl
from jax.experimental.pallas import tpu as pltpu

# ----------------------------- config (static python) ------------------------
CONV_LAYERS = [  # (in_ch, out_ch, kernel, stride)
    (1, 32, 10, 5),
    (32, 32, 3, 2),
]
HIDDEN = 32
HEADS = 4
HEAD_DIM = HIDDEN // HEADS
FFN = 64
N_LAYERS = 2
POS_CONV_K = 3
POS_CONV_GROUPS = 4
LN_EPS = 1e-5


# ----------------------------- small helpers ---------------------------------
def _round_up(n, m):
    return -(-n // m) * m


def _bcast_spec(shape):
    # full-array block at every grid step (weights: DMA'd once, reused)
    nd = len(shape)
    return pl.BlockSpec(tuple(shape), lambda *_args, _nd=nd: (0,) * _nd)


def _gelu(y):
    # TODO(synk): torch uses exact erf GELU; tanh approx keeps the work on the EUP.
    return jax.nn.gelu(y, approximate=True)


def _ln(x, g, b):
    # always called on f32 values; g/b are (1, C)
    mu = jnp.mean(x, axis=-1, keepdims=True)
    var = jnp.mean(jnp.square(x - mu), axis=-1, keepdims=True)
    return (x - mu) * lax.rsqrt(var + LN_EPS) * g + b


# ----------------------------- kernel 1: fused frontend ----------------------
# conv1 (im2col-matmul + LN + GELU) -> conv2 (3 taps via even/odd blocks + roll)
# -> feature-projection LN + linear -> grouped positional conv (k=3, rolls)
# -> GELU + residual -> encoder LN.  One batch element per grid step.
def frontend_kernel(p_ref, w1_ref, b1_ref, g1_ref, a1_ref,
                    w2_ref, b2_ref, g2_ref, a2_ref,
                    fg_ref, fb_ref, fw_ref, fc_ref,
                    pw_ref, pc_ref, eg_ref, eb_ref, tm_ref, o_ref):
    T_pad = o_ref.shape[1]

    # ---- conv layer 1: rows are already permuted to [even frames | odd frames]
    p = p_ref[0].astype(jnp.bfloat16)                         # (2*T_pad, KC)
    y1 = jnp.dot(p, w1_ref[...], preferred_element_type=jnp.float32) + b1_ref[...]
    y1 = _gelu(_ln(y1, g1_ref[...], a1_ref[...]))             # (2*T_pad, C1) f32
    # TODO(synk): pretrained model's first conv uses GroupNorm over time; simplified
    #             to channel LayerNorm (the "layer_norm" extractor variant).

    # ---- conv layer 2 (k=3, s=2): out[t] = ev[t]@W0 + od[t]@W1 + ev[t+1]@W2
    ev = y1[:T_pad]                                           # y1[2t]
    od = y1[T_pad:]                                           # y1[2t+1]
    ev1 = pltpu.roll(ev, shift=T_pad - 1, axis=0)             # == roll(-1): y1[2t+2]
    w2 = w2_ref[...]                                          # (3, C1, C2) bf16
    y2 = (jnp.dot(ev.astype(jnp.bfloat16), w2[0], preferred_element_type=jnp.float32)
          + jnp.dot(od.astype(jnp.bfloat16), w2[1], preferred_element_type=jnp.float32)
          + jnp.dot(ev1.astype(jnp.bfloat16), w2[2], preferred_element_type=jnp.float32)
          + b2_ref[...])
    y2 = _gelu(_ln(y2, g2_ref[...], a2_ref[...]))             # (T_pad, C2) f32

    # ---- feature projection: LN -> Linear(conv_dim -> hidden)
    h = _ln(y2, fg_ref[...], fb_ref[...])
    h = jnp.dot(h.astype(jnp.bfloat16), fw_ref[...],
                preferred_element_type=jnp.float32) + fc_ref[...]   # (T_pad, H)
    h = h * tm_ref[...]                                       # zero the padded time rows

    # ---- grouped positional conv (k=3, pad=1) via XLU sublane rolls.
    # h has >=1 zero row at the end (T2 < T_pad), so roll(+1) row 0 is exactly the
    # conv's left zero padding; the roll(-1) wrap only pollutes padded rows.
    h_prev = pltpu.roll(h, shift=1, axis=0)                   # h[i-1]
    h_next = pltpu.roll(h, shift=T_pad - 1, axis=0)           # h[i+1]
    pw = pw_ref[...]                                          # (3, H, H) bf16
    pos = (jnp.dot(h_prev.astype(jnp.bfloat16), pw[0], preferred_element_type=jnp.float32)
           + jnp.dot(h.astype(jnp.bfloat16), pw[1], preferred_element_type=jnp.float32)
           + jnp.dot(h_next.astype(jnp.bfloat16), pw[2], preferred_element_type=jnp.float32)
           + pc_ref[...])
    z = _gelu(pos) + h
    o_ref[0] = _ln(z, eg_ref[...], eb_ref[...])


def frontend(patches, P, t_valid, T_pad):
    B, _, kc1 = patches.shape
    (_, c1, _, _), (_, c2, _, _) = CONV_LAYERS
    H = HIDDEN
    tmask = (jnp.arange(T_pad) < t_valid).astype(jnp.float32).reshape(T_pad, 1)

    ins = [patches,
           P["conv1_w"], P["conv1_b"].reshape(1, c1), P["conv1_g"].reshape(1, c1),
           P["conv1_beta"].reshape(1, c1),
           P["conv2_w"], P["conv2_b"].reshape(1, c2), P["conv2_g"].reshape(1, c2),
           P["conv2_beta"].reshape(1, c2),
           P["fp_ln_g"].reshape(1, c2), P["fp_ln_b"].reshape(1, c2),
           P["fp_w"], P["fp_b"].reshape(1, H),
           P["pos_w"], P["pos_b"].reshape(1, H),
           P["enc_ln_g"].reshape(1, H), P["enc_ln_b"].reshape(1, H),
           tmask]
    in_specs = ([pl.BlockSpec((1, 2 * T_pad, kc1), lambda b: (b, 0, 0))]
                + [_bcast_spec(a.shape) for a in ins[1:]])
    return pl.pallas_call(
        frontend_kernel,
        grid=(B,),
        out_shape=jax.ShapeDtypeStruct((B, T_pad, H), jnp.float32),
        in_specs=in_specs,
        out_specs=pl.BlockSpec((1, T_pad, H), lambda b: (b, 0, 0)),
        compiler_params=pltpu.CompilerParams(dimension_semantics=("parallel",)),
    )(*ins)


# ----------------------------- kernel 2: fused encoder stack -----------------
# One pallas_call for ALL layers: grid=(B, N_LAYERS).  The activation lives in
# the output VMEM block (same block index across the layer axis), so layers are
# chained without HBM round-trips or extra dispatches.
def encoder_kernel(x_ref, hm_ref, kb_ref,
                   wqkv_ref, bqkv_ref, wo_ref, bo_ref,
                   g1_ref, a1_ref, w1_ref, c1_ref,
                   w2_ref, c2_ref, g2_ref, a2_ref, o_ref):
    H = HIDDEN
    l = pl.program_id(1)

    @pl.when(l == 0)
    def _():
        o_ref[0] = x_ref[0]

    xv = o_ref[0]                                             # (T_pad, H) f32

    # merged QKV projection; 1/sqrt(Dh) already folded into the Q part of wqkv
    qkv = jnp.dot(xv.astype(jnp.bfloat16), wqkv_ref[0],
                  preferred_element_type=jnp.float32) + bqkv_ref[0]   # (T_pad, 3H)
    q, k, v = qkv[:, :H], qkv[:, H:2 * H], qkv[:, 2 * H:]
    k_bf = k.astype(jnp.bfloat16)
    hm_all = hm_ref[...]                                      # (HEADS, 1, H) f32
    kb = kb_ref[...]                                          # (1, T_pad): 0 / -1e30

    # TODO(synk): head-masked full-width matmuls do HEADS x redundant MXU work;
    #             fine at H=32 (MXU has slack) but restructure (heads folded into
    #             the sublane axis) before scaling to real wav2vec2 dims.
    attn = jnp.zeros_like(xv)
    for hd in range(HEADS):
        hm = hm_all[hd]                                       # (1, H) constant input
        q_h = (q * hm).astype(jnp.bfloat16)
        s = lax.dot_general(q_h, k_bf, (((1,), (1,)), ((), ())),
                            preferred_element_type=jnp.float32) + kb  # mask pad keys
        s = s - jnp.max(s, axis=-1, keepdims=True)
        pexp = jnp.exp(s)                                     # softmax kept in f32
        pexp = pexp * pl.reciprocal(jnp.sum(pexp, axis=-1, keepdims=True), approx=True)
        v_h = (v * hm).astype(jnp.bfloat16)
        attn = attn + jnp.dot(pexp.astype(jnp.bfloat16), v_h,
                              preferred_element_type=jnp.float32)

    proj = jnp.dot(attn.astype(jnp.bfloat16), wo_ref[0],
                   preferred_element_type=jnp.float32) + bo_ref[0]
    y = _ln(proj + xv, g1_ref[0], a1_ref[0])                  # post-norm, as in torch
    ff = _gelu(jnp.dot(y.astype(jnp.bfloat16), w1_ref[0],
                       preferred_element_type=jnp.float32) + c1_ref[0])
    ff = jnp.dot(ff.astype(jnp.bfloat16), w2_ref[0],
                 preferred_element_type=jnp.float32) + c2_ref[0]
    o_ref[0] = _ln(ff + y, g2_ref[0], a2_ref[0])


def encoder(x, LP, hmask, kbias):
    B, T_pad, H = x.shape
    L = LP["wqkv"].shape[0]

    def r3(a):  # (L, d) -> (L, 1, d): keeps the last two block dims == array dims
        return a.reshape(a.shape[0], 1, a.shape[1])

    def _layer_spec(shape):
        nd = len(shape)
        return pl.BlockSpec((1,) + tuple(shape[1:]),
                            lambda b, l, _nd=nd: (l,) + (0,) * (_nd - 1))

    ins = [x, hmask, kbias,
           LP["wqkv"], r3(LP["bqkv"]), LP["wo"], r3(LP["bo"]),
           r3(LP["ln1_g"]), r3(LP["ln1_b"]), LP["w1"], r3(LP["b1"]),
           LP["w2"], r3(LP["b2"]), r3(LP["ln2_g"]), r3(LP["ln2_b"])]
    in_specs = ([pl.BlockSpec((1, T_pad, H), lambda b, l: (b, 0, 0)),
                 pl.BlockSpec(hmask.shape, lambda b, l: (0, 0, 0)),
                 pl.BlockSpec(kbias.shape, lambda b, l: (0, 0))]
                + [_layer_spec(a.shape) for a in ins[3:]])
    return pl.pallas_call(
        encoder_kernel,
        grid=(B, L),
        out_shape=jax.ShapeDtypeStruct((B, T_pad, H), jnp.float32),
        in_specs=in_specs,
        # same output block across the layer axis -> activation stays resident in VMEM
        out_specs=pl.BlockSpec((1, T_pad, H), lambda b, l: (b, 0, 0)),
        compiler_params=pltpu.CompilerParams(
            dimension_semantics=("parallel", "arbitrary")),
    )(*ins)


# ----------------------------- parameters ------------------------------------
def init_params(key):
    keys = iter(jax.random.split(key, 64))

    def nrm(shape, scale=0.02):
        return jax.random.normal(next(keys), shape, jnp.float32) * scale

    (cin1, c1, k1, s1), (cin2, c2, k2, s2) = CONV_LAYERS
    kc1 = _round_up(k1 * cin1, 8)                             # 10 -> 16 lane padding

    p = {}
    # conv feature extractor (conv -> channel LayerNorm -> GELU)
    w1 = jnp.zeros((kc1, c1), jnp.float32).at[:k1 * cin1].set(nrm((k1 * cin1, c1)))
    p["conv1_w"] = w1.astype(jnp.bfloat16)
    p["conv1_b"] = jnp.zeros((c1,), jnp.float32)
    p["conv1_g"] = jnp.ones((c1,), jnp.float32)
    p["conv1_beta"] = jnp.zeros((c1,), jnp.float32)
    p["conv2_w"] = nrm((k2, c1, c2)).astype(jnp.bfloat16)     # per-tap (cin, cout)
    p["conv2_b"] = jnp.zeros((c2,), jnp.float32)
    p["conv2_g"] = jnp.ones((c2,), jnp.float32)
    p["conv2_beta"] = jnp.zeros((c2,), jnp.float32)

    # feature projection: LN -> Linear(conv_dim -> hidden)
    p["fp_ln_g"] = jnp.ones((c2,), jnp.float32)
    p["fp_ln_b"] = jnp.zeros((c2,), jnp.float32)
    p["fp_w"] = nrm((c2, HIDDEN)).astype(jnp.bfloat16)
    p["fp_b"] = jnp.zeros((HIDDEN,), jnp.float32)

    # grouped positional conv embedding (block-diagonal weight == grouped conv)
    cpg = HIDDEN // POS_CONV_GROUPS
    grp = jnp.arange(HIDDEN) // cpg
    gmask = (grp[:, None] == grp[None, :]).astype(jnp.float32)
    p["pos_w"] = (nrm((POS_CONV_K, HIDDEN, HIDDEN)) * gmask[None]).astype(jnp.bfloat16)
    p["pos_b"] = jnp.zeros((HIDDEN,), jnp.float32)
    p["enc_ln_g"] = jnp.ones((HIDDEN,), jnp.float32)
    p["enc_ln_b"] = jnp.zeros((HIDDEN,), jnp.float32)

    # transformer encoder layers, stacked along a leading N_LAYERS axis
    scale = 1.0 / (HEAD_DIM ** 0.5)
    wqkv, bqkv, wo, bo = [], [], [], []
    g1, b1, w1l, c1l, w2l, c2l, g2, b2 = [], [], [], [], [], [], [], []
    for _ in range(N_LAYERS):
        wq, wk, wv = nrm((HIDDEN, HIDDEN)), nrm((HIDDEN, HIDDEN)), nrm((HIDDEN, HIDDEN))
        wqkv.append(jnp.concatenate([wq * scale, wk, wv], axis=1))   # scale folded in
        bqkv.append(jnp.zeros((3 * HIDDEN,), jnp.float32))
        wo.append(nrm((HIDDEN, HIDDEN)))
        bo.append(jnp.zeros((HIDDEN,), jnp.float32))
        g1.append(jnp.ones((HIDDEN,), jnp.float32))
        b1.append(jnp.zeros((HIDDEN,), jnp.float32))
        w1l.append(nrm((HIDDEN, FFN)))
        c1l.append(jnp.zeros((FFN,), jnp.float32))
        w2l.append(nrm((FFN, HIDDEN)))
        c2l.append(jnp.zeros((HIDDEN,), jnp.float32))
        g2.append(jnp.ones((HIDDEN,), jnp.float32))
        b2.append(jnp.zeros((HIDDEN,), jnp.float32))
    p["layers"] = dict(
        wqkv=jnp.stack(wqkv).astype(jnp.bfloat16), bqkv=jnp.stack(bqkv),
        wo=jnp.stack(wo).astype(jnp.bfloat16), bo=jnp.stack(bo),
        ln1_g=jnp.stack(g1), ln1_b=jnp.stack(b1),
        w1=jnp.stack(w1l).astype(jnp.bfloat16), b1=jnp.stack(c1l),
        w2=jnp.stack(w2l).astype(jnp.bfloat16), b2=jnp.stack(c2l),
        ln2_g=jnp.stack(g2), ln2_b=jnp.stack(b2))
    return p


# ----------------------------- forward ---------------------------------------
@jax.jit
def speech_recognition_forward(params, waveform):
    """Returns the encoder hidden states (B, T_out, HIDDEN).

    torchaudio's Wav2Vec2Model.forward returns (features, lengths); with no
    `lengths` argument the second element is None, so we return only features.
    Dropout is a no-op in eval mode.
    """
    B, L = waveform.shape
    (cin1, c1, k1, s1), (cin2, c2, k2, s2) = CONV_LAYERS
    T1 = (L - k1) // s1 + 1                                   # conv1 frames
    T2 = (T1 - k2) // s2 + 1                                  # conv2 frames (output T)
    T_pad = _round_up(T2, 8)
    if T_pad == T2:
        T_pad += 8            # keep >=1 zero row so roll-based conv edge padding is exact
    kc1 = _round_up(k1 * cin1, 8)
    assert (T1 + 1) // 2 <= T_pad and T1 // 2 <= T_pad

    # im2col for conv1 (tiny XLA gather on the waveform), rows permuted to
    # [even frames | odd frames] so the stride-2 second conv becomes contiguous
    # slices + one roll inside the fused kernel.  Lane dim padded 10 -> 16.
    idx = jnp.arange(T1)[:, None] * s1 + jnp.arange(k1)[None, :]
    p1 = waveform[:, idx]                                     # (B, T1, k1)  (cin1 == 1)
    n_even, n_odd = (T1 + 1) // 2, T1 // 2
    patches = jnp.zeros((B, 2 * T_pad, kc1), jnp.float32)
    patches = patches.at[:, :n_even, :k1].set(p1[:, 0::2, :])
    patches = patches.at[:, T_pad:T_pad + n_odd, :k1].set(p1[:, 1::2, :])

    # --- fused frontend: convs + feature projection + positional conv + LN ---
    x = frontend(patches, params, T2, T_pad)                  # (B, T_pad, HIDDEN)

    # small constant masks for the encoder (hoisted out of the kernel)
    lane = jnp.arange(HIDDEN)
    hmask = (lane[None, :] // HEAD_DIM == jnp.arange(HEADS)[:, None]).astype(jnp.float32)
    hmask = hmask.reshape(HEADS, 1, HIDDEN)
    kbias = jnp.where(jnp.arange(T_pad) < T2, 0.0, -1e30).astype(jnp.float32)
    kbias = kbias.reshape(1, T_pad)

    # --- all transformer encoder layers in one fused pallas_call ---
    x = encoder(x, params["layers"], hmask, kbias)
    return x[:, :T2, :]


# ----------------------------- main ------------------------------------------
if __name__ == "__main__":
    key = jax.random.PRNGKey(0)
    k_param, k_wave = jax.random.split(key)

    params = init_params(k_param)
    waveform = jax.random.normal(k_wave, (2, 800), jnp.float32)      # (B, L)

    out = speech_recognition_forward(params, waveform)
    out = jax.block_until_ready(out)

    # shape sanity: L=800 -> conv(k=10,s=5)->159 -> conv(k=3,s=2)->79 frames
    assert out.shape == (2, 79, HIDDEN), out.shape
    assert bool(jnp.all(jnp.isfinite(out)))
    print("KERNEL_OK")
</pallas_src>

<mosaic_0001>
module attributes {stable_mosaic.version = 11 : i64} {
  func.func @frontend_kernel(%arg0: i32, %arg1: memref<1x160x16xf32, #tpu.memory_space<vmem>>, %arg2: memref<16x32xbf16, #tpu.memory_space<vmem>>, %arg3: memref<1x32xf32, #tpu.memory_space<vmem>>, %arg4: memref<1x32xf32, #tpu.memory_space<vmem>>, %arg5: memref<1x32xf32, #tpu.memory_space<vmem>>, %arg6: memref<3x32x32xbf16, #tpu.memory_space<vmem>>, %arg7: memref<1x32xf32, #tpu.memory_space<vmem>>, %arg8: memref<1x32xf32, #tpu.memory_space<vmem>>, %arg9: memref<1x32xf32, #tpu.memory_space<vmem>>, %arg10: memref<1x32xf32, #tpu.memory_space<vmem>>, %arg11: memref<1x32xf32, #tpu.memory_space<vmem>>, %arg12: memref<32x32xbf16, #tpu.memory_space<vmem>>, %arg13: memref<1x32xf32, #tpu.memory_space<vmem>>, %arg14: memref<3x32x32xbf16, #tpu.memory_space<vmem>>, %arg15: memref<1x32xf32, #tpu.memory_space<vmem>>, %arg16: memref<1x32xf32, #tpu.memory_space<vmem>>, %arg17: memref<1x32xf32, #tpu.memory_space<vmem>>, %arg18: memref<80x1xf32, #tpu.memory_space<vmem>>, %arg19: memref<1x80x32xf32, #tpu.memory_space<vmem>>) attributes {dimension_semantics = [#tpu.dimension_semantics<parallel>], iteration_bounds = array<i64: 2>, scalar_prefetch = 0 : i64, scratch_operands = 0 : i64, tpu.core_type = #tpu.core_type<tc>, window_params = [{transform_indices = @transform_0, window_bounds = array<i64: 1, 160, 16>}, {pipeline_mode = #tpu.pipeline_mode<synchronous>, transform_indices = @transform_1, window_bounds = array<i64: 16, 32>}, {pipeline_mode = #tpu.pipeline_mode<synchronous>, transform_indices = @transform_2, window_bounds = array<i64: 1, 32>}, {pipeline_mode = #tpu.pipeline_mode<synchronous>, transform_indices = @transform_3, window_bounds = array<i64: 1, 32>}, {pipeline_mode = #tpu.pipeline_mode<synchronous>, transform_indices = @transform_4, window_bounds = array<i64: 1, 32>}, {pipeline_mode = #tpu.pipeline_mode<synchronous>, transform_indices = @transform_5, window_bounds = array<i64: 3, 32, 32>}, {pipeline_mode = #tpu.pipeline_mode<synchronous>, transform_indices = @transform_6, window_bounds = array<i64: 1, 32>}, {pipeline_mode = #tpu.pipeline_mode<synchronous>, transform_indices = @transform_7, window_bounds = array<i64: 1, 32>}, {pipeline_mode = #tpu.pipeline_mode<synchronous>, transform_indices = @transform_8, window_bounds = array<i64: 1, 32>}, {pipeline_mode = #tpu.pipeline_mode<synchronous>, transform_indices = @transform_9, window_bounds = array<i64: 1, 32>}, {pipeline_mode = #tpu.pipeline_mode<synchronous>, transform_indices = @transform_10, window_bounds = array<i64: 1, 32>}, {pipeline_mode = #tpu.pipeline_mode<synchronous>, transform_indices = @transform_11, window_bounds = array<i64: 32, 32>}, {pipeline_mode = #tpu.pipeline_mode<synchronous>, transform_indices = @transform_12, window_bounds = array<i64: 1, 32>}, {pipeline_mode = #tpu.pipeline_mode<synchronous>, transform_indices = @transform_13, window_bounds = array<i64: 3, 32, 32>}, {pipeline_mode = #tpu.pipeline_mode<synchronous>, transform_indices = @transform_14, window_bounds = array<i64: 1, 32>}, {pipeline_mode = #tpu.pipeline_mode<synchronous>, transform_indices = @transform_15, window_bounds = array<i64: 1, 32>}, {pipeline_mode = #tpu.pipeline_mode<synchronous>, transform_indices = @transform_16, window_bounds = array<i64: 1, 32>}, {pipeline_mode = #tpu.pipeline_mode<synchronous>, transform_indices = @transform_17, window_bounds = array<i64: 80, 1>}, {transform_indices = @transform_18, window_bounds = array<i64: 1, 80, 32>}]} {
    %c0 = arith.constant 0 : index
    %c0_0 = arith.constant 0 : index
    %c0_1 = arith.constant 0 : index
    %0 = vector.load %arg1[%c0, %c0_0, %c0_1] : memref<1x160x16xf32, #tpu.memory_space<vmem>>, vector<1x160x16xf32>
    %1 = vector.shape_cast %0 : vector<1x160x16xf32> to vector<160x16xf32>
    %2 = arith.truncf %1 : vector<160x16xf32> to vector<160x16xbf16>
    %c0_2 = arith.constant 0 : index
    %c0_3 = arith.constant 0 : index
    %3 = vector.load %arg2[%c0_2, %c0_3] : memref<16x32xbf16, #tpu.memory_space<vmem>>, vector<16x32xbf16>
    %cst = arith.constant dense<0.000000e+00> : vector<160x32xf32>
    %4 = tpu.matmul %2, %3, %cst {dimension_numbers = #tpu.dot_dimension_numbers<[1], [0], [0], [1], [0, 0, 1, 1], [], []>} : vector<160x16xbf16>, vector<16x32xbf16>, vector<160x32xf32> -> vector<160x32xf32>
    %c0_4 = arith.constant 0 : index
    %c0_5 = arith.constant 0 : index
    %5 = vector.load %arg3[%c0_4, %c0_5] : memref<1x32xf32, #tpu.memory_space<vmem>>, vector<1x32xf32>
    %6 = vector.broadcast %5 : vector<1x32xf32> to vector<160x32xf32>
    %7 = arith.addf %4, %6 : vector<160x32xf32>
    %c0_6 = arith.constant 0 : index
    %c0_7 = arith.constant 0 : index
    %8 = vector.load %arg4[%c0_6, %c0_7] : memref<1x32xf32, #tpu.memory_space<vmem>>, vector<1x32xf32>
    %c0_8 = arith.constant 0 : index
    %c0_9 = arith.constant 0 : index
    %9 = vector.load %arg5[%c0_8, %c0_9] : memref<1x32xf32, #tpu.memory_space<vmem>>, vector<1x32xf32>
    %cst_10 = arith.constant dense<0.000000e+00> : vector<160xf32>
    %10 = vector.multi_reduction <add>, %7, %cst_10 [1] : vector<160x32xf32> to vector<160xf32>
    %11 = vector.shape_cast %10 : vector<160xf32> to vector<160x1xf32>
    %cst_11 = arith.constant 3.200000e+01 : f32
    %12 = vector.broadcast %cst_11 : f32 to vector<160x1xf32>
    %13 = arith.divf %11, %12 : vector<160x1xf32>
    %14 = vector.broadcast %13 : vector<160x1xf32> to vector<160x32xf32>
    %15 = arith.subf %7, %14 : vector<160x32xf32>
    %16 = arith.mulf %15, %15 : vector<160x32xf32>
    %cst_12 = arith.constant dense<0.000000e+00> : vector<160xf32>
    %17 = vector.multi_reduction <add>, %16, %cst_12 [1] : vector<160x32xf32> to vector<160xf32>
    %18 = vector.shape_cast %17 : vector<160xf32> to vector<160x1xf32>
    %cst_13 = arith.constant 3.200000e+01 : f32
    %19 = vector.broadcast %cst_13 : f32 to vector<160x1xf32>
    %20 = arith.divf %18, %19 : vector<160x1xf32>
    %21 = vector.broadcast %13 : vector<160x1xf32> to vector<160x32xf32>
    %22 = arith.subf %7, %21 : vector<160x32xf32>
    %cst_14 = arith.constant 9.99999974E-6 : f32
    %23 = vector.broadcast %cst_14 : f32 to vector<160x1xf32>
    %24 = arith.addf %20, %23 : vector<160x1xf32>
    %25 = math.rsqrt %24 : vector<160x1xf32>
    %26 = vector.broadcast %25 : vector<160x1xf32> to vector<160x32xf32>
    %27 = arith.mulf %22, %26 : vector<160x32xf32>
    %28 = vector.broadcast %8 : vector<1x32xf32> to vector<160x32xf32>
    %29 = arith.mulf %27, %28 : vector<160x32xf32>
    %30 = vector.broadcast %9 : vector<1x32xf32> to vector<160x32xf32>
    %31 = arith.addf %29, %30 : vector<160x32xf32>
    %32 = arith.mulf %31, %31 : vector<160x32xf32>
    %33 = arith.mulf %31, %32 : vector<160x32xf32>
    %cst_15 = arith.constant 4.471500e-02 : f32
    %34 = vector.broadcast %cst_15 : f32 to vector<160x32xf32>
    %35 = arith.mulf %34, %33 : vector<160x32xf32>
    %36 = arith.addf %31, %35 : vector<160x32xf32>
    %cst_16 = arith.constant 0.797884583 : f32
    %37 = vector.broadcast %cst_16 : f32 to vector<160x32xf32>
    %38 = arith.mulf %37, %36 : vector<160x32xf32>
    %39 = math.tanh %38 : vector<160x32xf32>
    %cst_17 = arith.constant 1.000000e+00 : f32
    %40 = vector.broadcast %cst_17 : f32 to vector<160x32xf32>
    %41 = arith.addf %40, %39 : vector<160x32xf32>
    %cst_18 = arith.constant 5.000000e-01 : f32
    %42 = vector.broadcast %cst_18 : f32 to vector<160x32xf32>
    %43 = arith.mulf %42, %41 : vector<160x32xf32>
    %44 = arith.mulf %31, %43 : vector<160x32xf32>
    %45 = vector.extract_strided_slice %44 {offsets = [0, 0], sizes = [80, 32], strides = [1, 1]} : vector<160x32xf32> to vector<80x32xf32>
    %46 = vector.extract_strided_slice %44 {offsets = [80, 0], sizes = [80, 32], strides = [1, 1]} : vector<160x32xf32> to vector<80x32xf32>
    %c79_i32 = arith.constant 79 : i32
    %47 = tpu.dynamic_rotate %45 by %c79_i32 dim 0 : vector<80x32xf32>, i32 -> vector<80x32xf32>
    %c0_19 = arith.constant 0 : index
    %c0_20 = arith.constant 0 : index
    %c0_21 = arith.constant 0 : index
    %48 = vector.load %arg6[%c0_19, %c0_20, %c0_21] : memref<3x32x32xbf16, #tpu.memory_space<vmem>>, vector<3x32x32xbf16>
    %49 = arith.truncf %45 : vector<80x32xf32> to vector<80x32xbf16>
    %50 = vector.extract_strided_slice %48 {offsets = [0, 0, 0], sizes = [1, 32, 32], strides = [1, 1, 1]} : vector<3x32x32xbf16> to vector<1x32x32xbf16>
    %51 = vector.shape_cast %50 : vector<1x32x32xbf16> to vector<32x32xbf16>
    %cst_22 = arith.constant dense<0.000000e+00> : vector<80x32xf32>
    %52 = tpu.matmul %49, %51, %cst_22 {dimension_numbers = #tpu.dot_dimension_numbers<[1], [0], [0], [1], [0, 0, 1, 1], [], []>} : vector<80x32xbf16>, vector<32x32xbf16>, vector<80x32xf32> -> vector<80x32xf32>
    %53 = arith.truncf %46 : vector<80x32xf32> to vector<80x32xbf16>
    %54 = vector.extract_strided_slice %48 {offsets = [1, 0, 0], sizes = [1, 32, 32], strides = [1, 1, 1]} : vector<3x32x32xbf16> to vector<1x32x32xbf16>
    %55 = vector.shape_cast %54 : vector<1x32x32xbf16> to vector<32x32xbf16>
    %cst_23 = arith.constant dense<0.000000e+00> : vector<80x32xf32>
    %56 = tpu.matmul %53, %55, %cst_23 {dimension_numbers = #tpu.dot_dimension_numbers<[1], [0], [0], [1], [0, 0, 1, 1], [], []>} : vector<80x32xbf16>, vector<32x32xbf16>, vector<80x32xf32> -> vector<80x32xf32>
    %57 = arith.addf %52, %56 : vector<80x32xf32>
    %58 = arith.truncf %47 : vector<80x32xf32> to vector<80x32xbf16>
    %59 = vector.extract_strided_slice %48 {offsets = [2, 0, 0], sizes = [1, 32, 32], strides = [1, 1, 1]} : vector<3x32x32xbf16> to vector<1x32x32xbf16>
    %60 = vector.shape_cast %59 : vector<1x32x32xbf16> to vector<32x32xbf16>
    %cst_24 = arith.constant dense<0.000000e+00> : vector<80x32xf32>
    %61 = tpu.matmul %58, %60, %cst_24 {dimension_numbers = #tpu.dot_dimension_numbers<[1], [0], [0], [1], [0, 0, 1, 1], [], []>} : vector<80x32xbf16>, vector<32x32xbf16>, vector<80x32xf32> -> vector<80x32xf32>
    %62 = arith.addf %57, %61 : vector<80x32xf32>
    %c0_25 = arith.constant 0 : index
    %c0_26 = arith.constant 0 : index
    %63 = vector.load %arg7[%c0_25, %c0_26] : memref<1x32xf32, #tpu.memory_space<vmem>>, vector<1x32xf32>
    %64 = vector.broadcast %63 : vector<1x32xf32> to vector<80x32xf32>
    %65 = arith.addf %62, %64 : vector<80x32xf32>
    %c0_27 = arith.constant 0 : index
    %c0_28 = arith.constant 0 : index
    %66 = vector.load %arg8[%c0_27, %c0_28] : memref<1x32xf32, #tpu.memory_space<vmem>>, vector<1x32xf32>
    %c0_29 = arith.constant 0 : index
    %c0_30 = arith.constant 0 : index
    %67 = vector.load %arg9[%c0_29, %c0_30] : memref<1x32xf32, #tpu.memory_space<vmem>>, vector<1x32xf32>
    %cst_31 = arith.constant dense<0.000000e+00> : vector<80xf32>
    %68 = vector.multi_reduction <add>, %65, %cst_31 [1] : vector<80x32xf32> to vector<80xf32>
    %69 = vector.shape_cast %68 : vector<80xf32> to vector<80x1xf32>
    %cst_32 = arith.constant 3.200000e+01 : f32
    %70 = vector.broadcast %cst_32 : f32 to vector<80x1xf32>
    %71 = arith.divf %69, %70 : vector<80x1xf32>
    %72 = vector.broadcast %71 : vector<80x1xf32> to vector<80x32xf32>
    %73 = arith.subf %65, %72 : vector<80x32xf32>
    %74 = arith.mulf %73, %73 : vector<80x32xf32>
    %cst_33 = arith.constant dense<0.000000e+00> : vector<80xf32>
    %75 = vector.multi_reduction <add>, %74, %cst_33 [1] : vector<80x32xf32> to vector<80xf32>
    %76 = vector.shape_cast %75 : vector<80xf32> to vector<80x1xf32>
    %cst_34 = arith.constant 3.200000e+01 : f32
    %77 = vector.broadcast %cst_34 : f32 to vector<80x1xf32>
    %78 = arith.divf %76, %77 : vector<80x1xf32>
    %79 = vector.broadcast %71 : vector<80x1xf32> to vector<80x32xf32>
    %80 = arith.subf %65, %79 : vector<80x32xf32>
    %cst_35 = arith.constant 9.99999974E-6 : f32
    %81 = vector.broadcast %cst_35 : f32 to vector<80x1xf32>
    %82 = arith.addf %78, %81 : vector<80x1xf32>
    %83 = math.rsqrt %82 : vector<80x1xf32>
    %84 = vector.broadcast %83 : vector<80x1xf32> to vector<80x32xf32>
    %85 = arith.mulf %80, %84 : vector<80x32xf32>
    %86 = vector.broadcast %66 : vector<1x32xf32> to vector<80x32xf32>
    %87 = arith.mulf %85, %86 : vector<80x32xf32>
    %88 = vector.broadcast %67 : vector<1x32xf32> to vector<80x32xf32>
    %89 = arith.addf %87, %88 : vector<80x32xf32>
    %90 = arith.mulf %89, %89 : vector<80x32xf32>
    %91 = arith.mulf %89, %90 : vector<80x32xf32>
    %cst_36 = arith.constant 4.471500e-02 : f32
    %92 = vector.broadcast %cst_36 : f32 to vector<80x32xf32>
    %93 = arith.mulf %92, %91 : vector<80x32xf32>
    %94 = arith.addf %89, %93 : vector<80x32xf32>
    %cst_37 = arith.constant 0.797884583 : f32
    %95 = vector.broadcast %cst_37 : f32 to vector<80x32xf32>
    %96 = arith.mulf %95, %94 : vector<80x32xf32>
    %97 = math.tanh %96 : vector<80x32xf32>
    %cst_38 = arith.constant 1.000000e+00 : f32
    %98 = vector.broadcast %cst_38 : f32 to vector<80x32xf32>
    %99 = arith.addf %98, %97 : vector<80x32xf32>
    %cst_39 = arith.constant 5.000000e-01 : f32
    %100 = vector.broadcast %cst_39 : f32 to vector<80x32xf32>
    %101 = arith.mulf %100, %99 : vector<80x32xf32>
    %102 = arith.mulf %89, %101 : vector<80x32xf32>
    %c0_40 = arith.constant 0 : index
    %c0_41 = arith.constant 0 : index
    %103 = vector.load %arg10[%c0_40, %c0_41] : memref<1x32xf32, #tpu.memory_space<vmem>>, vector<1x32xf32>
    %c0_42 = arith.constant 0 : index
    %c0_43 = arith.constant 0 : index
    %104 = vector.load %arg11[%c0_42, %c0_43] : memref<1x32xf32, #tpu.memory_space<vmem>>, vector<1x32xf32>
    %cst_44 = arith.constant dense<0.000000e+00> : vector<80xf32>
    %105 = vector.multi_reduction <add>, %102, %cst_44 [1] : vector<80x32xf32> to vector<80xf32>
    %106 = vector.shape_cast %105 : vector<80xf32> to vector<80x1xf32>
    %cst_45 = arith.constant 3.200000e+01 : f32
    %107 = vector.broadcast %cst_45 : f32 to vector<80x1xf32>
    %108 = arith.divf %106, %107 : vector<80x1xf32>
    %109 = vector.broadcast %108 : vector<80x1xf32> to vector<80x32xf32>
    %110 = arith.subf %102, %109 : vector<80x32xf32>
    %111 = arith.mulf %110, %110 : vector<80x32xf32>
    %cst_46 = arith.constant dense<0.000000e+00> : vector<80xf32>
    %112 = vector.multi_reduction <add>, %111, %cst_46 [1] : vector<80x32xf32> to vector<80xf32>
    %113 = vector.shape_cast %112 : vector<80xf32> to vector<80x1xf32>
    %cst_47 = arith.constant 3.200000e+01 : f32
    %114 = vector.broadcast %cst_47 : f32 to vector<80x1xf32>
    %115 = arith.divf %113, %114 : vector<80x1xf32>
    %116 = vector.broadcast %108 : vector<80x1xf32> to vector<80x32xf32>
    %117 = arith.subf %102, %116 : vector<80x32xf32>
    %cst_48 = arith.constant 9.99999974E-6 : f32
    %118 = vector.broadcast %cst_48 : f32 to vector<80x1xf32>
    %119 = arith.addf %115, %118 : vector<80x1xf32>
    %120 = math.rsqrt %119 : vector<80x1xf32>
    %121 = vector.broadcast %120 : vector<80x1xf32> to vector<80x32xf32>
    %122 = arith.mulf %117, %121 : vector<80x32xf32>
    %123 = vector.broadcast %103 : vector<1x32xf32> to vector<80x32xf32>
    %124 = arith.mulf %122, %123 : vector<80x32xf32>
    %125 = vector.broadcast %104 : vector<1x32xf32> to vector<80x32xf32>
    %126 = arith.addf %124, %125 : vector<80x32xf32>
    %127 = arith.truncf %126 : vector<80x32xf32> to vector<80x32xbf16>
    %c0_49 = arith.constant 0 : index
    %c0_50 = arith.constant 0 : index
    %128 = vector.load %arg12[%c0_49, %c0_50] : memref<32x32xbf16, #tpu.memory_space<vmem>>, vector<32x32xbf16>
    %cst_51 = arith.constant dense<0.000000e+00> : vector<80x32xf32>
    %129 = tpu.matmul %127, %128, %cst_51 {dimension_numbers = #tpu.dot_dimension_numbers<[1], [0], [0], [1], [0, 0, 1, 1], [], []>} : vector<80x32xbf16>, vector<32x32xbf16>, vector<80x32xf32> -> vector<80x32xf32>
    %c0_52 = arith.constant 0 : index
    %c0_53 = arith.constant 0 : index
    %130 = vector.load %arg13[%c0_52, %c0_53] : memref<1x32xf32, #tpu.memory_space<vmem>>, vector<1x32xf32>
    %131 = vector.broadcast %130 : vector<1x32xf32> to vector<80x32xf32>
    %132 = arith.addf %129, %131 : vector<80x32xf32>
    %c0_54 = arith.constant 0 : index
    %c0_55 = arith.constant 0 : index
    %133 = vector.load %arg18[%c0_54, %c0_55] : memref<80x1xf32, #tpu.memory_space<vmem>>, vector<80x1xf32>
    %134 = vector.broadcast %133 : vector<80x1xf32> to vector<80x32xf32>
    %135 = arith.mulf %132, %134 : vector<80x32xf32>
    %c1_i32 = arith.constant 1 : i32
    %136 = tpu.dynamic_rotate %135 by %c1_i32 dim 0 : vector<80x32xf32>, i32 -> vector<80x32xf32>
    %c79_i32_56 = arith.constant 79 : i32
    %137 = tpu.dynamic_rotate %135 by %c79_i32_56 dim 0 : vector<80x32xf32>, i32 -> vector<80x32xf32>
    %c0_57 = arith.constant 0 : index
    %c0_58 = arith.constant 0 : index
    %c0_59 = arith.constant 0 : index
    %138 = vector.load %arg14[%c0_57, %c0_58, %c0_59] : memref<3x32x32xbf16, #tpu.memory_space<vmem>>, vector<3x32x32xbf16>
    %139 = arith.truncf %136 : vector<80x32xf32> to vector<80x32xbf16>
    %140 = vector.extract_strided_slice %138 {offsets = [0, 0, 0], sizes = [1, 32, 32], strides = [1, 1, 1]} : vector<3x32x32xbf16> to vector<1x32x32xbf16>
    %141 = vector.shape_cast %140 : vector<1x32x32xbf16> to vector<32x32xbf16>
    %cst_60 = arith.constant dense<0.000000e+00> : vector<80x32xf32>
    %142 = tpu.matmul %139, %141, %cst_60 {dimension_numbers = #tpu.dot_dimension_numbers<[1], [0], [0], [1], [0, 0, 1, 1], [], []>} : vector<80x32xbf16>, vector<32x32xbf16>, vector<80x32xf32> -> vector<80x32xf32>
    %143 = arith.truncf %135 : vector<80x32xf32> to vector<80x32xbf16>
    %144 = vector.extract_strided_slice %138 {offsets = [1, 0, 0], sizes = [1, 32, 32], strides = [1, 1, 1]} : vector<3x32x32xbf16> to vector<1x32x32xbf16>
    %145 = vector.shape_cast %144 : vector<1x32x32xbf16> to vector<32x32xbf16>
    %cst_61 = arith.constant dense<0.000000e+00> : vector<80x32xf32>
    %146 = tpu.matmul %143, %145, %cst_61 {dimension_numbers = #tpu.dot_dimension_numbers<[1], [0], [0], [1], [0, 0, 1, 1], [], []>} : vector<80x32xbf16>, vector<32x32xbf16>, vector<80x32xf32> -> vector<80x32xf32>
    %147 = arith.addf %142, %146 : vector<80x32xf32>
    %148 = arith.truncf %137 : vector<80x32xf32> to vector<80x32xbf16>
    %149 = vector.extract_strided_slice %138 {offsets = [2, 0, 0], sizes = [1, 32, 32], strides = [1, 1, 1]} : vector<3x32x32xbf16> to vector<1x32x32xbf16>
    %150 = vector.shape_cast %149 : vector<1x32x32xbf16> to vector<32x32xbf16>
    %cst_62 = arith.constant dense<0.000000e+00> : vector<80x32xf32>
    %151 = tpu.matmul %148, %150, %cst_62 {dimension_numbers = #tpu.dot_dimension_numbers<[1], [0], [0], [1], [0, 0, 1, 1], [], []>} : vector<80x32xbf16>, vector<32x32xbf16>, vector<80x32xf32> -> vector<80x32xf32>
    %152 = arith.addf %147, %151 : vector<80x32xf32>
    %c0_63 = arith.constant 0 : index
    %c0_64 = arith.constant 0 : index
    %153 = vector.load %arg15[%c0_63, %c0_64] : memref<1x32xf32, #tpu.memory_space<vmem>>, vector<1x32xf32>
    %154 = vector.broadcast %153 : vector<1x32xf32> to vector<80x32xf32>
    %155 = arith.addf %152, %154 : vector<80x32xf32>
    %156 = arith.mulf %155, %155 : vector<80x32xf32>
    %157 = arith.mulf %155, %156 : vector<80x32xf32>
    %cst_65 = arith.constant 4.471500e-02 : f32
    %158 = vector.broadcast %cst_65 : f32 to vector<80x32xf32>
    %159 = arith.mulf %158, %157 : vector<80x32xf32>
    %160 = arith.addf %155, %159 : vector<80x32xf32>
    %cst_66 = arith.constant 0.797884583 : f32
    %161 = vector.broadcast %cst_66 : f32 to vector<80x32xf32>
    %162 = arith.mulf %161, %160 : vector<80x32xf32>
    %163 = math.tanh %162 : vector<80x32xf32>
    %cst_67 = arith.constant 1.000000e+00 : f32
    %164 = vector.broadcast %cst_67 : f32 to vector<80x32xf32>
    %165 = arith.addf %164, %163 : vector<80x32xf32>
    %cst_68 = arith.constant 5.000000e-01 : f32
    %166 = vector.broadcast %cst_68 : f32 to vector<80x32xf32>
    %167 = arith.mulf %166, %165 : vector<80x32xf32>
    %168 = arith.mulf %155, %167 : vector<80x32xf32>
    %169 = arith.addf %168, %135 : vector<80x32xf32>
    %c0_69 = arith.constant 0 : index
    %c0_70 = arith.constant 0 : index
    %170 = vector.load %arg16[%c0_69, %c0_70] : memref<1x32xf32, #tpu.memory_space<vmem>>, vector<1x32xf32>
    %c0_71 = arith.constant 0 : index
    %c0_72 = arith.constant 0 : index
    %171 = vector.load %arg17[%c0_71, %c0_72] : memref<1x32xf32, #tpu.memory_space<vmem>>, vector<1x32xf32>
    %cst_73 = arith.constant dense<0.000000e+00> : vector<80xf32>
    %172 = vector.multi_reduction <add>, %169, %cst_73 [1] : vector<80x32xf32> to vector<80xf32>
    %173 = vector.shape_cast %172 : vector<80xf32> to vector<80x1xf32>
    %cst_74 = arith.constant 3.200000e+01 : f32
    %174 = vector.broadcast %cst_74 : f32 to vector<80x1xf32>
    %175 = arith.divf %173, %174 : vector<80x1xf32>
    %176 = vector.broadcast %175 : vector<80x1xf32> to vector<80x32xf32>
    %177 = arith.subf %169, %176 : vector<80x32xf32>
    %178 = arith.mulf %177, %177 : vector<80x32xf32>
    %cst_75 = arith.constant dense<0.000000e+00> : vector<80xf32>
    %179 = vector.multi_reduction <add>, %178, %cst_75 [1] : vector<80x32xf32> to vector<80xf32>
    %180 = vector.shape_cast %179 : vector<80xf32> to vector<80x1xf32>
    %cst_76 = arith.constant 3.200000e+01 : f32
    %181 = vector.broadcast %cst_76 : f32 to vector<80x1xf32>
    %182 = arith.divf %180, %181 : vector<80x1xf32>
    %183 = vector.broadcast %175 : vector<80x1xf32> to vector<80x32xf32>
    %184 = arith.subf %169, %183 : vector<80x32xf32>
    %cst_77 = arith.constant 9.99999974E-6 : f32
    %185 = vector.broadcast %cst_77 : f32 to vector<80x1xf32>
    %186 = arith.addf %182, %185 : vector<80x1xf32>
    %187 = math.rsqrt %186 : vector<80x1xf32>
    %188 = vector.broadcast %187 : vector<80x1xf32> to vector<80x32xf32>
    %189 = arith.mulf %184, %188 : vector<80x32xf32>
    %190 = vector.broadcast %170 : vector<1x32xf32> to vector<80x32xf32>
    %191 = arith.mulf %189, %190 : vector<80x32xf32>
    %192 = vector.broadcast %171 : vector<1x32xf32> to vector<80x32xf32>
    %193 = arith.addf %191, %192 : vector<80x32xf32>
    %c0_78 = arith.constant 0 : index
    %c0_79 = arith.constant 0 : index
    %c0_80 = arith.constant 0 : index
    %194 = vector.load %arg19[%c0_78, %c0_79, %c0_80] : memref<1x80x32xf32, #tpu.memory_space<vmem>>, vector<1x80x32xf32>
    %195 = vector.shape_cast %194 : vector<1x80x32xf32> to vector<80x32xf32>
    %196 = vector.shape_cast %193 : vector<80x32xf32> to vector<1x80x32xf32>
    tpu.vector_store %arg19[%c0_78, %c0_79, %c0_80], %196 {strides = array<i32>} : memref<1x80x32xf32, #tpu.memory_space<vmem>>, vector<1x80x32xf32>,
    return
  }
  func.func @transform_0(%arg0: i32) -> (i32, i32, i32) {
    %c0_i32 = arith.constant 0 : i32
    %c0_i32_0 = arith.constant 0 : i32
    %c0_i32_1 = arith.constant 0 : i32
    return %arg0, %c0_i32, %c0_i32_0 : i32, i32, i32
  }
  func.func @transform_1(%arg0: i32) -> (i32, i32) {
    %c0_i32 = arith.constant 0 : i32
    %c0_i32_0 = arith.constant 0 : i32
    %c0_i32_1 = arith.constant 0 : i32
    return %c0_i32, %c0_i32_0 : i32, i32
  }
  func.func @transform_2(%arg0: i32) -> (i32, i32) {
    %c0_i32 = arith.constant 0 : i32
    %c0_i32_0 = arith.constant 0 : i32
    %c0_i32_1 = arith.constant 0 : i32
    return %c0_i32, %c0_i32_0 : i32, i32
  }
  func.func @transform_3(%arg0: i32) -> (i32, i32) {
    %c0_i32 = arith.constant 0 : i32
    %c0_i32_0 = arith.constant 0 : i32
    %c0_i32_1 = arith.constant 0 : i32
    return %c0_i32, %c0_i32_0 : i32, i32
  }
  func.func @transform_4(%arg0: i32) -> (i32, i32) {
    %c0_i32 = arith.constant 0 : i32
    %c0_i32_0 = arith.constant 0 : i32
    %c0_i32_1 = arith.constant 0 : i32
    return %c0_i32, %c0_i32_0 : i32, i32
  }
  func.func @transform_5(%arg0: i32) -> (i32, i32, i32) {
    %c0_i32 = arith.constant 0 : i32
    %c0_i32_0 = arith.constant 0 : i32
    %c0_i32_1 = arith.constant 0 : i32
    %c0_i32_2 = arith.constant 0 : i32
    return %c0_i32, %c0_i32_0, %c0_i32_1 : i32, i32, i32
  }
  func.func @transform_6(%arg0: i32) -> (i32, i32) {
    %c0_i32 = arith.constant 0 : i32
    %c0_i32_0 = arith.constant 0 : i32
    %c0_i32_1 = arith.constant 0 : i32
    return %c0_i32, %c0_i32_0 : i32, i32
  }
  func.func @transform_7(%arg0: i32) -> (i32, i32) {
    %c0_i32 = arith.constant 0 : i32
    %c0_i32_0 = arith.constant 0 : i32
    %c0_i32_1 = arith.constant 0 : i32
    return %c0_i32, %c0_i32_0 : i32, i32
  }
  func.func @transform_8(%arg0: i32) -> (i32, i32) {
    %c0_i32 = arith.constant 0 : i32
    %c0_i32_0 = arith.constant 0 : i32
    %c0_i32_1 = arith.constant 0 : i32
    return %c0_i32, %c0_i32_0 : i32, i32
  }
  func.func @transform_9(%arg0: i32) -> (i32, i32) {
    %c0_i32 = arith.constant 0 : i32
    %c0_i32_0 = arith.constant 0 : i32
    %c0_i32_1 = arith.constant 0 : i32
    return %c0_i32, %c0_i32_0 : i32, i32
  }
  func.func @transform_10(%arg0: i32) -> (i32, i32) {
    %c0_i32 = arith.constant 0 : i32
    %c0_i32_0 = arith.constant 0 : i32
    %c0_i32_1 = arith.constant 0 : i32
    return %c0_i32, %c0_i32_0 : i32, i32
  }
  func.func @transform_11(%arg0: i32) -> (i32, i32) {
    %c0_i32 = arith.constant 0 : i32
    %c0_i32_0 = arith.constant 0 : i32
    %c0_i32_1 = arith.constant 0 : i32
    return %c0_i32, %c0_i32_0 : i32, i32
  }
  func.func @transform_12(%arg0: i32) -> (i32, i32) {
    %c0_i32 = arith.constant 0 : i32
    %c0_i32_0 = arith.constant 0 : i32
    %c0_i32_1 = arith.constant 0 : i32
    return %c0_i32, %c0_i32_0 : i32, i32
  }
  func.func @transform_13(%arg0: i32) -> (i32, i32, i32) {
    %c0_i32 = arith.constant 0 : i32
    %c0_i32_0 = arith.constant 0 : i32
    %c0_i32_1 = arith.constant 0 : i32
    %c0_i32_2 = arith.constant 0 : i32
    return %c0_i32, %c0_i32_0, %c0_i32_1 : i32, i32, i32
  }
  func.func @transform_14(%arg0: i32) -> (i32, i32) {
    %c0_i32 = arith.constant 0 : i32
    %c0_i32_0 = arith.constant 0 : i32
    %c0_i32_1 = arith.constant 0 : i32
    return %c0_i32, %c0_i32_0 : i32, i32
  }
  func.func @transform_15(%arg0: i32) -> (i32, i32) {
    %c0_i32 = arith.constant 0 : i32
    %c0_i32_0 = arith.constant 0 : i32
    %c0_i32_1 = arith.constant 0 : i32
    return %c0_i32, %c0_i32_0 : i32, i32
  }
  func.func @transform_16(%arg0: i32) -> (i32, i32) {
    %c0_i32 = arith.constant 0 : i32
    %c0_i32_0 = arith.constant 0 : i32
    %c0_i32_1 = arith.constant 0 : i32
    return %c0_i32, %c0_i32_0 : i32, i32
  }
  func.func @transform_17(%arg0: i32) -> (i32, i32) {
    %c0_i32 = arith.constant 0 : i32
    %c0_i32_0 = arith.constant 0 : i32
    %c0_i32_1 = arith.constant 0 : i32
    return %c0_i32, %c0_i32_0 : i32, i32
  }
  func.func @transform_18(%arg0: i32) -> (i32, i32, i32) {
    %c0_i32 = arith.constant 0 : i32
    %c0_i32_0 = arith.constant 0 : i32
    %c0_i32_1 = arith.constant 0 : i32
    return %arg0, %c0_i32, %c0_i32_0 : i32, i32, i32
  }
}

module attributes {stable_mosaic.version = 11 : i64} {
  func.func @encoder_kernel(%arg0: i32, %arg1: i32, %arg2: memref<1x80x32xf32, #tpu.memory_space<vmem>>, %arg3: memref<4x1x32xf32, #tpu.memory_space<vmem>>, %arg4: memref<1x80xf32, #tpu.memory_space<vmem>>, %arg5: memref<1x32x96xbf16, #tpu.memory_space<vmem>>, %arg6: memref<1x1x96xf32, #tpu.memory_space<vmem>>, %arg7: memref<1x32x32xbf16, #tpu.memory_space<vmem>>, %arg8: memref<1x1x32xf32, #tpu.memory_space<vmem>>, %arg9: memref<1x1x32xf32, #tpu.memory_space<vmem>>, %arg10: memref<1x1x32xf32, #tpu.memory_space<vmem>>, %arg11: memref<1x32x64xbf16, #tpu.memory_space<vmem>>, %arg12: memref<1x1x64xf32, #tpu.memory_space<vmem>>, %arg13: memref<1x64x32xbf16, #tpu.memory_space<vmem>>, %arg14: memref<1x1x32xf32, #tpu.memory_space<vmem>>, %arg15: memref<1x1x32xf32, #tpu.memory_space<vmem>>, %arg16: memref<1x1x32xf32, #tpu.memory_space<vmem>>, %arg17: memref<1x80x32xf32, #tpu.memory_space<vmem>>) attributes {dimension_semantics = [#tpu.dimension_semantics<parallel>, #tpu.dimension_semantics<arbitrary>], iteration_bounds = array<i64: 2, 2>, scalar_prefetch = 0 : i64, scratch_operands = 0 : i64, tpu.core_type = #tpu.core_type<tc>, window_params = [{transform_indices = @transform_0, window_bounds = array<i64: 1, 80, 32>}, {pipeline_mode = #tpu.pipeline_mode<synchronous>, transform_indices = @transform_1, window_bounds = array<i64: 4, 1, 32>}, {pipeline_mode = #tpu.pipeline_mode<synchronous>, transform_indices = @transform_2, window_bounds = array<i64: 1, 80>}, {transform_indices = @transform_3, window_bounds = array<i64: 1, 32, 96>}, {transform_indices = @transform_4, window_bounds = array<i64: 1, 1, 96>}, {transform_indices = @transform_5, window_bounds = array<i64: 1, 32, 32>}, {transform_indices = @transform_6, window_bounds = array<i64: 1, 1, 32>}, {transform_indices = @transform_7, window_bounds = array<i64: 1, 1, 32>}, {transform_indices = @transform_8, window_bounds = array<i64: 1, 1, 32>}, {transform_indices = @transform_9, window_bounds = array<i64: 1, 32, 64>}, {transform_indices = @transform_10, window_bounds = array<i64: 1, 1, 64>}, {transform_indices = @transform_11, window_bounds = array<i64: 1, 64, 32>}, {transform_indices = @transform_12, window_bounds = array<i64: 1, 1, 32>}, {transform_indices = @transform_13, window_bounds = array<i64: 1, 1, 32>}, {transform_indices = @transform_14, window_bounds = array<i64: 1, 1, 32>}, {transform_indices = @transform_15, window_bounds = array<i64: 1, 80, 32>}]} {
    %c0_i32 = arith.constant 0 : i32
    %0 = arith.cmpi eq, %arg1, %c0_i32 : i32
    %1 = arith.extui %0 : i1 to i32
    %c0_i32_0 = arith.constant 0 : i32
    %2 = arith.cmpi ne, %1, %c0_i32_0 : i32
    scf.if %2 {
      %c0_81 = arith.constant 0 : index
      %c0_82 = arith.constant 0 : index
      %c0_83 = arith.constant 0 : index
      %210 = vector.load %arg2[%c0_81, %c0_82, %c0_83] : memref<1x80x32xf32, #tpu.memory_space<vmem>>, vector<1x80x32xf32>
      %211 = vector.shape_cast %210 : vector<1x80x32xf32> to vector<80x32xf32>
      %c0_84 = arith.constant 0 : index
      %c0_85 = arith.constant 0 : index
      %c0_86 = arith.constant 0 : index
      %212 = vector.load %arg17[%c0_84, %c0_85, %c0_86] : memref<1x80x32xf32, #tpu.memory_space<vmem>>, vector<1x80x32xf32>
      %213 = vector.shape_cast %212 : vector<1x80x32xf32> to vector<80x32xf32>
      %214 = vector.shape_cast %211 : vector<80x32xf32> to vector<1x80x32xf32>
      tpu.vector_store %arg17[%c0_84, %c0_85, %c0_86], %214 {strides = array<i32>} : memref<1x80x32xf32, #tpu.memory_space<vmem>>, vector<1x80x32xf32>,
    } else {
    }
    %c0 = arith.constant 0 : index
    %c0_1 = arith.constant 0 : index
    %c0_2 = arith.constant 0 : index
    %3 = vector.load %arg17[%c0, %c0_1, %c0_2] : memref<1x80x32xf32, #tpu.memory_space<vmem>>, vector<1x80x32xf32>
    %4 = vector.shape_cast %3 : vector<1x80x32xf32> to vector<80x32xf32>
    %5 = arith.truncf %4 : vector<80x32xf32> to vector<80x32xbf16>
    %c0_3 = arith.constant 0 : index
    %c0_4 = arith.constant 0 : index
    %c0_5 = arith.constant 0 : index
    %6 = vector.load %arg5[%c0_3, %c0_4, %c0_5] : memref<1x32x96xbf16, #tpu.memory_space<vmem>>, vector<1x32x96xbf16>
    %7 = vector.shape_cast %6 : vector<1x32x96xbf16> to vector<32x96xbf16>
    %cst = arith.constant dense<0.000000e+00> : vector<80x96xf32>
    %8 = tpu.matmul %5, %7, %cst {dimension_numbers = #tpu.dot_dimension_numbers<[1], [0], [0], [1], [0, 0, 1, 1], [], []>} : vector<80x32xbf16>, vector<32x96xbf16>, vector<80x96xf32> -> vector<80x96xf32>
    %c0_6 = arith.constant 0 : index
    %c0_7 = arith.constant 0 : index
    %c0_8 = arith.constant 0 : index
    %9 = vector.load %arg6[%c0_6, %c0_7, %c0_8] : memref<1x1x96xf32, #tpu.memory_space<vmem>>, vector<1x1x96xf32>
    %10 = vector.shape_cast %9 : vector<1x1x96xf32> to vector<1x96xf32>
    %11 = vector.broadcast %10 : vector<1x96xf32> to vector<80x96xf32>
    %12 = arith.addf %8, %11 : vector<80x96xf32>
    %13 = vector.extract_strided_slice %12 {offsets = [0, 0], sizes = [80, 32], strides = [1, 1]} : vector<80x96xf32> to vector<80x32xf32>
    %14 = vector.extract_strided_slice %12 {offsets = [0, 32], sizes = [80, 32], strides = [1, 1]} : vector<80x96xf32> to vector<80x32xf32>
    %15 = vector.extract_strided_slice %12 {offsets = [0, 64], sizes = [80, 32], strides = [1, 1]} : vector<80x96xf32> to vector<80x32xf32>
    %16 = arith.truncf %14 : vector<80x32xf32> to vector<80x32xbf16>
    %c0_9 = arith.constant 0 : index
    %c0_10 = arith.constant 0 : index
    %c0_11 = arith.constant 0 : index
    %17 = vector.load %arg3[%c0_9, %c0_10, %c0_11] : memref<4x1x32xf32, #tpu.memory_space<vmem>>, vector<4x1x32xf32>
    %c0_12 = arith.constant 0 : index
    %c0_13 = arith.constant 0 : index
    %18 = vector.load %arg4[%c0_12, %c0_13] : memref<1x80xf32, #tpu.memory_space<vmem>>, vector<1x80xf32>
    %cst_14 = arith.constant 0.000000e+00 : f32
    %19 = vector.broadcast %cst_14 : f32 to vector<80x32xf32>
    %20 = vector.extract_strided_slice %17 {offsets = [0, 0, 0], sizes = [1, 1, 32], strides = [1, 1, 1]} : vector<4x1x32xf32> to vector<1x1x32xf32>
    %21 = vector.shape_cast %20 : vector<1x1x32xf32> to vector<1x32xf32>
    %22 = vector.broadcast %21 : vector<1x32xf32> to vector<80x32xf32>
    %23 = arith.mulf %13, %22 : vector<80x32xf32>
    %24 = arith.truncf %23 : vector<80x32xf32> to vector<80x32xbf16>
    %cst_15 = arith.constant dense<0.000000e+00> : vector<80x80xf32>
    %25 = tpu.matmul %24, %16, %cst_15 {dimension_numbers = #tpu.dot_dimension_numbers<[1], [1], [0], [0], [0, 0, 1, 0], [], []>} : vector<80x32xbf16>, vector<80x32xbf16>, vector<80x80xf32> -> vector<80x80xf32>
    %26 = vector.broadcast %18 : vector<1x80xf32> to vector<80x80xf32>
    %27 = arith.addf %25, %26 : vector<80x80xf32>
    %cst_16 = arith.constant dense<0xFF800000> : vector<80xf32>
    %28 = vector.multi_reduction <maximumf>, %27, %cst_16 [1] : vector<80x80xf32> to vector<80xf32>
    %29 = vector.shape_cast %28 : vector<80xf32> to vector<80x1xf32>
    %30 = vector.broadcast %29 : vector<80x1xf32> to vector<80x80xf32>
    %31 = arith.subf %27, %30 : vector<80x80xf32>
    %32 = math.exp %31 : vector<80x80xf32>
    %cst_17 = arith.constant dense<0.000000e+00> : vector<80xf32>
    %33 = vector.multi_reduction <add>, %32, %cst_17 [1] : vector<80x80xf32> to vector<80xf32>
    %34 = vector.shape_cast %33 : vector<80xf32> to vector<80x1xf32>
    %35 = tpu.reciprocal %34 {approx = true} : vector<80x1xf32> -> vector<80x1xf32>
    %36 = vector.broadcast %35 : vector<80x1xf32> to vector<80x80xf32>
    %37 = arith.mulf %32, %36 : vector<80x80xf32>
    %38 = vector.broadcast %21 : vector<1x32xf32> to vector<80x32xf32>
    %39 = arith.mulf %15, %38 : vector<80x32xf32>
    %40 = arith.truncf %39 : vector<80x32xf32> to vector<80x32xbf16>
    %41 = arith.truncf %37 : vector<80x80xf32> to vector<80x80xbf16>
    %cst_18 = arith.constant dense<0.000000e+00> : vector<80x32xf32>
    %42 = tpu.matmul %41, %40, %cst_18 {dimension_numbers = #tpu.dot_dimension_numbers<[1], [0], [0], [1], [0, 0, 1, 1], [], []>} : vector<80x80xbf16>, vector<80x32xbf16>, vector<80x32xf32> -> vector<80x32xf32>
    %43 = arith.addf %19, %42 : vector<80x32xf32>
    %44 = vector.extract_strided_slice %17 {offsets = [1, 0, 0], sizes = [1, 1, 32], strides = [1, 1, 1]} : vector<4x1x32xf32> to vector<1x1x32xf32>
    %45 = vector.shape_cast %44 : vector<1x1x32xf32> to vector<1x32xf32>
    %46 = vector.broadcast %45 : vector<1x32xf32> to vector<80x32xf32>
    %47 = arith.mulf %13, %46 : vector<80x32xf32>
    %48 = arith.truncf %47 : vector<80x32xf32> to vector<80x32xbf16>
    %cst_19 = arith.constant dense<0.000000e+00> : vector<80x80xf32>
    %49 = tpu.matmul %48, %16, %cst_19 {dimension_numbers = #tpu.dot_dimension_numbers<[1], [1], [0], [0], [0, 0, 1, 0], [], []>} : vector<80x32xbf16>, vector<80x32xbf16>, vector<80x80xf32> -> vector<80x80xf32>
    %50 = vector.broadcast %18 : vector<1x80xf32> to vector<80x80xf32>
    %51 = arith.addf %49, %50 : vector<80x80xf32>
    %cst_20 = arith.constant dense<0xFF800000> : vector<80xf32>
    %52 = vector.multi_reduction <maximumf>, %51, %cst_20 [1] : vector<80x80xf32> to vector<80xf32>
    %53 = vector.shape_cast %52 : vector<80xf32> to vector<80x1xf32>
    %54 = vector.broadcast %53 : vector<80x1xf32> to vector<80x80xf32>
    %55 = arith.subf %51, %54 : vector<80x80xf32>
    %56 = math.exp %55 : vector<80x80xf32>
    %cst_21 = arith.constant dense<0.000000e+00> : vector<80xf32>
    %57 = vector.multi_reduction <add>, %56, %cst_21 [1] : vector<80x80xf32> to vector<80xf32>
    %58 = vector.shape_cast %57 : vector<80xf32> to vector<80x1xf32>
    %59 = tpu.reciprocal %58 {approx = true} : vector<80x1xf32> -> vector<80x1xf32>
    %60 = vector.broadcast %59 : vector<80x1xf32> to vector<80x80xf32>
    %61 = arith.mulf %56, %60 : vector<80x80xf32>
    %62 = vector.broadcast %45 : vector<1x32xf32> to vector<80x32xf32>
    %63 = arith.mulf %15, %62 : vector<80x32xf32>
    %64 = arith.truncf %63 : vector<80x32xf32> to vector<80x32xbf16>
    %65 = arith.truncf %61 : vector<80x80xf32> to vector<80x80xbf16>
    %cst_22 = arith.constant dense<0.000000e+00> : vector<80x32xf32>
    %66 = tpu.matmul %65, %64, %cst_22 {dimension_numbers = #tpu.dot_dimension_numbers<[1], [0], [0], [1], [0, 0, 1, 1], [], []>} : vector<80x80xbf16>, vector<80x32xbf16>, vector<80x32xf32> -> vector<80x32xf32>
    %67 = arith.addf %43, %66 : vector<80x32xf32>
    %68 = vector.extract_strided_slice %17 {offsets = [2, 0, 0], sizes = [1, 1, 32], strides = [1, 1, 1]} : vector<4x1x32xf32> to vector<1x1x32xf32>
    %69 = vector.shape_cast %68 : vector<1x1x32xf32> to vector<1x32xf32>
    %70 = vector.broadcast %69 : vector<1x32xf32> to vector<80x32xf32>
    %71 = arith.mulf %13, %70 : vector<80x32xf32>
    %72 = arith.truncf %71 : vector<80x32xf32> to vector<80x32xbf16>
    %cst_23 = arith.constant dense<0.000000e+00> : vector<80x80xf32>
    %73 = tpu.matmul %72, %16, %cst_23 {dimension_numbers = #tpu.dot_dimension_numbers<[1], [1], [0], [0], [0, 0, 1, 0], [], []>} : vector<80x32xbf16>, vector<80x32xbf16>, vector<80x80xf32> -> vector<80x80xf32>
    %74 = vector.broadcast %18 : vector<1x80xf32> to vector<80x80xf32>
    %75 = arith.addf %73, %74 : vector<80x80xf32>
    %cst_24 = arith.constant dense<0xFF800000> : vector<80xf32>
    %76 = vector.multi_reduction <maximumf>, %75, %cst_24 [1] : vector<80x80xf32> to vector<80xf32>
    %77 = vector.shape_cast %76 : vector<80xf32> to vector<80x1xf32>
    %78 = vector.broadcast %77 : vector<80x1xf32> to vector<80x80xf32>
    %79 = arith.subf %75, %78 : vector<80x80xf32>
    %80 = math.exp %79 : vector<80x80xf32>
    %cst_25 = arith.constant dense<0.000000e+00> : vector<80xf32>
    %81 = vector.multi_reduction <add>, %80, %cst_25 [1] : vector<80x80xf32> to vector<80xf32>
    %82 = vector.shape_cast %81 : vector<80xf32> to vector<80x1xf32>
    %83 = tpu.reciprocal %82 {approx = true} : vector<80x1xf32> -> vector<80x1xf32>
    %84 = vector.broadcast %83 : vector<80x1xf32> to vector<80x80xf32>
    %85 = arith.mulf %80, %84 : vector<80x80xf32>
    %86 = vector.broadcast %69 : vector<1x32xf32> to vector<80x32xf32>
    %87 = arith.mulf %15, %86 : vector<80x32xf32>
    %88 = arith.truncf %87 : vector<80x32xf32> to vector<80x32xbf16>
    %89 = arith.truncf %85 : vector<80x80xf32> to vector<80x80xbf16>
    %cst_26 = arith.constant dense<0.000000e+00> : vector<80x32xf32>
    %90 = tpu.matmul %89, %88, %cst_26 {dimension_numbers = #tpu.dot_dimension_numbers<[1], [0], [0], [1], [0, 0, 1, 1], [], []>} : vector<80x80xbf16>, vector<80x32xbf16>, vector<80x32xf32> -> vector<80x32xf32>
    %91 = arith.addf %67, %90 : vector<80x32xf32>
    %92 = vector.extract_strided_slice %17 {offsets = [3, 0, 0], sizes = [1, 1, 32], strides = [1, 1, 1]} : vector<4x1x32xf32> to vector<1x1x32xf32>
    %93 = vector.shape_cast %92 : vector<1x1x32xf32> to vector<1x32xf32>
    %94 = vector.broadcast %93 : vector<1x32xf32> to vector<80x32xf32>
    %95 = arith.mulf %13, %94 : vector<80x32xf32>
    %96 = arith.truncf %95 : vector<80x32xf32> to vector<80x32xbf16>
    %cst_27 = arith.constant dense<0.000000e+00> : vector<80x80xf32>
    %97 = tpu.matmul %96, %16, %cst_27 {dimension_numbers = #tpu.dot_dimension_numbers<[1], [1], [0], [0], [0, 0, 1, 0], [], []>} : vector<80x32xbf16>, vector<80x32xbf16>, vector<80x80xf32> -> vector<80x80xf32>
    %98 = vector.broadcast %18 : vector<1x80xf32> to vector<80x80xf32>
    %99 = arith.addf %97, %98 : vector<80x80xf32>
    %cst_28 = arith.constant dense<0xFF800000> : vector<80xf32>
    %100 = vector.multi_reduction <maximumf>, %99, %cst_28 [1] : vector<80x80xf32> to vector<80xf32>
    %101 = vector.shape_cast %100 : vector<80xf32> to vector<80x1xf32>
    %102 = vector.broadcast %101 : vector<80x1xf32> to vector<80x80xf32>
    %103 = arith.subf %99, %102 : vector<80x80xf32>
    %104 = math.exp %103 : vector<80x80xf32>
    %cst_29 = arith.constant dense<0.000000e+00> : vector<80xf32>
    %105 = vector.multi_reduction <add>, %104, %cst_29 [1] : vector<80x80xf32> to vector<80xf32>
    %106 = vector.shape_cast %105 : vector<80xf32> to vector<80x1xf32>
    %107 = tpu.reciprocal %106 {approx = true} : vector<80x1xf32> -> vector<80x1xf32>
    %108 = vector.broadcast %107 : vector<80x1xf32> to vector<80x80xf32>
    %109 = arith.mulf %104, %108 : vector<80x80xf32>
    %110 = vector.broadcast %93 : vector<1x32xf32> to vector<80x32xf32>
    %111 = arith.mulf %15, %110 : vector<80x32xf32>
    %112 = arith.truncf %111 : vector<80x32xf32> to vector<80x32xbf16>
    %113 = arith.truncf %109 : vector<80x80xf32> to vector<80x80xbf16>
    %cst_30 = arith.constant dense<0.000000e+00> : vector<80x32xf32>
    %114 = tpu.matmul %113, %112, %cst_30 {dimension_numbers = #tpu.dot_dimension_numbers<[1], [0], [0], [1], [0, 0, 1, 1], [], []>} : vector<80x80xbf16>, vector<80x32xbf16>, vector<80x32xf32> -> vector<80x32xf32>
    %115 = arith.addf %91, %114 : vector<80x32xf32>
    %116 = arith.truncf %115 : vector<80x32xf32> to vector<80x32xbf16>
    %c0_31 = arith.constant 0 : index
    %c0_32 = arith.constant 0 : index
    %c0_33 = arith.constant 0 : index
    %117 = vector.load %arg7[%c0_31, %c0_32, %c0_33] : memref<1x32x32xbf16, #tpu.memory_space<vmem>>, vector<1x32x32xbf16>
    %118 = vector.shape_cast %117 : vector<1x32x32xbf16> to vector<32x32xbf16>
    %cst_34 = arith.constant dense<0.000000e+00> : vector<80x32xf32>
    %119 = tpu.matmul %116, %118, %cst_34 {dimension_numbers = #tpu.dot_dimension_numbers<[1], [0], [0], [1], [0, 0, 1, 1], [], []>} : vector<80x32xbf16>, vector<32x32xbf16>, vector<80x32xf32> -> vector<80x32xf32>
    %c0_35 = arith.constant 0 : index
    %c0_36 = arith.constant 0 : index
    %c0_37 = arith.constant 0 : index
    %120 = vector.load %arg8[%c0_35, %c0_36, %c0_37] : memref<1x1x32xf32, #tpu.memory_space<vmem>>, vector<1x1x32xf32>
    %121 = vector.shape_cast %120 : vector<1x1x32xf32> to vector<1x32xf32>
    %122 = vector.broadcast %121 : vector<1x32xf32> to vector<80x32xf32>
    %123 = arith.addf %119, %122 : vector<80x32xf32>
    %124 = arith.addf %123, %4 : vector<80x32xf32>
    %c0_38 = arith.constant 0 : index
    %c0_39 = arith.constant 0 : index
    %c0_40 = arith.constant 0 : index
    %125 = vector.load %arg9[%c0_38, %c0_39, %c0_40] : memref<1x1x32xf32, #tpu.memory_space<vmem>>, vector<1x1x32xf32>
    %126 = vector.shape_cast %125 : vector<1x1x32xf32> to vector<1x32xf32>
    %c0_41 = arith.constant 0 : index
    %c0_42 = arith.constant 0 : index
    %c0_43 = arith.constant 0 : index
    %127 = vector.load %arg10[%c0_41, %c0_42, %c0_43] : memref<1x1x32xf32, #tpu.memory_space<vmem>>, vector<1x1x32xf32>
    %128 = vector.shape_cast %127 : vector<1x1x32xf32> to vector<1x32xf32>
    %cst_44 = arith.constant dense<0.000000e+00> : vector<80xf32>
    %129 = vector.multi_reduction <add>, %124, %cst_44 [1] : vector<80x32xf32> to vector<80xf32>
    %130 = vector.shape_cast %129 : vector<80xf32> to vector<80x1xf32>
    %cst_45 = arith.constant 3.200000e+01 : f32
    %131 = vector.broadcast %cst_45 : f32 to vector<80x1xf32>
    %132 = arith.divf %130, %131 : vector<80x1xf32>
    %133 = vector.broadcast %132 : vector<80x1xf32> to vector<80x32xf32>
    %134 = arith.subf %124, %133 : vector<80x32xf32>
    %135 = arith.mulf %134, %134 : vector<80x32xf32>
    %cst_46 = arith.constant dense<0.000000e+00> : vector<80xf32>
    %136 = vector.multi_reduction <add>, %135, %cst_46 [1] : vector<80x32xf32> to vector<80xf32>
    %137 = vector.shape_cast %136 : vector<80xf32> to vector<80x1xf32>
    %cst_47 = arith.constant 3.200000e+01 : f32
    %138 = vector.broadcast %cst_47 : f32 to vector<80x1xf32>
    %139 = arith.divf %137, %138 : vector<80x1xf32>
    %140 = vector.broadcast %132 : vector<80x1xf32> to vector<80x32xf32>
    %141 = arith.subf %124, %140 : vector<80x32xf32>
    %cst_48 = arith.constant 9.99999974E-6 : f32
    %142 = vector.broadcast %cst_48 : f32 to vector<80x1xf32>
    %143 = arith.addf %139, %142 : vector<80x1xf32>
    %144 = math.rsqrt %143 : vector<80x1xf32>
    %145 = vector.broadcast %144 : vector<80x1xf32> to vector<80x32xf32>
    %146 = arith.mulf %141, %145 : vector<80x32xf32>
    %147 = vector.broadcast %126 : vector<1x32xf32> to vector<80x32xf32>
    %148 = arith.mulf %146, %147 : vector<80x32xf32>
    %149 = vector.broadcast %128 : vector<1x32xf32> to vector<80x32xf32>
    %150 = arith.addf %148, %149 : vector<80x32xf32>
    %151 = arith.truncf %150 : vector<80x32xf32> to vector<80x32xbf16>
    %c0_49 = arith.constant 0 : index
    %c0_50 = arith.constant 0 : index
    %c0_51 = arith.constant 0 : index
    %152 = vector.load %arg11[%c0_49, %c0_50, %c0_51] : memref<1x32x64xbf16, #tpu.memory_space<vmem>>, vector<1x32x64xbf16>
    %153 = vector.shape_cast %152 : vector<1x32x64xbf16> to vector<32x64xbf16>
    %cst_52 = arith.constant dense<0.000000e+00> : vector<80x64xf32>
    %154 = tpu.matmul %151, %153, %cst_52 {dimension_numbers = #tpu.dot_dimension_numbers<[1], [0], [0], [1], [0, 0, 1, 1], [], []>} : vector<80x32xbf16>, vector<32x64xbf16>, vector<80x64xf32> -> vector<80x64xf32>
    %c0_53 = arith.constant 0 : index
    %c0_54 = arith.constant 0 : index
    %c0_55 = arith.constant 0 : index
    %155 = vector.load %arg12[%c0_53, %c0_54, %c0_55] : memref<1x1x64xf32, #tpu.memory_space<vmem>>, vector<1x1x64xf32>
    %156 = vector.shape_cast %155 : vector<1x1x64xf32> to vector<1x64xf32>
    %157 = vector.broadcast %156 : vector<1x64xf32> to vector<80x64xf32>
    %158 = arith.addf %154, %157 : vector<80x64xf32>
    %159 = arith.mulf %158, %158 : vector<80x64xf32>
    %160 = arith.mulf %158, %159 : vector<80x64xf32>
    %cst_56 = arith.constant 4.471500e-02 : f32
    %161 = vector.broadcast %cst_56 : f32 to vector<80x64xf32>
    %162 = arith.mulf %161, %160 : vector<80x64xf32>
    %163 = arith.addf %158, %162 : vector<80x64xf32>
    %cst_57 = arith.constant 0.797884583 : f32
    %164 = vector.broadcast %cst_57 : f32 to vector<80x64xf32>
    %165 = arith.mulf %164, %163 : vector<80x64xf32>
    %166 = math.tanh %165 : vector<80x64xf32>
    %cst_58 = arith.constant 1.000000e+00 : f32
    %167 = vector.broadcast %cst_58 : f32 to vector<80x64xf32>
    %168 = arith.addf %167, %166 : vector<80x64xf32>
    %cst_59 = arith.constant 5.000000e-01 : f32
    %169 = vector.broadcast %cst_59 : f32 to vector<80x64xf32>
    %170 = arith.mulf %169, %168 : vector<80x64xf32>
    %171 = arith.mulf %158, %170 : vector<80x64xf32>
    %172 = arith.truncf %171 : vector<80x64xf32> to vector<80x64xbf16>
    %c0_60 = arith.constant 0 : index
    %c0_61 = arith.constant 0 : index
    %c0_62 = arith.constant 0 : index
    %173 = vector.load %arg13[%c0_60, %c0_61, %c0_62] : memref<1x64x32xbf16, #tpu.memory_space<vmem>>, vector<1x64x32xbf16>
    %174 = vector.shape_cast %173 : vector<1x64x32xbf16> to vector<64x32xbf16>
    %cst_63 = arith.constant dense<0.000000e+00> : vector<80x32xf32>
    %175 = tpu.matmul %172, %174, %cst_63 {dimension_numbers = #tpu.dot_dimension_numbers<[1], [0], [0], [1], [0, 0, 1, 1], [], []>} : vector<80x64xbf16>, vector<64x32xbf16>, vector<80x32xf32> -> vector<80x32xf32>
    %c0_64 = arith.constant 0 : index
    %c0_65 = arith.constant 0 : index
    %c0_66 = arith.constant 0 : index
    %176 = vector.load %arg14[%c0_64, %c0_65, %c0_66] : memref<1x1x32xf32, #tpu.memory_space<vmem>>, vector<1x1x32xf32>
    %177 = vector.shape_cast %176 : vector<1x1x32xf32> to vector<1x32xf32>
    %178 = vector.broadcast %177 : vector<1x32xf32> to vector<80x32xf32>
    %179 = arith.addf %175, %178 : vector<80x32xf32>
    %180 = arith.addf %179, %150 : vector<80x32xf32>
    %c0_67 = arith.constant 0 : index
    %c0_68 = arith.constant 0 : index
    %c0_69 = arith.constant 0 : index
    %181 = vector.load %arg15[%c0_67, %c0_68, %c0_69] : memref<1x1x32xf32, #tpu.memory_space<vmem>>, vector<1x1x32xf32>
    %182 = vector.shape_cast %181 : vector<1x1x32xf32> to vector<1x32xf32>
    %c0_70 = arith.constant 0 : index
    %c0_71 = arith.constant 0 : index
    %c0_72 = arith.constant 0 : index
    %183 = vector.load %arg16[%c0_70, %c0_71, %c0_72] : memref<1x1x32xf32, #tpu.memory_space<vmem>>, vector<1x1x32xf32>
    %184 = vector.shape_cast %183 : vector<1x1x32xf32> to vector<1x32xf32>
    %cst_73 = arith.constant dense<0.000000e+00> : vector<80xf32>
    %185 = vector.multi_reduction <add>, %180, %cst_73 [1] : vector<80x32xf32> to vector<80xf32>
    %186 = vector.shape_cast %185 : vector<80xf32> to vector<80x1xf32>
    %cst_74 = arith.constant 3.200000e+01 : f32
    %187 = vector.broadcast %cst_74 : f32 to vector<80x1xf32>
    %188 = arith.divf %186, %187 : vector<80x1xf32>
    %189 = vector.broadcast %188 : vector<80x1xf32> to vector<80x32xf32>
    %190 = arith.subf %180, %189 : vector<80x32xf32>
    %191 = arith.mulf %190, %190 : vector<80x32xf32>
    %cst_75 = arith.constant dense<0.000000e+00> : vector<80xf32>
    %192 = vector.multi_reduction <add>, %191, %cst_75 [1] : vector<80x32xf32> to vector<80xf32>
    %193 = vector.shape_cast %192 : vector<80xf32> to vector<80x1xf32>
    %cst_76 = arith.constant 3.200000e+01 : f32
    %194 = vector.broadcast %cst_76 : f32 to vector<80x1xf32>
    %195 = arith.divf %193, %194 : vector<80x1xf32>
    %196 = vector.broadcast %188 : vector<80x1xf32> to vector<80x32xf32>
    %197 = arith.subf %180, %196 : vector<80x32xf32>
    %cst_77 = arith.constant 9.99999974E-6 : f32
    %198 = vector.broadcast %cst_77 : f32 to vector<80x1xf32>
    %199 = arith.addf %195, %198 : vector<80x1xf32>
    %200 = math.rsqrt %199 : vector<80x1xf32>
    %201 = vector.broadcast %200 : vector<80x1xf32> to vector<80x32xf32>
    %202 = arith.mulf %197, %201 : vector<80x32xf32>
    %203 = vector.broadcast %182 : vector<1x32xf32> to vector<80x32xf32>
    %204 = arith.mulf %202, %203 : vector<80x32xf32>
    %205 = vector.broadcast %184 : vector<1x32xf32> to vector<80x32xf32>
    %206 = arith.addf %204, %205 : vector<80x32xf32>
    %c0_78 = arith.constant 0 : index
    %c0_79 = arith.constant 0 : index
    %c0_80 = arith.constant 0 : index
    %207 = vector.load %arg17[%c0_78, %c0_79, %c0_80] : memref<1x80x32xf32, #tpu.memory_space<vmem>>, vector<1x80x32xf32>
    %208 = vector.shape_cast %207 : vector<1x80x32xf32> to vector<80x32xf32>
    %209 = vector.shape_cast %206 : vector<80x32xf32> to vector<1x80x32xf32>
    tpu.vector_store %arg17[%c0_78, %c0_79, %c0_80], %209 {strides = array<i32>} : memref<1x80x32xf32, #tpu.memory_space<vmem>>, vector<1x80x32xf32>,
    return
  }
  func.func @transform_0(%arg0: i32, %arg1: i32) -> (i32, i32, i32) {
    %c0_i32 = arith.constant 0 : i32
    %c0_i32_0 = arith.constant 0 : i32
    %c0_i32_1 = arith.constant 0 : i32
    return %arg0, %c0_i32, %c0_i32_0 : i32, i32, i32
  }
  func.func @transform_1(%arg0: i32, %arg1: i32) -> (i32, i32, i32) {
    %c0_i32 = arith.constant 0 : i32
    %c0_i32_0 = arith.constant 0 : i32
    %c0_i32_1 = arith.constant 0 : i32
    %c0_i32_2 = arith.constant 0 : i32
    return %c0_i32, %c0_i32_0, %c0_i32_1 : i32, i32, i32
  }
  func.func @transform_2(%arg0: i32, %arg1: i32) -> (i32, i32) {
    %c0_i32 = arith.constant 0 : i32
    %c0_i32_0 = arith.constant 0 : i32
    %c0_i32_1 = arith.constant 0 : i32
    return %c0_i32, %c0_i32_0 : i32, i32
  }
  func.func @transform_3(%arg0: i32, %arg1: i32) -> (i32, i32, i32) {
    %c0_i32 = arith.constant 0 : i32
    %c0_i32_0 = arith.constant 0 : i32
    %c0_i32_1 = arith.constant 0 : i32
    return %arg1, %c0_i32, %c0_i32_0 : i32, i32, i32
  }
  func.func @transform_4(%arg0: i32, %arg1: i32) -> (i32, i32, i32) {
    %c0_i32 = arith.constant 0 : i32
    %c0_i32_0 = arith.constant 0 : i32
    %c0_i32_1 = arith.constant 0 : i32
    return %arg1, %c0_i32, %c0_i32_0 : i32, i32, i32
  }
  func.func @transform_5(%arg0: i32, %arg1: i32) -> (i32, i32, i32) {
    %c0_i32 = arith.constant 0 : i32
    %c0_i32_0 = arith.constant 0 : i32
    %c0_i32_1 = arith.constant 0 : i32
    return %arg1, %c0_i32, %c0_i32_0 : i32, i32, i32
  }
  func.func @transform_6(%arg0: i32, %arg1: i32) -> (i32, i32, i32) {
    %c0_i32 = arith.constant 0 : i32
    %c0_i32_0 = arith.constant 0 : i32
    %c0_i32_1 = arith.constant 0 : i32
    return %arg1, %c0_i32, %c0_i32_0 : i32, i32, i32
  }
  func.func @transform_7(%arg0: i32, %arg1: i32) -> (i32, i32, i32) {
    %c0_i32 = arith.constant 0 : i32
    %c0_i32_0 = arith.constant 0 : i32
    %c0_i32_1 = arith.constant 0 : i32
    return %arg1, %c0_i32, %c0_i32_0 : i32, i32, i32
  }
  func.func @transform_8(%arg0: i32, %arg1: i32) -> (i32, i32, i32) {
    %c0_i32 = arith.constant 0 : i32
    %c0_i32_0 = arith.constant 0 : i32
    %c0_i32_1 = arith.constant 0 : i32
    return %arg1, %c0_i32, %c0_i32_0 : i32, i32, i32
  }
  func.func @transform_9(%arg0: i32, %arg1: i32) -> (i32, i32, i32) {
    %c0_i32 = arith.constant 0 : i32
    %c0_i32_0 = arith.constant 0 : i32
    %c0_i32_1 = arith.constant 0 : i32
    return %arg1, %c0_i32, %c0_i32_0 : i32, i32, i32
  }
  func.func @transform_10(%arg0: i32, %arg1: i32) -> (i32, i32, i32) {
    %c0_i32 = arith.constant 0 : i32
    %c0_i32_0 = arith.constant 0 : i32
    %c0_i32_1 = arith.constant 0 : i32
    return %arg1, %c0_i32, %c0_i32_0 : i32, i32, i32
  }
  func.func @transform_11(%arg0: i32, %arg1: i32) -> (i32, i32, i32) {
    %c0_i32 = arith.constant 0 : i32
    %c0_i32_0 = arith.constant 0 : i32
    %c0_i32_1 = arith.constant 0 : i32
    return %arg1, %c0_i32, %c0_i32_0 : i32, i32, i32
  }
  func.func @transform_12(%arg0: i32, %arg1: i32) -> (i32, i32, i32) {
    %c0_i32 = arith.constant 0 : i32
    %c0_i32_0 = arith.constant 0 : i32
    %c0_i32_1 = arith.constant 0 : i32
    return %arg1, %c0_i32, %c0_i32_0 : i32, i32, i32
  }
  func.func @transform_13(%arg0: i32, %arg1: i32) -> (i32, i32, i32) {
    %c0_i32 = arith.constant 0 : i32
    %c0_i32_0 = arith.constant 0 : i32
    %c0_i32_1 = arith.constant 0 : i32
    return %arg1, %c0_i32, %c0_i32_0 : i32, i32, i32
  }
  func.func @transform_14(%arg0: i32, %arg1: i32) -> (i32, i32, i32) {
    %c0_i32 = arith.constant 0 : i32
    %c0_i32_0 = arith.constant 0 : i32
    %c0_i32_1 = arith.constant 0 : i32
    return %arg1, %c0_i32, %c0_i32_0 : i32, i32, i32
  }
  func.func @transform_15(%arg0: i32, %arg1: i32) -> (i32, i32, i32) {
    %c0_i32 = arith.constant 0 : i32
    %c0_i32_0 = arith.constant 0 : i32
    %c0_i32_1 = arith.constant 0 : i32
    return %arg0, %c0_i32, %c0_i32_0 : i32, i32, i32
  }
}

</mosaic_0001>

<llo_original>
// kernel: speech_recognition_forward.3
$region0: #{speech_recognition_forward.3}
  #allocation0 [shape = 'u32[]', space=smem, size = 0x4, offset = 0x4, fixed_abs, tag = 'smem constant byte address 0x4 - core index']
  #allocation1 [shape = 'u32[72,128]{1,0:T(1,128)}', space=vmem, size = 0x9000, scoped, tag = 'internal scratch']
  %s0 = inlined_call_operand.vmem [shape: f32[2,80,32], index: 0, kind: input, shape index: {}]
  %s1 = inlined_call_operand.vmem [shape: f32[4,1,32], index: 1, kind: input, shape index: {}]
  %s2 = inlined_call_operand.vmem [shape: f32[1,80], index: 2, kind: input, shape index: {}]
  %s3 = inlined_call_operand.vmem [shape: bf16[2,32,96], index: 3, kind: input, shape index: {}]
  %s4 = inlined_call_operand.vmem [shape: f32[2,1,96], index: 4, kind: input, shape index: {}]
  %s5 = inlined_call_operand.vmem [shape: bf16[2,32,32], index: 5, kind: input, shape index: {}]
  %s6 = inlined_call_operand.vmem [shape: f32[2,1,32], index: 6, kind: input, shape index: {}]
  %s7 = inlined_call_operand.vmem [shape: f32[2,1,32], index: 7, kind: input, shape index: {}]
  %s8 = inlined_call_operand.vmem [shape: f32[2,1,32], index: 8, kind: input, shape index: {}]
  %s9 = inlined_call_operand.vmem [shape: bf16[2,32,64], index: 9, kind: input, shape index: {}]
  %s10 = inlined_call_operand.vmem [shape: f32[2,1,64], index: 10, kind: input, shape index: {}]
  %s11 = inlined_call_operand.vmem [shape: bf16[2,64,32], index: 11, kind: input, shape index: {}]
  %s12 = inlined_call_operand.vmem [shape: f32[2,1,32], index: 12, kind: input, shape index: {}]
  %s13 = inlined_call_operand.vmem [shape: f32[2,1,32], index: 13, kind: input, shape index: {}]
  %s14 = inlined_call_operand.vmem [shape: f32[2,1,32], index: 14, kind: input, shape index: {}]
  %s15 = inlined_call_operand.vmem [shape: f32[2,80,32], index: 15, kind: output, shape index: {}]
  %s16 = sld [smem:[#allocation0]]
  $region97: #{speech_recognition_forward.3} parent=0
    _
  %s18 = ssub.s32 1, %s16
  %s19 = scalar_select 0, %s18, %s16
  loop: start=0, step=1, limit=6
  $region2: #{speech_recognition_forward.3} parent=0 // loop_pre_header
    _
  $region3: #{speech_recognition_forward.3} parent=0 // loop_header
    %s21 = sphi 0, %s25
    %p22 = scmp.ge.s32.totalorder %s21, 6
    %s28 = sphi 0, %s40
    %s29 = sphi 0, %s36
    %s30 = sphi 0, %s28
    %s31 = sphi 0, %s29
    %s32 = sphi 0, %s30
    %s33 = sphi 0, %s31
    %s43 = sphi 0, %s45
    %s46 = sphi 0, %s43
    %s47 = sphi 0, %s46
    %s63 = sphi 0, %s47
    %s67 = sphi 0, %s67
    %s69 = sphi 0, %s67
    %s70 = sphi 0, %s69
    %s84 = sphi 0, %s70
    %s88 = sphi 0, %s88
    %s90 = sphi 0, %s88
    %s91 = sphi 0, %s90
    %s105 = sphi 0, %s91
    %s111 = sphi 0, %s113
    %s114 = sphi 0, %s111
    %s115 = sphi 0, %s114
    %s131 = sphi 0, %s115
    %s137 = sphi 0, %s139
    %s140 = sphi 0, %s137
    %s141 = sphi 0, %s140
    %s157 = sphi 0, %s141
    %s163 = sphi 0, %s165
    %s166 = sphi 0, %s163
    %s167 = sphi 0, %s166
    %s183 = sphi 0, %s167
    %s189 = sphi 0, %s191
    %s192 = sphi 0, %s189
    %s193 = sphi 0, %s192
    %s209 = sphi 0, %s193
    %s215 = sphi 0, %s217
    %s218 = sphi 0, %s215
    %s219 = sphi 0, %s218
    %s235 = sphi 0, %s219
    %s241 = sphi 0, %s243
    %s244 = sphi 0, %s241
    %s245 = sphi 0, %s244
    %s261 = sphi 0, %s245
    %s267 = sphi 0, %s269
    %s270 = sphi 0, %s267
    %s271 = sphi 0, %s270
    %s287 = sphi 0, %s271
    %s293 = sphi 0, %s295
    %s296 = sphi 0, %s293
    %s297 = sphi 0, %s296
    %s313 = sphi 0, %s297
    %s319 = sphi 0, %s321
    %s322 = sphi 0, %s319
    %s323 = sphi 0, %s322
    %s339 = sphi 0, %s323
    %s345 = sphi 0, %s347
    %s348 = sphi 0, %s345
    %s349 = sphi 0, %s348
    %s365 = sphi 0, %s349
    %s371 = sphi 0, %s373
    %s374 = sphi 0, %s371
    %s375 = sphi 0, %s374
    %s391 = sphi 0, %s375
    %s397 = sphi 0, %s399
    %s400 = sphi 0, %s397
    %s401 = sphi 0, %s400
    %s417 = sphi 0, %s401
    %s423 = sphi 0, %s425
    %s426 = sphi 0, %s423
    %s427 = sphi 0, %s426
    %s443 = sphi 0, %s427
  $region4: #{speech_recognition_forward.3} parent=0 // loop_header_branch
    %24 = sbr.rel (%p22) target = $region8
  $region5: #{speech_recognition_forward.3} parent=0 // loop_body
    %s26 = ssub.s32 %s21, 1
    %s27 = ssub.s32 %s21, 2
    %s34 = sadd.s32 1, %s29
    %p35 = scmp.ge.s32.totalorder %s34, 2
    %s36 = scalar_select %p35, 0, %s34
    %s37 = sadd.s32 1, %s28
    %s38 = scalar_select %p35, %s37, %s28
    %p39 = scmp.ge.s32.totalorder %s38, 2
    %s40 = scalar_select %p39, 0, %s38
    %s41 = ssub.s32 %s28, %s40
    %p42 = scmp.eq.s32.totalorder %s41, 0
    %s44 = sadd.s32 %s43, 1
    %s45 = scalar_select %p42, %s43, %s44
    %p48 = pneg %p42
    %p49 = scmp.eq.s32.totalorder %s21, 3
    %p50 = por %p48, %p49
    %p51 = scmp.ne.s32.totalorder %s43, %s46
    %p52 = scmp.eq.s32.totalorder %s21, 0
    %p53 = por %p51, %p52
    %p54 = scmp.ne.s32.totalorder %s43, %s46
    %p55 = scmp.eq.s32.totalorder %s26, 3
    %p56 = por %p54, %p55
    %p57 = scmp.ne.s32.totalorder %s46, %s47
    %p58 = scmp.eq.s32.totalorder %s26, 0
    %p59 = por %p57, %p58
    %p60 = scmp.ne.s32.totalorder %s46, %s47
    %p61 = scmp.eq.s32.totalorder %s27, 3
    %p62 = por %p60, %p61
    %p64 = scmp.ne.s32.totalorder %s47, %s63
    %p65 = scmp.eq.s32.totalorder %s27, 0
    %p66 = por %p64, %p65
    %s68 = sadd.s32 %s67, 1
    %p71 = scmp.eq.s32.totalorder %s21, 3
    %p72 = scmp.ne.s32.totalorder %s67, %s69
    %p73 = scmp.eq.s32.totalorder %s21, 0
    %p74 = por %p72, %p73
    %p75 = scmp.ne.s32.totalorder %s67, %s69
    %p76 = scmp.eq.s32.totalorder %s26, 3
    %p77 = por %p75, %p76
    %p78 = scmp.ne.s32.totalorder %s69, %s70
    %p79 = scmp.eq.s32.totalorder %s26, 0
    %p80 = por %p78, %p79
    %p81 = scmp.ne.s32.totalorder %s69, %s70
    %p82 = scmp.eq.s32.totalorder %s27, 3
    %p83 = por %p81, %p82
    %p85 = scmp.ne.s32.totalorder %s70, %s84
    %p86 = scmp.eq.s32.totalorder %s27, 0
    %p87 = por %p85, %p86
    %s89 = sadd.s32 %s88, 1
    %p92 = scmp.eq.s32.totalorder %s21, 3
    %p93 = scmp.ne.s32.totalorder %s88, %s90
    %p94 = scmp.eq.s32.totalorder %s21, 0
    %p95 = por %p93, %p94
    %p96 = scmp.ne.s32.totalorder %s88, %s90
    %p97 = scmp.eq.s32.totalorder %s26, 3
    %p98 = por %p96, %p97
    %p99 = scmp.ne.s32.totalorder %s90, %s91
    %p100 = scmp.eq.s32.totalorder %s26, 0
    %p101 = por %p99, %p100
    %p102 = scmp.ne.s32.totalorder %s90, %s91
    %p103 = scmp.eq.s32.totalorder %s27, 3
    %p104 = por %p102, %p103
    %p106 = scmp.ne.s32.totalorder %s91, %s105
    %p107 = scmp.eq.s32.totalorder %s27, 0
    %p108 = por %p106, %p107
    %s109 = ssub.s32 %s29, %s36
    %p110 = scmp.eq.s32.totalorder %s109, 0
    %s112 = sadd.s32 %s111, 1
    %s113 = scalar_select %p110, %s111, %s112
    %p116 = pneg %p110
    %p117 = scmp.eq.s32.totalorder %s21, 3
    %p118 = por %p116, %p117
    %p119 = scmp.ne.s32.totalorder %s111, %s114
    %p120 = scmp.eq.s32.totalorder %s21, 0
    %p121 = por %p119, %p120
    %p122 = scmp.ne.s32.totalorder %s111, %s114
    %p123 = scmp.eq.s32.totalorder %s26, 3
    %p124 = por %p122, %p123
    %p125 = scmp.ne.s32.totalorder %s114, %s115
    %p126 = scmp.eq.s32.totalorder %s26, 0
    %p127 = por %p125, %p126
    %p128 = scmp.ne.s32.totalorder %s114, %s115
    %p129 = scmp.eq.s32.totalorder %s27, 3
    %p130 = por %p128, %p129
    %p132 = scmp.ne.s32.totalorder %s115, %s131
    %p133 = scmp.eq.s32.totalorder %s27, 0
    %p134 = por %p132, %p133
    %s135 = ssub.s32 %s29, %s36
    %p136 = scmp.eq.s32.totalorder %s135, 0
    %s138 = sadd.s32 %s137, 1
    %s139 = scalar_select %p136, %s137, %s138
    %p142 = pneg %p136
    %p143 = scmp.eq.s32.totalorder %s21, 3
    %p144 = por %p142, %p143
    %p145 = scmp.ne.s32.totalorder %s137, %s140
    %p146 = scmp.eq.s32.totalorder %s21, 0
    %p147 = por %p145, %p146
    %p148 = scmp.ne.s32.totalorder %s137, %s140
    %p149 = scmp.eq.s32.totalorder %s26, 3
    %p150 = por %p148, %p149
    %p151 = scmp.ne.s32.totalorder %s140, %s141
    %p152 = scmp.eq.s32.totalorder %s26, 0
    %p153 = por %p151, %p152
    %p154 = scmp.ne.s32.totalorder %s140, %s141
    %p155 = scmp.eq.s32.totalorder %s27, 3
    %p156 = por %p154, %p155
    %p158 = scmp.ne.s32.totalorder %s141, %s157
    %p159 = scmp.eq.s32.totalorder %s27, 0
    %p160 = por %p158, %p159
    %s161 = ssub.s32 %s29, %s36
    %p162 = scmp.eq.s32.totalorder %s161, 0
    %s164 = sadd.s32 %s163, 1
    %s165 = scalar_select %p162, %s163, %s164
    %p168 = pneg %p162
    %p169 = scmp.eq.s32.totalorder %s21, 3
    %p170 = por %p168, %p169
    %p171 = scmp.ne.s32.totalorder %s163, %s166
    %p172 = scmp.eq.s32.totalorder %s21, 0
    %p173 = por %p171, %p172
    %p174 = scmp.ne.s32.totalorder %s163, %s166
    %p175 = scmp.eq.s32.totalorder %s26, 3
    %p176 = por %p174, %p175
    %p177 = scmp.ne.s32.totalorder %s166, %s167
    %p178 = scmp.eq.s32.totalorder %s26, 0
    %p179 = por %p177, %p178
    %p180 = scmp.ne.s32.totalorder %s166, %s167
    %p181 = scmp.eq.s32.totalorder %s27, 3
    %p182 = por %p180, %p181
    %p184 = scmp.ne.s32.totalorder %s167, %s183
    %p185 = scmp.eq.s32.totalorder %s27, 0
    %p186 = por %p184, %p185
    %s187 = ssub.s32 %s29, %s36
    %p188 = scmp.eq.s32.totalorder %s187, 0
    %s190 = sadd.s32 %s189, 1
    %s191 = scalar_select %p188, %s189, %s190
    %p194 = pneg %p188
    %p195 = scmp.eq.s32.totalorder %s21, 3
    %p196 = por %p194, %p195
    %p197 = scmp.ne.s32.totalorder %s189, %s192
    %p198 = scmp.eq.s32.totalorder %s21, 0
    %p199 = por %p197, %p198
    %p200 = scmp.ne.s32.totalorder %s189, %s192
    %p201 = scmp.eq.s32.totalorder %s26, 3
    %p202 = por %p200, %p201
    %p203 = scmp.ne.s32.totalorder %s192, %s193
    %p204 = scmp.eq.s32.totalorder %s26, 0
    %p205 = por %p203, %p204
    %p206 = scmp.ne.s32.totalorder %s192, %s193
    %p207 = scmp.eq.s32.totalorder %s27, 3
    %p208 = por %p206, %p207
    %p210 = scmp.ne.s32.totalorder %s193, %s209
    %p211 = scmp.eq.s32.totalorder %s27, 0
    %p212 = por %p210, %p211
    %s213 = ssub.s32 %s29, %s36
    %p214 = scmp.eq.s32.totalorder %s213, 0
    %s216 = sadd.s32 %s215, 1
    %s217 = scalar_select %p214, %s215, %s216
    %p220 = pneg %p214
    %p221 = scmp.eq.s32.totalorder %s21, 3
    %p222 = por %p220, %p221
    %p223 = scmp.ne.s32.totalorder %s215, %s218
    %p224 = scmp.eq.s32.totalorder %s21, 0
    %p225 = por %p223, %p224
    %p226 = scmp.ne.s32.totalorder %s215, %s218
    %p227 = scmp.eq.s32.totalorder %s26, 3
    %p228 = por %p226, %p227
    %p229 = scmp.ne.s32.totalorder %s218, %s219
    %p230 = scmp.eq.s32.totalorder %s26, 0
    %p231 = por %p229, %p230
    %p232 = scmp.ne.s32.totalorder %s218, %s219
    %p233 = scmp.eq.s32.totalorder %s27, 3
    %p234 = por %p232, %p233
    %p236 = scmp.ne.s32.totalorder %s219, %s235
    %p237 = scmp.eq.s32.totalorder %s27, 0
    %p238 = por %p236, %p237
    %s239 = ssub.s32 %s29, %s36
    %p240 = scmp.eq.s32.totalorder %s239, 0
    %s242 = sadd.s32 %s241, 1
    %s243 = scalar_select %p240, %s241, %s242
    %p246 = pneg %p240
    %p247 = scmp.eq.s32.totalorder %s21, 3
    %p248 = por %p246, %p247
    %p249 = scmp.ne.s32.totalorder %s241, %s244
    %p250 = scmp.eq.s32.totalorder %s21, 0
    %p251 = por %p249, %p250
    %p252 = scmp.ne.s32.totalorder %s241, %s244
    %p253 = scmp.eq.s32.totalorder %s26, 3
    %p254 = por %p252, %p253
    %p255 = scmp.ne.s32.totalorder %s244, %s245
    %p256 = scmp.eq.s32.totalorder %s26, 0
    %p257 = por %p255, %p256
    %p258 = scmp.ne.s32.totalorder %s244, %s245
    %p259 = scmp.eq.s32.totalorder %s27, 3
    %p260 = por %p258, %p259
    %p262 = scmp.ne.s32.totalorder %s245, %s261
    %p263 = scmp.eq.s32.totalorder %s27, 0
    %p264 = por %p262, %p263
    %s265 = ssub.s32 %s29, %s36
    %p266 = scmp.eq.s32.totalorder %s265, 0
    %s268 = sadd.s32 %s267, 1
    %s269 = scalar_select %p266, %s267, %s268
    %p272 = pneg %p266
    %p273 = scmp.eq.s32.totalorder %s21, 3
    %p274 = por %p272, %p273
    %p275 = scmp.ne.s32.totalorder %s267, %s270
    %p276 = scmp.eq.s32.totalorder %s21, 0
    %p277 = por %p275, %p276
    %p278 = scmp.ne.s32.totalorder %s267, %s270
    %p279 = scmp.eq.s32.totalorder %s26, 3
    %p280 = por %p278, %p279
    %p281 = scmp.ne.s32.totalorder %s270, %s271
    %p282 = scmp.eq.s32.totalorder %s26, 0
    %p283 = por %p281, %p282
    %p284 = scmp.ne.s32.totalorder %s270, %s271
    %p285 = scmp.eq.s32.totalorder %s27, 3
    %p286 = por %p284, %p285
    %p288 = scmp.ne.s32.totalorder %s271, %s287
    %p289 = scmp.eq.s32.totalorder %s27, 0
    %p290 = por %p288, %p289
    %s291 = ssub.s32 %s29, %s36
    %p292 = scmp.eq.s32.totalorder %s291, 0
    %s294 = sadd.s32 %s293, 1
    %s295 = scalar_select %p292, %s293, %s294
    %p298 = pneg %p292
    %p299 = scmp.eq.s32.totalorder %s21, 3
    %p300 = por %p298, %p299
    %p301 = scmp.ne.s32.totalorder %s293, %s296
    %p302 = scmp.eq.s32.totalorder %s21, 0
    %p303 = por %p301, %p302
    %p304 = scmp.ne.s32.totalorder %s293, %s296
    %p305 = scmp.eq.s32.totalorder %s26, 3
    %p306 = por %p304, %p305
    %p307 = scmp.ne.s32.totalorder %s296, %s297
    %p308 = scmp.eq.s32.totalorder %s26, 0
    %p309 = por %p307, %p308
    %p310 = scmp.ne.s32.totalorder %s296, %s297
    %p311 = scmp.eq.s32.totalorder %s27, 3
    %p312 = por %p310, %p311
    %p314 = scmp.ne.s32.totalorder %s297, %s313
    %p315 = scmp.eq.s32.totalorder %s27, 0
    %p316 = por %p314, %p315
    %s317 = ssub.s32 %s29, %s36
    %p318 = scmp.eq.s32.totalorder %s317, 0
    %s320 = sadd.s32 %s319, 1
    %s321 = scalar_select %p318, %s319, %s320
    %p324 = pneg %p318
    %p325 = scmp.eq.s32.totalorder %s21, 3
    %p326 = por %p324, %p325
    %p327 = scmp.ne.s32.totalorder %s319, %s322
    %p328 = scmp.eq.s32.totalorder %s21, 0
    %p329 = por %p327, %p328
    %p330 = scmp.ne.s32.totalorder %s319, %s322
    %p331 = scmp.eq.s32.totalorder %s26, 3
    %p332 = por %p330, %p331
    %p333 = scmp.ne.s32.totalorder %s322, %s323
    %p334 = scmp.eq.s32.totalorder %s26, 0
    %p335 = por %p333, %p334
    %p336 = scmp.ne.s32.totalorder %s322, %s323
    %p337 = scmp.eq.s32.totalorder %s27, 3
    %p338 = por %p336, %p337
    %p340 = scmp.ne.s32.totalorder %s323, %s339
    %p341 = scmp.eq.s32.totalorder %s27, 0
    %p342 = por %p340, %p341
    %s343 = ssub.s32 %s29, %s36
    %p344 = scmp.eq.s32.totalorder %s343, 0
    %s346 = sadd.s32 %s345, 1
    %s347 = scalar_select %p344, %s345, %s346
    %p350 = pneg %p344
    %p351 = scmp.eq.s32.totalorder %s21, 3
    %p352 = por %p350, %p351
    %p353 = scmp.ne.s32.totalorder %s345, %s348
    %p354 = scmp.eq.s32.totalorder %s21, 0
    %p355 = por %p353, %p354
    %p356 = scmp.ne.s32.totalorder %s345, %s348
    %p357 = scmp.eq.s32.totalorder %s26, 3
    %p358 = por %p356, %p357
    %p359 = scmp.ne.s32.totalorder %s348, %s349
    %p360 = scmp.eq.s32.totalorder %s26, 0
    %p361 = por %p359, %p360
    %p362 = scmp.ne.s32.totalorder %s348, %s349
    %p363 = scmp.eq.s32.totalorder %s27, 3
    %p364 = por %p362, %p363
    %p366 = scmp.ne.s32.totalorder %s349, %s365
    %p367 = scmp.eq.s32.totalorder %s27, 0
    %p368 = por %p366, %p367
    %s369 = ssub.s32 %s29, %s36
    %p370 = scmp.eq.s32.totalorder %s369, 0
    %s372 = sadd.s32 %s371, 1
    %s373 = scalar_select %p370, %s371, %s372
    %p376 = pneg %p370
    %p377 = scmp.eq.s32.totalorder %s21, 3
    %p378 = por %p376, %p377
    %p379 = scmp.ne.s32.totalorder %s371, %s374
    %p380 = scmp.eq.s32.totalorder %s21, 0
    %p381 = por %p379, %p380
    %p382 = scmp.ne.s32.totalorder %s371, %s374
    %p383 = scmp.eq.s32.totalorder %s26, 3
    %p384 = por %p382, %p383
    %p385 = scmp.ne.s32.totalorder %s374, %s375
    %p386 = scmp.eq.s32.totalorder %s26, 0
    %p387 = por %p385, %p386
    %p388 = scmp.ne.s32.totalorder %s374, %s375
    %p389 = scmp.eq.s32.totalorder %s27, 3
    %p390 = por %p388, %p389
    %p392 = scmp.ne.s32.totalorder %s375, %s391
    %p393 = scmp.eq.s32.totalorder %s27, 0
    %p394 = por %p392, %p393
    %s395 = ssub.s32 %s29, %s36
    %p396 = scmp.eq.s32.totalorder %s395, 0
    %s398 = sadd.s32 %s397, 1
    %s399 = scalar_select %p396, %s397, %s398
    %p402 = pneg %p396
    %p403 = scmp.eq.s32.totalorder %s21, 3
    %p404 = por %p402, %p403
    %p405 = scmp.ne.s32.totalorder %s397, %s400
    %p406 = scmp.eq.s32.totalorder %s21, 0
    %p407 = por %p405, %p406
    %p408 = scmp.ne.s32.totalorder %s397, %s400
    %p409 = scmp.eq.s32.totalorder %s26, 3
    %p410 = por %p408, %p409
    %p411 = scmp.ne.s32.totalorder %s400, %s401
    %p412 = scmp.eq.s32.totalorder %s26, 0
    %p413 = por %p411, %p412
    %p414 = scmp.ne.s32.totalorder %s400, %s401
    %p415 = scmp.eq.s32.totalorder %s27, 3
    %p416 = por %p414, %p415
    %p418 = scmp.ne.s32.totalorder %s401, %s417
    %p419 = scmp.eq.s32.totalorder %s27, 0
    %p420 = por %p418, %p419
    %s421 = ssub.s32 %s28, %s40
    %p422 = scmp.eq.s32.totalorder %s421, 0
    %s424 = sadd.s32 %s423, 1
    %s425 = scalar_select %p422, %s423, %s424
    %p428 = pneg %p422
    %p429 = scmp.eq.s32.totalorder %s21, 3
    %p430 = por %p428, %p429
    %p431 = scmp.ne.s32.totalorder %s423, %s426
    %p432 = scmp.eq.s32.totalorder %s21, 0
    %p433 = por %p431, %p432
    %p434 = scmp.ne.s32.totalorder %s423, %s426
    %p435 = scmp.eq.s32.totalorder %s26, 3
    %p436 = por %p434, %p435
    %p437 = scmp.ne.s32.totalorder %s426, %s427
    %p438 = scmp.eq.s32.totalorder %s26, 0
    %p439 = por %p437, %p438
    %p440 = scmp.ne.s32.totalorder %s426, %s427
    %p441 = scmp.eq.s32.totalorder %s27, 3
    %p442 = por %p440, %p441
    %p444 = scmp.ne.s32.totalorder %s427, %s443
    %p445 = scmp.eq.s32.totalorder %s27, 0
    %p446 = por %p444, %p445
    %p447 = scmp.le.s32.totalorder 1, %s21
    %p448 = scmp.lt.s32.totalorder %s21, 5
    %p449 = pnand %p447, %p448
    %p450 = pneg %p449
    // Predicated region
    $region9: #{speech_recognition_forward.3} parent=5 // pred_check
      _
    $region10: #{speech_recognition_forward.3} parent=5 // pred_check_branch
      %452 = sbr.rel (%p449) target = $region12
    $region11: #{speech_recognition_forward.3} parent=5 // pred_region
      %s453 = ssub.s32 %s21, 1
      // Predicated region
      $region13: #{speech_recognition_forward.3} parent=11 // pred_check
        %p454 = pneg %p80
      $region14: #{speech_recognition_forward.3} parent=11 // pred_check_branch
        %456 = sbr.rel (%p454) target = $region16
      $region15: #{speech_recognition_forward.3} parent=11 // pred_region
        _
      $region16: #{speech_recognition_forward.3} parent=11 // pred_fallthru
        _
      // Predicated region
      $region17: #{speech_recognition_forward.3} parent=11 // pred_check
        %p457 = pneg %p101
      $region18: #{speech_recognition_forward.3} parent=11 // pred_check_branch
        %459 = sbr.rel (%p457) target = $region20
      $region19: #{speech_recognition_forward.3} parent=11 // pred_region
        _
      $region20: #{speech_recognition_forward.3} parent=11 // pred_fallthru
        _
    $region12: #{speech_recognition_forward.3} parent=5 // pred_fallthru
      _
    %p460 = scmp.lt.s32.totalorder %s21, 4
    // Predicated region
    $region21: #{speech_recognition_forward.3} parent=5 // pred_check
      %p461 = pneg %p460
    $region22: #{speech_recognition_forward.3} parent=5 // pred_check_branch
      %463 = sbr.rel (%p461) target = $region24
    $region23: #{speech_recognition_forward.3} parent=5 // pred_region
      // Predicated region
      $region25: #{speech_recognition_forward.3} parent=23 // pred_check
        %p464 = pneg %p53
      $region26: #{speech_recognition_forward.3} parent=23 // pred_check_branch
        %466 = sbr.rel (%p464) target = $region28
      $region27: #{speech_recognition_forward.3} parent=23 // pred_region
        %p467 = scmp.lt.s32.totalorder %s28, 1
        %s468 = scalar_select %p467, %s28, 1
        %s469 = smul.addr %s468, 10
        %s470 = smul.addr %s469, 8
        %s471 = scalar_lea.vmem %s0, %s470
      $region28: #{speech_recognition_forward.3} parent=23 // pred_fallthru
        _
      // Predicated region
      $region29: #{speech_recognition_forward.3} parent=23 // pred_check
        %p472 = pneg %p121
      $region30: #{speech_recognition_forward.3} parent=23 // pred_check_branch
        %474 = sbr.rel (%p472) target = $region32
      $region31: #{speech_recognition_forward.3} parent=23 // pred_region
        %p475 = scmp.lt.s32.totalorder %s29, 1
        %s476 = scalar_select %p475, %s29, 1
        %s477 = smul.addr %s476, 4
        %s478 = smul.addr %s477, 4
        %s479 = scalar_lea.vmem %s3, %s478
      $region32: #{speech_recognition_forward.3} parent=23 // pred_fallthru
        _
      // Predicated region
      $region33: #{speech_recognition_forward.3} parent=23 // pred_check
        %p480 = pneg %p147
      $region34: #{speech_recognition_forward.3} parent=23 // pred_check_branch
        %482 = sbr.rel (%p480) target = $region36
      $region35: #{speech_recognition_forward.3} parent=23 // pred_region
        %p483 = scmp.lt.s32.totalorder %s29, 1
        %s484 = scalar_select %p483, %s29, 1
        %s485 = scalar_lea.vmem %s4, %s484
      $region36: #{speech_recognition_forward.3} parent=23 // pred_fallthru
        _
      // Predicated region
      $region37: #{speech_recognition_forward.3} parent=23 // pred_check
        %p486 = pneg %p173
      $region38: #{speech_recognition_forward.3} parent=23 // pred_check_branch
        %488 = sbr.rel (%p486) target = $region40
      $region39: #{speech_recognition_forward.3} parent=23 // pred_region
        %p489 = scmp.lt.s32.totalorder %s29, 1
        %s490 = scalar_select %p489, %s29, 1
        %s491 = smul.addr %s490, 4
        %s492 = smul.addr %s491, 4
        %s493 = scalar_lea.vmem %s5, %s492
      $region40: #{speech_recognition_forward.3} parent=23 // pred_fallthru
        _
      // Predicated region
      $region41: #{speech_recognition_forward.3} parent=23 // pred_check
        %p494 = pneg %p199
      $region42: #{speech_recognition_forward.3} parent=23 // pred_check_branch
        %496 = sbr.rel (%p494) target = $region44
      $region43: #{speech_recognition_forward.3} parent=23 // pred_region
        %p497 = scmp.lt.s32.totalorder %s29, 1
        %s498 = scalar_select %p497, %s29, 1
        %s499 = scalar_lea.vmem %s6, %s498
      $region44: #{speech_recognition_forward.3} parent=23 // pred_fallthru
        _
      // Predicated region
      $region45: #{speech_recognition_forward.3} parent=23 // pred_check
        %p500 = pneg %p225
      $region46: #{speech_recognition_forward.3} parent=23 // pred_check_branch
        %502 = sbr.rel (%p500) target = $region48
      $region47: #{speech_recognition_forward.3} parent=23 // pred_region
        %p503 = scmp.lt.s32.totalorder %s29, 1
        %s504 = scalar_select %p503, %s29, 1
        %s505 = scalar_lea.vmem %s7, %s504
      $region48: #{speech_recognition_forward.3} parent=23 // pred_fallthru
        _
      // Predicated region
      $region49: #{speech_recognition_forward.3} parent=23 // pred_check
        %p506 = pneg %p251
      $region50: #{speech_recognition_forward.3} parent=23 // pred_check_branch
        %508 = sbr.rel (%p506) target = $region52
      $region51: #{speech_recognition_forward.3} parent=23 // pred_region
        %p509 = scmp.lt.s32.totalorder %s29, 1
        %s510 = scalar_select %p509, %s29, 1
        %s511 = scalar_lea.vmem %s8, %s510
      $region52: #{speech_recognition_forward.3} parent=23 // pred_fallthru
        _
      // Predicated region
      $region53: #{speech_recognition_forward.3} parent=23 // pred_check
        %p512 = pneg %p277
      $region54: #{speech_recognition_forward.3} parent=23 // pred_check_branch
        %514 = sbr.rel (%p512) target = $region56
      $region55: #{speech_recognition_forward.3} parent=23 // pred_region
        %p515 = scmp.lt.s32.totalorder %s29, 1
        %s516 = scalar_select %p515, %s29, 1
        %s517 = smul.addr %s516, 4
        %s518 = smul.addr %s517, 4
        %s519 = scalar_lea.vmem %s9, %s518
      $region56: #{speech_recognition_forward.3} parent=23 // pred_fallthru
        _
      // Predicated region
      $region57: #{speech_recognition_forward.3} parent=23 // pred_check
        %p520 = pneg %p303
      $region58: #{speech_recognition_forward.3} parent=23 // pred_check_branch
        %522 = sbr.rel (%p520) target = $region60
      $region59: #{speech_recognition_forward.3} parent=23 // pred_region
        %p523 = scmp.lt.s32.totalorder %s29, 1
        %s524 = scalar_select %p523, %s29, 1
        %s525 = scalar_lea.vmem %s10, %s524
      $region60: #{speech_recognition_forward.3} parent=23 // pred_fallthru
        _
      // Predicated region
      $region61: #{speech_recognition_forward.3} parent=23 // pred_check
        %p526 = pneg %p329
      $region62: #{speech_recognition_forward.3} parent=23 // pred_check_branch
        %528 = sbr.rel (%p526) target = $region64
      $region63: #{speech_recognition_forward.3} parent=23 // pred_region
        %p529 = scmp.lt.s32.totalorder %s29, 1
        %s530 = scalar_select %p529, %s29, 1
        %s531 = smul.addr %s530, 8
        %s532 = smul.addr %s531, 4
        %s533 = scalar_lea.vmem %s11, %s532
      $region64: #{speech_recognition_forward.3} parent=23 // pred_fallthru
        _
      // Predicated region
      $region65: #{speech_recognition_forward.3} parent=23 // pred_check
        %p534 = pneg %p355
      $region66: #{speech_recognition_forward.3} parent=23 // pred_check_branch
        %536 = sbr.rel (%p534) target = $region68
      $region67: #{speech_recognition_forward.3} parent=23 // pred_region
        %p537 = scmp.lt.s32.totalorder %s29, 1
        %s538 = scalar_select %p537, %s29, 1
        %s539 = scalar_lea.vmem %s12, %s538
      $region68: #{speech_recognition_forward.3} parent=23 // pred_fallthru
        _
      // Predicated region
      $region69: #{speech_recognition_forward.3} parent=23 // pred_check
        %p540 = pneg %p381
      $region70: #{speech_recognition_forward.3} parent=23 // pred_check_branch
        %542 = sbr.rel (%p540) target = $region72
      $region71: #{speech_recognition_forward.3} parent=23 // pred_region
        %p543 = scmp.lt.s32.totalorder %s29, 1
        %s544 = scalar_select %p543, %s29, 1
        %s545 = scalar_lea.vmem %s13, %s544
      $region72: #{speech_recognition_forward.3} parent=23 // pred_fallthru
        _
      // Predicated region
      $region73: #{speech_recognition_forward.3} parent=23 // pred_check
        %p546 = pneg %p407
      $region74: #{speech_recognition_forward.3} parent=23 // pred_check_branch
        %548 = sbr.rel (%p546) target = $region76
      $region75: #{speech_recognition_forward.3} parent=23 // pred_region
        %p549 = scmp.lt.s32.totalorder %s29, 1
        %s550 = scalar_select %p549, %s29, 1
        %s551 = scalar_lea.vmem %s14, %s550
      $region76: #{speech_recognition_forward.3} parent=23 // pred_fallthru
        _
    $region24: #{speech_recognition_forward.3} parent=5 // pred_fallthru
      _
    %p552 = scmp.le.s32.totalorder 1, %s21
    %p553 = scmp.lt.s32.totalorder %s21, 5
    %p554 = pnand %p552, %p553
    %p555 = pneg %p554
    // Predicated region
    $region77: #{speech_recognition_forward.3} parent=5 // pred_check
      _
    $region78: #{speech_recognition_forward.3} parent=5 // pred_check_branch
      %557 = sbr.rel (%p554) target = $region80
    $region79: #{speech_recognition_forward.3} parent=5 // pred_region
      %s558 = ssub.s32 %s21, 1
      %p559 = scmp.lt.s32.totalorder %s30, 1
      %s560 = scalar_select %p559, %s30, 1
      %s561 = smul.addr %s560, 10
      %s562 = smul.addr %s561, 8
      %s563 = scalar_lea.vmem %s0, %s562
      %p564 = pneg %p59
      %p565 = pneg %p56
      %p566 = pneg %p80
      %p567 = pneg %p77
      %p568 = pneg %p101
      %p569 = pneg %p98
      %p570 = scmp.lt.s32.totalorder %s31, 1
      %s571 = scalar_select %p570, %s31, 1
      %s572 = smul.addr %s571, 4
      %s573 = smul.addr %s572, 4
      %s574 = scalar_lea.vmem %s3, %s573
      %p575 = pneg %p127
      %p576 = pneg %p124
      %p577 = scmp.lt.s32.totalorder %s31, 1
      %s578 = scalar_select %p577, %s31, 1
      %s579 = scalar_lea.vmem %s4, %s578
      %p580 = pneg %p153
      %p581 = pneg %p150
      %p582 = scmp.lt.s32.totalorder %s31, 1
      %s583 = scalar_select %p582, %s31, 1
      %s584 = smul.addr %s583, 4
      %s585 = smul.addr %s584, 4
      %s586 = scalar_lea.vmem %s5, %s585
      %p587 = pneg %p179
      %p588 = pneg %p176
      %p589 = scmp.lt.s32.totalorder %s31, 1
      %s590 = scalar_select %p589, %s31, 1
      %s591 = scalar_lea.vmem %s6, %s590
      %p592 = pneg %p205
      %p593 = pneg %p202
      %p594 = scmp.lt.s32.totalorder %s31, 1
      %s595 = scalar_select %p594, %s31, 1
      %s596 = scalar_lea.vmem %s7, %s595
      %p597 = pneg %p231
      %p598 = pneg %p228
      %p599 = scmp.lt.s32.totalorder %s31, 1
      %s600 = scalar_select %p599, %s31, 1
      %s601 = scalar_lea.vmem %s8, %s600
      %p602 = pneg %p257
      %p603 = pneg %p254
      %p604 = scmp.lt.s32.totalorder %s31, 1
      %s605 = scalar_select %p604, %s31, 1
      %s606 = smul.addr %s605, 4
      %s607 = smul.addr %s606, 4
      %s608 = scalar_lea.vmem %s9, %s607
      %p609 = pneg %p283
      %p610 = pneg %p280
      %p611 = scmp.lt.s32.totalorder %s31, 1
      %s612 = scalar_select %p611, %s31, 1
      %s613 = scalar_lea.vmem %s10, %s612
      %p614 = pneg %p309
      %p615 = pneg %p306
      %p616 = scmp.lt.s32.totalorder %s31, 1
      %s617 = scalar_select %p616, %s31, 1
      %s618 = smul.addr %s617, 8
      %s619 = smul.addr %s618, 4
      %s620 = scalar_lea.vmem %s11, %s619
      %p621 = pneg %p335
      %p622 = pneg %p332
      %p623 = scmp.lt.s32.totalorder %s31, 1
      %s624 = scalar_select %p623, %s31, 1
      %s625 = scalar_lea.vmem %s12, %s624
      %p626 = pneg %p361
      %p627 = pneg %p358
      %p628 = scmp.lt.s32.totalorder %s31, 1
      %s629 = scalar_select %p628, %s31, 1
      %s630 = scalar_lea.vmem %s13, %s629
      %p631 = pneg %p387
      %p632 = pneg %p384
      %p633 = scmp.lt.s32.totalorder %s31, 1
      %s634 = scalar_select %p633, %s31, 1
      %s635 = scalar_lea.vmem %s14, %s634
      %p636 = pneg %p413
      %p637 = pneg %p410
      %p638 = pneg %p439
      %p639 = pneg %p436
      %p640 = scmp.lt.s32.totalorder %s30, 1
      %s641 = scalar_select %p640, %s30, 1
      %s642 = smul.addr %s641, 10
      %s643 = smul.addr %s642, 8
      %s644 = scalar_lea.vmem %s15, %s643
      %p645 = scmp.lt.s32.totalorder %s30, 1
      %s646 = scalar_select %p645, %s30, 1
      %s647 = smul.addr %s646, 10
      %s648 = smul.addr %s647, 8
      %s649 = scalar_lea.vmem %s0, %s648
      %p650 = scmp.lt.s32.totalorder %s31, 1
      %s651 = scalar_select %p650, %s31, 1
      %s652 = smul.addr %s651, 4
      %s653 = smul.addr %s652, 4
      %s654 = scalar_lea.vmem %s3, %s653
      %p655 = scmp.lt.s32.totalorder %s31, 1
      %s656 = scalar_select %p655, %s31, 1
      %s657 = scalar_lea.vmem %s4, %s656
      %p658 = scmp.lt.s32.totalorder %s31, 1
      %s659 = scalar_select %p658, %s31, 1
      %s660 = smul.addr %s659, 4
      %s661 = smul.addr %s660, 4
      %s662 = scalar_lea.vmem %s5, %s661
      %p663 = scmp.lt.s32.totalorder %s31, 1
      %s664 = scalar_select %p663, %s31, 1
      %s665 = scalar_lea.vmem %s6, %s664
      %p666 = scmp.lt.s32.totalorder %s31, 1
      %s667 = scalar_select %p666, %s31, 1
      %s668 = scalar_lea.vmem %s7, %s667
      %p669 = scmp.lt.s32.totalorder %s31, 1
      %s670 = scalar_select %p669, %s31, 1
      %s671 = scalar_lea.vmem %s8, %s670
      %p672 = scmp.lt.s32.totalorder %s31, 1
      %s673 = scalar_select %p672, %s31, 1
      %s674 = smul.addr %s673, 4
      %s675 = smul.addr %s674, 4
      %s676 = scalar_lea.vmem %s9, %s675
      %p677 = scmp.lt.s32.totalorder %s31, 1
      %s678 = scalar_select %p677, %s31, 1
      %s679 = scalar_lea.vmem %s10, %s678
      %p680 = scmp.lt.s32.totalorder %s31, 1
      %s681 = scalar_select %p680, %s31, 1
      %s682 = smul.addr %s681, 8
      %s683 = smul.addr %s682, 4
      %s684 = scalar_lea.vmem %s11, %s683
      %p685 = scmp.lt.s32.totalorder %s31, 1
      %s686 = scalar_select %p685, %s31, 1
      %s687 = scalar_lea.vmem %s12, %s686
      %p688 = scmp.lt.s32.totalorder %s31, 1
      %s689 = scalar_select %p688, %s31, 1
      %s690 = scalar_lea.vmem %s13, %s689
      %p691 = scmp.lt.s32.totalorder %s31, 1
      %s692 = scalar_select %p691, %s31, 1
      %s693 = scalar_lea.vmem %s14, %s692
      %p694 = scmp.lt.s32.totalorder %s30, 1
      %s695 = scalar_select %p694, %s30, 1
      %s696 = smul.addr %s695, 10
      %s697 = smul.addr %s696, 8
      %s698 = scalar_lea.vmem %s15, %s697
      %p700 = scmp.eq.s32.totalorder %s31, 0
      // Predicated region
      $region81: #{speech_recognition_forward.3} parent=79 // pred_check
        %p701 = pneg %p700
      $region82: #{speech_recognition_forward.3} parent=79 // pred_check_branch
        %703 = sbr.rel (%p701) target = $region84
      $region83: #{speech_recognition_forward.3} parent=79 // pred_region
        %v704 = vld [vmem:[%s649] sm:$0xff]
        %v705 = vld [vmem:[%s649 + $0x8] sm:$0xff]
        %v706 = vld [vmem:[%s649 + $0x10] sm:$0xff]
        %v707 = vld [vmem:[%s649 + $0x18] sm:$0xff]
        %v708 = vld [vmem:[%s649 + $0x20] sm:$0xff]
        %v709 = vld [vmem:[%s649 + $0x28] sm:$0xff]
        %v710 = vld [vmem:[%s649 + $0x30] sm:$0xff]
        %v711 = vld [vmem:[%s649 + $0x38] sm:$0xff]
        %v712 = vld [vmem:[%s649 + $0x40] sm:$0xff]
        %v713 = vld [vmem:[%s649 + $0x48] sm:$0xff]
        %vm714 = vcmask 261120
        %715 = vst.msk [vmem:[%s698] sm:$0xff] %vm714, %v704
        %716 = vst.msk [vmem:[%s698 + $0x8] sm:$0xff] %vm714, %v705
        %717 = vst.msk [vmem:[%s698 + $0x10] sm:$0xff] %vm714, %v706
        %718 = vst.msk [vmem:[%s698 + $0x18] sm:$0xff] %vm714, %v707
        %719 = vst.msk [vmem:[%s698 + $0x20] sm:$0xff] %vm714, %v708
        %720 = vst.msk [vmem:[%s698 + $0x28] sm:$0xff] %vm714, %v709
        %721 = vst.msk [vmem:[%s698 + $0x30] sm:$0xff] %vm714, %v710
        %722 = vst.msk [vmem:[%s698 + $0x38] sm:$0xff] %vm714, %v711
        %723 = vst.msk [vmem:[%s698 + $0x40] sm:$0xff] %vm714, %v712
        %724 = vst.msk [vmem:[%s698 + $0x48] sm:$0xff] %vm714, %v713
      $region84: #{speech_recognition_forward.3} parent=79 // pred_fallthru
        _
      %v725 = vld [vmem:[%s698] sm:$0xff]
      %v726 = vld [vmem:[%s698 + $0x8] sm:$0xff]
      %v727 = vld [vmem:[%s698 + $0x10] sm:$0xff]
      %v728 = vld [vmem:[%s698 + $0x18] sm:$0xff]
      %v729 = vld [vmem:[%s698 + $0x20] sm:$0xff]
      %v730 = vld [vmem:[%s698 + $0x28] sm:$0xff]
      %v731 = vld [vmem:[%s698 + $0x30] sm:$0xff]
      %v732 = vld [vmem:[%s698 + $0x38] sm:$0xff]
      %v733 = vld [vmem:[%s698 + $0x40] sm:$0xff]
      %v734 = vld [vmem:[%s698 + $0x48] sm:$0xff]
      %v735 = vpack.c.bf16 %v726, %v725
      %v736 = vpack.c.bf16 %v728, %v727
      %v737 = vpack.c.bf16 %v730, %v729
      %v738 = vpack.c.bf16 %v732, %v731
      %v739 = vpack.c.bf16 %v734, %v733
      %v740 = vld [vmem:[%s654] sm:$0xf]
      %v741 = vld [vmem:[%s654 + $0x4] sm:$0xf]
      %v742 = vld [vmem:[%s654 + $0x8] sm:$0xf]
      %v743 = vld [vmem:[%s654 + $0xc] sm:$0xf]
      %v744 = vld [vmem:[%s657] sm:$0x1]
      %v746 = vperm.slane %v744, 0
      %v752 = vunpack.c.l.b16 %v740
      %v753 = vunpack.c.l.b16 %v741
      %v754 = vunpack.c.l.b16 %v742
      %v755 = vunpack.c.l.b16 %v743
      %v756 = vpack.c.b16 %v753, %v752
      %v757 = vpack.c.b16 %v755, %v754
      %vm760 = vcmask 261120
      %v762 = vsel %vm760, %v735, 0
      %v765 = vsel %vm760, %v736, 0
      %v768 = vsel %vm760, %v737, 0
      %v771 = vsel %vm760, %v738, 0
      %v774 = vsel %vm760, %v739, 0
      %776 = vmatpush.bf16.msra.mxu0 0
      %777 = vmatpush.bf16.msra.mxu0 0
      %778 = vmatpush.bf16.msra.mxu0 0
      %779 = vmatpush.bf16.msra.mxu0 0
      %780 = vmatpush.bf16.msra.mxu0 0
      %781 = vmatpush.bf16.msra.mxu0 0
      %782 = vmatpush.bf16.msra.mxu0 %v757
      %783 = vmatpush.bf16.msra.mxu0 %v756
      %784 = vmatmul.bf16.gmra.mxu0 %v762
      %v785 = vpop.f32.mrf.mxu0
      %v786 = vadd.f32 %v746, %v785
      %v787 = vpop.f32.mrf.mxu0
      %v788 = vadd.f32 %v746, %v787
      %789 = vmatmul.bf16.gmra.mxu0 %v765
      %v790 = vpop.f32.mrf.mxu0
      %v791 = vadd.f32 %v746, %v790
      %v792 = vpop.f32.mrf.mxu0
      %v793 = vadd.f32 %v746, %v792
      %794 = vmatmul.bf16.gmra.mxu0 %v768
      %v795 = vpop.f32.mrf.mxu0
      %v796 = vadd.f32 %v746, %v795
      %v797 = vpop.f32.mrf.mxu0
      %v798 = vadd.f32 %v746, %v797
      %799 = vmatmul.bf16.gmra.mxu0 %v771
      %v800 = vpop.f32.mrf.mxu0
      %v801 = vadd.f32 %v746, %v800
      %v802 = vpop.f32.mrf.mxu0
      %v803 = vadd.f32 %v746, %v802
      %804 = vmatmul.bf16.gmra.mxu0 %v774
      %v805 = vpop.f32.mrf.mxu0
      %v806 = vadd.f32 %v746, %v805
      %v807 = vpop.f32.mrf.mxu0
      %v808 = vadd.f32 %v746, %v807
      %809 = vdwg.mxu0
      %v810 = vpack.c.bf16 %v788, %v786
      %v811 = vpack.c.bf16 %v793, %v791
      %v812 = vpack.c.bf16 %v798, %v796
      %v813 = vpack.c.bf16 %v803, %v801
      %v814 = vpack.c.bf16 %v808, %v806
      %v815 = vld [vmem:[%s1] sm:$0x1]
      %v816 = vld [vmem:[%s1 + $0x1] sm:$0x1]
      %v817 = vld [vmem:[%s1 + $0x2] sm:$0x1]
      %v818 = vld [vmem:[%s1 + $0x3] sm:$0x1]
      %v819 = vld [vmem:[%s2] sm:$0x1]
      %v821 = vperm.slane %v815, 0
      %v823 = vmul.f32 %v786, %v821
      %v824 = vmul.f32 %v788, %v821
      %v825 = vmul.f32 %v791, %v821
      %v826 = vmul.f32 %v793, %v821
      %v827 = vmul.f32 %v796, %v821
      %v828 = vmul.f32 %v798, %v821
      %v829 = vmul.f32 %v801, %v821
      %v830 = vmul.f32 %v803, %v821
      %v831 = vmul.f32 %v806, %v821
      %v832 = vmul.f32 %v808, %v821
      %v833 = vpack.c.bf16 %v824, %v823
      %v834 = vpack.c.bf16 %v826, %v825
      %v835 = vpack.c.bf16 %v828, %v827
      %v836 = vpack.c.bf16 %v830, %v829
      %v837 = vpack.c.bf16 %v832, %v831
      %v839 = vperm.slane %v819, 0
      %846 = vrot.lane.b32.xlu0 %v810, 96
      %v847 = vpop.permute.xlu0 %846
      %848 = vrot.lane.b32.xlu0 %v811, 96
      %v849 = vpop.permute.xlu0 %848
      %850 = vrot.lane.b32.xlu0 %v812, 96
      %v851 = vpop.permute.xlu0 %850
      %852 = vrot.lane.b32.xlu0 %v813, 96
      %v853 = vpop.permute.xlu0 %852
      %854 = vrot.lane.b32.xlu0 %v814, 96
      %v855 = vpop.permute.xlu0 %854
      %v857 = vsel %vm760, %v833, 0
      %v860 = vsel %vm760, %v834, 0
      %v863 = vsel %vm760, %v835, 0
      %v866 = vsel %vm760, %v836, 0
      %v869 = vsel %vm760, %v837, 0
      %v872 = vsel %vm760, %v847, 0
      %v875 = vsel %vm760, %v849, 0
      %v878 = vsel %vm760, %v851, 0
      %v881 = vsel %vm760, %v853, 0
      %v884 = vsel %vm760, %v855, 0
      %886 = vmatpush.bf16.xpose.msra.mxu0 0
      %887 = vmatpush.bf16.xpose.msra.mxu0 0
      %888 = vmatpush.bf16.xpose.msra.mxu0 0
      %889 = vmatpush.bf16.xpose.msra.mxu0 %v884
      %890 = vmatpush.bf16.xpose.msra.mxu0 %v881
      %891 = vmatpush.bf16.xpose.msra.mxu0 %v878
      %892 = vmatpush.bf16.xpose.msra.mxu0 %v875
      %893 = vmatpush.bf16.xpose.msra.mxu0 %v872
      %894 = vmatmul.bf16.gmra.mxu0 %v857
      %v895 = vpop.f32.mrf.mxu0
      %v896 = vadd.f32 %v839, %v895
      %v897 = vpop.f32.mrf.mxu0
      %v898 = vadd.f32 %v839, %v897
      %899 = vmatmul.bf16.gmra.mxu0 %v860
      %v900 = vpop.f32.mrf.mxu0
      %v901 = vadd.f32 %v839, %v900
      %v902 = vpop.f32.mrf.mxu0
      %v903 = vadd.f32 %v839, %v902
      %904 = vmatmul.bf16.gmra.mxu0 %v863
      %v905 = vpop.f32.mrf.mxu0
      %v906 = vadd.f32 %v839, %v905
      %v907 = vpop.f32.mrf.mxu0
      %v908 = vadd.f32 %v839, %v907
      %909 = vmatmul.bf16.gmra.mxu0 %v866
      %v910 = vpop.f32.mrf.mxu0
      %v911 = vadd.f32 %v839, %v910
      %v912 = vpop.f32.mrf.mxu0
      %v913 = vadd.f32 %v839, %v912
      %914 = vmatmul.bf16.gmra.mxu0 %v869
      %v915 = vpop.f32.mrf.mxu0
      %v916 = vadd.f32 %v839, %v915
      %v917 = vpop.f32.mrf.mxu0
      %v918 = vadd.f32 %v839, %v917
      %919 = vdwg.mxu0
      %vm920 = vcmask 654336
      %v921 = vsel %vm920, %v896, -inf
      %922 = vmax.xlane.f32.xlu0 %v921
      %v923 = vpop.xlane.xlu0 %922
      %v924 = vsel %vm920, %v898, -inf
      %925 = vmax.xlane.f32.xlu0 %v924
      %v926 = vpop.xlane.xlu0 %925
      %v927 = vsel %vm920, %v901, -inf
      %928 = vmax.xlane.f32.xlu0 %v927
      %v929 = vpop.xlane.xlu0 %928
      %v930 = vsel %vm920, %v903, -inf
      %931 = vmax.xlane.f32.xlu0 %v930
      %v932 = vpop.xlane.xlu0 %931
      %v933 = vsel %vm920, %v906, -inf
      %934 = vmax.xlane.f32.xlu0 %v933
      %v935 = vpop.xlane.xlu0 %934
      %v936 = vsel %vm920, %v908, -inf
      %937 = vmax.xlane.f32.xlu0 %v936
      %v938 = vpop.xlane.xlu0 %937
      %v939 = vsel %vm920, %v911, -inf
      %940 = vmax.xlane.f32.xlu0 %v939
      %v941 = vpop.xlane.xlu0 %940
      %v942 = vsel %vm920, %v913, -inf
      %943 = vmax.xlane.f32.xlu0 %v942
      %v944 = vpop.xlane.xlu0 %943
      %v945 = vsel %vm920, %v916, -inf
      %946 = vmax.xlane.f32.xlu0 %v945
      %v947 = vpop.xlane.xlu0 %946
      %v948 = vsel %vm920, %v918, -inf
      %949 = vmax.xlane.f32.xlu0 %v948
      %v950 = vpop.xlane.xlu0 %949
      %v951 = vsub.f32 %v896, %v923
      %v952 = vsub.f32 %v898, %v926
      %v953 = vsub.f32 %v901, %v929
      %v954 = vsub.f32 %v903, %v932
      %v955 = vsub.f32 %v906, %v935
      %v956 = vsub.f32 %v908, %v938
      %v957 = vsub.f32 %v911, %v941
      %v958 = vsub.f32 %v913, %v944
      %v959 = vsub.f32 %v916, %v947
      %v960 = vsub.f32 %v918, %v950
      %v961 = vmul.f32 %v951, 1.442695
      %v962 = vpow.pop %v961
      %v963 = vmul.f32 %v952, 1.442695
      %v964 = vpow.pop %v963
      %v965 = vmul.f32 %v953, 1.442695
      %v966 = vpow.pop %v965
      %v967 = vmul.f32 %v954, 1.442695
      %v968 = vpow.pop %v967
      %v969 = vmul.f32 %v955, 1.442695
      %v970 = vpow.pop %v969
      %v971 = vmul.f32 %v956, 1.442695
      %v972 = vpow.pop %v971
      %v973 = vmul.f32 %v957, 1.442695
      %v974 = vpow.pop %v973
      %v975 = vmul.f32 %v958, 1.442695
      %v976 = vpow.pop %v975
      %v977 = vmul.f32 %v959, 1.442695
      %v978 = vpow.pop %v977
      %v979 = vmul.f32 %v960, 1.442695
      %v980 = vpow.pop %v979
      %v981 = vsel %vm920, %v962, 0.0
      %982 = vadd.xlane.f32.xlu0 %v981
      %v983 = vpop.xlane.xlu0 %982
      %v984 = vsel %vm920, %v964, 0.0
      %985 = vadd.xlane.f32.xlu0 %v984
      %v986 = vpop.xlane.xlu0 %985
      %v987 = vsel %vm920, %v966, 0.0
      %988 = vadd.xlane.f32.xlu0 %v987
      %v989 = vpop.xlane.xlu0 %988
      %v990 = vsel %vm920, %v968, 0.0
      %991 = vadd.xlane.f32.xlu0 %v990
      %v992 = vpop.xlane.xlu0 %991
      %v993 = vsel %vm920, %v970, 0.0
      %994 = vadd.xlane.f32.xlu0 %v993
      %v995 = vpop.xlane.xlu0 %994
      %v996 = vsel %vm920, %v972, 0.0
      %997 = vadd.xlane.f32.xlu0 %v996
      %v998 = vpop.xlane.xlu0 %997
      %v999 = vsel %vm920, %v974, 0.0
      %1000 = vadd.xlane.f32.xlu0 %v999
      %v1001 = vpop.xlane.xlu0 %1000
      %v1002 = vsel %vm920, %v976, 0.0
      %1003 = vadd.xlane.f32.xlu0 %v1002
      %v1004 = vpop.xlane.xlu0 %1003
      %v1005 = vsel %vm920, %v978, 0.0
      %1006 = vadd.xlane.f32.xlu0 %v1005
      %v1007 = vpop.xlane.xlu0 %1006
      %v1008 = vsel %vm920, %v980, 0.0
      %1009 = vadd.xlane.f32.xlu0 %v1008
      %v1010 = vpop.xlane.xlu0 %1009
      %v1011 = vrcp.pop %v983
      %v1012 = vrcp.pop %v986
      %v1013 = vrcp.pop %v989
      %v1014 = vrcp.pop %v992
      %v1015 = vrcp.pop %v995
      %v1016 = vrcp.pop %v998
      %v1017 = vrcp.pop %v1001
      %v1018 = vrcp.pop %v1004
      %v1019 = vrcp.pop %v1007
      %v1020 = vrcp.pop %v1010
      %v1021 = vmul.f32 %v962, %v1011
      %v1022 = vmul.f32 %v964, %v1012
      %v1023 = vmul.f32 %v966, %v1013
      %v1024 = vmul.f32 %v968, %v1014
      %v1025 = vmul.f32 %v970, %v1015
      %v1026 = vmul.f32 %v972, %v1016
      %v1027 = vmul.f32 %v974, %v1017
      %v1028 = vmul.f32 %v976, %v1018
      %v1029 = vmul.f32 %v978, %v1019
      %v1030 = vmul.f32 %v980, %v1020
      %1031 = vrot.lane.b32.xlu0 %v821, 64
      %v1032 = vpop.permute.xlu0 %1031
      %v1034 = vmul.f32 %v786, %v1032
      %v1035 = vmul.f32 %v788, %v1032
      %v1036 = vmul.f32 %v791, %v1032
      %v1037 = vmul.f32 %v793, %v1032
      %v1038 = vmul.f32 %v796, %v1032
      %v1039 = vmul.f32 %v798, %v1032
      %v1040 = vmul.f32 %v801, %v1032
      %v1041 = vmul.f32 %v803, %v1032
      %v1042 = vmul.f32 %v806, %v1032
      %v1043 = vmul.f32 %v808, %v1032
      %v1044 = vpack.c.bf16 %v1035, %v1034
      %v1045 = vpack.c.bf16 %v1037, %v1036
      %v1046 = vpack.c.bf16 %v1039, %v1038
      %v1047 = vpack.c.bf16 %v1041, %v1040
      %v1048 = vpack.c.bf16 %v1043, %v1042
      %v1049 = vpack.c.bf16 %v1022, %v1021
      %v1050 = vpack.c.bf16 %v1024, %v1023
      %v1051 = vpack.c.bf16 %v1026, %v1025
      %v1052 = vpack.c.bf16 %v1028, %v1027
      %v1053 = vpack.c.bf16 %v1030, %v1029
      %v1055 = vperm.slane %v816, 0
      %v1057 = vmul.f32 %v786, %v1055
      %v1058 = vmul.f32 %v788, %v1055
      %v1059 = vmul.f32 %v791, %v1055
      %v1060 = vmul.f32 %v793, %v1055
      %v1061 = vmul.f32 %v796, %v1055
      %v1062 = vmul.f32 %v798, %v1055
      %v1063 = vmul.f32 %v801, %v1055
      %v1064 = vmul.f32 %v803, %v1055
      %v1065 = vmul.f32 %v806, %v1055
      %v1066 = vmul.f32 %v808, %v1055
      %v1067 = vpack.c.bf16 %v1058, %v1057
      %v1068 = vpack.c.bf16 %v1060, %v1059
      %v1069 = vpack.c.bf16 %v1062, %v1061
      %v1070 = vpack.c.bf16 %v1064, %v1063
      %v1071 = vpack.c.bf16 %v1066, %v1065
      %v1073 = vsel %vm760, %v1067, 0
      %v1076 = vsel %vm760, %v1068, 0
      %v1079 = vsel %vm760, %v1069, 0
      %v1082 = vsel %vm760, %v1070, 0
      %v1085 = vsel %vm760, %v1071, 0
      %1087 = vmatpush.bf16.xpose.msra.mxu0 0
      %1088 = vmatpush.bf16.xpose.msra.mxu0 0
      %1089 = vmatpush.bf16.xpose.msra.mxu0 0
      %1090 = vmatpush.bf16.xpose.msra.mxu0 %v884
      %1091 = vmatpush.bf16.xpose.msra.mxu0 %v881
      %1092 = vmatpush.bf16.xpose.msra.mxu0 %v878
      %1093 = vmatpush.bf16.xpose.msra.mxu0 %v875
      %1094 = vmatpush.bf16.xpose.msra.mxu0 %v872
      %1095 = vmatmul.bf16.gmra.mxu0 %v1073
      %v1096 = vpop.f32.mrf.mxu0
      %v1097 = vadd.f32 %v839, %v1096
      %v1098 = vpop.f32.mrf.mxu0
      %v1099 = vadd.f32 %v839, %v1098
      %1100 = vmatmul.bf16.gmra.mxu0 %v1076
      %v1101 = vpop.f32.mrf.mxu0
      %v1102 = vadd.f32 %v839, %v1101
      %v1103 = vpop.f32.mrf.mxu0
      %v1104 = vadd.f32 %v839, %v1103
      %1105 = vmatmul.bf16.gmra.mxu0 %v1079
      %v1106 = vpop.f32.mrf.mxu0
      %v1107 = vadd.f32 %v839, %v1106
      %v1108 = vpop.f32.mrf.mxu0
      %v1109 = vadd.f32 %v839, %v1108
      %1110 = vmatmul.bf16.gmra.mxu0 %v1082
      %v1111 = vpop.f32.mrf.mxu0
      %v1112 = vadd.f32 %v839, %v1111
      %v1113 = vpop.f32.mrf.mxu0
      %v1114 = vadd.f32 %v839, %v1113
      %1115 = vmatmul.bf16.gmra.mxu0 %v1085
      %v1116 = vpop.f32.mrf.mxu0
      %v1117 = vadd.f32 %v839, %v1116
      %v1118 = vpop.f32.mrf.mxu0
      %v1119 = vadd.f32 %v839, %v1118
      %1120 = vdwg.mxu0
      %v1121 = vsel %vm920, %v1097, -inf
      %1122 = vmax.xlane.f32.xlu0 %v1121
      %v1123 = vpop.xlane.xlu0 %1122
      %v1124 = vsel %vm920, %v1099, -inf
      %1125 = vmax.xlane.f32.xlu0 %v1124
      %v1126 = vpop.xlane.xlu0 %1125
      %v1127 = vsel %vm920, %v1102, -inf
      %1128 = vmax.xlane.f32.xlu0 %v1127
      %v1129 = vpop.xlane.xlu0 %1128
      %v1130 = vsel %vm920, %v1104, -inf
      %1131 = vmax.xlane.f32.xlu0 %v1130
      %v1132 = vpop.xlane.xlu0 %1131
      %v1133 = vsel %vm920, %v1107, -inf
      %1134 = vmax.xlane.f32.xlu0 %v1133
      %v1135 = vpop.xlane.xlu0 %1134
      %v1136 = vsel %vm920, %v1109, -inf
      %1137 = vmax.xlane.f32.xlu0 %v1136
      %v1138 = vpop.xlane.xlu0 %1137
      %v1139 = vsel %vm920, %v1112, -inf
      %1140 = vmax.xlane.f32.xlu0 %v1139
      %v1141 = vpop.xlane.xlu0 %1140
      %v1142 = vsel %vm920, %v1114, -inf
      %1143 = vmax.xlane.f32.xlu0 %v1142
      %v1144 = vpop.xlane.xlu0 %1143
      %v1145 = vsel %vm920, %v1117, -inf
      %1146 = vmax.xlane.f32.xlu0 %v1145
      %v1147 = vpop.xlane.xlu0 %1146
      %v1148 = vsel %vm920, %v1119, -inf
      %1149 = vmax.xlane.f32.xlu0 %v1148
      %v1150 = vpop.xlane.xlu0 %1149
      %v1151 = vsub.f32 %v1097, %v1123
      %v1152 = vsub.f32 %v1099, %v1126
      %v1153 = vsub.f32 %v1102, %v1129
      %v1154 = vsub.f32 %v1104, %v1132
      %v1155 = vsub.f32 %v1107, %v1135
      %v1156 = vsub.f32 %v1109, %v1138
      %v1157 = vsub.f32 %v1112, %v1141
      %v1158 = vsub.f32 %v1114, %v1144
      %v1159 = vsub.f32 %v1117, %v1147
      %v1160 = vsub.f32 %v1119, %v1150
      %v1161 = vmul.f32 %v1151, 1.442695
      %v1162 = vpow.pop %v1161
      %v1163 = vmul.f32 %v1152, 1.442695
      %v1164 = vpow.pop %v1163
      %v1165 = vmul.f32 %v1153, 1.442695
      %v1166 = vpow.pop %v1165
      %v1167 = vmul.f32 %v1154, 1.442695
      %v1168 = vpow.pop %v1167
      %v1169 = vmul.f32 %v1155, 1.442695
      %v1170 = vpow.pop %v1169
      %v1171 = vmul.f32 %v1156, 1.442695
      %v1172 = vpow.pop %v1171
      %v1173 = vmul.f32 %v1157, 1.442695
      %v1174 = vpow.pop %v1173
      %v1175 = vmul.f32 %v1158, 1.442695
      %v1176 = vpow.pop %v1175
      %v1177 = vmul.f32 %v1159, 1.442695
      %v1178 = vpow.pop %v1177
      %v1179 = vmul.f32 %v1160, 1.442695
      %v1180 = vpow.pop %v1179
      %v1181 = vsel %vm920, %v1162, 0.0
      %1182 = vadd.xlane.f32.xlu0 %v1181
      %v1183 = vpop.xlane.xlu0 %1182
      %v1184 = vsel %vm920, %v1164, 0.0
      %1185 = vadd.xlane.f32.xlu0 %v1184
      %v1186 = vpop.xlane.xlu0 %1185
      %v1187 = vsel %vm920, %v1166, 0.0
      %1188 = vadd.xlane.f32.xlu0 %v1187
      %v1189 = vpop.xlane.xlu0 %1188
      %v1190 = vsel %vm920, %v1168, 0.0
      %1191 = vadd.xlane.f32.xlu0 %v1190
      %v1192 = vpop.xlane.xlu0 %1191
      %v1193 = vsel %vm920, %v1170, 0.0
      %1194 = vadd.xlane.f32.xlu0 %v1193
      %v1195 = vpop.xlane.xlu0 %1194
      %v1196 = vsel %vm920, %v1172, 0.0
      %1197 = vadd.xlane.f32.xlu0 %v1196
      %v1198 = vpop.xlane.xlu0 %1197
      %v1199 = vsel %vm920, %v1174, 0.0
      %1200 = vadd.xlane.f32.xlu0 %v1199
      %v1201 = vpop.xlane.xlu0 %1200
      %v1202 = vsel %vm920, %v1176, 0.0
      %1203 = vadd.xlane.f32.xlu0 %v1202
      %v1204 = vpop.xlane.xlu0 %1203
      %v1205 = vsel %vm920, %v1178, 0.0
      %1206 = vadd.xlane.f32.xlu0 %v1205
      %v1207 = vpop.xlane.xlu0 %1206
      %v1208 = vsel %vm920, %v1180, 0.0
      %1209 = vadd.xlane.f32.xlu0 %v1208
      %v1210 = vpop.xlane.xlu0 %1209
      %v1211 = vrcp.pop %v1183
      %v1212 = vrcp.pop %v1186
      %v1213 = vrcp.pop %v1189
      %v1214 = vrcp.pop %v1192
      %v1215 = vrcp.pop %v1195
      %v1216 = vrcp.pop %v1198
      %v1217 = vrcp.pop %v1201
      %v1218 = vrcp.pop %v1204
      %v1219 = vrcp.pop %v1207
      %v1220 = vrcp.pop %v1210
      %v1221 = vmul.f32 %v1162, %v1211
      %v1222 = vmul.f32 %v1164, %v1212
      %v1223 = vmul.f32 %v1166, %v1213
      %v1224 = vmul.f32 %v1168, %v1214
      %v1225 = vmul.f32 %v1170, %v1215
      %v1226 = vmul.f32 %v1172, %v1216
      %v1227 = vmul.f32 %v1174, %v1217
      %v1228 = vmul.f32 %v1176, %v1218
      %v1229 = vmul.f32 %v1178, %v1219
      %v1230 = vmul.f32 %v1180, %v1220
      %1231 = vrot.lane.b32.xlu0 %v1055, 64
      %v1232 = vpop.permute.xlu0 %1231
      %v1234 = vmul.f32 %v786, %v1232
      %v1235 = vmul.f32 %v788, %v1232
      %v1236 = vmul.f32 %v791, %v1232
      %v1237 = vmul.f32 %v793, %v1232
      %v1238 = vmul.f32 %v796, %v1232
      %v1239 = vmul.f32 %v798, %v1232
      %v1240 = vmul.f32 %v801, %v1232
      %v1241 = vmul.f32 %v803, %v1232
      %v1242 = vmul.f32 %v806, %v1232
      %v1243 = vmul.f32 %v808, %v1232
      %v1244 = vpack.c.bf16 %v1235, %v1234
      %v1245 = vpack.c.bf16 %v1237, %v1236
      %v1246 = vpack.c.bf16 %v1239, %v1238
      %v1247 = vpack.c.bf16 %v1241, %v1240
      %v1248 = vpack.c.bf16 %v1243, %v1242
      %v1249 = vpack.c.bf16 %v1222, %v1221
      %v1250 = vpack.c.bf16 %v1224, %v1223
      %v1251 = vpack.c.bf16 %v1226, %v1225
      %v1252 = vpack.c.bf16 %v1228, %v1227
      %v1253 = vpack.c.bf16 %v1230, %v1229
      %1259 = vrot.lane.b32.xlu0 %v1244, 64
      %v1260 = vpop.permute.xlu0 %1259
      %1261 = vrot.lane.b32.xlu0 %v1245, 64
      %v1262 = vpop.permute.xlu0 %1261
      %1263 = vrot.lane.b32.xlu0 %v1246, 64
      %v1264 = vpop.permute.xlu0 %1263
      %1265 = vrot.lane.b32.xlu0 %v1247, 64
      %v1266 = vpop.permute.xlu0 %1265
      %1267 = vrot.lane.b32.xlu0 %v1248, 64
      %v1268 = vpop.permute.xlu0 %1267
      %v1275 = vsel %vm920, %v1249, 0
      %v1278 = vsel %vm920, %v1250, 0
      %v1281 = vsel %vm920, %v1251, 0
      %v1284 = vsel %vm920, %v1252, 0
      %v1287 = vsel %vm920, %v1253, 0
      %1289 = vmatpush.bf16.msra.mxu0 0
      %1290 = vmatpush.bf16.msra.mxu0 0
      %1291 = vmatpush.bf16.msra.mxu0 0
      %1292 = vmatpush.bf16.msra.mxu0 %v1268
      %1293 = vmatpush.bf16.msra.mxu0 %v1266
      %1294 = vmatpush.bf16.msra.mxu0 %v1264
      %1295 = vmatpush.bf16.msra.mxu0 %v1262
      %1296 = vmatpush.bf16.msra.mxu0 %v1260
      %1297 = vmatmul.bf16.gmra.mxu0 %v1275
      %v1298 = vpop.f32.mrf.mxu0
      %v1299 = vadd.f32 0.0, %v1298
      %v1300 = vpop.f32.mrf.mxu0
      %v1301 = vadd.f32 0.0, %v1300
      %1302 = vmatmul.bf16.gmra.mxu0 %v1278
      %v1303 = vpop.f32.mrf.mxu0
      %v1304 = vadd.f32 0.0, %v1303
      %v1305 = vpop.f32.mrf.mxu0
      %v1306 = vadd.f32 0.0, %v1305
      %1307 = vmatmul.bf16.gmra.mxu0 %v1281
      %v1308 = vpop.f32.mrf.mxu0
      %v1309 = vadd.f32 0.0, %v1308
      %v1310 = vpop.f32.mrf.mxu0
      %v1311 = vadd.f32 0.0, %v1310
      %1312 = vmatmul.bf16.gmra.mxu0 %v1284
      %v1313 = vpop.f32.mrf.mxu0
      %v1314 = vadd.f32 0.0, %v1313
      %v1315 = vpop.f32.mrf.mxu0
      %v1316 = vadd.f32 0.0, %v1315
      %1317 = vmatmul.bf16.gmra.mxu0 %v1287
      %v1318 = vpop.f32.mrf.mxu0
      %v1319 = vadd.f32 0.0, %v1318
      %v1320 = vpop.f32.mrf.mxu0
      %v1321 = vadd.f32 0.0, %v1320
      %1322 = vdwg.mxu0
      %1328 = vrot.lane.b32.xlu0 %v1044, 64
      %v1329 = vpop.permute.xlu0 %1328
      %1330 = vrot.lane.b32.xlu0 %v1045, 64
      %v1331 = vpop.permute.xlu0 %1330
      %1332 = vrot.lane.b32.xlu0 %v1046, 64
      %v1333 = vpop.permute.xlu0 %1332
      %1334 = vrot.lane.b32.xlu0 %v1047, 64
      %v1335 = vpop.permute.xlu0 %1334
      %1336 = vrot.lane.b32.xlu0 %v1048, 64
      %v1337 = vpop.permute.xlu0 %1336
      %v1344 = vsel %vm920, %v1049, 0
      %v1347 = vsel %vm920, %v1050, 0
      %v1350 = vsel %vm920, %v1051, 0
      %v1353 = vsel %vm920, %v1052, 0
      %v1356 = vsel %vm920, %v1053, 0
      %1358 = vmatpush.bf16.msra.mxu0 0
      %1359 = vmatpush.bf16.msra.mxu0 0
      %1360 = vmatpush.bf16.msra.mxu0 0
      %1361 = vmatpush.bf16.msra.mxu0 %v1337
      %1362 = vmatpush.bf16.msra.mxu0 %v1335
      %1363 = vmatpush.bf16.msra.mxu0 %v1333
      %1364 = vmatpush.bf16.msra.mxu0 %v1331
      %1365 = vmatpush.bf16.msra.mxu0 %v1329
      %1366 = vmatmul.bf16.gmra.mxu0 %v1344
      %v1367 = vpop.f32.mrf.mxu0
      %v1368 = vadd.f32 %v1299, %v1367
      %v1369 = vpop.f32.mrf.mxu0
      %v1370 = vadd.f32 %v1301, %v1369
      %1371 = vmatmul.bf16.gmra.mxu0 %v1347
      %v1372 = vpop.f32.mrf.mxu0
      %v1373 = vadd.f32 %v1304, %v1372
      %v1374 = vpop.f32.mrf.mxu0
      %v1375 = vadd.f32 %v1306, %v1374
      %1376 = vmatmul.bf16.gmra.mxu0 %v1350
      %v1377 = vpop.f32.mrf.mxu0
      %v1378 = vadd.f32 %v1309, %v1377
      %v1379 = vpop.f32.mrf.mxu0
      %v1380 = vadd.f32 %v1311, %v1379
      %1381 = vmatmul.bf16.gmra.mxu0 %v1353
      %v1382 = vpop.f32.mrf.mxu0
      %v1383 = vadd.f32 %v1314, %v1382
      %v1384 = vpop.f32.mrf.mxu0
      %v1385 = vadd.f32 %v1316, %v1384
      %1386 = vmatmul.bf16.gmra.mxu0 %v1356
      %v1387 = vpop.f32.mrf.mxu0
      %v1388 = vadd.f32 %v1319, %v1387
      %v1389 = vpop.f32.mrf.mxu0
      %v1390 = vadd.f32 %v1321, %v1389
      %1391 = vdwg.mxu0
      %v1393 = vperm.slane %v817, 0
      %v1395 = vmul.f32 %v786, %v1393
      %v1396 = vmul.f32 %v788, %v1393
      %v1397 = vmul.f32 %v791, %v1393
      %v1398 = vmul.f32 %v793, %v1393
      %v1399 = vmul.f32 %v796, %v1393
      %v1400 = vmul.f32 %v798, %v1393
      %v1401 = vmul.f32 %v801, %v1393
      %v1402 = vmul.f32 %v803, %v1393
      %v1403 = vmul.f32 %v806, %v1393
      %v1404 = vmul.f32 %v808, %v1393
      %v1405 = vpack.c.bf16 %v1396, %v1395
      %v1406 = vpack.c.bf16 %v1398, %v1397
      %v1407 = vpack.c.bf16 %v1400, %v1399
      %v1408 = vpack.c.bf16 %v1402, %v1401
      %v1409 = vpack.c.bf16 %v1404, %v1403
      %v1411 = vsel %vm760, %v1405, 0
      %v1414 = vsel %vm760, %v1406, 0
      %v1417 = vsel %vm760, %v1407, 0
      %v1420 = vsel %vm760, %v1408, 0
      %v1423 = vsel %vm760, %v1409, 0
      %1425 = vmatpush.bf16.xpose.msra.mxu0 0
      %1426 = vmatpush.bf16.xpose.msra.mxu0 0
      %1427 = vmatpush.bf16.xpose.msra.mxu0 0
      %1428 = vmatpush.bf16.xpose.msra.mxu0 %v884
      %1429 = vmatpush.bf16.xpose.msra.mxu0 %v881
      %1430 = vmatpush.bf16.xpose.msra.mxu0 %v878
      %1431 = vmatpush.bf16.xpose.msra.mxu0 %v875
      %1432 = vmatpush.bf16.xpose.msra.mxu0 %v872
      %1433 = vmatmul.bf16.gmra.mxu0 %v1411
      %v1434 = vpop.f32.mrf.mxu0
      %v1435 = vadd.f32 %v839, %v1434
      %v1436 = vpop.f32.mrf.mxu0
      %v1437 = vadd.f32 %v839, %v1436
      %1438 = vmatmul.bf16.gmra.mxu0 %v1414
      %v1439 = vpop.f32.mrf.mxu0
      %v1440 = vadd.f32 %v839, %v1439
      %v1441 = vpop.f32.mrf.mxu0
      %v1442 = vadd.f32 %v839, %v1441
      %1443 = vmatmul.bf16.gmra.mxu0 %v1417
      %v1444 = vpop.f32.mrf.mxu0
      %v1445 = vadd.f32 %v839, %v1444
      %v1446 = vpop.f32.mrf.mxu0
      %v1447 = vadd.f32 %v839, %v1446
      %1448 = vmatmul.bf16.gmra.mxu0 %v1420
      %v1449 = vpop.f32.mrf.mxu0
      %v1450 = vadd.f32 %v839, %v1449
      %v1451 = vpop.f32.mrf.mxu0
      %v1452 = vadd.f32 %v839, %v1451
      %1453 = vmatmul.bf16.gmra.mxu0 %v1423
      %v1454 = vpop.f32.mrf.mxu0
      %v1455 = vadd.f32 %v839, %v1454
      %v1456 = vpop.f32.mrf.mxu0
      %v1457 = vadd.f32 %v839, %v1456
      %1458 = vdwg.mxu0
      %v1459 = vsel %vm920, %v1435, -inf
      %1460 = vmax.xlane.f32.xlu0 %v1459
      %v1461 = vpop.xlane.xlu0 %1460
      %v1462 = vsel %vm920, %v1437, -inf
      %1463 = vmax.xlane.f32.xlu0 %v1462
      %v1464 = vpop.xlane.xlu0 %1463
      %v1465 = vsel %vm920, %v1440, -inf
      %1466 = vmax.xlane.f32.xlu0 %v1465
      %v1467 = vpop.xlane.xlu0 %1466
      %v1468 = vsel %vm920, %v1442, -inf
      %1469 = vmax.xlane.f32.xlu0 %v1468
      %v1470 = vpop.xlane.xlu0 %1469
      %v1471 = vsel %vm920, %v1445, -inf
      %1472 = vmax.xlane.f32.xlu0 %v1471
      %v1473 = vpop.xlane.xlu0 %1472
      %v1474 = vsel %vm920, %v1447, -inf
      %1475 = vmax.xlane.f32.xlu0 %v1474
      %v1476 = vpop.xlane.xlu0 %1475
      %v1477 = vsel %vm920, %v1450, -inf
      %1478 = vmax.xlane.f32.xlu0 %v1477
      %v1479 = vpop.xlane.xlu0 %1478
      %v1480 = vsel %vm920, %v1452, -inf
      %1481 = vmax.xlane.f32.xlu0 %v1480
      %v1482 = vpop.xlane.xlu0 %1481
      %v1483 = vsel %vm920, %v1455, -inf
      %1484 = vmax.xlane.f32.xlu0 %v1483
      %v1485 = vpop.xlane.xlu0 %1484
      %v1486 = vsel %vm920, %v1457, -inf
      %1487 = vmax.xlane.f32.xlu0 %v1486
      %v1488 = vpop.xlane.xlu0 %1487
      %v1489 = vsub.f32 %v1435, %v1461
      %v1490 = vsub.f32 %v1437, %v1464
      %v1491 = vsub.f32 %v1440, %v1467
      %v1492 = vsub.f32 %v1442, %v1470
      %v1493 = vsub.f32 %v1445, %v1473
      %v1494 = vsub.f32 %v1447, %v1476
      %v1495 = vsub.f32 %v1450, %v1479
      %v1496 = vsub.f32 %v1452, %v1482
      %v1497 = vsub.f32 %v1455, %v1485
      %v1498 = vsub.f32 %v1457, %v1488
      %v1499 = vmul.f32 %v1489, 1.442695
      %v1500 = vpow.pop %v1499
      %v1501 = vmul.f32 %v1490, 1.442695
      %v1502 = vpow.pop %v1501
      %v1503 = vmul.f32 %v1491, 1.442695
      %v1504 = vpow.pop %v1503
      %v1505 = vmul.f32 %v1492, 1.442695
      %v1506 = vpow.pop %v1505
      %v1507 = vmul.f32 %v1493, 1.442695
      %v1508 = vpow.pop %v1507
      %v1509 = vmul.f32 %v1494, 1.442695
      %v1510 = vpow.pop %v1509
      %v1511 = vmul.f32 %v1495, 1.442695
      %v1512 = vpow.pop %v1511
      %v1513 = vmul.f32 %v1496, 1.442695
      %v1514 = vpow.pop %v1513
      %v1515 = vmul.f32 %v1497, 1.442695
      %v1516 = vpow.pop %v1515
      %v1517 = vmul.f32 %v1498, 1.442695
      %v1518 = vpow.pop %v1517
      %v1519 = vsel %vm920, %v1500, 0.0
      %1520 = vadd.xlane.f32.xlu0 %v1519
      %v1521 = vpop.xlane.xlu0 %1520
      %v1522 = vsel %vm920, %v1502, 0.0
      %1523 = vadd.xlane.f32.xlu0 %v1522
      %v1524 = vpop.xlane.xlu0 %1523
      %v1525 = vsel %vm920, %v1504, 0.0
      %1526 = vadd.xlane.f32.xlu0 %v1525
      %v1527 = vpop.xlane.xlu0 %1526
      %v1528 = vsel %vm920, %v1506, 0.0
      %1529 = vadd.xlane.f32.xlu0 %v1528
      %v1530 = vpop.xlane.xlu0 %1529
      %v1531 = vsel %vm920, %v1508, 0.0
      %1532 = vadd.xlane.f32.xlu0 %v1531
      %v1533 = vpop.xlane.xlu0 %1532
      %v1534 = vsel %vm920, %v1510, 0.0
      %1535 = vadd.xlane.f32.xlu0 %v1534
      %v1536 = vpop.xlane.xlu0 %1535
      %v1537 = vsel %vm920, %v1512, 0.0
      %1538 = vadd.xlane.f32.xlu0 %v1537
      %v1539 = vpop.xlane.xlu0 %1538
      %v1540 = vsel %vm920, %v1514, 0.0
      %1541 = vadd.xlane.f32.xlu0 %v1540
      %v1542 = vpop.xlane.xlu0 %1541
      %v1543 = vsel %vm920, %v1516, 0.0
      %1544 = vadd.xlane.f32.xlu0 %v1543
      %v1545 = vpop.xlane.xlu0 %1544
      %v1546 = vsel %vm920, %v1518, 0.0
      %1547 = vadd.xlane.f32.xlu0 %v1546
      %v1548 = vpop.xlane.xlu0 %1547
      %v1549 = vrcp.pop %v1521
      %v1550 = vrcp.pop %v1524
      %v1551 = vrcp.pop %v1527
      %v1552 = vrcp.pop %v1530
      %v1553 = vrcp.pop %v1533
      %v1554 = vrcp.pop %v1536
      %v1555 = vrcp.pop %v1539
      %v1556 = vrcp.pop %v1542
      %v1557 = vrcp.pop %v1545
      %v1558 = vrcp.pop %v1548
      %v1559 = vmul.f32 %v1500, %v1549
      %v1560 = vmul.f32 %v1502, %v1550
      %v1561 = vmul.f32 %v1504, %v1551
      %v1562 = vmul.f32 %v1506, %v1552
      %v1563 = vmul.f32 %v1508, %v1553
      %v1564 = vmul.f32 %v1510, %v1554
      %v1565 = vmul.f32 %v1512, %v1555
      %v1566 = vmul.f32 %v1514, %v1556
      %v1567 = vmul.f32 %v1516, %v1557
      %v1568 = vmul.f32 %v1518, %v1558
      %1569 = vrot.lane.b32.xlu0 %v1393, 64
      %v1570 = vpop.permute.xlu0 %1569
      %v1572 = vmul.f32 %v786, %v1570
      %v1573 = vmul.f32 %v788, %v1570
      %v1574 = vmul.f32 %v791, %v1570
      %v1575 = vmul.f32 %v793, %v1570
      %v1576 = vmul.f32 %v796, %v1570
      %v1577 = vmul.f32 %v798, %v1570
      %v1578 = vmul.f32 %v801, %v1570
      %v1579 = vmul.f32 %v803, %v1570
      %v1580 = vmul.f32 %v806, %v1570
      %v1581 = vmul.f32 %v808, %v1570
      %v1582 = vpack.c.bf16 %v1573, %v1572
      %v1583 = vpack.c.bf16 %v1575, %v1574
      %v1584 = vpack.c.bf16 %v1577, %v1576
      %v1585 = vpack.c.bf16 %v1579, %v1578
      %v1586 = vpack.c.bf16 %v1581, %v1580
      %v1587 = vpack.c.bf16 %v1560, %v1559
      %v1588 = vpack.c.bf16 %v1562, %v1561
      %v1589 = vpack.c.bf16 %v1564, %v1563
      %v1590 = vpack.c.bf16 %v1566, %v1565
      %v1591 = vpack.c.bf16 %v1568, %v1567
      %1597 = vrot.lane.b32.xlu0 %v1582, 64
      %v1598 = vpop.permute.xlu0 %1597
      %1599 = vrot.lane.b32.xlu0 %v1583, 64
      %v1600 = vpop.permute.xlu0 %1599
      %1601 = vrot.lane.b32.xlu0 %v1584, 64
      %v1602 = vpop.permute.xlu0 %1601
      %1603 = vrot.lane.b32.xlu0 %v1585, 64
      %v1604 = vpop.permute.xlu0 %1603
      %1605 = vrot.lane.b32.xlu0 %v1586, 64
      %v1606 = vpop.permute.xlu0 %1605
      %v1613 = vsel %vm920, %v1587, 0
      %v1616 = vsel %vm920, %v1588, 0
      %v1619 = vsel %vm920, %v1589, 0
      %v1622 = vsel %vm920, %v1590, 0
      %v1625 = vsel %vm920, %v1591, 0
      %1627 = vmatpush.bf16.msra.mxu0 0
      %1628 = vmatpush.bf16.msra.mxu0 0
      %1629 = vmatpush.bf16.msra.mxu0 0
      %1630 = vmatpush.bf16.msra.mxu0 %v1606
      %1631 = vmatpush.bf16.msra.mxu0 %v1604
      %1632 = vmatpush.bf16.msra.mxu0 %v1602
      %1633 = vmatpush.bf16.msra.mxu0 %v1600
      %1634 = vmatpush.bf16.msra.mxu0 %v1598
      %1635 = vmatmul.bf16.gmra.mxu0 %v1613
      %v1636 = vpop.f32.mrf.mxu0
      %v1637 = vadd.f32 0.0, %v1636
      %v1638 = vpop.f32.mrf.mxu0
      %v1639 = vadd.f32 0.0, %v1638
      %1640 = vmatmul.bf16.gmra.mxu0 %v1616
      %v1641 = vpop.f32.mrf.mxu0
      %v1642 = vadd.f32 0.0, %v1641
      %v1643 = vpop.f32.mrf.mxu0
      %v1644 = vadd.f32 0.0, %v1643
      %1645 = vmatmul.bf16.gmra.mxu0 %v1619
      %v1646 = vpop.f32.mrf.mxu0
      %v1647 = vadd.f32 0.0, %v1646
      %v1648 = vpop.f32.mrf.mxu0
      %v1649 = vadd.f32 0.0, %v1648
      %1650 = vmatmul.bf16.gmra.mxu0 %v1622
      %v1651 = vpop.f32.mrf.mxu0
      %v1652 = vadd.f32 0.0, %v1651
      %v1653 = vpop.f32.mrf.mxu0
      %v1654 = vadd.f32 0.0, %v1653
      %1655 = vmatmul.bf16.gmra.mxu0 %v1625
      %v1656 = vpop.f32.mrf.mxu0
      %v1657 = vadd.f32 0.0, %v1656
      %v1658 = vpop.f32.mrf.mxu0
      %v1659 = vadd.f32 0.0, %v1658
      %1660 = vdwg.mxu0
      %v1661 = vadd.f32 %v1368, %v1637
      %v1662 = vadd.f32 %v1370, %v1639
      %v1663 = vadd.f32 %v1373, %v1642
      %v1664 = vadd.f32 %v1375, %v1644
      %v1665 = vadd.f32 %v1378, %v1647
      %v1666 = vadd.f32 %v1380, %v1649
      %v1667 = vadd.f32 %v1383, %v1652
      %v1668 = vadd.f32 %v1385, %v1654
      %v1669 = vadd.f32 %v1388, %v1657
      %v1670 = vadd.f32 %v1390, %v1659
      %v1672 = vperm.slane %v818, 0
      %v1674 = vmul.f32 %v786, %v1672
      %v1675 = vmul.f32 %v788, %v1672
      %v1676 = vmul.f32 %v791, %v1672
      %v1677 = vmul.f32 %v793, %v1672
      %v1678 = vmul.f32 %v796, %v1672
      %v1679 = vmul.f32 %v798, %v1672
      %v1680 = vmul.f32 %v801, %v1672
      %v1681 = vmul.f32 %v803, %v1672
      %v1682 = vmul.f32 %v806, %v1672
      %v1683 = vmul.f32 %v808, %v1672
      %v1684 = vpack.c.bf16 %v1675, %v1674
      %v1685 = vpack.c.bf16 %v1677, %v1676
      %v1686 = vpack.c.bf16 %v1679, %v1678
      %v1687 = vpack.c.bf16 %v1681, %v1680
      %v1688 = vpack.c.bf16 %v1683, %v1682
      %v1690 = vsel %vm760, %v1684, 0
      %v1693 = vsel %vm760, %v1685, 0
      %v1696 = vsel %vm760, %v1686, 0
      %v1699 = vsel %vm760, %v1687, 0
      %v1702 = vsel %vm760, %v1688, 0
      %1704 = vmatpush.bf16.xpose.msra.mxu0 0
      %1705 = vmatpush.bf16.xpose.msra.mxu0 0
      %1706 = vmatpush.bf16.xpose.msra.mxu0 0
      %1707 = vmatpush.bf16.xpose.msra.mxu0 %v884
      %1708 = vmatpush.bf16.xpose.msra.mxu0 %v881
      %1709 = vmatpush.bf16.xpose.msra.mxu0 %v878
      %1710 = vmatpush.bf16.xpose.msra.mxu0 %v875
      %1711 = vmatpush.bf16.xpose.msra.mxu0 %v872
      %1712 = vmatmul.bf16.gmra.mxu0 %v1690
      %v1713 = vpop.f32.mrf.mxu0
      %v1714 = vadd.f32 %v839, %v1713
      %v1715 = vpop.f32.mrf.mxu0
      %v1716 = vadd.f32 %v839, %v1715
      %1717 = vmatmul.bf16.gmra.mxu0 %v1693
      %v1718 = vpop.f32.mrf.mxu0
      %v1719 = vadd.f32 %v839, %v1718
      %v1720 = vpop.f32.mrf.mxu0
      %v1721 = vadd.f32 %v839, %v1720
      %1722 = vmatmul.bf16.gmra.mxu0 %v1696
      %v1723 = vpop.f32.mrf.mxu0
      %v1724 = vadd.f32 %v839, %v1723
      %v1725 = vpop.f32.mrf.mxu0
      %v1726 = vadd.f32 %v839, %v1725
      %1727 = vmatmul.bf16.gmra.mxu0 %v1699
      %v1728 = vpop.f32.mrf.mxu0
      %v1729 = vadd.f32 %v839, %v1728
      %v1730 = vpop.f32.mrf.mxu0
      %v1731 = vadd.f32 %v839, %v1730
      %1732 = vmatmul.bf16.gmra.mxu0 %v1702
      %v1733 = vpop.f32.mrf.mxu0
      %v1734 = vadd.f32 %v839, %v1733
      %v1735 = vpop.f32.mrf.mxu0
      %v1736 = vadd.f32 %v839, %v1735
      %1737 = vdwg.mxu0
      %v1738 = vsel %vm920, %v1714, -inf
      %1739 = vmax.xlane.f32.xlu0 %v1738
      %v1740 = vpop.xlane.xlu0 %1739
      %v1741 = vsel %vm920, %v1716, -inf
      %1742 = vmax.xlane.f32.xlu0 %v1741
      %v1743 = vpop.xlane.xlu0 %1742
      %v1744 = vsel %vm920, %v1719, -inf
      %1745 = vmax.xlane.f32.xlu0 %v1744
      %v1746 = vpop.xlane.xlu0 %1745
      %v1747 = vsel %vm920, %v1721, -inf
      %1748 = vmax.xlane.f32.xlu0 %v1747
      %v1749 = vpop.xlane.xlu0 %1748
      %v1750 = vsel %vm920, %v1724, -inf
      %1751 = vmax.xlane.f32.xlu0 %v1750
      %v1752 = vpop.xlane.xlu0 %1751
      %v1753 = vsel %vm920, %v1726, -inf
      %1754 = vmax.xlane.f32.xlu0 %v1753
      %v1755 = vpop.xlane.xlu0 %1754
      %v1756 = vsel %vm920, %v1729, -inf
      %1757 = vmax.xlane.f32.xlu0 %v1756
      %v1758 = vpop.xlane.xlu0 %1757
      %v1759 = vsel %vm920, %v1731, -inf
      %1760 = vmax.xlane.f32.xlu0 %v1759
      %v1761 = vpop.xlane.xlu0 %1760
      %v1762 = vsel %vm920, %v1734, -inf
      %1763 = vmax.xlane.f32.xlu0 %v1762
      %v1764 = vpop.xlane.xlu0 %1763
      %v1765 = vsel %vm920, %v1736, -inf
      %1766 = vmax.xlane.f32.xlu0 %v1765
      %v1767 = vpop.xlane.xlu0 %1766
      %v1768 = vsub.f32 %v1714, %v1740
      %v1769 = vsub.f32 %v1716, %v1743
      %v1770 = vsub.f32 %v1719, %v1746
      %v1771 = vsub.f32 %v1721, %v1749
      %v1772 = vsub.f32 %v1724, %v1752
      %v1773 = vsub.f32 %v1726, %v1755
      %v1774 = vsub.f32 %v1729, %v1758
      %v1775 = vsub.f32 %v1731, %v1761
      %v1776 = vsub.f32 %v1734, %v1764
      %v1777 = vsub.f32 %v1736, %v1767
      %v1778 = vmul.f32 %v1768, 1.442695
      %v1779 = vpow.pop %v1778
      %v1780 = vmul.f32 %v1769, 1.442695
      %v1781 = vpow.pop %v1780
      %v1782 = vmul.f32 %v1770, 1.442695
      %v1783 = vpow.pop %v1782
      %v1784 = vmul.f32 %v1771, 1.442695
      %v1785 = vpow.pop %v1784
      %v1786 = vmul.f32 %v1772, 1.442695
      %v1787 = vpow.pop %v1786
      %v1788 = vmul.f32 %v1773, 1.442695
      %v1789 = vpow.pop %v1788
      %v1790 = vmul.f32 %v1774, 1.442695
      %v1791 = vpow.pop %v1790
      %v1792 = vmul.f32 %v1775, 1.442695
      %v1793 = vpow.pop %v1792
      %v1794 = vmul.f32 %v1776, 1.442695
      %v1795 = vpow.pop %v1794
      %v1796 = vmul.f32 %v1777, 1.442695
      %v1797 = vpow.pop %v1796
      %v1798 = vsel %vm920, %v1779, 0.0
      %1799 = vadd.xlane.f32.xlu0 %v1798
      %v1800 = vpop.xlane.xlu0 %1799
      %v1801 = vsel %vm920, %v1781, 0.0
      %1802 = vadd.xlane.f32.xlu0 %v1801
      %v1803 = vpop.xlane.xlu0 %1802
      %v1804 = vsel %vm920, %v1783, 0.0
      %1805 = vadd.xlane.f32.xlu0 %v1804
      %v1806 = vpop.xlane.xlu0 %1805
      %v1807 = vsel %vm920, %v1785, 0.0
      %1808 = vadd.xlane.f32.xlu0 %v1807
      %v1809 = vpop.xlane.xlu0 %1808
      %v1810 = vsel %vm920, %v1787, 0.0
      %1811 = vadd.xlane.f32.xlu0 %v1810
      %v1812 = vpop.xlane.xlu0 %1811
      %v1813 = vsel %vm920, %v1789, 0.0
      %1814 = vadd.xlane.f32.xlu0 %v1813
      %v1815 = vpop.xlane.xlu0 %1814
      %v1816 = vsel %vm920, %v1791, 0.0
      %1817 = vadd.xlane.f32.xlu0 %v1816
      %v1818 = vpop.xlane.xlu0 %1817
      %v1819 = vsel %vm920, %v1793, 0.0
      %1820 = vadd.xlane.f32.xlu0 %v1819
      %v1821 = vpop.xlane.xlu0 %1820
      %v1822 = vsel %vm920, %v1795, 0.0
      %1823 = vadd.xlane.f32.xlu0 %v1822
      %v1824 = vpop.xlane.xlu0 %1823
      %v1825 = vsel %vm920, %v1797, 0.0
      %1826 = vadd.xlane.f32.xlu0 %v1825
      %v1827 = vpop.xlane.xlu0 %1826
      %v1828 = vrcp.pop %v1800
      %v1829 = vrcp.pop %v1803
      %v1830 = vrcp.pop %v1806
      %v1831 = vrcp.pop %v1809
      %v1832 = vrcp.pop %v1812
      %v1833 = vrcp.pop %v1815
      %v1834 = vrcp.pop %v1818
      %v1835 = vrcp.pop %v1821
      %v1836 = vrcp.pop %v1824
      %v1837 = vrcp.pop %v1827
      %v1838 = vmul.f32 %v1779, %v1828
      %v1839 = vmul.f32 %v1781, %v1829
      %v1840 = vmul.f32 %v1783, %v1830
      %v1841 = vmul.f32 %v1785, %v1831
      %v1842 = vmul.f32 %v1787, %v1832
      %v1843 = vmul.f32 %v1789, %v1833
      %v1844 = vmul.f32 %v1791, %v1834
      %v1845 = vmul.f32 %v1793, %v1835
      %v1846 = vmul.f32 %v1795, %v1836
      %v1847 = vmul.f32 %v1797, %v1837
      %1848 = vrot.lane.b32.xlu0 %v1672, 64
      %v1849 = vpop.permute.xlu0 %1848
      %v1851 = vmul.f32 %v786, %v1849
      %v1852 = vmul.f32 %v788, %v1849
      %v1853 = vmul.f32 %v791, %v1849
      %v1854 = vmul.f32 %v793, %v1849
      %v1855 = vmul.f32 %v796, %v1849
      %v1856 = vmul.f32 %v798, %v1849
      %v1857 = vmul.f32 %v801, %v1849
      %v1858 = vmul.f32 %v803, %v1849
      %v1859 = vmul.f32 %v806, %v1849
      %v1860 = vmul.f32 %v808, %v1849
      %v1861 = vpack.c.bf16 %v1852, %v1851
      %v1862 = vpack.c.bf16 %v1854, %v1853
      %v1863 = vpack.c.bf16 %v1856, %v1855
      %v1864 = vpack.c.bf16 %v1858, %v1857
      %v1865 = vpack.c.bf16 %v1860, %v1859
      %v1866 = vpack.c.bf16 %v1839, %v1838
      %v1867 = vpack.c.bf16 %v1841, %v1840
      %v1868 = vpack.c.bf16 %v1843, %v1842
      %v1869 = vpack.c.bf16 %v1845, %v1844
      %v1870 = vpack.c.bf16 %v1847, %v1846
      %1876 = vrot.lane.b32.xlu0 %v1861, 64
      %v1877 = vpop.permute.xlu0 %1876
      %1878 = vrot.lane.b32.xlu0 %v1862, 64
      %v1879 = vpop.permute.xlu0 %1878
      %1880 = vrot.lane.b32.xlu0 %v1863, 64
      %v1881 = vpop.permute.xlu0 %1880
      %1882 = vrot.lane.b32.xlu0 %v1864, 64
      %v1883 = vpop.permute.xlu0 %1882
      %1884 = vrot.lane.b32.xlu0 %v1865, 64
      %v1885 = vpop.permute.xlu0 %1884
      %v1892 = vsel %vm920, %v1866, 0
      %v1895 = vsel %vm920, %v1867, 0
      %v1898 = vsel %vm920, %v1868, 0
      %v1901 = vsel %vm920, %v1869, 0
      %v1904 = vsel %vm920, %v1870, 0
      %1906 = vmatpush.bf16.msra.mxu0 0
      %1907 = vmatpush.bf16.msra.mxu0 0
      %1908 = vmatpush.bf16.msra.mxu0 0
      %1909 = vmatpush.bf16.msra.mxu0 %v1885
      %1910 = vmatpush.bf16.msra.mxu0 %v1883
      %1911 = vmatpush.bf16.msra.mxu0 %v1881
      %1912 = vmatpush.bf16.msra.mxu0 %v1879
      %1913 = vmatpush.bf16.msra.mxu0 %v1877
      %1914 = vmatmul.bf16.gmra.mxu0 %v1892
      %v1915 = vpop.f32.mrf.mxu0
      %v1916 = vadd.f32 0.0, %v1915
      %v1917 = vpop.f32.mrf.mxu0
      %v1918 = vadd.f32 0.0, %v1917
      %1919 = vmatmul.bf16.gmra.mxu0 %v1895
      %v1920 = vpop.f32.mrf.mxu0
      %v1921 = vadd.f32 0.0, %v1920
      %v1922 = vpop.f32.mrf.mxu0
      %v1923 = vadd.f32 0.0, %v1922
      %1924 = vmatmul.bf16.gmra.mxu0 %v1898
      %v1925 = vpop.f32.mrf.mxu0
      %v1926 = vadd.f32 0.0, %v1925
      %v1927 = vpop.f32.mrf.mxu0
      %v1928 = vadd.f32 0.0, %v1927
      %1929 = vmatmul.bf16.gmra.mxu0 %v1901
      %v1930 = vpop.f32.mrf.mxu0
      %v1931 = vadd.f32 0.0, %v1930
      %v1932 = vpop.f32.mrf.mxu0
      %v1933 = vadd.f32 0.0, %v1932
      %1934 = vmatmul.bf16.gmra.mxu0 %v1904
      %v1935 = vpop.f32.mrf.mxu0
      %v1936 = vadd.f32 0.0, %v1935
      %v1937 = vpop.f32.mrf.mxu0
      %v1938 = vadd.f32 0.0, %v1937
      %1939 = vdwg.mxu0
      %v1940 = vadd.f32 %v1661, %v1916
      %v1941 = vadd.f32 %v1662, %v1918
      %v1942 = vadd.f32 %v1663, %v1921
      %v1943 = vadd.f32 %v1664, %v1923
      %v1944 = vadd.f32 %v1665, %v1926
      %v1945 = vadd.f32 %v1666, %v1928
      %v1946 = vadd.f32 %v1667, %v1931
      %v1947 = vadd.f32 %v1668, %v1933
      %v1948 = vadd.f32 %v1669, %v1936
      %v1949 = vadd.f32 %v1670, %v1938
      %v1950 = vpack.c.bf16 %v1941, %v1940
      %v1951 = vpack.c.bf16 %v1943, %v1942
      %v1952 = vpack.c.bf16 %v1945, %v1944
      %v1953 = vpack.c.bf16 %v1947, %v1946
      %v1954 = vpack.c.bf16 %v1949, %v1948
      %v1955 = vld [vmem:[%s662] sm:$0xf]
      %v1956 = vld [vmem:[%s662 + $0x4] sm:$0xf]
      %v1957 = vld [vmem:[%s662 + $0x8] sm:$0xf]
      %v1958 = vld [vmem:[%s662 + $0xc] sm:$0xf]
      %v1959 = vld [vmem:[%s665] sm:$0x1]
      %v1961 = vperm.slane %v1959, 0
      %v1967 = vunpack.c.l.b16 %v1955
      %v1968 = vunpack.c.l.b16 %v1956
      %v1969 = vunpack.c.l.b16 %v1957
      %v1970 = vunpack.c.l.b16 %v1958
      %v1971 = vpack.c.b16 %v1968, %v1967
      %v1972 = vpack.c.b16 %v1970, %v1969
      %v1976 = vsel %vm760, %v1950, 0
      %v1979 = vsel %vm760, %v1951, 0
      %v1982 = vsel %vm760, %v1952, 0
      %v1985 = vsel %vm760, %v1953, 0
      %v1988 = vsel %vm760, %v1954, 0
      %1990 = vmatpush.bf16.msra.mxu0 0
      %1991 = vmatpush.bf16.msra.mxu0 0
      %1992 = vmatpush.bf16.msra.mxu0 0
      %1993 = vmatpush.bf16.msra.mxu0 0
      %1994 = vmatpush.bf16.msra.mxu0 0
      %1995 = vmatpush.bf16.msra.mxu0 0
      %1996 = vmatpush.bf16.msra.mxu0 %v1972
      %1997 = vmatpush.bf16.msra.mxu0 %v1971
      %1998 = vmatmul.bf16.gmra.mxu0 %v1976
      %v1999 = vpop.f32.mrf.mxu0
      %v2000 = vadd.f32 %v1961, %v1999
      %v2001 = vpop.f32.mrf.mxu0
      %v2002 = vadd.f32 %v1961, %v2001
      %2003 = vmatmul.bf16.gmra.mxu0 %v1979
      %v2004 = vpop.f32.mrf.mxu0
      %v2005 = vadd.f32 %v1961, %v2004
      %v2006 = vpop.f32.mrf.mxu0
      %v2007 = vadd.f32 %v1961, %v2006
      %2008 = vmatmul.bf16.gmra.mxu0 %v1982
      %v2009 = vpop.f32.mrf.mxu0
      %v2010 = vadd.f32 %v1961, %v2009
      %v2011 = vpop.f32.mrf.mxu0
      %v2012 = vadd.f32 %v1961, %v2011
      %2013 = vmatmul.bf16.gmra.mxu0 %v1985
      %v2014 = vpop.f32.mrf.mxu0
      %v2015 = vadd.f32 %v1961, %v2014
      %v2016 = vpop.f32.mrf.mxu0
      %v2017 = vadd.f32 %v1961, %v2016
      %2018 = vmatmul.bf16.gmra.mxu0 %v1988
      %v2019 = vpop.f32.mrf.mxu0
      %v2020 = vadd.f32 %v1961, %v2019
      %v2021 = vpop.f32.mrf.mxu0
      %v2022 = vadd.f32 %v1961, %v2021
      %2023 = vdwg.mxu0
      %v2024 = vadd.f32 %v2000, %v725
      %v2025 = vadd.f32 %v2002, %v726
      %v2026 = vadd.f32 %v2005, %v727
      %v2027 = vadd.f32 %v2007, %v728
      %v2028 = vadd.f32 %v2010, %v729
      %v2029 = vadd.f32 %v2012, %v730
      %v2030 = vadd.f32 %v2015, %v731
      %v2031 = vadd.f32 %v2017, %v732
      %v2032 = vadd.f32 %v2020, %v733
      %v2033 = vadd.f32 %v2022, %v734
      %v2034 = vld [vmem:[%s668] sm:$0x1]
      %v2035 = vld [vmem:[%s671] sm:$0x1]
      %v2036 = vsel %vm760, %v2024, 0.0
      %2037 = vadd.xlane.f32.xlu0 %v2036
      %v2038 = vpop.xlane.xlu0 %2037
      %v2039 = vsel %vm760, %v2025, 0.0
      %2040 = vadd.xlane.f32.xlu0 %v2039
      %v2041 = vpop.xlane.xlu0 %2040
      %v2042 = vsel %vm760, %v2026, 0.0
      %2043 = vadd.xlane.f32.xlu0 %v2042
      %v2044 = vpop.xlane.xlu0 %2043
      %v2045 = vsel %vm760, %v2027, 0.0
      %2046 = vadd.xlane.f32.xlu0 %v2045
      %v2047 = vpop.xlane.xlu0 %2046
      %v2048 = vsel %vm760, %v2028, 0.0
      %2049 = vadd.xlane.f32.xlu0 %v2048
      %v2050 = vpop.xlane.xlu0 %2049
      %v2051 = vsel %vm760, %v2029, 0.0
      %2052 = vadd.xlane.f32.xlu0 %v2051
      %v2053 = vpop.xlane.xlu0 %2052
      %v2054 = vsel %vm760, %v2030, 0.0
      %2055 = vadd.xlane.f32.xlu0 %v2054
      %v2056 = vpop.xlane.xlu0 %2055
      %v2057 = vsel %vm760, %v2031, 0.0
      %2058 = vadd.xlane.f32.xlu0 %v2057
      %v2059 = vpop.xlane.xlu0 %2058
      %v2060 = vsel %vm760, %v2032, 0.0
      %2061 = vadd.xlane.f32.xlu0 %v2060
      %v2062 = vpop.xlane.xlu0 %2061
      %v2063 = vsel %vm760, %v2033, 0.0
      %2064 = vadd.xlane.f32.xlu0 %v2063
      %v2065 = vpop.xlane.xlu0 %2064
      %v2066 = vrcp.pop 32.0
      %v2067 = vmul.f32 32.0, %v2066
      %v2068 = vsub.f32 1.0, %v2067
      %v2069 = vmul.f32 %v2066, %v2068
      %v2070 = vadd.f32 %v2066, %v2069
      %vm2071 = vweird.f32 %v2066
      %v2072 = vsel %vm2071, %v2066, %v2070
      %v2073 = vmul.f32 %v2038, %v2072
      %v2074 = vmul.f32 %v2041, %v2072
      %v2075 = vmul.f32 %v2044, %v2072
      %v2076 = vmul.f32 %v2047, %v2072
      %v2077 = vmul.f32 %v2050, %v2072
      %v2078 = vmul.f32 %v2053, %v2072
      %v2079 = vmul.f32 %v2056, %v2072
      %v2080 = vmul.f32 %v2059, %v2072
      %v2081 = vmul.f32 %v2062, %v2072
      %v2082 = vmul.f32 %v2065, %v2072
      %v2083 = vsub.f32 %v2024, %v2073
      %v2084 = vsub.f32 %v2025, %v2074
      %v2085 = vsub.f32 %v2026, %v2075
      %v2086 = vsub.f32 %v2027, %v2076
      %v2087 = vsub.f32 %v2028, %v2077
      %v2088 = vsub.f32 %v2029, %v2078
      %v2089 = vsub.f32 %v2030, %v2079
      %v2090 = vsub.f32 %v2031, %v2080
      %v2091 = vsub.f32 %v2032, %v2081
      %v2092 = vsub.f32 %v2033, %v2082
      %v2093 = vmul.f32 %v2083, %v2083
      %v2094 = vmul.f32 %v2084, %v2084
      %v2095 = vmul.f32 %v2085, %v2085
      %v2096 = vmul.f32 %v2086, %v2086
      %v2097 = vmul.f32 %v2087, %v2087
      %v2098 = vmul.f32 %v2088, %v2088
      %v2099 = vmul.f32 %v2089, %v2089
      %v2100 = vmul.f32 %v2090, %v2090
      %v2101 = vmul.f32 %v2091, %v2091
      %v2102 = vmul.f32 %v2092, %v2092
      %v2103 = vsel %vm760, %v2093, 0.0
      %2104 = vadd.xlane.f32.xlu0 %v2103
      %v2105 = vpop.xlane.xlu0 %2104
      %v2106 = vsel %vm760, %v2094, 0.0
      %2107 = vadd.xlane.f32.xlu0 %v2106
      %v2108 = vpop.xlane.xlu0 %2107
      %v2109 = vsel %vm760, %v2095, 0.0
      %2110 = vadd.xlane.f32.xlu0 %v2109
      %v2111 = vpop.xlane.xlu0 %2110
      %v2112 = vsel %vm760, %v2096, 0.0
      %2113 = vadd.xlane.f32.xlu0 %v2112
      %v2114 = vpop.xlane.xlu0 %2113
      %v2115 = vsel %vm760, %v2097, 0.0
      %2116 = vadd.xlane.f32.xlu0 %v2115
      %v2117 = vpop.xlane.xlu0 %2116
      %v2118 = vsel %vm760, %v2098, 0.0
      %2119 = vadd.xlane.f32.xlu0 %v2118
      %v2120 = vpop.xlane.xlu0 %2119
      %v2121 = vsel %vm760, %v2099, 0.0
      %2122 = vadd.xlane.f32.xlu0 %v2121
      %v2123 = vpop.xlane.xlu0 %2122
      %v2124 = vsel %vm760, %v2100, 0.0
      %2125 = vadd.xlane.f32.xlu0 %v2124
      %v2126 = vpop.xlane.xlu0 %2125
      %v2127 = vsel %vm760, %v2101, 0.0
      %2128 = vadd.xlane.f32.xlu0 %v2127
      %v2129 = vpop.xlane.xlu0 %2128
      %v2130 = vsel %vm760, %v2102, 0.0
      %2131 = vadd.xlane.f32.xlu0 %v2130
      %v2132 = vpop.xlane.xlu0 %2131
      %v2133 = vmul.f32 %v2105, %v2072
      %v2134 = vmul.f32 %v2108, %v2072
      %v2135 = vmul.f32 %v2111, %v2072
      %v2136 = vmul.f32 %v2114, %v2072
      %v2137 = vmul.f32 %v2117, %v2072
      %v2138 = vmul.f32 %v2120, %v2072
      %v2139 = vmul.f32 %v2123, %v2072
      %v2140 = vmul.f32 %v2126, %v2072
      %v2141 = vmul.f32 %v2129, %v2072
      %v2142 = vmul.f32 %v2132, %v2072
      %v2143 = vadd.f32 %v2133, 1e-05
      %v2144 = vadd.f32 %v2134, 1e-05
      %v2145 = vadd.f32 %v2135, 1e-05
      %v2146 = vadd.f32 %v2136, 1e-05
      %v2147 = vadd.f32 %v2137, 1e-05
      %v2148 = vadd.f32 %v2138, 1e-05
      %v2149 = vadd.f32 %v2139, 1e-05
      %v2150 = vadd.f32 %v2140, 1e-05
      %v2151 = vadd.f32 %v2141, 1e-05
      %v2152 = vadd.f32 %v2142, 1e-05
      %v2153 = vrsqrt.pop %v2143
      %v2154 = vmul.f32 %v2153, %v2143
      %v2155 = vmul.f32 %v2154, %v2153
      %v2156 = vmul.f32 0.5, %v2155
      %v2157 = vsub.f32 1.5, %v2156
      %v2158 = vmul.f32 %v2153, %v2157
      %vm2159 = vweird.f32 %v2143
      %vm2160 = vweird.f32 %v2153
      %vm2161 = vmor %vm2159, %vm2160
      %v2162 = vsel %vm2161, %v2153, %v2158
      %v2163 = vrsqrt.pop %v2144
      %v2164 = vmul.f32 %v2163, %v2144
      %v2165 = vmul.f32 %v2164, %v2163
      %v2166 = vmul.f32 0.5, %v2165
      %v2167 = vsub.f32 1.5, %v2166
      %v2168 = vmul.f32 %v2163, %v2167
      %vm2169 = vweird.f32 %v2144
      %vm2170 = vweird.f32 %v2163
      %vm2171 = vmor %vm2169, %vm2170
      %v2172 = vsel %vm2171, %v2163, %v2168
      %v2173 = vrsqrt.pop %v2145
      %v2174 = vmul.f32 %v2173, %v2145
      %v2175 = vmul.f32 %v2174, %v2173
      %v2176 = vmul.f32 0.5, %v2175
      %v2177 = vsub.f32 1.5, %v2176
      %v2178 = vmul.f32 %v2173, %v2177
      %vm2179 = vweird.f32 %v2145
      %vm2180 = vweird.f32 %v2173
      %vm2181 = vmor %vm2179, %vm2180
      %v2182 = vsel %vm2181, %v2173, %v2178
      %v2183 = vrsqrt.pop %v2146
      %v2184 = vmul.f32 %v2183, %v2146
      %v2185 = vmul.f32 %v2184, %v2183
      %v2186 = vmul.f32 0.5, %v2185
      %v2187 = vsub.f32 1.5, %v2186
      %v2188 = vmul.f32 %v2183, %v2187
      %vm2189 = vweird.f32 %v2146
      %vm2190 = vweird.f32 %v2183
      %vm2191 = vmor %vm2189, %vm2190
      %v2192 = vsel %vm2191, %v2183, %v2188
      %v2193 = vrsqrt.pop %v2147
      %v2194 = vmul.f32 %v2193, %v2147
      %v2195 = vmul.f32 %v2194, %v2193
      %v2196 = vmul.f32 0.5, %v2195
      %v2197 = vsub.f32 1.5, %v2196
      %v2198 = vmul.f32 %v2193, %v2197
      %vm2199 = vweird.f32 %v2147
      %vm2200 = vweird.f32 %v2193
      %vm2201 = vmor %vm2199, %vm2200
      %v2202 = vsel %vm2201, %v2193, %v2198
      %v2203 = vrsqrt.pop %v2148
      %v2204 = vmul.f32 %v2203, %v2148
      %v2205 = vmul.f32 %v2204, %v2203
      %v2206 = vmul.f32 0.5, %v2205
      %v2207 = vsub.f32 1.5, %v2206
      %v2208 = vmul.f32 %v2203, %v2207
      %vm2209 = vweird.f32 %v2148
      %vm2210 = vweird.f32 %v2203
      %vm2211 = vmor %vm2209, %vm2210
      %v2212 = vsel %vm2211, %v2203, %v2208
      %v2213 = vrsqrt.pop %v2149
      %v2214 = vmul.f32 %v2213, %v2149
      %v2215 = vmul.f32 %v2214, %v2213
      %v2216 = vmul.f32 0.5, %v2215
      %v2217 = vsub.f32 1.5, %v2216
      %v2218 = vmul.f32 %v2213, %v2217
      %vm2219 = vweird.f32 %v2149
      %vm2220 = vweird.f32 %v2213
      %vm2221 = vmor %vm2219, %vm2220
      %v2222 = vsel %vm2221, %v2213, %v2218
      %v2223 = vrsqrt.pop %v2150
      %v2224 = vmul.f32 %v2223, %v2150
      %v2225 = vmul.f32 %v2224, %v2223
      %v2226 = vmul.f32 0.5, %v2225
      %v2227 = vsub.f32 1.5, %v2226
      %v2228 = vmul.f32 %v2223, %v2227
      %vm2229 = vweird.f32 %v2150
      %vm2230 = vweird.f32 %v2223
      %vm2231 = vmor %vm2229, %vm2230
      %v2232 = vsel %vm2231, %v2223, %v2228
      %v2233 = vrsqrt.pop %v2151
      %v2234 = vmul.f32 %v2233, %v2151
      %v2235 = vmul.f32 %v2234, %v2233
      %v2236 = vmul.f32 0.5, %v2235
      %v2237 = vsub.f32 1.5, %v2236
      %v2238 = vmul.f32 %v2233, %v2237
      %vm2239 = vweird.f32 %v2151
      %vm2240 = vweird.f32 %v2233
      %vm2241 = vmor %vm2239, %vm2240
      %v2242 = vsel %vm2241, %v2233, %v2238
      %v2243 = vrsqrt.pop %v2152
      %v2244 = vmul.f32 %v2243, %v2152
      %v2245 = vmul.f32 %v2244, %v2243
      %v2246 = vmul.f32 0.5, %v2245
      %v2247 = vsub.f32 1.5, %v2246
      %v2248 = vmul.f32 %v2243, %v2247
      %vm2249 = vweird.f32 %v2152
      %vm2250 = vweird.f32 %v2243
      %vm2251 = vmor %vm2249, %vm2250
      %v2252 = vsel %vm2251, %v2243, %v2248
      %v2253 = vmul.f32 %v2083, %v2162
      %v2254 = vmul.f32 %v2084, %v2172
      %v2255 = vmul.f32 %v2085, %v2182
      %v2256 = vmul.f32 %v2086, %v2192
      %v2257 = vmul.f32 %v2087, %v2202
      %v2258 = vmul.f32 %v2088, %v2212
      %v2259 = vmul.f32 %v2089, %v2222
      %v2260 = vmul.f32 %v2090, %v2232
      %v2261 = vmul.f32 %v2091, %v2242
      %v2262 = vmul.f32 %v2092, %v2252
      %v2264 = vperm.slane %v2034, 0
      %v2266 = vmul.f32 %v2253, %v2264
      %v2267 = vmul.f32 %v2254, %v2264
      %v2268 = vmul.f32 %v2255, %v2264
      %v2269 = vmul.f32 %v2256, %v2264
      %v2270 = vmul.f32 %v2257, %v2264
      %v2271 = vmul.f32 %v2258, %v2264
      %v2272 = vmul.f32 %v2259, %v2264
      %v2273 = vmul.f32 %v2260, %v2264
      %v2274 = vmul.f32 %v2261, %v2264
      %v2275 = vmul.f32 %v2262, %v2264
      %v2277 = vperm.slane %v2035, 0
      %v2279 = vadd.f32 %v2266, %v2277
      %v2280 = vadd.f32 %v2267, %v2277
      %v2281 = vadd.f32 %v2268, %v2277
      %v2282 = vadd.f32 %v2269, %v2277
      %v2283 = vadd.f32 %v2270, %v2277
      %v2284 = vadd.f32 %v2271, %v2277
      %v2285 = vadd.f32 %v2272, %v2277
      %v2286 = vadd.f32 %v2273, %v2277
      %v2287 = vadd.f32 %v2274, %v2277
      %v2288 = vadd.f32 %v2275, %v2277
      %v2289 = vpack.c.bf16 %v2280, %v2279
      %v2290 = vpack.c.bf16 %v2282, %v2281
      %v2291 = vpack.c.bf16 %v2284, %v2283
      %v2292 = vpack.c.bf16 %v2286, %v2285
      %v2293 = vpack.c.bf16 %v2288, %v2287
      %v2294 = vld [vmem:[%s676] sm:$0xf]
      %v2295 = vld [vmem:[%s676 + $0x4] sm:$0xf]
      %v2296 = vld [vmem:[%s676 + $0x8] sm:$0xf]
      %v2297 = vld [vmem:[%s676 + $0xc] sm:$0xf]
      %v2298 = vld [vmem:[%s679] sm:$0x1]
      %v2300 = vperm.slane %v2298, 0
      %v2306 = vunpack.c.l.b16 %v2294
      %v2307 = vunpack.c.l.b16 %v2295
      %v2308 = vunpack.c.l.b16 %v2296
      %v2309 = vunpack.c.l.b16 %v2297
      %v2310 = vpack.c.b16 %v2307, %v2306
      %v2311 = vpack.c.b16 %v2309, %v2308
      %v2315 = vsel %vm760, %v2289, 0
      %v2318 = vsel %vm760, %v2290, 0
      %v2321 = vsel %vm760, %v2291, 0
      %v2324 = vsel %vm760, %v2292, 0
      %v2327 = vsel %vm760, %v2293, 0
      %2329 = vmatpush.bf16.msra.mxu0 0
      %2330 = vmatpush.bf16.msra.mxu0 0
      %2331 = vmatpush.bf16.msra.mxu0 0
      %2332 = vmatpush.bf16.msra.mxu0 0
      %2333 = vmatpush.bf16.msra.mxu0 0
      %2334 = vmatpush.bf16.msra.mxu0 0
      %2335 = vmatpush.bf16.msra.mxu0 %v2311
      %2336 = vmatpush.bf16.msra.mxu0 %v2310
      %2337 = vmatmul.bf16.gmra.mxu0 %v2315
      %v2338 = vpop.f32.mrf.mxu0
      %v2339 = vadd.f32 %v2300, %v2338
      %v2340 = vpop.f32.mrf.mxu0
      %v2341 = vadd.f32 %v2300, %v2340
      %2342 = vmatmul.bf16.gmra.mxu0 %v2318
      %v2343 = vpop.f32.mrf.mxu0
      %v2344 = vadd.f32 %v2300, %v2343
      %v2345 = vpop.f32.mrf.mxu0
      %v2346 = vadd.f32 %v2300, %v2345
      %2347 = vmatmul.bf16.gmra.mxu0 %v2321
      %v2348 = vpop.f32.mrf.mxu0
      %v2349 = vadd.f32 %v2300, %v2348
      %v2350 = vpop.f32.mrf.mxu0
      %v2351 = vadd.f32 %v2300, %v2350
      %2352 = vmatmul.bf16.gmra.mxu0 %v2324
      %v2353 = vpop.f32.mrf.mxu0
      %v2354 = vadd.f32 %v2300, %v2353
      %v2355 = vpop.f32.mrf.mxu0
      %v2356 = vadd.f32 %v2300, %v2355
      %2357 = vmatmul.bf16.gmra.mxu0 %v2327
      %v2358 = vpop.f32.mrf.mxu0
      %v2359 = vadd.f32 %v2300, %v2358
      %v2360 = vpop.f32.mrf.mxu0
      %v2361 = vadd.f32 %v2300, %v2360
      %2362 = vdwg.mxu0
      %v2363 = vmul.f32 %v2339, %v2339
      %v2364 = vmul.f32 %v2341, %v2341
      %v2365 = vmul.f32 %v2344, %v2344
      %v2366 = vmul.f32 %v2346, %v2346
      %v2367 = vmul.f32 %v2349, %v2349
      %v2368 = vmul.f32 %v2351, %v2351
      %v2369 = vmul.f32 %v2354, %v2354
      %v2370 = vmul.f32 %v2356, %v2356
      %v2371 = vmul.f32 %v2359, %v2359
      %v2372 = vmul.f32 %v2361, %v2361
      %v2373 = vmul.f32 %v2339, %v2363
      %v2374 = vmul.f32 %v2341, %v2364
      %v2375 = vmul.f32 %v2344, %v2365
      %v2376 = vmul.f32 %v2346, %v2366
      %v2377 = vmul.f32 %v2349, %v2367
      %v2378 = vmul.f32 %v2351, %v2368
      %v2379 = vmul.f32 %v2354, %v2369
      %v2380 = vmul.f32 %v2356, %v2370
      %v2381 = vmul.f32 %v2359, %v2371
      %v2382 = vmul.f32 %v2361, %v2372
      %v2383 = vmul.f32 %v2373, 0.044715
      %v2384 = vmul.f32 %v2374, 0.044715
      %v2385 = vmul.f32 %v2375, 0.044715
      %v2386 = vmul.f32 %v2376, 0.044715
      %v2387 = vmul.f32 %v2377, 0.044715
      %v2388 = vmul.f32 %v2378, 0.044715
      %v2389 = vmul.f32 %v2379, 0.044715
      %v2390 = vmul.f32 %v2380, 0.044715
      %v2391 = vmul.f32 %v2381, 0.044715
      %v2392 = vmul.f32 %v2382, 0.044715
      %v2393 = vadd.f32 %v2339, %v2383
      %v2394 = vadd.f32 %v2341, %v2384
      %v2395 = vadd.f32 %v2344, %v2385
      %v2396 = vadd.f32 %v2346, %v2386
      %v2397 = vadd.f32 %v2349, %v2387
      %v2398 = vadd.f32 %v2351, %v2388
      %v2399 = vadd.f32 %v2354, %v2389
      %v2400 = vadd.f32 %v2356, %v2390
      %v2401 = vadd.f32 %v2359, %v2391
      %v2402 = vadd.f32 %v2361, %v2392
      %v2403 = vmul.f32 %v2393, 0.7978846
      %v2404 = vmul.f32 %v2394, 0.7978846
      %v2405 = vmul.f32 %v2395, 0.7978846
      %v2406 = vmul.f32 %v2396, 0.7978846
      %v2407 = vmul.f32 %v2397, 0.7978846
      %v2408 = vmul.f32 %v2398, 0.7978846
      %v2409 = vmul.f32 %v2399, 0.7978846
      %v2410 = vmul.f32 %v2400, 0.7978846
      %v2411 = vmul.f32 %v2401, 0.7978846
      %v2412 = vmul.f32 %v2402, 0.7978846
      %v2413 = vtanh.pop %v2403
      %v2414 = vtanh.pop %v2404
      %v2415 = vtanh.pop %v2405
      %v2416 = vtanh.pop %v2406
      %v2417 = vtanh.pop %v2407
      %v2418 = vtanh.pop %v2408
      %v2419 = vtanh.pop %v2409
      %v2420 = vtanh.pop %v2410
      %v2421 = vtanh.pop %v2411
      %v2422 = vtanh.pop %v2412
      %v2423 = vadd.f32 %v2413, 1.0
      %v2424 = vadd.f32 %v2414, 1.0
      %v2425 = vadd.f32 %v2415, 1.0
      %v2426 = vadd.f32 %v2416, 1.0
      %v2427 = vadd.f32 %v2417, 1.0
      %v2428 = vadd.f32 %v2418, 1.0
      %v2429 = vadd.f32 %v2419, 1.0
      %v2430 = vadd.f32 %v2420, 1.0
      %v2431 = vadd.f32 %v2421, 1.0
      %v2432 = vadd.f32 %v2422, 1.0
      %v2433 = vmul.f32 %v2423, 0.5
      %v2434 = vmul.f32 %v2424, 0.5
      %v2435 = vmul.f32 %v2425, 0.5
      %v2436 = vmul.f32 %v2426, 0.5
      %v2437 = vmul.f32 %v2427, 0.5
      %v2438 = vmul.f32 %v2428, 0.5
      %v2439 = vmul.f32 %v2429, 0.5
      %v2440 = vmul.f32 %v2430, 0.5
      %v2441 = vmul.f32 %v2431, 0.5
      %v2442 = vmul.f32 %v2432, 0.5
      %v2443 = vmul.f32 %v2339, %v2433
      %v2444 = vmul.f32 %v2341, %v2434
      %v2445 = vmul.f32 %v2344, %v2435
      %v2446 = vmul.f32 %v2346, %v2436
      %v2447 = vmul.f32 %v2349, %v2437
      %v2448 = vmul.f32 %v2351, %v2438
      %v2449 = vmul.f32 %v2354, %v2439
      %v2450 = vmul.f32 %v2356, %v2440
      %v2451 = vmul.f32 %v2359, %v2441
      %v2452 = vmul.f32 %v2361, %v2442
      %v2453 = vpack.c.bf16 %v2444, %v2443
      %v2454 = vpack.c.bf16 %v2446, %v2445
      %v2455 = vpack.c.bf16 %v2448, %v2447
      %v2456 = vpack.c.bf16 %v2450, %v2449
      %v2457 = vpack.c.bf16 %v2452, %v2451
      %v2458 = vld [vmem:[%s684] sm:$0xf]
      %v2459 = vld [vmem:[%s684 + $0x4] sm:$0xf]
      %v2460 = vld [vmem:[%s684 + $0x8] sm:$0xf]
      %v2461 = vld [vmem:[%s684 + $0xc] sm:$0xf]
      %v2462 = vld [vmem:[%s684 + $0x10] sm:$0xf]
      %v2463 = vld [vmem:[%s684 + $0x14] sm:$0xf]
      %v2464 = vld [vmem:[%s684 + $0x18] sm:$0xf]
      %v2465 = vld [vmem:[%s684 + $0x1c] sm:$0xf]
      %v2466 = vld [vmem:[%s687] sm:$0x1]
      %v2468 = vperm.slane %v2466, 0
      %v2478 = vunpack.c.l.b16 %v2458
      %v2479 = vunpack.c.l.b16 %v2459
      %v2480 = vunpack.c.l.b16 %v2460
      %v2481 = vunpack.c.l.b16 %v2461
      %v2482 = vunpack.c.l.b16 %v2462
      %v2483 = vunpack.c.l.b16 %v2463
      %v2484 = vunpack.c.l.b16 %v2464
      %v2485 = vunpack.c.l.b16 %v2465
      %v2486 = vpack.c.b16 %v2479, %v2478
      %v2487 = vpack.c.b16 %v2481, %v2480
      %v2488 = vpack.c.b16 %v2483, %v2482
      %v2489 = vpack.c.b16 %v2485, %v2484
      %vm2494 = vcmask 523264
      %v2496 = vsel %vm2494, %v2453, 0
      %v2499 = vsel %vm2494, %v2454, 0
      %v2502 = vsel %vm2494, %v2455, 0
      %v2505 = vsel %vm2494, %v2456, 0
      %v2508 = vsel %vm2494, %v2457, 0
      %2510 = vmatpush.bf16.msra.mxu0 0
      %2511 = vmatpush.bf16.msra.mxu0 0
      %2512 = vmatpush.bf16.msra.mxu0 0
      %2513 = vmatpush.bf16.msra.mxu0 0
      %2514 = vmatpush.bf16.msra.mxu0 %v2489
      %2515 = vmatpush.bf16.msra.mxu0 %v2488
      %2516 = vmatpush.bf16.msra.mxu0 %v2487
      %2517 = vmatpush.bf16.msra.mxu0 %v2486
      %2518 = vmatmul.bf16.gmra.mxu0 %v2496
      %v2519 = vpop.f32.mrf.mxu0
      %v2520 = vadd.f32 %v2468, %v2519
      %v2521 = vpop.f32.mrf.mxu0
      %v2522 = vadd.f32 %v2468, %v2521
      %2523 = vmatmul.bf16.gmra.mxu0 %v2499
      %v2524 = vpop.f32.mrf.mxu0
      %v2525 = vadd.f32 %v2468, %v2524
      %v2526 = vpop.f32.mrf.mxu0
      %v2527 = vadd.f32 %v2468, %v2526
      %2528 = vmatmul.bf16.gmra.mxu0 %v2502
      %v2529 = vpop.f32.mrf.mxu0
      %v2530 = vadd.f32 %v2468, %v2529
      %v2531 = vpop.f32.mrf.mxu0
      %v2532 = vadd.f32 %v2468, %v2531
      %2533 = vmatmul.bf16.gmra.mxu0 %v2505
      %v2534 = vpop.f32.mrf.mxu0
      %v2535 = vadd.f32 %v2468, %v2534
      %v2536 = vpop.f32.mrf.mxu0
      %v2537 = vadd.f32 %v2468, %v2536
      %2538 = vmatmul.bf16.gmra.mxu0 %v2508
      %v2539 = vpop.f32.mrf.mxu0
      %v2540 = vadd.f32 %v2468, %v2539
      %v2541 = vpop.f32.mrf.mxu0
      %v2542 = vadd.f32 %v2468, %v2541
      %2543 = vdwg.mxu0
      %v2544 = vadd.f32 %v2520, %v2279
      %v2545 = vadd.f32 %v2522, %v2280
      %v2546 = vadd.f32 %v2525, %v2281
      %v2547 = vadd.f32 %v2527, %v2282
      %v2548 = vadd.f32 %v2530, %v2283
      %v2549 = vadd.f32 %v2532, %v2284
      %v2550 = vadd.f32 %v2535, %v2285
      %v2551 = vadd.f32 %v2537, %v2286
      %v2552 = vadd.f32 %v2540, %v2287
      %v2553 = vadd.f32 %v2542, %v2288
      %v2554 = vld [vmem:[%s690] sm:$0x1]
      %v2555 = vld [vmem:[%s693] sm:$0x1]
      %v2556 = vsel %vm760, %v2544, 0.0
      %2557 = vadd.xlane.f32.xlu0 %v2556
      %v2558 = vpop.xlane.xlu0 %2557
      %v2559 = vsel %vm760, %v2545, 0.0
      %2560 = vadd.xlane.f32.xlu0 %v2559
      %v2561 = vpop.xlane.xlu0 %2560
      %v2562 = vsel %vm760, %v2546, 0.0
      %2563 = vadd.xlane.f32.xlu0 %v2562
      %v2564 = vpop.xlane.xlu0 %2563
      %v2565 = vsel %vm760, %v2547, 0.0
      %2566 = vadd.xlane.f32.xlu0 %v2565
      %v2567 = vpop.xlane.xlu0 %2566
      %v2568 = vsel %vm760, %v2548, 0.0
      %2569 = vadd.xlane.f32.xlu0 %v2568
      %v2570 = vpop.xlane.xlu0 %2569
      %v2571 = vsel %vm760, %v2549, 0.0
      %2572 = vadd.xlane.f32.xlu0 %v2571
      %v2573 = vpop.xlane.xlu0 %2572
      %v2574 = vsel %vm760, %v2550, 0.0
      %2575 = vadd.xlane.f32.xlu0 %v2574
      %v2576 = vpop.xlane.xlu0 %2575
      %v2577 = vsel %vm760, %v2551, 0.0
      %2578 = vadd.xlane.f32.xlu0 %v2577
      %v2579 = vpop.xlane.xlu0 %2578
      %v2580 = vsel %vm760, %v2552, 0.0
      %2581 = vadd.xlane.f32.xlu0 %v2580
      %v2582 = vpop.xlane.xlu0 %2581
      %v2583 = vsel %vm760, %v2553, 0.0
      %2584 = vadd.xlane.f32.xlu0 %v2583
      %v2585 = vpop.xlane.xlu0 %2584
      %v2586 = vmul.f32 %v2558, %v2072
      %v2587 = vmul.f32 %v2561, %v2072
      %v2588 = vmul.f32 %v2564, %v2072
      %v2589 = vmul.f32 %v2567, %v2072
      %v2590 = vmul.f32 %v2570, %v2072
      %v2591 = vmul.f32 %v2573, %v2072
      %v2592 = vmul.f32 %v2576, %v2072
      %v2593 = vmul.f32 %v2579, %v2072
      %v2594 = vmul.f32 %v2582, %v2072
      %v2595 = vmul.f32 %v2585, %v2072
      %v2596 = vsub.f32 %v2544, %v2586
      %v2597 = vsub.f32 %v2545, %v2587
      %v2598 = vsub.f32 %v2546, %v2588
      %v2599 = vsub.f32 %v2547, %v2589
      %v2600 = vsub.f32 %v2548, %v2590
      %v2601 = vsub.f32 %v2549, %v2591
      %v2602 = vsub.f32 %v2550, %v2592
      %v2603 = vsub.f32 %v2551, %v2593
      %v2604 = vsub.f32 %v2552, %v2594
      %v2605 = vsub.f32 %v2553, %v2595
      %v2606 = vmul.f32 %v2596, %v2596
      %v2607 = vmul.f32 %v2597, %v2597
      %v2608 = vmul.f32 %v2598, %v2598
      %v2609 = vmul.f32 %v2599, %v2599
      %v2610 = vmul.f32 %v2600, %v2600
      %v2611 = vmul.f32 %v2601, %v2601
      %v2612 = vmul.f32 %v2602, %v2602
      %v2613 = vmul.f32 %v2603, %v2603
      %v2614 = vmul.f32 %v2604, %v2604
      %v2615 = vmul.f32 %v2605, %v2605
      %v2616 = vsel %vm760, %v2606, 0.0
      %2617 = vadd.xlane.f32.xlu0 %v2616
      %v2618 = vpop.xlane.xlu0 %2617
      %v2619 = vsel %vm760, %v2607, 0.0
      %2620 = vadd.xlane.f32.xlu0 %v2619
      %v2621 = vpop.xlane.xlu0 %2620
      %v2622 = vsel %vm760, %v2608, 0.0
      %2623 = vadd.xlane.f32.xlu0 %v2622
      %v2624 = vpop.xlane.xlu0 %2623
      %v2625 = vsel %vm760, %v2609, 0.0
      %2626 = vadd.xlane.f32.xlu0 %v2625
      %v2627 = vpop.xlane.xlu0 %2626
      %v2628 = vsel %vm760, %v2610, 0.0
      %2629 = vadd.xlane.f32.xlu0 %v2628
      %v2630 = vpop.xlane.xlu0 %2629
      %v2631 = vsel %vm760, %v2611, 0.0
      %2632 = vadd.xlane.f32.xlu0 %v2631
      %v2633 = vpop.xlane.xlu0 %2632
      %v2634 = vsel %vm760, %v2612, 0.0
      %2635 = vadd.xlane.f32.xlu0 %v2634
      %v2636 = vpop.xlane.xlu0 %2635
      %v2637 = vsel %vm760, %v2613, 0.0
      %2638 = vadd.xlane.f32.xlu0 %v2637
      %v2639 = vpop.xlane.xlu0 %2638
      %v2640 = vsel %vm760, %v2614, 0.0
      %2641 = vadd.xlane.f32.xlu0 %v2640
      %v2642 = vpop.xlane.xlu0 %2641
      %v2643 = vsel %vm760, %v2615, 0.0
      %2644 = vadd.xlane.f32.xlu0 %v2643
      %v2645 = vpop.xlane.xlu0 %2644
      %v2646 = vmul.f32 %v2618, %v2072
      %v2647 = vmul.f32 %v2621, %v2072
      %v2648 = vmul.f32 %v2624, %v2072
      %v2649 = vmul.f32 %v2627, %v2072
      %v2650 = vmul.f32 %v2630, %v2072
      %v2651 = vmul.f32 %v2633, %v2072
      %v2652 = vmul.f32 %v2636, %v2072
      %v2653 = vmul.f32 %v2639, %v2072
      %v2654 = vmul.f32 %v2642, %v2072
      %v2655 = vmul.f32 %v2645, %v2072
      %v2656 = vadd.f32 %v2646, 1e-05
      %v2657 = vadd.f32 %v2647, 1e-05
      %v2658 = vadd.f32 %v2648, 1e-05
      %v2659 = vadd.f32 %v2649, 1e-05
      %v2660 = vadd.f32 %v2650, 1e-05
      %v2661 = vadd.f32 %v2651, 1e-05
      %v2662 = vadd.f32 %v2652, 1e-05
      %v2663 = vadd.f32 %v2653, 1e-05
      %v2664 = vadd.f32 %v2654, 1e-05
      %v2665 = vadd.f32 %v2655, 1e-05
      %v2666 = vrsqrt.pop %v2656
      %v2667 = vmul.f32 %v2666, %v2656
      %v2668 = vmul.f32 %v2667, %v2666
      %v2669 = vmul.f32 0.5, %v2668
      %v2670 = vsub.f32 1.5, %v2669
      %v2671 = vmul.f32 %v2666, %v2670
      %vm2672 = vweird.f32 %v2656
      %vm2673 = vweird.f32 %v2666
      %vm2674 = vmor %vm2672, %vm2673
      %v2675 = vsel %vm2674, %v2666, %v2671
      %v2676 = vrsqrt.pop %v2657
      %v2677 = vmul.f32 %v2676, %v2657
      %v2678 = vmul.f32 %v2677, %v2676
      %v2679 = vmul.f32 0.5, %v2678
      %v2680 = vsub.f32 1.5, %v2679
      %v2681 = vmul.f32 %v2676, %v2680
      %vm2682 = vweird.f32 %v2657
      %vm2683 = vweird.f32 %v2676
      %vm2684 = vmor %vm2682, %vm2683
      %v2685 = vsel %vm2684, %v2676, %v2681
      %v2686 = vrsqrt.pop %v2658
      %v2687 = vmul.f32 %v2686, %v2658
      %v2688 = vmul.f32 %v2687, %v2686
      %v2689 = vmul.f32 0.5, %v2688
      %v2690 = vsub.f32 1.5, %v2689
      %v2691 = vmul.f32 %v2686, %v2690
      %vm2692 = vweird.f32 %v2658
      %vm2693 = vweird.f32 %v2686
      %vm2694 = vmor %vm2692, %vm2693
      %v2695 = vsel %vm2694, %v2686, %v2691
      %v2696 = vrsqrt.pop %v2659
      %v2697 = vmul.f32 %v2696, %v2659
      %v2698 = vmul.f32 %v2697, %v2696
      %v2699 = vmul.f32 0.5, %v2698
      %v2700 = vsub.f32 1.5, %v2699
      %v2701 = vmul.f32 %v2696, %v2700
      %vm2702 = vweird.f32 %v2659
      %vm2703 = vweird.f32 %v2696
      %vm2704 = vmor %vm2702, %vm2703
      %v2705 = vsel %vm2704, %v2696, %v2701
      %v2706 = vrsqrt.pop %v2660
      %v2707 = vmul.f32 %v2706, %v2660
      %v2708 = vmul.f32 %v2707, %v2706
      %v2709 = vmul.f32 0.5, %v2708
      %v2710 = vsub.f32 1.5, %v2709
      %v2711 = vmul.f32 %v2706, %v2710
      %vm2712 = vweird.f32 %v2660
      %vm2713 = vweird.f32 %v2706
      %vm2714 = vmor %vm2712, %vm2713
      %v2715 = vsel %vm2714, %v2706, %v2711
      %v2716 = vrsqrt.pop %v2661
      %v2717 = vmul.f32 %v2716, %v2661
      %v2718 = vmul.f32 %v2717, %v2716
      %v2719 = vmul.f32 0.5, %v2718
      %v2720 = vsub.f32 1.5, %v2719
      %v2721 = vmul.f32 %v2716, %v2720
      %vm2722 = vweird.f32 %v2661
      %vm2723 = vweird.f32 %v2716
      %vm2724 = vmor %vm2722, %vm2723
      %v2725 = vsel %vm2724, %v2716, %v2721
      %v2726 = vrsqrt.pop %v2662
      %v2727 = vmul.f32 %v2726, %v2662
      %v2728 = vmul.f32 %v2727, %v2726
      %v2729 = vmul.f32 0.5, %v2728
      %v2730 = vsub.f32 1.5, %v2729
      %v2731 = vmul.f32 %v2726, %v2730
      %vm2732 = vweird.f32 %v2662
      %vm2733 = vweird.f32 %v2726
      %vm2734 = vmor %vm2732, %vm2733
      %v2735 = vsel %vm2734, %v2726, %v2731
      %v2736 = vrsqrt.pop %v2663
      %v2737 = vmul.f32 %v2736, %v2663
      %v2738 = vmul.f32 %v2737, %v2736
      %v2739 = vmul.f32 0.5, %v2738
      %v2740 = vsub.f32 1.5, %v2739
      %v2741 = vmul.f32 %v2736, %v2740
      %vm2742 = vweird.f32 %v2663
      %vm2743 = vweird.f32 %v2736
      %vm2744 = vmor %vm2742, %vm2743
      %v2745 = vsel %vm2744, %v2736, %v2741
      %v2746 = vrsqrt.pop %v2664
      %v2747 = vmul.f32 %v2746, %v2664
      %v2748 = vmul.f32 %v2747, %v2746
      %v2749 = vmul.f32 0.5, %v2748
      %v2750 = vsub.f32 1.5, %v2749
      %v2751 = vmul.f32 %v2746, %v2750
      %vm2752 = vweird.f32 %v2664
      %vm2753 = vweird.f32 %v2746
      %vm2754 = vmor %vm2752, %vm2753
      %v2755 = vsel %vm2754, %v2746, %v2751
      %v2756 = vrsqrt.pop %v2665
      %v2757 = vmul.f32 %v2756, %v2665
      %v2758 = vmul.f32 %v2757, %v2756
      %v2759 = vmul.f32 0.5, %v2758
      %v2760 = vsub.f32 1.5, %v2759
      %v2761 = vmul.f32 %v2756, %v2760
      %vm2762 = vweird.f32 %v2665
      %vm2763 = vweird.f32 %v2756
      %vm2764 = vmor %vm2762, %vm2763
      %v2765 = vsel %vm2764, %v2756, %v2761
      %v2766 = vmul.f32 %v2596, %v2675
      %v2767 = vmul.f32 %v2597, %v2685
      %v2768 = vmul.f32 %v2598, %v2695
      %v2769 = vmul.f32 %v2599, %v2705
      %v2770 = vmul.f32 %v2600, %v2715
      %v2771 = vmul.f32 %v2601, %v2725
      %v2772 = vmul.f32 %v2602, %v2735
      %v2773 = vmul.f32 %v2603, %v2745
      %v2774 = vmul.f32 %v2604, %v2755
      %v2775 = vmul.f32 %v2605, %v2765
      %v2777 = vperm.slane %v2554, 0
      %v2779 = vmul.f32 %v2766, %v2777
      %v2780 = vmul.f32 %v2767, %v2777
      %v2781 = vmul.f32 %v2768, %v2777
      %v2782 = vmul.f32 %v2769, %v2777
      %v2783 = vmul.f32 %v2770, %v2777
      %v2784 = vmul.f32 %v2771, %v2777
      %v2785 = vmul.f32 %v2772, %v2777
      %v2786 = vmul.f32 %v2773, %v2777
      %v2787 = vmul.f32 %v2774, %v2777
      %v2788 = vmul.f32 %v2775, %v2777
      %v2790 = vperm.slane %v2555, 0
      %v2792 = vadd.f32 %v2779, %v2790
      %v2793 = vadd.f32 %v2780, %v2790
      %v2794 = vadd.f32 %v2781, %v2790
      %v2795 = vadd.f32 %v2782, %v2790
      %v2796 = vadd.f32 %v2783, %v2790
      %v2797 = vadd.f32 %v2784, %v2790
      %v2798 = vadd.f32 %v2785, %v2790
      %v2799 = vadd.f32 %v2786, %v2790
      %v2800 = vadd.f32 %v2787, %v2790
      %v2801 = vadd.f32 %v2788, %v2790
      %2802 = vst.msk [vmem:[%s698] sm:$0xff] %vm760, %v2792
      %2803 = vst.msk [vmem:[%s698 + $0x8] sm:$0xff] %vm760, %v2793
      %2804 = vst.msk [vmem:[%s698 + $0x10] sm:$0xff] %vm760, %v2794
      %2805 = vst.msk [vmem:[%s698 + $0x18] sm:$0xff] %vm760, %v2795
      %2806 = vst.msk [vmem:[%s698 + $0x20] sm:$0xff] %vm760, %v2796
      %2807 = vst.msk [vmem:[%s698 + $0x28] sm:$0xff] %vm760, %v2797
      %2808 = vst.msk [vmem:[%s698 + $0x30] sm:$0xff] %vm760, %v2798
      %2809 = vst.msk [vmem:[%s698 + $0x38] sm:$0xff] %vm760, %v2799
      %2810 = vst.msk [vmem:[%s698 + $0x40] sm:$0xff] %vm760, %v2800
      %2811 = vst.msk [vmem:[%s698 + $0x48] sm:$0xff] %vm760, %v2801
      %p2812 = scmp.lt.s32.totalorder %s30, 1
      %s2813 = scalar_select %p2812, %s30, 1
      %s2814 = smul.addr %s2813, 10
      %s2815 = smul.addr %s2814, 8
      %s2816 = scalar_lea.vmem %s15, %s2815
      // Predicated region
      $region85: #{speech_recognition_forward.3} parent=79 // pred_check
        %p2817 = pneg %p436
      $region86: #{speech_recognition_forward.3} parent=79 // pred_check_branch
        %2819 = sbr.rel (%p2817) target = $region88
      $region87: #{speech_recognition_forward.3} parent=79 // pred_region
        _
      $region88: #{speech_recognition_forward.3} parent=79 // pred_fallthru
        _
    $region80: #{speech_recognition_forward.3} parent=5 // pred_fallthru
      _
    %p2820 = scmp.le.s32.totalorder 2, %s21
    // Predicated region
    $region89: #{speech_recognition_forward.3} parent=5 // pred_check
      %p2821 = pneg %p2820
    $region90: #{speech_recognition_forward.3} parent=5 // pred_check_branch
      %2823 = sbr.rel (%p2821) target = $region92
    $region91: #{speech_recognition_forward.3} parent=5 // pred_region
      %s2824 = ssub.s32 %s21, 2
      // Predicated region
      $region93: #{speech_recognition_forward.3} parent=91 // pred_check
        %p2825 = pneg %p442
      $region94: #{speech_recognition_forward.3} parent=91 // pred_check_branch
        %2827 = sbr.rel (%p2825) target = $region96
      $region95: #{speech_recognition_forward.3} parent=91 // pred_region
        %p2828 = scmp.lt.s32.totalorder %s32, 1
        %s2829 = scalar_select %p2828, %s32, 1
        %s2830 = smul.addr %s2829, 10
        %s2831 = smul.addr %s2830, 8
        %s2832 = scalar_lea.vmem %s15, %s2831
      $region96: #{speech_recognition_forward.3} parent=91 // pred_fallthru
        _
    $region92: #{speech_recognition_forward.3} parent=5 // pred_fallthru
      _
  $region6: #{speech_recognition_forward.3} parent=0 // loop_footer
    %s25 = sadd.s32 1, %s21
  $region7: #{speech_recognition_forward.3} parent=0 // loop_footer_branch
    %20 = sbr.rel target = $region3
  $region8: #{speech_recognition_forward.3} parent=0 // loop_exit
    _

// kernel: speech_recognition_forward.2
$region0: #{speech_recognition_forward.2}
  #allocation0 [shape = 'u32[]', space=smem, size = 0x4, offset = 0x4, fixed_abs, tag = 'smem constant byte address 0x4 - core index']
  #allocation1 [shape = 'u32[72,128]{1,0:T(1,128)}', space=vmem, size = 0x9000, scoped, tag = 'internal scratch']
  %s0 = inlined_call_operand.vmem [shape: f32[2,160,16], index: 0, kind: input, shape index: {}]
  %s1 = inlined_call_operand.vmem [shape: bf16[16,32], index: 1, kind: input, shape index: {}]
  %s2 = inlined_call_operand.vmem [shape: f32[1,32], index: 2, kind: input, shape index: {}]
  %s3 = inlined_call_operand.vmem [shape: f32[1,32], index: 3, kind: input, shape index: {}]
  %s4 = inlined_call_operand.vmem [shape: f32[1,32], index: 4, kind: input, shape index: {}]
  %s5 = inlined_call_operand.vmem [shape: bf16[3,32,32], index: 5, kind: input, shape index: {}]
  %s6 = inlined_call_operand.vmem [shape: f32[1,32], index: 6, kind: input, shape index: {}]
  %s7 = inlined_call_operand.vmem [shape: f32[1,32], index: 7, kind: input, shape index: {}]
  %s8 = inlined_call_operand.vmem [shape: f32[1,32], index: 8, kind: input, shape index: {}]
  %s9 = inlined_call_operand.vmem [shape: f32[1,32], index: 9, kind: input, shape index: {}]
  %s10 = inlined_call_operand.vmem [shape: f32[1,32], index: 10, kind: input, shape index: {}]
  %s11 = inlined_call_operand.vmem [shape: bf16[32,32], index: 11, kind: input, shape index: {}]
  %s12 = inlined_call_operand.vmem [shape: f32[1,32], index: 12, kind: input, shape index: {}]
  %s13 = inlined_call_operand.vmem [shape: bf16[3,32,32], index: 13, kind: input, shape index: {}]
  %s14 = inlined_call_operand.vmem [shape: f32[1,32], index: 14, kind: input, shape index: {}]
  %s15 = inlined_call_operand.vmem [shape: f32[1,32], index: 15, kind: input, shape index: {}]
  %s16 = inlined_call_operand.vmem [shape: f32[1,32], index: 16, kind: input, shape index: {}]
  %s17 = inlined_call_operand.vmem [shape: f32[80,1], index: 17, kind: input, shape index: {}]
  %s18 = inlined_call_operand.vmem [shape: f32[2,80,32], index: 18, kind: output, shape index: {}]
  %s19 = sld [smem:[#allocation0]]
  $region105: #{speech_recognition_forward.2} parent=0
    _
  %s21 = ssub.s32 1, %s19
  %s22 = scalar_select 0, %s21, %s19
  loop: start=0, step=1, limit=4
  $region2: #{speech_recognition_forward.2} parent=0 // loop_pre_header
    _
  $region3: #{speech_recognition_forward.2} parent=0 // loop_header
    %s24 = sphi 0, %s28
    %p25 = scmp.ge.s32.totalorder %s24, 4
    %s34 = sphi 0, %s36
    %s37 = sphi 0, %s34
    %s38 = sphi 0, %s37
    %s54 = sphi 0, %s38
    %s58 = sphi 0, %s58
    %s60 = sphi 0, %s58
    %s61 = sphi 0, %s60
    %s75 = sphi 0, %s61
    %s79 = sphi 0, %s79
    %s81 = sphi 0, %s79
    %s82 = sphi 0, %s81
    %s96 = sphi 0, %s82
    %s100 = sphi 0, %s100
    %s102 = sphi 0, %s100
    %s103 = sphi 0, %s102
    %s117 = sphi 0, %s103
    %s121 = sphi 0, %s121
    %s123 = sphi 0, %s121
    %s124 = sphi 0, %s123
    %s138 = sphi 0, %s124
    %s142 = sphi 0, %s142
    %s144 = sphi 0, %s142
    %s145 = sphi 0, %s144
    %s159 = sphi 0, %s145
    %s163 = sphi 0, %s163
    %s165 = sphi 0, %s163
    %s166 = sphi 0, %s165
    %s180 = sphi 0, %s166
    %s184 = sphi 0, %s184
    %s186 = sphi 0, %s184
    %s187 = sphi 0, %s186
    %s201 = sphi 0, %s187
    %s205 = sphi 0, %s205
    %s207 = sphi 0, %s205
    %s208 = sphi 0, %s207
    %s222 = sphi 0, %s208
    %s226 = sphi 0, %s226
    %s228 = sphi 0, %s226
    %s229 = sphi 0, %s228
    %s243 = sphi 0, %s229
    %s247 = sphi 0, %s247
    %s249 = sphi 0, %s247
    %s250 = sphi 0, %s249
    %s264 = sphi 0, %s250
    %s268 = sphi 0, %s268
    %s270 = sphi 0, %s268
    %s271 = sphi 0, %s270
    %s285 = sphi 0, %s271
    %s289 = sphi 0, %s289
    %s291 = sphi 0, %s289
    %s292 = sphi 0, %s291
    %s306 = sphi 0, %s292
    %s310 = sphi 0, %s310
    %s312 = sphi 0, %s310
    %s313 = sphi 0, %s312
    %s327 = sphi 0, %s313
    %s331 = sphi 0, %s331
    %s333 = sphi 0, %s331
    %s334 = sphi 0, %s333
    %s348 = sphi 0, %s334
    %s352 = sphi 0, %s352
    %s354 = sphi 0, %s352
    %s355 = sphi 0, %s354
    %s369 = sphi 0, %s355
    %s373 = sphi 0, %s373
    %s375 = sphi 0, %s373
    %s376 = sphi 0, %s375
    %s390 = sphi 0, %s376
    %s394 = sphi 0, %s394
    %s396 = sphi 0, %s394
    %s397 = sphi 0, %s396
    %s411 = sphi 0, %s397
    %s417 = sphi 0, %s419
    %s420 = sphi 0, %s417
    %s421 = sphi 0, %s420
    %s437 = sphi 0, %s421
  $region4: #{speech_recognition_forward.2} parent=0 // loop_header_branch
    %27 = sbr.rel (%p25) target = $region8
  $region5: #{speech_recognition_forward.2} parent=0 // loop_body
    %s29 = ssub.s32 %s24, 1
    %s30 = ssub.s32 %s24, 2
    %s31 = sadd.s32 %s24, 1
    %s32 = ssub.s32 %s24, %s31
    %p33 = scmp.eq.s32.totalorder %s32, 0
    %s35 = sadd.s32 %s34, 1
    %s36 = scalar_select %p33, %s34, %s35
    %p39 = pneg %p33
    %p40 = scmp.eq.s32.totalorder %s24, 1
    %p41 = por %p39, %p40
    %p42 = scmp.ne.s32.totalorder %s34, %s37
    %p43 = scmp.eq.s32.totalorder %s24, 0
    %p44 = por %p42, %p43
    %p45 = scmp.ne.s32.totalorder %s34, %s37
    %p46 = scmp.eq.s32.totalorder %s29, 1
    %p47 = por %p45, %p46
    %p48 = scmp.ne.s32.totalorder %s37, %s38
    %p49 = scmp.eq.s32.totalorder %s29, 0
    %p50 = por %p48, %p49
    %p51 = scmp.ne.s32.totalorder %s37, %s38
    %p52 = scmp.eq.s32.totalorder %s30, 1
    %p53 = por %p51, %p52
    %p55 = scmp.ne.s32.totalorder %s38, %s54
    %p56 = scmp.eq.s32.totalorder %s30, 0
    %p57 = por %p55, %p56
    %s59 = sadd.s32 %s58, 1
    %p62 = scmp.eq.s32.totalorder %s24, 1
    %p63 = scmp.ne.s32.totalorder %s58, %s60
    %p64 = scmp.eq.s32.totalorder %s24, 0
    %p65 = por %p63, %p64
    %p66 = scmp.ne.s32.totalorder %s58, %s60
    %p67 = scmp.eq.s32.totalorder %s29, 1
    %p68 = por %p66, %p67
    %p69 = scmp.ne.s32.totalorder %s60, %s61
    %p70 = scmp.eq.s32.totalorder %s29, 0
    %p71 = por %p69, %p70
    %p72 = scmp.ne.s32.totalorder %s60, %s61
    %p73 = scmp.eq.s32.totalorder %s30, 1
    %p74 = por %p72, %p73
    %p76 = scmp.ne.s32.totalorder %s61, %s75
    %p77 = scmp.eq.s32.totalorder %s30, 0
    %p78 = por %p76, %p77
    %s80 = sadd.s32 %s79, 1
    %p83 = scmp.eq.s32.totalorder %s24, 1
    %p84 = scmp.ne.s32.totalorder %s79, %s81
    %p85 = scmp.eq.s32.totalorder %s24, 0
    %p86 = por %p84, %p85
    %p87 = scmp.ne.s32.totalorder %s79, %s81
    %p88 = scmp.eq.s32.totalorder %s29, 1
    %p89 = por %p87, %p88
    %p90 = scmp.ne.s32.totalorder %s81, %s82
    %p91 = scmp.eq.s32.totalorder %s29, 0
    %p92 = por %p90, %p91
    %p93 = scmp.ne.s32.totalorder %s81, %s82
    %p94 = scmp.eq.s32.totalorder %s30, 1
    %p95 = por %p93, %p94
    %p97 = scmp.ne.s32.totalorder %s82, %s96
    %p98 = scmp.eq.s32.totalorder %s30, 0
    %p99 = por %p97, %p98
    %s101 = sadd.s32 %s100, 1
    %p104 = scmp.eq.s32.totalorder %s24, 1
    %p105 = scmp.ne.s32.totalorder %s100, %s102
    %p106 = scmp.eq.s32.totalorder %s24, 0
    %p107 = por %p105, %p106
    %p108 = scmp.ne.s32.totalorder %s100, %s102
    %p109 = scmp.eq.s32.totalorder %s29, 1
    %p110 = por %p108, %p109
    %p111 = scmp.ne.s32.totalorder %s102, %s103
    %p112 = scmp.eq.s32.totalorder %s29, 0
    %p113 = por %p111, %p112
    %p114 = scmp.ne.s32.totalorder %s102, %s103
    %p115 = scmp.eq.s32.totalorder %s30, 1
    %p116 = por %p114, %p115
    %p118 = scmp.ne.s32.totalorder %s103, %s117
    %p119 = scmp.eq.s32.totalorder %s30, 0
    %p120 = por %p118, %p119
    %s122 = sadd.s32 %s121, 1
    %p125 = scmp.eq.s32.totalorder %s24, 1
    %p126 = scmp.ne.s32.totalorder %s121, %s123
    %p127 = scmp.eq.s32.totalorder %s24, 0
    %p128 = por %p126, %p127
    %p129 = scmp.ne.s32.totalorder %s121, %s123
    %p130 = scmp.eq.s32.totalorder %s29, 1
    %p131 = por %p129, %p130
    %p132 = scmp.ne.s32.totalorder %s123, %s124
    %p133 = scmp.eq.s32.totalorder %s29, 0
    %p134 = por %p132, %p133
    %p135 = scmp.ne.s32.totalorder %s123, %s124
    %p136 = scmp.eq.s32.totalorder %s30, 1
    %p137 = por %p135, %p136
    %p139 = scmp.ne.s32.totalorder %s124, %s138
    %p140 = scmp.eq.s32.totalorder %s30, 0
    %p141 = por %p139, %p140
    %s143 = sadd.s32 %s142, 1
    %p146 = scmp.eq.s32.totalorder %s24, 1
    %p147 = scmp.ne.s32.totalorder %s142, %s144
    %p148 = scmp.eq.s32.totalorder %s24, 0
    %p149 = por %p147, %p148
    %p150 = scmp.ne.s32.totalorder %s142, %s144
    %p151 = scmp.eq.s32.totalorder %s29, 1
    %p152 = por %p150, %p151
    %p153 = scmp.ne.s32.totalorder %s144, %s145
    %p154 = scmp.eq.s32.totalorder %s29, 0
    %p155 = por %p153, %p154
    %p156 = scmp.ne.s32.totalorder %s144, %s145
    %p157 = scmp.eq.s32.totalorder %s30, 1
    %p158 = por %p156, %p157
    %p160 = scmp.ne.s32.totalorder %s145, %s159
    %p161 = scmp.eq.s32.totalorder %s30, 0
    %p162 = por %p160, %p161
    %s164 = sadd.s32 %s163, 1
    %p167 = scmp.eq.s32.totalorder %s24, 1
    %p168 = scmp.ne.s32.totalorder %s163, %s165
    %p169 = scmp.eq.s32.totalorder %s24, 0
    %p170 = por %p168, %p169
    %p171 = scmp.ne.s32.totalorder %s163, %s165
    %p172 = scmp.eq.s32.totalorder %s29, 1
    %p173 = por %p171, %p172
    %p174 = scmp.ne.s32.totalorder %s165, %s166
    %p175 = scmp.eq.s32.totalorder %s29, 0
    %p176 = por %p174, %p175
    %p177 = scmp.ne.s32.totalorder %s165, %s166
    %p178 = scmp.eq.s32.totalorder %s30, 1
    %p179 = por %p177, %p178
    %p181 = scmp.ne.s32.totalorder %s166, %s180
    %p182 = scmp.eq.s32.totalorder %s30, 0
    %p183 = por %p181, %p182
    %s185 = sadd.s32 %s184, 1
    %p188 = scmp.eq.s32.totalorder %s24, 1
    %p189 = scmp.ne.s32.totalorder %s184, %s186
    %p190 = scmp.eq.s32.totalorder %s24, 0
    %p191 = por %p189, %p190
    %p192 = scmp.ne.s32.totalorder %s184, %s186
    %p193 = scmp.eq.s32.totalorder %s29, 1
    %p194 = por %p192, %p193
    %p195 = scmp.ne.s32.totalorder %s186, %s187
    %p196 = scmp.eq.s32.totalorder %s29, 0
    %p197 = por %p195, %p196
    %p198 = scmp.ne.s32.totalorder %s186, %s187
    %p199 = scmp.eq.s32.totalorder %s30, 1
    %p200 = por %p198, %p199
    %p202 = scmp.ne.s32.totalorder %s187, %s201
    %p203 = scmp.eq.s32.totalorder %s30, 0
    %p204 = por %p202, %p203
    %s206 = sadd.s32 %s205, 1
    %p209 = scmp.eq.s32.totalorder %s24, 1
    %p210 = scmp.ne.s32.totalorder %s205, %s207
    %p211 = scmp.eq.s32.totalorder %s24, 0
    %p212 = por %p210, %p211
    %p213 = scmp.ne.s32.totalorder %s205, %s207
    %p214 = scmp.eq.s32.totalorder %s29, 1
    %p215 = por %p213, %p214
    %p216 = scmp.ne.s32.totalorder %s207, %s208
    %p217 = scmp.eq.s32.totalorder %s29, 0
    %p218 = por %p216, %p217
    %p219 = scmp.ne.s32.totalorder %s207, %s208
    %p220 = scmp.eq.s32.totalorder %s30, 1
    %p221 = por %p219, %p220
    %p223 = scmp.ne.s32.totalorder %s208, %s222
    %p224 = scmp.eq.s32.totalorder %s30, 0
    %p225 = por %p223, %p224
    %s227 = sadd.s32 %s226, 1
    %p230 = scmp.eq.s32.totalorder %s24, 1
    %p231 = scmp.ne.s32.totalorder %s226, %s228
    %p232 = scmp.eq.s32.totalorder %s24, 0
    %p233 = por %p231, %p232
    %p234 = scmp.ne.s32.totalorder %s226, %s228
    %p235 = scmp.eq.s32.totalorder %s29, 1
    %p236 = por %p234, %p235
    %p237 = scmp.ne.s32.totalorder %s228, %s229
    %p238 = scmp.eq.s32.totalorder %s29, 0
    %p239 = por %p237, %p238
    %p240 = scmp.ne.s32.totalorder %s228, %s229
    %p241 = scmp.eq.s32.totalorder %s30, 1
    %p242 = por %p240, %p241
    %p244 = scmp.ne.s32.totalorder %s229, %s243
    %p245 = scmp.eq.s32.totalorder %s30, 0
    %p246 = por %p244, %p245
    %s248 = sadd.s32 %s247, 1
    %p251 = scmp.eq.s32.totalorder %s24, 1
    %p252 = scmp.ne.s32.totalorder %s247, %s249
    %p253 = scmp.eq.s32.totalorder %s24, 0
    %p254 = por %p252, %p253
    %p255 = scmp.ne.s32.totalorder %s247, %s249
    %p256 = scmp.eq.s32.totalorder %s29, 1
    %p257 = por %p255, %p256
    %p258 = scmp.ne.s32.totalorder %s249, %s250
    %p259 = scmp.eq.s32.totalorder %s29, 0
    %p260 = por %p258, %p259
    %p261 = scmp.ne.s32.totalorder %s249, %s250
    %p262 = scmp.eq.s32.totalorder %s30, 1
    %p263 = por %p261, %p262
    %p265 = scmp.ne.s32.totalorder %s250, %s264
    %p266 = scmp.eq.s32.totalorder %s30, 0
    %p267 = por %p265, %p266
    %s269 = sadd.s32 %s268, 1
    %p272 = scmp.eq.s32.totalorder %s24, 1
    %p273 = scmp.ne.s32.totalorder %s268, %s270
    %p274 = scmp.eq.s32.totalorder %s24, 0
    %p275 = por %p273, %p274
    %p276 = scmp.ne.s32.totalorder %s268, %s270
    %p277 = scmp.eq.s32.totalorder %s29, 1
    %p278 = por %p276, %p277
    %p279 = scmp.ne.s32.totalorder %s270, %s271
    %p280 = scmp.eq.s32.totalorder %s29, 0
    %p281 = por %p279, %p280
    %p282 = scmp.ne.s32.totalorder %s270, %s271
    %p283 = scmp.eq.s32.totalorder %s30, 1
    %p284 = por %p282, %p283
    %p286 = scmp.ne.s32.totalorder %s271, %s285
    %p287 = scmp.eq.s32.totalorder %s30, 0
    %p288 = por %p286, %p287
    %s290 = sadd.s32 %s289, 1
    %p293 = scmp.eq.s32.totalorder %s24, 1
    %p294 = scmp.ne.s32.totalorder %s289, %s291
    %p295 = scmp.eq.s32.totalorder %s24, 0
    %p296 = por %p294, %p295
    %p297 = scmp.ne.s32.totalorder %s289, %s291
    %p298 = scmp.eq.s32.totalorder %s29, 1
    %p299 = por %p297, %p298
    %p300 = scmp.ne.s32.totalorder %s291, %s292
    %p301 = scmp.eq.s32.totalorder %s29, 0
    %p302 = por %p300, %p301
    %p303 = scmp.ne.s32.totalorder %s291, %s292
    %p304 = scmp.eq.s32.totalorder %s30, 1
    %p305 = por %p303, %p304
    %p307 = scmp.ne.s32.totalorder %s292, %s306
    %p308 = scmp.eq.s32.totalorder %s30, 0
    %p309 = por %p307, %p308
    %s311 = sadd.s32 %s310, 1
    %p314 = scmp.eq.s32.totalorder %s24, 1
    %p315 = scmp.ne.s32.totalorder %s310, %s312
    %p316 = scmp.eq.s32.totalorder %s24, 0
    %p317 = por %p315, %p316
    %p318 = scmp.ne.s32.totalorder %s310, %s312
    %p319 = scmp.eq.s32.totalorder %s29, 1
    %p320 = por %p318, %p319
    %p321 = scmp.ne.s32.totalorder %s312, %s313
    %p322 = scmp.eq.s32.totalorder %s29, 0
    %p323 = por %p321, %p322
    %p324 = scmp.ne.s32.totalorder %s312, %s313
    %p325 = scmp.eq.s32.totalorder %s30, 1
    %p326 = por %p324, %p325
    %p328 = scmp.ne.s32.totalorder %s313, %s327
    %p329 = scmp.eq.s32.totalorder %s30, 0
    %p330 = por %p328, %p329
    %s332 = sadd.s32 %s331, 1
    %p335 = scmp.eq.s32.totalorder %s24, 1
    %p336 = scmp.ne.s32.totalorder %s331, %s333
    %p337 = scmp.eq.s32.totalorder %s24, 0
    %p338 = por %p336, %p337
    %p339 = scmp.ne.s32.totalorder %s331, %s333
    %p340 = scmp.eq.s32.totalorder %s29, 1
    %p341 = por %p339, %p340
    %p342 = scmp.ne.s32.totalorder %s333, %s334
    %p343 = scmp.eq.s32.totalorder %s29, 0
    %p344 = por %p342, %p343
    %p345 = scmp.ne.s32.totalorder %s333, %s334
    %p346 = scmp.eq.s32.totalorder %s30, 1
    %p347 = por %p345, %p346
    %p349 = scmp.ne.s32.totalorder %s334, %s348
    %p350 = scmp.eq.s32.totalorder %s30, 0
    %p351 = por %p349, %p350
    %s353 = sadd.s32 %s352, 1
    %p356 = scmp.eq.s32.totalorder %s24, 1
    %p357 = scmp.ne.s32.totalorder %s352, %s354
    %p358 = scmp.eq.s32.totalorder %s24, 0
    %p359 = por %p357, %p358
    %p360 = scmp.ne.s32.totalorder %s352, %s354
    %p361 = scmp.eq.s32.totalorder %s29, 1
    %p362 = por %p360, %p361
    %p363 = scmp.ne.s32.totalorder %s354, %s355
    %p364 = scmp.eq.s32.totalorder %s29, 0
    %p365 = por %p363, %p364
    %p366 = scmp.ne.s32.totalorder %s354, %s355
    %p367 = scmp.eq.s32.totalorder %s30, 1
    %p368 = por %p366, %p367
    %p370 = scmp.ne.s32.totalorder %s355, %s369
    %p371 = scmp.eq.s32.totalorder %s30, 0
    %p372 = por %p370, %p371
    %s374 = sadd.s32 %s373, 1
    %p377 = scmp.eq.s32.totalorder %s24, 1
    %p378 = scmp.ne.s32.totalorder %s373, %s375
    %p379 = scmp.eq.s32.totalorder %s24, 0
    %p380 = por %p378, %p379
    %p381 = scmp.ne.s32.totalorder %s373, %s375
    %p382 = scmp.eq.s32.totalorder %s29, 1
    %p383 = por %p381, %p382
    %p384 = scmp.ne.s32.totalorder %s375, %s376
    %p385 = scmp.eq.s32.totalorder %s29, 0
    %p386 = por %p384, %p385
    %p387 = scmp.ne.s32.totalorder %s375, %s376
    %p388 = scmp.eq.s32.totalorder %s30, 1
    %p389 = por %p387, %p388
    %p391 = scmp.ne.s32.totalorder %s376, %s390
    %p392 = scmp.eq.s32.totalorder %s30, 0
    %p393 = por %p391, %p392
    %s395 = sadd.s32 %s394, 1
    %p398 = scmp.eq.s32.totalorder %s24, 1
    %p399 = scmp.ne.s32.totalorder %s394, %s396
    %p400 = scmp.eq.s32.totalorder %s24, 0
    %p401 = por %p399, %p400
    %p402 = scmp.ne.s32.totalorder %s394, %s396
    %p403 = scmp.eq.s32.totalorder %s29, 1
    %p404 = por %p402, %p403
    %p405 = scmp.ne.s32.totalorder %s396, %s397
    %p406 = scmp.eq.s32.totalorder %s29, 0
    %p407 = por %p405, %p406
    %p408 = scmp.ne.s32.totalorder %s396, %s397
    %p409 = scmp.eq.s32.totalorder %s30, 1
    %p410 = por %p408, %p409
    %p412 = scmp.ne.s32.totalorder %s397, %s411
    %p413 = scmp.eq.s32.totalorder %s30, 0
    %p414 = por %p412, %p413
    %s415 = ssub.s32 %s24, %s31
    %p416 = scmp.eq.s32.totalorder %s415, 0
    %s418 = sadd.s32 %s417, 1
    %s419 = scalar_select %p416, %s417, %s418
    %p422 = pneg %p416
    %p423 = scmp.eq.s32.totalorder %s24, 1
    %p424 = por %p422, %p423
    %p425 = scmp.ne.s32.totalorder %s417, %s420
    %p426 = scmp.eq.s32.totalorder %s24, 0
    %p427 = por %p425, %p426
    %p428 = scmp.ne.s32.totalorder %s417, %s420
    %p429 = scmp.eq.s32.totalorder %s29, 1
    %p430 = por %p428, %p429
    %p431 = scmp.ne.s32.totalorder %s420, %s421
    %p432 = scmp.eq.s32.totalorder %s29, 0
    %p433 = por %p431, %p432
    %p434 = scmp.ne.s32.totalorder %s420, %s421
    %p435 = scmp.eq.s32.totalorder %s30, 1
    %p436 = por %p434, %p435
    %p438 = scmp.ne.s32.totalorder %s421, %s437
    %p439 = scmp.eq.s32.totalorder %s30, 0
    %p440 = por %p438, %p439
    %p441 = scmp.le.s32.totalorder 1, %s24
    %p442 = scmp.lt.s32.totalorder %s24, 3
    %p443 = pnand %p441, %p442
    %p444 = pneg %p443
    // Predicated region
    $region9: #{speech_recognition_forward.2} parent=5 // pred_check
      _
    $region10: #{speech_recognition_forward.2} parent=5 // pred_check_branch
      %446 = sbr.rel (%p443) target = $region12
    $region11: #{speech_recognition_forward.2} parent=5 // pred_region
      %s447 = ssub.s32 %s24, 1
      // Predicated region
      $region13: #{speech_recognition_forward.2} parent=11 // pred_check
        %p448 = pneg %p71
      $region14: #{speech_recognition_forward.2} parent=11 // pred_check_branch
        %450 = sbr.rel (%p448) target = $region16
      $region15: #{speech_recognition_forward.2} parent=11 // pred_region
        _
      $region16: #{speech_recognition_forward.2} parent=11 // pred_fallthru
        _
      // Predicated region
      $region17: #{speech_recognition_forward.2} parent=11 // pred_check
        %p451 = pneg %p92
      $region18: #{speech_recognition_forward.2} parent=11 // pred_check_branch
        %453 = sbr.rel (%p451) target = $region20
      $region19: #{speech_recognition_forward.2} parent=11 // pred_region
        _
      $region20: #{speech_recognition_forward.2} parent=11 // pred_fallthru
        _
      // Predicated region
      $region21: #{speech_recognition_forward.2} parent=11 // pred_check
        %p454 = pneg %p113
      $region22: #{speech_recognition_forward.2} parent=11 // pred_check_branch
        %456 = sbr.rel (%p454) target = $region24
      $region23: #{speech_recognition_forward.2} parent=11 // pred_region
        _
      $region24: #{speech_recognition_forward.2} parent=11 // pred_fallthru
        _
      // Predicated region
      $region25: #{speech_recognition_forward.2} parent=11 // pred_check
        %p457 = pneg %p134
      $region26: #{speech_recognition_forward.2} parent=11 // pred_check_branch
        %459 = sbr.rel (%p457) target = $region28
      $region27: #{speech_recognition_forward.2} parent=11 // pred_region
        _
      $region28: #{speech_recognition_forward.2} parent=11 // pred_fallthru
        _
      // Predicated region
      $region29: #{speech_recognition_forward.2} parent=11 // pred_check
        %p460 = pneg %p155
      $region30: #{speech_recognition_forward.2} parent=11 // pred_check_branch
        %462 = sbr.rel (%p460) target = $region32
      $region31: #{speech_recognition_forward.2} parent=11 // pred_region
        _
      $region32: #{speech_recognition_forward.2} parent=11 // pred_fallthru
        _
      // Predicated region
      $region33: #{speech_recognition_forward.2} parent=11 // pred_check
        %p463 = pneg %p176
      $region34: #{speech_recognition_forward.2} parent=11 // pred_check_branch
        %465 = sbr.rel (%p463) target = $region36
      $region35: #{speech_recognition_forward.2} parent=11 // pred_region
        _
      $region36: #{speech_recognition_forward.2} parent=11 // pred_fallthru
        _
      // Predicated region
      $region37: #{speech_recognition_forward.2} parent=11 // pred_check
        %p466 = pneg %p197
      $region38: #{speech_recognition_forward.2} parent=11 // pred_check_branch
        %468 = sbr.rel (%p466) target = $region40
      $region39: #{speech_recognition_forward.2} parent=11 // pred_region
        _
      $region40: #{speech_recognition_forward.2} parent=11 // pred_fallthru
        _
      // Predicated region
      $region41: #{speech_recognition_forward.2} parent=11 // pred_check
        %p469 = pneg %p218
      $region42: #{speech_recognition_forward.2} parent=11 // pred_check_branch
        %471 = sbr.rel (%p469) target = $region44
      $region43: #{speech_recognition_forward.2} parent=11 // pred_region
        _
      $region44: #{speech_recognition_forward.2} parent=11 // pred_fallthru
        _
      // Predicated region
      $region45: #{speech_recognition_forward.2} parent=11 // pred_check
        %p472 = pneg %p239
      $region46: #{speech_recognition_forward.2} parent=11 // pred_check_branch
        %474 = sbr.rel (%p472) target = $region48
      $region47: #{speech_recognition_forward.2} parent=11 // pred_region
        _
      $region48: #{speech_recognition_forward.2} parent=11 // pred_fallthru
        _
      // Predicated region
      $region49: #{speech_recognition_forward.2} parent=11 // pred_check
        %p475 = pneg %p260
      $region50: #{speech_recognition_forward.2} parent=11 // pred_check_branch
        %477 = sbr.rel (%p475) target = $region52
      $region51: #{speech_recognition_forward.2} parent=11 // pred_region
        _
      $region52: #{speech_recognition_forward.2} parent=11 // pred_fallthru
        _
      // Predicated region
      $region53: #{speech_recognition_forward.2} parent=11 // pred_check
        %p478 = pneg %p281
      $region54: #{speech_recognition_forward.2} parent=11 // pred_check_branch
        %480 = sbr.rel (%p478) target = $region56
      $region55: #{speech_recognition_forward.2} parent=11 // pred_region
        _
      $region56: #{speech_recognition_forward.2} parent=11 // pred_fallthru
        _
      // Predicated region
      $region57: #{speech_recognition_forward.2} parent=11 // pred_check
        %p481 = pneg %p302
      $region58: #{speech_recognition_forward.2} parent=11 // pred_check_branch
        %483 = sbr.rel (%p481) target = $region60
      $region59: #{speech_recognition_forward.2} parent=11 // pred_region
        _
      $region60: #{speech_recognition_forward.2} parent=11 // pred_fallthru
        _
      // Predicated region
      $region61: #{speech_recognition_forward.2} parent=11 // pred_check
        %p484 = pneg %p323
      $region62: #{speech_recognition_forward.2} parent=11 // pred_check_branch
        %486 = sbr.rel (%p484) target = $region64
      $region63: #{speech_recognition_forward.2} parent=11 // pred_region
        _
      $region64: #{speech_recognition_forward.2} parent=11 // pred_fallthru
        _
      // Predicated region
      $region65: #{speech_recognition_forward.2} parent=11 // pred_check
        %p487 = pneg %p344
      $region66: #{speech_recognition_forward.2} parent=11 // pred_check_branch
        %489 = sbr.rel (%p487) target = $region68
      $region67: #{speech_recognition_forward.2} parent=11 // pred_region
        _
      $region68: #{speech_recognition_forward.2} parent=11 // pred_fallthru
        _
      // Predicated region
      $region69: #{speech_recognition_forward.2} parent=11 // pred_check
        %p490 = pneg %p365
      $region70: #{speech_recognition_forward.2} parent=11 // pred_check_branch
        %492 = sbr.rel (%p490) target = $region72
      $region71: #{speech_recognition_forward.2} parent=11 // pred_region
        _
      $region72: #{speech_recognition_forward.2} parent=11 // pred_fallthru
        _
      // Predicated region
      $region73: #{speech_recognition_forward.2} parent=11 // pred_check
        %p493 = pneg %p386
      $region74: #{speech_recognition_forward.2} parent=11 // pred_check_branch
        %495 = sbr.rel (%p493) target = $region76
      $region75: #{speech_recognition_forward.2} parent=11 // pred_region
        _
      $region76: #{speech_recognition_forward.2} parent=11 // pred_fallthru
        _
      // Predicated region
      $region77: #{speech_recognition_forward.2} parent=11 // pred_check
        %p496 = pneg %p407
      $region78: #{speech_recognition_forward.2} parent=11 // pred_check_branch
        %498 = sbr.rel (%p496) target = $region80
      $region79: #{speech_recognition_forward.2} parent=11 // pred_region
        _
      $region80: #{speech_recognition_forward.2} parent=11 // pred_fallthru
        _
    $region12: #{speech_recognition_forward.2} parent=5 // pred_fallthru
      _
    %p499 = scmp.lt.s32.totalorder %s24, 2
    // Predicated region
    $region81: #{speech_recognition_forward.2} parent=5 // pred_check
      %p500 = pneg %p499
    $region82: #{speech_recognition_forward.2} parent=5 // pred_check_branch
      %502 = sbr.rel (%p500) target = $region84
    $region83: #{speech_recognition_forward.2} parent=5 // pred_region
      // Predicated region
      $region85: #{speech_recognition_forward.2} parent=83 // pred_check
        %p503 = pneg %p44
      $region86: #{speech_recognition_forward.2} parent=83 // pred_check_branch
        %505 = sbr.rel (%p503) target = $region88
      $region87: #{speech_recognition_forward.2} parent=83 // pred_region
        %p506 = scmp.lt.s32.totalorder %s24, 1
        %s507 = scalar_select %p506, %s24, 1
        %s508 = smul.addr %s507, 20
        %s509 = smul.addr %s508, 8
        %s510 = scalar_lea.vmem %s0, %s509
      $region88: #{speech_recognition_forward.2} parent=83 // pred_fallthru
        _
    $region84: #{speech_recognition_forward.2} parent=5 // pred_fallthru
      _
    %p511 = scmp.le.s32.totalorder 1, %s24
    %p512 = scmp.lt.s32.totalorder %s24, 3
    %p513 = pnand %p511, %p512
    %p514 = pneg %p513
    // Predicated region
    $region89: #{speech_recognition_forward.2} parent=5 // pred_check
      _
    $region90: #{speech_recognition_forward.2} parent=5 // pred_check_branch
      %516 = sbr.rel (%p513) target = $region92
    $region91: #{speech_recognition_forward.2} parent=5 // pred_region
      %s517 = ssub.s32 %s24, 1
      %p518 = scmp.lt.s32.totalorder %s29, 1
      %s519 = scalar_select %p518, %s29, 1
      %s520 = smul.addr %s519, 20
      %s521 = smul.addr %s520, 8
      %s522 = scalar_lea.vmem %s0, %s521
      %p523 = pneg %p50
      %p524 = pneg %p47
      %p525 = pneg %p71
      %p526 = pneg %p68
      %p527 = pneg %p92
      %p528 = pneg %p89
      %p529 = pneg %p113
      %p530 = pneg %p110
      %p531 = pneg %p134
      %p532 = pneg %p131
      %p533 = pneg %p155
      %p534 = pneg %p152
      %p535 = pneg %p176
      %p536 = pneg %p173
      %p537 = pneg %p197
      %p538 = pneg %p194
      %p539 = pneg %p218
      %p540 = pneg %p215
      %p541 = pneg %p239
      %p542 = pneg %p236
      %p543 = pneg %p260
      %p544 = pneg %p257
      %p545 = pneg %p281
      %p546 = pneg %p278
      %p547 = pneg %p302
      %p548 = pneg %p299
      %p549 = pneg %p323
      %p550 = pneg %p320
      %p551 = pneg %p344
      %p552 = pneg %p341
      %p553 = pneg %p365
      %p554 = pneg %p362
      %p555 = pneg %p386
      %p556 = pneg %p383
      %p557 = pneg %p407
      %p558 = pneg %p404
      %p559 = pneg %p433
      %p560 = pneg %p430
      %p561 = scmp.lt.s32.totalorder %s29, 1
      %s562 = scalar_select %p561, %s29, 1
      %s563 = smul.addr %s562, 10
      %s564 = smul.addr %s563, 8
      %s565 = scalar_lea.vmem %s18, %s564
      %p566 = scmp.lt.s32.totalorder %s29, 1
      %s567 = scalar_select %p566, %s29, 1
      %s568 = smul.addr %s567, 20
      %s569 = smul.addr %s568, 8
      %s570 = scalar_lea.vmem %s0, %s569
      %p571 = scmp.lt.s32.totalorder %s29, 1
      %s572 = scalar_select %p571, %s29, 1
      %s573 = smul.addr %s572, 10
      %s574 = smul.addr %s573, 8
      %s575 = scalar_lea.vmem %s18, %s574
      %v577 = vld [vmem:[%s570] sm:$0xff]
      %v578 = vld [vmem:[%s570 + $0x8] sm:$0xff]
      %v579 = vld [vmem:[%s570 + $0x10] sm:$0xff]
      %v580 = vld [vmem:[%s570 + $0x18] sm:$0xff]
      %v581 = vld [vmem:[%s570 + $0x20] sm:$0xff]
      %v582 = vld [vmem:[%s570 + $0x28] sm:$0xff]
      %v583 = vld [vmem:[%s570 + $0x30] sm:$0xff]
      %v584 = vld [vmem:[%s570 + $0x38] sm:$0xff]
      %v585 = vld [vmem:[%s570 + $0x40] sm:$0xff]
      %v586 = vld [vmem:[%s570 + $0x48] sm:$0xff]
      %v587 = vld [vmem:[%s570 + $0x50] sm:$0xff]
      %v588 = vld [vmem:[%s570 + $0x58] sm:$0xff]
      %v589 = vld [vmem:[%s570 + $0x60] sm:$0xff]
      %v590 = vld [vmem:[%s570 + $0x68] sm:$0xff]
      %v591 = vld [vmem:[%s570 + $0x70] sm:$0xff]
      %v592 = vld [vmem:[%s570 + $0x78] sm:$0xff]
      %v593 = vld [vmem:[%s570 + $0x80] sm:$0xff]
      %v594 = vld [vmem:[%s570 + $0x88] sm:$0xff]
      %v595 = vld [vmem:[%s570 + $0x90] sm:$0xff]
      %v596 = vld [vmem:[%s570 + $0x98] sm:$0xff]
      %v597 = vpack.c.bf16 %v578, %v577
      %v598 = vpack.c.bf16 %v580, %v579
      %v599 = vpack.c.bf16 %v582, %v581
      %v600 = vpack.c.bf16 %v584, %v583
      %v601 = vpack.c.bf16 %v586, %v585
      %v602 = vpack.c.bf16 %v588, %v587
      %v603 = vpack.c.bf16 %v590, %v589
      %v604 = vpack.c.bf16 %v592, %v591
      %v605 = vpack.c.bf16 %v594, %v593
      %v606 = vpack.c.bf16 %v596, %v595
      %v607 = vld [vmem:[%s1] sm:$0xf]
      %v608 = vld [vmem:[%s1 + $0x4] sm:$0xf]
      %v609 = vld [vmem:[%s2] sm:$0x1]
      %v611 = vperm.slane %v609, 0
      %v615 = vunpack.c.l.b16 %v607
      %v616 = vunpack.c.l.b16 %v608
      %v617 = vpack.c.b16 %v616, %v615
      %vm619 = vcmask 130048
      %v621 = vsel %vm619, %v597, 0
      %v624 = vsel %vm619, %v598, 0
      %v627 = vsel %vm619, %v599, 0
      %v630 = vsel %vm619, %v600, 0
      %v633 = vsel %vm619, %v601, 0
      %v636 = vsel %vm619, %v602, 0
      %v639 = vsel %vm619, %v603, 0
      %v642 = vsel %vm619, %v604, 0
      %v645 = vsel %vm619, %v605, 0
      %v648 = vsel %vm619, %v606, 0
      %650 = vmatpush.bf16.msra.mxu0 0
      %651 = vmatpush.bf16.msra.mxu0 0
      %652 = vmatpush.bf16.msra.mxu0 0
      %653 = vmatpush.bf16.msra.mxu0 0
      %654 = vmatpush.bf16.msra.mxu0 0
      %655 = vmatpush.bf16.msra.mxu0 0
      %656 = vmatpush.bf16.msra.mxu0 0
      %657 = vmatpush.bf16.msra.mxu0 %v617
      %658 = vmatmul.bf16.gmra.mxu0 %v621
      %v659 = vpop.f32.mrf.mxu0
      %v660 = vadd.f32 %v611, %v659
      %v661 = vpop.f32.mrf.mxu0
      %v662 = vadd.f32 %v611, %v661
      %663 = vmatmul.bf16.gmra.mxu0 %v624
      %v664 = vpop.f32.mrf.mxu0
      %v665 = vadd.f32 %v611, %v664
      %v666 = vpop.f32.mrf.mxu0
      %v667 = vadd.f32 %v611, %v666
      %668 = vmatmul.bf16.gmra.mxu0 %v627
      %v669 = vpop.f32.mrf.mxu0
      %v670 = vadd.f32 %v611, %v669
      %v671 = vpop.f32.mrf.mxu0
      %v672 = vadd.f32 %v611, %v671
      %673 = vmatmul.bf16.gmra.mxu0 %v630
      %v674 = vpop.f32.mrf.mxu0
      %v675 = vadd.f32 %v611, %v674
      %v676 = vpop.f32.mrf.mxu0
      %v677 = vadd.f32 %v611, %v676
      %678 = vmatmul.bf16.gmra.mxu0 %v633
      %v679 = vpop.f32.mrf.mxu0
      %v680 = vadd.f32 %v611, %v679
      %v681 = vpop.f32.mrf.mxu0
      %v682 = vadd.f32 %v611, %v681
      %683 = vmatmul.bf16.gmra.mxu0 %v636
      %v684 = vpop.f32.mrf.mxu0
      %v685 = vadd.f32 %v611, %v684
      %v686 = vpop.f32.mrf.mxu0
      %v687 = vadd.f32 %v611, %v686
      %688 = vmatmul.bf16.gmra.mxu0 %v639
      %v689 = vpop.f32.mrf.mxu0
      %v690 = vadd.f32 %v611, %v689
      %v691 = vpop.f32.mrf.mxu0
      %v692 = vadd.f32 %v611, %v691
      %693 = vmatmul.bf16.gmra.mxu0 %v642
      %v694 = vpop.f32.mrf.mxu0
      %v695 = vadd.f32 %v611, %v694
      %v696 = vpop.f32.mrf.mxu0
      %v697 = vadd.f32 %v611, %v696
      %698 = vmatmul.bf16.gmra.mxu0 %v645
      %v699 = vpop.f32.mrf.mxu0
      %v700 = vadd.f32 %v611, %v699
      %v701 = vpop.f32.mrf.mxu0
      %v702 = vadd.f32 %v611, %v701
      %703 = vmatmul.bf16.gmra.mxu0 %v648
      %v704 = vpop.f32.mrf.mxu0
      %v705 = vadd.f32 %v611, %v704
      %v706 = vpop.f32.mrf.mxu0
      %v707 = vadd.f32 %v611, %v706
      %708 = vdwg.mxu0
      %v709 = vld [vmem:[%s3] sm:$0x1]
      %v710 = vld [vmem:[%s4] sm:$0x1]
      %vm711 = vcmask 261120
      %v712 = vsel %vm711, %v660, 0.0
      %713 = vadd.xlane.f32.xlu0 %v712
      %v714 = vpop.xlane.xlu0 %713
      %v715 = vsel %vm711, %v662, 0.0
      %716 = vadd.xlane.f32.xlu0 %v715
      %v717 = vpop.xlane.xlu0 %716
      %v718 = vsel %vm711, %v665, 0.0
      %719 = vadd.xlane.f32.xlu0 %v718
      %v720 = vpop.xlane.xlu0 %719
      %v721 = vsel %vm711, %v667, 0.0
      %722 = vadd.xlane.f32.xlu0 %v721
      %v723 = vpop.xlane.xlu0 %722
      %v724 = vsel %vm711, %v670, 0.0
      %725 = vadd.xlane.f32.xlu0 %v724
      %v726 = vpop.xlane.xlu0 %725
      %v727 = vsel %vm711, %v672, 0.0
      %728 = vadd.xlane.f32.xlu0 %v727
      %v729 = vpop.xlane.xlu0 %728
      %v730 = vsel %vm711, %v675, 0.0
      %731 = vadd.xlane.f32.xlu0 %v730
      %v732 = vpop.xlane.xlu0 %731
      %v733 = vsel %vm711, %v677, 0.0
      %734 = vadd.xlane.f32.xlu0 %v733
      %v735 = vpop.xlane.xlu0 %734
      %v736 = vsel %vm711, %v680, 0.0
      %737 = vadd.xlane.f32.xlu0 %v736
      %v738 = vpop.xlane.xlu0 %737
      %v739 = vsel %vm711, %v682, 0.0
      %740 = vadd.xlane.f32.xlu0 %v739
      %v741 = vpop.xlane.xlu0 %740
      %v742 = vsel %vm711, %v685, 0.0
      %743 = vadd.xlane.f32.xlu0 %v742
      %v744 = vpop.xlane.xlu0 %743
      %v745 = vsel %vm711, %v687, 0.0
      %746 = vadd.xlane.f32.xlu0 %v745
      %v747 = vpop.xlane.xlu0 %746
      %v748 = vsel %vm711, %v690, 0.0
      %749 = vadd.xlane.f32.xlu0 %v748
      %v750 = vpop.xlane.xlu0 %749
      %v751 = vsel %vm711, %v692, 0.0
      %752 = vadd.xlane.f32.xlu0 %v751
      %v753 = vpop.xlane.xlu0 %752
      %v754 = vsel %vm711, %v695, 0.0
      %755 = vadd.xlane.f32.xlu0 %v754
      %v756 = vpop.xlane.xlu0 %755
      %v757 = vsel %vm711, %v697, 0.0
      %758 = vadd.xlane.f32.xlu0 %v757
      %v759 = vpop.xlane.xlu0 %758
      %v760 = vsel %vm711, %v700, 0.0
      %761 = vadd.xlane.f32.xlu0 %v760
      %v762 = vpop.xlane.xlu0 %761
      %v763 = vsel %vm711, %v702, 0.0
      %764 = vadd.xlane.f32.xlu0 %v763
      %v765 = vpop.xlane.xlu0 %764
      %v766 = vsel %vm711, %v705, 0.0
      %767 = vadd.xlane.f32.xlu0 %v766
      %v768 = vpop.xlane.xlu0 %767
      %v769 = vsel %vm711, %v707, 0.0
      %770 = vadd.xlane.f32.xlu0 %v769
      %v771 = vpop.xlane.xlu0 %770
      %v772 = vrcp.pop 32.0
      %v773 = vmul.f32 32.0, %v772
      %v774 = vsub.f32 1.0, %v773
      %v775 = vmul.f32 %v772, %v774
      %v776 = vadd.f32 %v772, %v775
      %vm777 = vweird.f32 %v772
      %v778 = vsel %vm777, %v772, %v776
      %v779 = vmul.f32 %v714, %v778
      %v780 = vmul.f32 %v717, %v778
      %v781 = vmul.f32 %v720, %v778
      %v782 = vmul.f32 %v723, %v778
      %v783 = vmul.f32 %v726, %v778
      %v784 = vmul.f32 %v729, %v778
      %v785 = vmul.f32 %v732, %v778
      %v786 = vmul.f32 %v735, %v778
      %v787 = vmul.f32 %v738, %v778
      %v788 = vmul.f32 %v741, %v778
      %v789 = vmul.f32 %v744, %v778
      %v790 = vmul.f32 %v747, %v778
      %v791 = vmul.f32 %v750, %v778
      %v792 = vmul.f32 %v753, %v778
      %v793 = vmul.f32 %v756, %v778
      %v794 = vmul.f32 %v759, %v778
      %v795 = vmul.f32 %v762, %v778
      %v796 = vmul.f32 %v765, %v778
      %v797 = vmul.f32 %v768, %v778
      %v798 = vmul.f32 %v771, %v778
      %v799 = vsub.f32 %v660, %v779
      %v800 = vsub.f32 %v662, %v780
      %v801 = vsub.f32 %v665, %v781
      %v802 = vsub.f32 %v667, %v782
      %v803 = vsub.f32 %v670, %v783
      %v804 = vsub.f32 %v672, %v784
      %v805 = vsub.f32 %v675, %v785
      %v806 = vsub.f32 %v677, %v786
      %v807 = vsub.f32 %v680, %v787
      %v808 = vsub.f32 %v682, %v788
      %v809 = vsub.f32 %v685, %v789
      %v810 = vsub.f32 %v687, %v790
      %v811 = vsub.f32 %v690, %v791
      %v812 = vsub.f32 %v692, %v792
      %v813 = vsub.f32 %v695, %v793
      %v814 = vsub.f32 %v697, %v794
      %v815 = vsub.f32 %v700, %v795
      %v816 = vsub.f32 %v702, %v796
      %v817 = vsub.f32 %v705, %v797
      %v818 = vsub.f32 %v707, %v798
      %v819 = vmul.f32 %v799, %v799
      %v820 = vmul.f32 %v800, %v800
      %v821 = vmul.f32 %v801, %v801
      %v822 = vmul.f32 %v802, %v802
      %v823 = vmul.f32 %v803, %v803
      %v824 = vmul.f32 %v804, %v804
      %v825 = vmul.f32 %v805, %v805
      %v826 = vmul.f32 %v806, %v806
      %v827 = vmul.f32 %v807, %v807
      %v828 = vmul.f32 %v808, %v808
      %v829 = vmul.f32 %v809, %v809
      %v830 = vmul.f32 %v810, %v810
      %v831 = vmul.f32 %v811, %v811
      %v832 = vmul.f32 %v812, %v812
      %v833 = vmul.f32 %v813, %v813
      %v834 = vmul.f32 %v814, %v814
      %v835 = vmul.f32 %v815, %v815
      %v836 = vmul.f32 %v816, %v816
      %v837 = vmul.f32 %v817, %v817
      %v838 = vmul.f32 %v818, %v818
      %v839 = vsel %vm711, %v819, 0.0
      %840 = vadd.xlane.f32.xlu0 %v839
      %v841 = vpop.xlane.xlu0 %840
      %v842 = vsel %vm711, %v820, 0.0
      %843 = vadd.xlane.f32.xlu0 %v842
      %v844 = vpop.xlane.xlu0 %843
      %v845 = vsel %vm711, %v821, 0.0
      %846 = vadd.xlane.f32.xlu0 %v845
      %v847 = vpop.xlane.xlu0 %846
      %v848 = vsel %vm711, %v822, 0.0
      %849 = vadd.xlane.f32.xlu0 %v848
      %v850 = vpop.xlane.xlu0 %849
      %v851 = vsel %vm711, %v823, 0.0
      %852 = vadd.xlane.f32.xlu0 %v851
      %v853 = vpop.xlane.xlu0 %852
      %v854 = vsel %vm711, %v824, 0.0
      %855 = vadd.xlane.f32.xlu0 %v854
      %v856 = vpop.xlane.xlu0 %855
      %v857 = vsel %vm711, %v825, 0.0
      %858 = vadd.xlane.f32.xlu0 %v857
      %v859 = vpop.xlane.xlu0 %858
      %v860 = vsel %vm711, %v826, 0.0
      %861 = vadd.xlane.f32.xlu0 %v860
      %v862 = vpop.xlane.xlu0 %861
      %v863 = vsel %vm711, %v827, 0.0
      %864 = vadd.xlane.f32.xlu0 %v863
      %v865 = vpop.xlane.xlu0 %864
      %v866 = vsel %vm711, %v828, 0.0
      %867 = vadd.xlane.f32.xlu0 %v866
      %v868 = vpop.xlane.xlu0 %867
      %v869 = vsel %vm711, %v829, 0.0
      %870 = vadd.xlane.f32.xlu0 %v869
      %v871 = vpop.xlane.xlu0 %870
      %v872 = vsel %vm711, %v830, 0.0
      %873 = vadd.xlane.f32.xlu0 %v872
      %v874 = vpop.xlane.xlu0 %873
      %v875 = vsel %vm711, %v831, 0.0
      %876 = vadd.xlane.f32.xlu0 %v875
      %v877 = vpop.xlane.xlu0 %876
      %v878 = vsel %vm711, %v832, 0.0
      %879 = vadd.xlane.f32.xlu0 %v878
      %v880 = vpop.xlane.xlu0 %879
      %v881 = vsel %vm711, %v833, 0.0
      %882 = vadd.xlane.f32.xlu0 %v881
      %v883 = vpop.xlane.xlu0 %882
      %v884 = vsel %vm711, %v834, 0.0
      %885 = vadd.xlane.f32.xlu0 %v884
      %v886 = vpop.xlane.xlu0 %885
      %v887 = vsel %vm711, %v835, 0.0
      %888 = vadd.xlane.f32.xlu0 %v887
      %v889 = vpop.xlane.xlu0 %888
      %v890 = vsel %vm711, %v836, 0.0
      %891 = vadd.xlane.f32.xlu0 %v890
      %v892 = vpop.xlane.xlu0 %891
      %v893 = vsel %vm711, %v837, 0.0
      %894 = vadd.xlane.f32.xlu0 %v893
      %v895 = vpop.xlane.xlu0 %894
      %v896 = vsel %vm711, %v838, 0.0
      %897 = vadd.xlane.f32.xlu0 %v896
      %v898 = vpop.xlane.xlu0 %897
      %v899 = vmul.f32 %v841, %v778
      %v900 = vmul.f32 %v844, %v778
      %v901 = vmul.f32 %v847, %v778
      %v902 = vmul.f32 %v850, %v778
      %v903 = vmul.f32 %v853, %v778
      %v904 = vmul.f32 %v856, %v778
      %v905 = vmul.f32 %v859, %v778
      %v906 = vmul.f32 %v862, %v778
      %v907 = vmul.f32 %v865, %v778
      %v908 = vmul.f32 %v868, %v778
      %v909 = vmul.f32 %v871, %v778
      %v910 = vmul.f32 %v874, %v778
      %v911 = vmul.f32 %v877, %v778
      %v912 = vmul.f32 %v880, %v778
      %v913 = vmul.f32 %v883, %v778
      %v914 = vmul.f32 %v886, %v778
      %v915 = vmul.f32 %v889, %v778
      %v916 = vmul.f32 %v892, %v778
      %v917 = vmul.f32 %v895, %v778
      %v918 = vmul.f32 %v898, %v778
      %v919 = vadd.f32 %v899, 1e-05
      %v920 = vadd.f32 %v900, 1e-05
      %v921 = vadd.f32 %v901, 1e-05
      %v922 = vadd.f32 %v902, 1e-05
      %v923 = vadd.f32 %v903, 1e-05
      %v924 = vadd.f32 %v904, 1e-05
      %v925 = vadd.f32 %v905, 1e-05
      %v926 = vadd.f32 %v906, 1e-05
      %v927 = vadd.f32 %v907, 1e-05
      %v928 = vadd.f32 %v908, 1e-05
      %v929 = vadd.f32 %v909, 1e-05
      %v930 = vadd.f32 %v910, 1e-05
      %v931 = vadd.f32 %v911, 1e-05
      %v932 = vadd.f32 %v912, 1e-05
      %v933 = vadd.f32 %v913, 1e-05
      %v934 = vadd.f32 %v914, 1e-05
      %v935 = vadd.f32 %v915, 1e-05
      %v936 = vadd.f32 %v916, 1e-05
      %v937 = vadd.f32 %v917, 1e-05
      %v938 = vadd.f32 %v918, 1e-05
      %v939 = vrsqrt.pop %v919
      %v940 = vmul.f32 %v939, %v919
      %v941 = vmul.f32 %v940, %v939
      %v942 = vmul.f32 0.5, %v941
      %v943 = vsub.f32 1.5, %v942
      %v944 = vmul.f32 %v939, %v943
      %vm945 = vweird.f32 %v919
      %vm946 = vweird.f32 %v939
      %vm947 = vmor %vm945, %vm946
      %v948 = vsel %vm947, %v939, %v944
      %v949 = vrsqrt.pop %v920
      %v950 = vmul.f32 %v949, %v920
      %v951 = vmul.f32 %v950, %v949
      %v952 = vmul.f32 0.5, %v951
      %v953 = vsub.f32 1.5, %v952
      %v954 = vmul.f32 %v949, %v953
      %vm955 = vweird.f32 %v920
      %vm956 = vweird.f32 %v949
      %vm957 = vmor %vm955, %vm956
      %v958 = vsel %vm957, %v949, %v954
      %v959 = vrsqrt.pop %v921
      %v960 = vmul.f32 %v959, %v921
      %v961 = vmul.f32 %v960, %v959
      %v962 = vmul.f32 0.5, %v961
      %v963 = vsub.f32 1.5, %v962
      %v964 = vmul.f32 %v959, %v963
      %vm965 = vweird.f32 %v921
      %vm966 = vweird.f32 %v959
      %vm967 = vmor %vm965, %vm966
      %v968 = vsel %vm967, %v959, %v964
      %v969 = vrsqrt.pop %v922
      %v970 = vmul.f32 %v969, %v922
      %v971 = vmul.f32 %v970, %v969
      %v972 = vmul.f32 0.5, %v971
      %v973 = vsub.f32 1.5, %v972
      %v974 = vmul.f32 %v969, %v973
      %vm975 = vweird.f32 %v922
      %vm976 = vweird.f32 %v969
      %vm977 = vmor %vm975, %vm976
      %v978 = vsel %vm977, %v969, %v974
      %v979 = vrsqrt.pop %v923
      %v980 = vmul.f32 %v979, %v923
      %v981 = vmul.f32 %v980, %v979
      %v982 = vmul.f32 0.5, %v981
      %v983 = vsub.f32 1.5, %v982
      %v984 = vmul.f32 %v979, %v983
      %vm985 = vweird.f32 %v923
      %vm986 = vweird.f32 %v979
      %vm987 = vmor %vm985, %vm986
      %v988 = vsel %vm987, %v979, %v984
      %v989 = vrsqrt.pop %v924
      %v990 = vmul.f32 %v989, %v924
      %v991 = vmul.f32 %v990, %v989
      %v992 = vmul.f32 0.5, %v991
      %v993 = vsub.f32 1.5, %v992
      %v994 = vmul.f32 %v989, %v993
      %vm995 = vweird.f32 %v924
      %vm996 = vweird.f32 %v989
      %vm997 = vmor %vm995, %vm996
      %v998 = vsel %vm997, %v989, %v994
      %v999 = vrsqrt.pop %v925
      %v1000 = vmul.f32 %v999, %v925
      %v1001 = vmul.f32 %v1000, %v999
      %v1002 = vmul.f32 0.5, %v1001
      %v1003 = vsub.f32 1.5, %v1002
      %v1004 = vmul.f32 %v999, %v1003
      %vm1005 = vweird.f32 %v925
      %vm1006 = vweird.f32 %v999
      %vm1007 = vmor %vm1005, %vm1006
      %v1008 = vsel %vm1007, %v999, %v1004
      %v1009 = vrsqrt.pop %v926
      %v1010 = vmul.f32 %v1009, %v926
      %v1011 = vmul.f32 %v1010, %v1009
      %v1012 = vmul.f32 0.5, %v1011
      %v1013 = vsub.f32 1.5, %v1012
      %v1014 = vmul.f32 %v1009, %v1013
      %vm1015 = vweird.f32 %v926
      %vm1016 = vweird.f32 %v1009
      %vm1017 = vmor %vm1015, %vm1016
      %v1018 = vsel %vm1017, %v1009, %v1014
      %v1019 = vrsqrt.pop %v927
      %v1020 = vmul.f32 %v1019, %v927
      %v1021 = vmul.f32 %v1020, %v1019
      %v1022 = vmul.f32 0.5, %v1021
      %v1023 = vsub.f32 1.5, %v1022
      %v1024 = vmul.f32 %v1019, %v1023
      %vm1025 = vweird.f32 %v927
      %vm1026 = vweird.f32 %v1019
      %vm1027 = vmor %vm1025, %vm1026
      %v1028 = vsel %vm1027, %v1019, %v1024
      %v1029 = vrsqrt.pop %v928
      %v1030 = vmul.f32 %v1029, %v928
      %v1031 = vmul.f32 %v1030, %v1029
      %v1032 = vmul.f32 0.5, %v1031
      %v1033 = vsub.f32 1.5, %v1032
      %v1034 = vmul.f32 %v1029, %v1033
      %vm1035 = vweird.f32 %v928
      %vm1036 = vweird.f32 %v1029
      %vm1037 = vmor %vm1035, %vm1036
      %v1038 = vsel %vm1037, %v1029, %v1034
      %v1039 = vrsqrt.pop %v929
      %v1040 = vmul.f32 %v1039, %v929
      %v1041 = vmul.f32 %v1040, %v1039
      %v1042 = vmul.f32 0.5, %v1041
      %v1043 = vsub.f32 1.5, %v1042
      %v1044 = vmul.f32 %v1039, %v1043
      %vm1045 = vweird.f32 %v929
      %vm1046 = vweird.f32 %v1039
      %vm1047 = vmor %vm1045, %vm1046
      %v1048 = vsel %vm1047, %v1039, %v1044
      %v1049 = vrsqrt.pop %v930
      %v1050 = vmul.f32 %v1049, %v930
      %v1051 = vmul.f32 %v1050, %v1049
      %v1052 = vmul.f32 0.5, %v1051
      %v1053 = vsub.f32 1.5, %v1052
      %v1054 = vmul.f32 %v1049, %v1053
      %vm1055 = vweird.f32 %v930
      %vm1056 = vweird.f32 %v1049
      %vm1057 = vmor %vm1055, %vm1056
      %v1058 = vsel %vm1057, %v1049, %v1054
      %v1059 = vrsqrt.pop %v931
      %v1060 = vmul.f32 %v1059, %v931
      %v1061 = vmul.f32 %v1060, %v1059
      %v1062 = vmul.f32 0.5, %v1061
      %v1063 = vsub.f32 1.5, %v1062
      %v1064 = vmul.f32 %v1059, %v1063
      %vm1065 = vweird.f32 %v931
      %vm1066 = vweird.f32 %v1059
      %vm1067 = vmor %vm1065, %vm1066
      %v1068 = vsel %vm1067, %v1059, %v1064
      %v1069 = vrsqrt.pop %v932
      %v1070 = vmul.f32 %v1069, %v932
      %v1071 = vmul.f32 %v1070, %v1069
      %v1072 = vmul.f32 0.5, %v1071
      %v1073 = vsub.f32 1.5, %v1072
      %v1074 = vmul.f32 %v1069, %v1073
      %vm1075 = vweird.f32 %v932
      %vm1076 = vweird.f32 %v1069
      %vm1077 = vmor %vm1075, %vm1076
      %v1078 = vsel %vm1077, %v1069, %v1074
      %v1079 = vrsqrt.pop %v933
      %v1080 = vmul.f32 %v1079, %v933
      %v1081 = vmul.f32 %v1080, %v1079
      %v1082 = vmul.f32 0.5, %v1081
      %v1083 = vsub.f32 1.5, %v1082
      %v1084 = vmul.f32 %v1079, %v1083
      %vm1085 = vweird.f32 %v933
      %vm1086 = vweird.f32 %v1079
      %vm1087 = vmor %vm1085, %vm1086
      %v1088 = vsel %vm1087, %v1079, %v1084
      %v1089 = vrsqrt.pop %v934
      %v1090 = vmul.f32 %v1089, %v934
      %v1091 = vmul.f32 %v1090, %v1089
      %v1092 = vmul.f32 0.5, %v1091
      %v1093 = vsub.f32 1.5, %v1092
      %v1094 = vmul.f32 %v1089, %v1093
      %vm1095 = vweird.f32 %v934
      %vm1096 = vweird.f32 %v1089
      %vm1097 = vmor %vm1095, %vm1096
      %v1098 = vsel %vm1097, %v1089, %v1094
      %v1099 = vrsqrt.pop %v935
      %v1100 = vmul.f32 %v1099, %v935
      %v1101 = vmul.f32 %v1100, %v1099
      %v1102 = vmul.f32 0.5, %v1101
      %v1103 = vsub.f32 1.5, %v1102
      %v1104 = vmul.f32 %v1099, %v1103
      %vm1105 = vweird.f32 %v935
      %vm1106 = vweird.f32 %v1099
      %vm1107 = vmor %vm1105, %vm1106
      %v1108 = vsel %vm1107, %v1099, %v1104
      %v1109 = vrsqrt.pop %v936
      %v1110 = vmul.f32 %v1109, %v936
      %v1111 = vmul.f32 %v1110, %v1109
      %v1112 = vmul.f32 0.5, %v1111
      %v1113 = vsub.f32 1.5, %v1112
      %v1114 = vmul.f32 %v1109, %v1113
      %vm1115 = vweird.f32 %v936
      %vm1116 = vweird.f32 %v1109
      %vm1117 = vmor %vm1115, %vm1116
      %v1118 = vsel %vm1117, %v1109, %v1114
      %v1119 = vrsqrt.pop %v937
      %v1120 = vmul.f32 %v1119, %v937
      %v1121 = vmul.f32 %v1120, %v1119
      %v1122 = vmul.f32 0.5, %v1121
      %v1123 = vsub.f32 1.5, %v1122
      %v1124 = vmul.f32 %v1119, %v1123
      %vm1125 = vweird.f32 %v937
      %vm1126 = vweird.f32 %v1119
      %vm1127 = vmor %vm1125, %vm1126
      %v1128 = vsel %vm1127, %v1119, %v1124
      %v1129 = vrsqrt.pop %v938
      %v1130 = vmul.f32 %v1129, %v938
      %v1131 = vmul.f32 %v1130, %v1129
      %v1132 = vmul.f32 0.5, %v1131
      %v1133 = vsub.f32 1.5, %v1132
      %v1134 = vmul.f32 %v1129, %v1133
      %vm1135 = vweird.f32 %v938
      %vm1136 = vweird.f32 %v1129
      %vm1137 = vmor %vm1135, %vm1136
      %v1138 = vsel %vm1137, %v1129, %v1134
      %v1139 = vmul.f32 %v799, %v948
      %v1140 = vmul.f32 %v800, %v958
      %v1141 = vmul.f32 %v801, %v968
      %v1142 = vmul.f32 %v802, %v978
      %v1143 = vmul.f32 %v803, %v988
      %v1144 = vmul.f32 %v804, %v998
      %v1145 = vmul.f32 %v805, %v1008
      %v1146 = vmul.f32 %v806, %v1018
      %v1147 = vmul.f32 %v807, %v1028
      %v1148 = vmul.f32 %v808, %v1038
      %v1149 = vmul.f32 %v809, %v1048
      %v1150 = vmul.f32 %v810, %v1058
      %v1151 = vmul.f32 %v811, %v1068
      %v1152 = vmul.f32 %v812, %v1078
      %v1153 = vmul.f32 %v813, %v1088
      %v1154 = vmul.f32 %v814, %v1098
      %v1155 = vmul.f32 %v815, %v1108
      %v1156 = vmul.f32 %v816, %v1118
      %v1157 = vmul.f32 %v817, %v1128
      %v1158 = vmul.f32 %v818, %v1138
      %v1160 = vperm.slane %v709, 0
      %v1162 = vmul.f32 %v1139, %v1160
      %v1163 = vmul.f32 %v1140, %v1160
      %v1164 = vmul.f32 %v1141, %v1160
      %v1165 = vmul.f32 %v1142, %v1160
      %v1166 = vmul.f32 %v1143, %v1160
      %v1167 = vmul.f32 %v1144, %v1160
      %v1168 = vmul.f32 %v1145, %v1160
      %v1169 = vmul.f32 %v1146, %v1160
      %v1170 = vmul.f32 %v1147, %v1160
      %v1171 = vmul.f32 %v1148, %v1160
      %v1172 = vmul.f32 %v1149, %v1160
      %v1173 = vmul.f32 %v1150, %v1160
      %v1174 = vmul.f32 %v1151, %v1160
      %v1175 = vmul.f32 %v1152, %v1160
      %v1176 = vmul.f32 %v1153, %v1160
      %v1177 = vmul.f32 %v1154, %v1160
      %v1178 = vmul.f32 %v1155, %v1160
      %v1179 = vmul.f32 %v1156, %v1160
      %v1180 = vmul.f32 %v1157, %v1160
      %v1181 = vmul.f32 %v1158, %v1160
      %v1183 = vperm.slane %v710, 0
      %v1185 = vadd.f32 %v1162, %v1183
      %v1186 = vadd.f32 %v1163, %v1183
      %v1187 = vadd.f32 %v1164, %v1183
      %v1188 = vadd.f32 %v1165, %v1183
      %v1189 = vadd.f32 %v1166, %v1183
      %v1190 = vadd.f32 %v1167, %v1183
      %v1191 = vadd.f32 %v1168, %v1183
      %v1192 = vadd.f32 %v1169, %v1183
      %v1193 = vadd.f32 %v1170, %v1183
      %v1194 = vadd.f32 %v1171, %v1183
      %v1195 = vadd.f32 %v1172, %v1183
      %v1196 = vadd.f32 %v1173, %v1183
      %v1197 = vadd.f32 %v1174, %v1183
      %v1198 = vadd.f32 %v1175, %v1183
      %v1199 = vadd.f32 %v1176, %v1183
      %v1200 = vadd.f32 %v1177, %v1183
      %v1201 = vadd.f32 %v1178, %v1183
      %v1202 = vadd.f32 %v1179, %v1183
      %v1203 = vadd.f32 %v1180, %v1183
      %v1204 = vadd.f32 %v1181, %v1183
      %v1205 = vmul.f32 %v1185, %v1185
      %v1206 = vmul.f32 %v1186, %v1186
      %v1207 = vmul.f32 %v1187, %v1187
      %v1208 = vmul.f32 %v1188, %v1188
      %v1209 = vmul.f32 %v1189, %v1189
      %v1210 = vmul.f32 %v1190, %v1190
      %v1211 = vmul.f32 %v1191, %v1191
      %v1212 = vmul.f32 %v1192, %v1192
      %v1213 = vmul.f32 %v1193, %v1193
      %v1214 = vmul.f32 %v1194, %v1194
      %v1215 = vmul.f32 %v1195, %v1195
      %v1216 = vmul.f32 %v1196, %v1196
      %v1217 = vmul.f32 %v1197, %v1197
      %v1218 = vmul.f32 %v1198, %v1198
      %v1219 = vmul.f32 %v1199, %v1199
      %v1220 = vmul.f32 %v1200, %v1200
      %v1221 = vmul.f32 %v1201, %v1201
      %v1222 = vmul.f32 %v1202, %v1202
      %v1223 = vmul.f32 %v1203, %v1203
      %v1224 = vmul.f32 %v1204, %v1204
      %v1225 = vmul.f32 %v1185, %v1205
      %v1226 = vmul.f32 %v1186, %v1206
      %v1227 = vmul.f32 %v1187, %v1207
      %v1228 = vmul.f32 %v1188, %v1208
      %v1229 = vmul.f32 %v1189, %v1209
      %v1230 = vmul.f32 %v1190, %v1210
      %v1231 = vmul.f32 %v1191, %v1211
      %v1232 = vmul.f32 %v1192, %v1212
      %v1233 = vmul.f32 %v1193, %v1213
      %v1234 = vmul.f32 %v1194, %v1214
      %v1235 = vmul.f32 %v1195, %v1215
      %v1236 = vmul.f32 %v1196, %v1216
      %v1237 = vmul.f32 %v1197, %v1217
      %v1238 = vmul.f32 %v1198, %v1218
      %v1239 = vmul.f32 %v1199, %v1219
      %v1240 = vmul.f32 %v1200, %v1220
      %v1241 = vmul.f32 %v1201, %v1221
      %v1242 = vmul.f32 %v1202, %v1222
      %v1243 = vmul.f32 %v1203, %v1223
      %v1244 = vmul.f32 %v1204, %v1224
      %v1245 = vmul.f32 %v1225, 0.044715
      %v1246 = vmul.f32 %v1226, 0.044715
      %v1247 = vmul.f32 %v1227, 0.044715
      %v1248 = vmul.f32 %v1228, 0.044715
      %v1249 = vmul.f32 %v1229, 0.044715
      %v1250 = vmul.f32 %v1230, 0.044715
      %v1251 = vmul.f32 %v1231, 0.044715
      %v1252 = vmul.f32 %v1232, 0.044715
      %v1253 = vmul.f32 %v1233, 0.044715
      %v1254 = vmul.f32 %v1234, 0.044715
      %v1255 = vmul.f32 %v1235, 0.044715
      %v1256 = vmul.f32 %v1236, 0.044715
      %v1257 = vmul.f32 %v1237, 0.044715
      %v1258 = vmul.f32 %v1238, 0.044715
      %v1259 = vmul.f32 %v1239, 0.044715
      %v1260 = vmul.f32 %v1240, 0.044715
      %v1261 = vmul.f32 %v1241, 0.044715
      %v1262 = vmul.f32 %v1242, 0.044715
      %v1263 = vmul.f32 %v1243, 0.044715
      %v1264 = vmul.f32 %v1244, 0.044715
      %v1265 = vadd.f32 %v1185, %v1245
      %v1266 = vadd.f32 %v1186, %v1246
      %v1267 = vadd.f32 %v1187, %v1247
      %v1268 = vadd.f32 %v1188, %v1248
      %v1269 = vadd.f32 %v1189, %v1249
      %v1270 = vadd.f32 %v1190, %v1250
      %v1271 = vadd.f32 %v1191, %v1251
      %v1272 = vadd.f32 %v1192, %v1252
      %v1273 = vadd.f32 %v1193, %v1253
      %v1274 = vadd.f32 %v1194, %v1254
      %v1275 = vadd.f32 %v1195, %v1255
      %v1276 = vadd.f32 %v1196, %v1256
      %v1277 = vadd.f32 %v1197, %v1257
      %v1278 = vadd.f32 %v1198, %v1258
      %v1279 = vadd.f32 %v1199, %v1259
      %v1280 = vadd.f32 %v1200, %v1260
      %v1281 = vadd.f32 %v1201, %v1261
      %v1282 = vadd.f32 %v1202, %v1262
      %v1283 = vadd.f32 %v1203, %v1263
      %v1284 = vadd.f32 %v1204, %v1264
      %v1285 = vmul.f32 %v1265, 0.7978846
      %v1286 = vmul.f32 %v1266, 0.7978846
      %v1287 = vmul.f32 %v1267, 0.7978846
      %v1288 = vmul.f32 %v1268, 0.7978846
      %v1289 = vmul.f32 %v1269, 0.7978846
      %v1290 = vmul.f32 %v1270, 0.7978846
      %v1291 = vmul.f32 %v1271, 0.7978846
      %v1292 = vmul.f32 %v1272, 0.7978846
      %v1293 = vmul.f32 %v1273, 0.7978846
      %v1294 = vmul.f32 %v1274, 0.7978846
      %v1295 = vmul.f32 %v1275, 0.7978846
      %v1296 = vmul.f32 %v1276, 0.7978846
      %v1297 = vmul.f32 %v1277, 0.7978846
      %v1298 = vmul.f32 %v1278, 0.7978846
      %v1299 = vmul.f32 %v1279, 0.7978846
      %v1300 = vmul.f32 %v1280, 0.7978846
      %v1301 = vmul.f32 %v1281, 0.7978846
      %v1302 = vmul.f32 %v1282, 0.7978846
      %v1303 = vmul.f32 %v1283, 0.7978846
      %v1304 = vmul.f32 %v1284, 0.7978846
      %v1305 = vtanh.pop %v1285
      %v1306 = vtanh.pop %v1286
      %v1307 = vtanh.pop %v1287
      %v1308 = vtanh.pop %v1288
      %v1309 = vtanh.pop %v1289
      %v1310 = vtanh.pop %v1290
      %v1311 = vtanh.pop %v1291
      %v1312 = vtanh.pop %v1292
      %v1313 = vtanh.pop %v1293
      %v1314 = vtanh.pop %v1294
      %v1315 = vtanh.pop %v1295
      %v1316 = vtanh.pop %v1296
      %v1317 = vtanh.pop %v1297
      %v1318 = vtanh.pop %v1298
      %v1319 = vtanh.pop %v1299
      %v1320 = vtanh.pop %v1300
      %v1321 = vtanh.pop %v1301
      %v1322 = vtanh.pop %v1302
      %v1323 = vtanh.pop %v1303
      %v1324 = vtanh.pop %v1304
      %v1325 = vadd.f32 %v1305, 1.0
      %v1326 = vadd.f32 %v1306, 1.0
      %v1327 = vadd.f32 %v1307, 1.0
      %v1328 = vadd.f32 %v1308, 1.0
      %v1329 = vadd.f32 %v1309, 1.0
      %v1330 = vadd.f32 %v1310, 1.0
      %v1331 = vadd.f32 %v1311, 1.0
      %v1332 = vadd.f32 %v1312, 1.0
      %v1333 = vadd.f32 %v1313, 1.0
      %v1334 = vadd.f32 %v1314, 1.0
      %v1335 = vadd.f32 %v1315, 1.0
      %v1336 = vadd.f32 %v1316, 1.0
      %v1337 = vadd.f32 %v1317, 1.0
      %v1338 = vadd.f32 %v1318, 1.0
      %v1339 = vadd.f32 %v1319, 1.0
      %v1340 = vadd.f32 %v1320, 1.0
      %v1341 = vadd.f32 %v1321, 1.0
      %v1342 = vadd.f32 %v1322, 1.0
      %v1343 = vadd.f32 %v1323, 1.0
      %v1344 = vadd.f32 %v1324, 1.0
      %v1345 = vmul.f32 %v1325, 0.5
      %v1346 = vmul.f32 %v1326, 0.5
      %v1347 = vmul.f32 %v1327, 0.5
      %v1348 = vmul.f32 %v1328, 0.5
      %v1349 = vmul.f32 %v1329, 0.5
      %v1350 = vmul.f32 %v1330, 0.5
      %v1351 = vmul.f32 %v1331, 0.5
      %v1352 = vmul.f32 %v1332, 0.5
      %v1353 = vmul.f32 %v1333, 0.5
      %v1354 = vmul.f32 %v1334, 0.5
      %v1355 = vmul.f32 %v1335, 0.5
      %v1356 = vmul.f32 %v1336, 0.5
      %v1357 = vmul.f32 %v1337, 0.5
      %v1358 = vmul.f32 %v1338, 0.5
      %v1359 = vmul.f32 %v1339, 0.5
      %v1360 = vmul.f32 %v1340, 0.5
      %v1361 = vmul.f32 %v1341, 0.5
      %v1362 = vmul.f32 %v1342, 0.5
      %v1363 = vmul.f32 %v1343, 0.5
      %v1364 = vmul.f32 %v1344, 0.5
      %v1365 = vmul.f32 %v1185, %v1345
      %v1366 = vmul.f32 %v1186, %v1346
      %v1367 = vmul.f32 %v1187, %v1347
      %v1368 = vmul.f32 %v1188, %v1348
      %v1369 = vmul.f32 %v1189, %v1349
      %v1370 = vmul.f32 %v1190, %v1350
      %v1371 = vmul.f32 %v1191, %v1351
      %v1372 = vmul.f32 %v1192, %v1352
      %v1373 = vmul.f32 %v1193, %v1353
      %v1374 = vmul.f32 %v1194, %v1354
      %v1375 = vmul.f32 %v1195, %v1355
      %v1376 = vmul.f32 %v1196, %v1356
      %v1377 = vmul.f32 %v1197, %v1357
      %v1378 = vmul.f32 %v1198, %v1358
      %v1379 = vmul.f32 %v1199, %v1359
      %v1380 = vmul.f32 %v1200, %v1360
      %v1381 = vmul.f32 %v1201, %v1361
      %v1382 = vmul.f32 %v1202, %v1362
      %v1383 = vmul.f32 %v1203, %v1363
      %v1384 = vmul.f32 %v1204, %v1364
      %v1385 = vrot.slane %v1365, 1
      %v1386 = vrot.slane %v1366, 1
      %v1387 = vrot.slane %v1367, 1
      %v1388 = vrot.slane %v1368, 1
      %v1389 = vrot.slane %v1369, 1
      %v1390 = vrot.slane %v1370, 1
      %v1391 = vrot.slane %v1371, 1
      %v1392 = vrot.slane %v1372, 1
      %v1393 = vrot.slane %v1373, 1
      %v1394 = vrot.slane %v1374, 1
      %v1395 = vlaneseq
      %v1396 = vshrl.u32 %v1395, 7
      %vm1397 = vcmp.lt.s32.totalorder %v1396, 7
      %v1398 = vsel %vm1397, %v1393, %v1394
      %v1399 = vsel %vm1397, %v1392, %v1393
      %v1400 = vsel %vm1397, %v1391, %v1392
      %v1401 = vsel %vm1397, %v1390, %v1391
      %v1402 = vsel %vm1397, %v1389, %v1390
      %v1403 = vsel %vm1397, %v1388, %v1389
      %v1404 = vsel %vm1397, %v1387, %v1388
      %v1405 = vsel %vm1397, %v1386, %v1387
      %v1406 = vsel %vm1397, %v1385, %v1386
      %v1407 = vsel %vm1397, %v1394, %v1385
      %v1408 = vld [vmem:[%s5] sm:$0xf]
      %v1409 = vld [vmem:[%s5 + $0x4] sm:$0xf]
      %v1410 = vld [vmem:[%s5 + $0x8] sm:$0xf]
      %v1411 = vld [vmem:[%s5 + $0xc] sm:$0xf]
      %v1412 = vld [vmem:[%s5 + $0x10] sm:$0xf]
      %v1413 = vld [vmem:[%s5 + $0x14] sm:$0xf]
      %v1414 = vld [vmem:[%s5 + $0x18] sm:$0xf]
      %v1415 = vld [vmem:[%s5 + $0x1c] sm:$0xf]
      %v1416 = vld [vmem:[%s5 + $0x20] sm:$0xf]
      %v1417 = vld [vmem:[%s5 + $0x24] sm:$0xf]
      %v1418 = vld [vmem:[%s5 + $0x28] sm:$0xf]
      %v1419 = vld [vmem:[%s5 + $0x2c] sm:$0xf]
      %v1420 = vpack.c.bf16 %v1366, %v1365
      %v1421 = vpack.c.bf16 %v1368, %v1367
      %v1422 = vpack.c.bf16 %v1370, %v1369
      %v1423 = vpack.c.bf16 %v1372, %v1371
      %v1424 = vpack.c.bf16 %v1374, %v1373
      %v1425 = vpack.c.bf16 %v1376, %v1375
      %v1426 = vpack.c.bf16 %v1378, %v1377
      %v1427 = vpack.c.bf16 %v1380, %v1379
      %v1428 = vpack.c.bf16 %v1382, %v1381
      %v1429 = vpack.c.bf16 %v1384, %v1383
      %v1434 = vunpack.c.l.b16 %v1412
      %v1435 = vunpack.c.l.b16 %v1413
      %v1436 = vunpack.c.l.b16 %v1414
      %v1437 = vunpack.c.l.b16 %v1415
      %v1438 = vpack.c.b16 %v1435, %v1434
      %v1439 = vpack.c.b16 %v1437, %v1436
      %v1443 = vsel %vm711, %v1425, 0
      %v1446 = vsel %vm711, %v1426, 0
      %v1449 = vsel %vm711, %v1427, 0
      %v1452 = vsel %vm711, %v1428, 0
      %v1455 = vsel %vm711, %v1429, 0
      %1457 = vmatpush.bf16.msra.mxu0 0
      %1458 = vmatpush.bf16.msra.mxu0 0
      %1459 = vmatpush.bf16.msra.mxu0 0
      %1460 = vmatpush.bf16.msra.mxu0 0
      %1461 = vmatpush.bf16.msra.mxu0 0
      %1462 = vmatpush.bf16.msra.mxu0 0
      %1463 = vmatpush.bf16.msra.mxu0 %v1439
      %1464 = vmatpush.bf16.msra.mxu0 %v1438
      %1465 = vmatmul.bf16.gmra.mxu0 %v1443
      %v1466 = vpop.f32.mrf.mxu0
      %v1467 = vadd.f32 0.0, %v1466
      %v1468 = vpop.f32.mrf.mxu0
      %v1469 = vadd.f32 0.0, %v1468
      %1470 = vmatmul.bf16.gmra.mxu0 %v1446
      %v1471 = vpop.f32.mrf.mxu0
      %v1472 = vadd.f32 0.0, %v1471
      %v1473 = vpop.f32.mrf.mxu0
      %v1474 = vadd.f32 0.0, %v1473
      %1475 = vmatmul.bf16.gmra.mxu0 %v1449
      %v1476 = vpop.f32.mrf.mxu0
      %v1477 = vadd.f32 0.0, %v1476
      %v1478 = vpop.f32.mrf.mxu0
      %v1479 = vadd.f32 0.0, %v1478
      %1480 = vmatmul.bf16.gmra.mxu0 %v1452
      %v1481 = vpop.f32.mrf.mxu0
      %v1482 = vadd.f32 0.0, %v1481
      %v1483 = vpop.f32.mrf.mxu0
      %v1484 = vadd.f32 0.0, %v1483
      %1485 = vmatmul.bf16.gmra.mxu0 %v1455
      %v1486 = vpop.f32.mrf.mxu0
      %v1487 = vadd.f32 0.0, %v1486
      %v1488 = vpop.f32.mrf.mxu0
      %v1489 = vadd.f32 0.0, %v1488
      %1490 = vdwg.mxu0
      %v1495 = vunpack.c.l.b16 %v1408
      %v1496 = vunpack.c.l.b16 %v1409
      %v1497 = vunpack.c.l.b16 %v1410
      %v1498 = vunpack.c.l.b16 %v1411
      %v1499 = vpack.c.b16 %v1496, %v1495
      %v1500 = vpack.c.b16 %v1498, %v1497
      %v1504 = vsel %vm711, %v1420, 0
      %v1507 = vsel %vm711, %v1421, 0
      %v1510 = vsel %vm711, %v1422, 0
      %v1513 = vsel %vm711, %v1423, 0
      %v1516 = vsel %vm711, %v1424, 0
      %1518 = vmatpush.bf16.msra.mxu0 0
      %1519 = vmatpush.bf16.msra.mxu0 0
      %1520 = vmatpush.bf16.msra.mxu0 0
      %1521 = vmatpush.bf16.msra.mxu0 0
      %1522 = vmatpush.bf16.msra.mxu0 0
      %1523 = vmatpush.bf16.msra.mxu0 0
      %1524 = vmatpush.bf16.msra.mxu0 %v1500
      %1525 = vmatpush.bf16.msra.mxu0 %v1499
      %1526 = vmatmul.bf16.gmra.mxu0 %v1504
      %v1527 = vpop.f32.mrf.mxu0
      %v1528 = vadd.f32 %v1467, %v1527
      %v1529 = vpop.f32.mrf.mxu0
      %v1530 = vadd.f32 %v1469, %v1529
      %1531 = vmatmul.bf16.gmra.mxu0 %v1507
      %v1532 = vpop.f32.mrf.mxu0
      %v1533 = vadd.f32 %v1472, %v1532
      %v1534 = vpop.f32.mrf.mxu0
      %v1535 = vadd.f32 %v1474, %v1534
      %1536 = vmatmul.bf16.gmra.mxu0 %v1510
      %v1537 = vpop.f32.mrf.mxu0
      %v1538 = vadd.f32 %v1477, %v1537
      %v1539 = vpop.f32.mrf.mxu0
      %v1540 = vadd.f32 %v1479, %v1539
      %1541 = vmatmul.bf16.gmra.mxu0 %v1513
      %v1542 = vpop.f32.mrf.mxu0
      %v1543 = vadd.f32 %v1482, %v1542
      %v1544 = vpop.f32.mrf.mxu0
      %v1545 = vadd.f32 %v1484, %v1544
      %1546 = vmatmul.bf16.gmra.mxu0 %v1516
      %v1547 = vpop.f32.mrf.mxu0
      %v1548 = vadd.f32 %v1487, %v1547
      %v1549 = vpop.f32.mrf.mxu0
      %v1550 = vadd.f32 %v1489, %v1549
      %1551 = vdwg.mxu0
      %v1552 = vpack.c.bf16 %v1405, %v1406
      %v1553 = vpack.c.bf16 %v1403, %v1404
      %v1554 = vpack.c.bf16 %v1401, %v1402
      %v1555 = vpack.c.bf16 %v1399, %v1400
      %v1556 = vpack.c.bf16 %v1407, %v1398
      %v1561 = vunpack.c.l.b16 %v1416
      %v1562 = vunpack.c.l.b16 %v1417
      %v1563 = vunpack.c.l.b16 %v1418
      %v1564 = vunpack.c.l.b16 %v1419
      %v1565 = vpack.c.b16 %v1562, %v1561
      %v1566 = vpack.c.b16 %v1564, %v1563
      %v1570 = vsel %vm711, %v1552, 0
      %v1573 = vsel %vm711, %v1553, 0
      %v1576 = vsel %vm711, %v1554, 0
      %v1579 = vsel %vm711, %v1555, 0
      %v1582 = vsel %vm711, %v1556, 0
      %1584 = vmatpush.bf16.msra.mxu0 0
      %1585 = vmatpush.bf16.msra.mxu0 0
      %1586 = vmatpush.bf16.msra.mxu0 0
      %1587 = vmatpush.bf16.msra.mxu0 0
      %1588 = vmatpush.bf16.msra.mxu0 0
      %1589 = vmatpush.bf16.msra.mxu0 0
      %1590 = vmatpush.bf16.msra.mxu0 %v1566
      %1591 = vmatpush.bf16.msra.mxu0 %v1565
      %1592 = vmatmul.bf16.gmra.mxu0 %v1570
      %v1593 = vpop.f32.mrf.mxu0
      %v1594 = vadd.f32 0.0, %v1593
      %v1595 = vpop.f32.mrf.mxu0
      %v1596 = vadd.f32 0.0, %v1595
      %1597 = vmatmul.bf16.gmra.mxu0 %v1573
      %v1598 = vpop.f32.mrf.mxu0
      %v1599 = vadd.f32 0.0, %v1598
      %v1600 = vpop.f32.mrf.mxu0
      %v1601 = vadd.f32 0.0, %v1600
      %1602 = vmatmul.bf16.gmra.mxu0 %v1576
      %v1603 = vpop.f32.mrf.mxu0
      %v1604 = vadd.f32 0.0, %v1603
      %v1605 = vpop.f32.mrf.mxu0
      %v1606 = vadd.f32 0.0, %v1605
      %1607 = vmatmul.bf16.gmra.mxu0 %v1579
      %v1608 = vpop.f32.mrf.mxu0
      %v1609 = vadd.f32 0.0, %v1608
      %v1610 = vpop.f32.mrf.mxu0
      %v1611 = vadd.f32 0.0, %v1610
      %1612 = vmatmul.bf16.gmra.mxu0 %v1582
      %v1613 = vpop.f32.mrf.mxu0
      %v1614 = vadd.f32 0.0, %v1613
      %v1615 = vpop.f32.mrf.mxu0
      %v1616 = vadd.f32 0.0, %v1615
      %1617 = vdwg.mxu0
      %v1618 = vadd.f32 %v1528, %v1594
      %v1619 = vadd.f32 %v1530, %v1596
      %v1620 = vadd.f32 %v1533, %v1599
      %v1621 = vadd.f32 %v1535, %v1601
      %v1622 = vadd.f32 %v1538, %v1604
      %v1623 = vadd.f32 %v1540, %v1606
      %v1624 = vadd.f32 %v1543, %v1609
      %v1625 = vadd.f32 %v1545, %v1611
      %v1626 = vadd.f32 %v1548, %v1614
      %v1627 = vadd.f32 %v1550, %v1616
      %v1628 = vld [vmem:[%s6] sm:$0x1]
      %v1630 = vperm.slane %v1628, 0
      %v1632 = vadd.f32 %v1618, %v1630
      %v1633 = vadd.f32 %v1619, %v1630
      %v1634 = vadd.f32 %v1620, %v1630
      %v1635 = vadd.f32 %v1621, %v1630
      %v1636 = vadd.f32 %v1622, %v1630
      %v1637 = vadd.f32 %v1623, %v1630
      %v1638 = vadd.f32 %v1624, %v1630
      %v1639 = vadd.f32 %v1625, %v1630
      %v1640 = vadd.f32 %v1626, %v1630
      %v1641 = vadd.f32 %v1627, %v1630
      %v1642 = vld [vmem:[%s7] sm:$0x1]
      %v1643 = vld [vmem:[%s8] sm:$0x1]
      %v1644 = vsel %vm711, %v1632, 0.0
      %1645 = vadd.xlane.f32.xlu0 %v1644
      %v1646 = vpop.xlane.xlu0 %1645
      %v1647 = vsel %vm711, %v1633, 0.0
      %1648 = vadd.xlane.f32.xlu0 %v1647
      %v1649 = vpop.xlane.xlu0 %1648
      %v1650 = vsel %vm711, %v1634, 0.0
      %1651 = vadd.xlane.f32.xlu0 %v1650
      %v1652 = vpop.xlane.xlu0 %1651
      %v1653 = vsel %vm711, %v1635, 0.0
      %1654 = vadd.xlane.f32.xlu0 %v1653
      %v1655 = vpop.xlane.xlu0 %1654
      %v1656 = vsel %vm711, %v1636, 0.0
      %1657 = vadd.xlane.f32.xlu0 %v1656
      %v1658 = vpop.xlane.xlu0 %1657
      %v1659 = vsel %vm711, %v1637, 0.0
      %1660 = vadd.xlane.f32.xlu0 %v1659
      %v1661 = vpop.xlane.xlu0 %1660
      %v1662 = vsel %vm711, %v1638, 0.0
      %1663 = vadd.xlane.f32.xlu0 %v1662
      %v1664 = vpop.xlane.xlu0 %1663
      %v1665 = vsel %vm711, %v1639, 0.0
      %1666 = vadd.xlane.f32.xlu0 %v1665
      %v1667 = vpop.xlane.xlu0 %1666
      %v1668 = vsel %vm711, %v1640, 0.0
      %1669 = vadd.xlane.f32.xlu0 %v1668
      %v1670 = vpop.xlane.xlu0 %1669
      %v1671 = vsel %vm711, %v1641, 0.0
      %1672 = vadd.xlane.f32.xlu0 %v1671
      %v1673 = vpop.xlane.xlu0 %1672
      %v1674 = vmul.f32 %v1646, %v778
      %v1675 = vmul.f32 %v1649, %v778
      %v1676 = vmul.f32 %v1652, %v778
      %v1677 = vmul.f32 %v1655, %v778
      %v1678 = vmul.f32 %v1658, %v778
      %v1679 = vmul.f32 %v1661, %v778
      %v1680 = vmul.f32 %v1664, %v778
      %v1681 = vmul.f32 %v1667, %v778
      %v1682 = vmul.f32 %v1670, %v778
      %v1683 = vmul.f32 %v1673, %v778
      %v1684 = vsub.f32 %v1632, %v1674
      %v1685 = vsub.f32 %v1633, %v1675
      %v1686 = vsub.f32 %v1634, %v1676
      %v1687 = vsub.f32 %v1635, %v1677
      %v1688 = vsub.f32 %v1636, %v1678
      %v1689 = vsub.f32 %v1637, %v1679
      %v1690 = vsub.f32 %v1638, %v1680
      %v1691 = vsub.f32 %v1639, %v1681
      %v1692 = vsub.f32 %v1640, %v1682
      %v1693 = vsub.f32 %v1641, %v1683
      %v1694 = vmul.f32 %v1684, %v1684
      %v1695 = vmul.f32 %v1685, %v1685
      %v1696 = vmul.f32 %v1686, %v1686
      %v1697 = vmul.f32 %v1687, %v1687
      %v1698 = vmul.f32 %v1688, %v1688
      %v1699 = vmul.f32 %v1689, %v1689
      %v1700 = vmul.f32 %v1690, %v1690
      %v1701 = vmul.f32 %v1691, %v1691
      %v1702 = vmul.f32 %v1692, %v1692
      %v1703 = vmul.f32 %v1693, %v1693
      %v1704 = vsel %vm711, %v1694, 0.0
      %1705 = vadd.xlane.f32.xlu0 %v1704
      %v1706 = vpop.xlane.xlu0 %1705
      %v1707 = vsel %vm711, %v1695, 0.0
      %1708 = vadd.xlane.f32.xlu0 %v1707
      %v1709 = vpop.xlane.xlu0 %1708
      %v1710 = vsel %vm711, %v1696, 0.0
      %1711 = vadd.xlane.f32.xlu0 %v1710
      %v1712 = vpop.xlane.xlu0 %1711
      %v1713 = vsel %vm711, %v1697, 0.0
      %1714 = vadd.xlane.f32.xlu0 %v1713
      %v1715 = vpop.xlane.xlu0 %1714
      %v1716 = vsel %vm711, %v1698, 0.0
      %1717 = vadd.xlane.f32.xlu0 %v1716
      %v1718 = vpop.xlane.xlu0 %1717
      %v1719 = vsel %vm711, %v1699, 0.0
      %1720 = vadd.xlane.f32.xlu0 %v1719
      %v1721 = vpop.xlane.xlu0 %1720
      %v1722 = vsel %vm711, %v1700, 0.0
      %1723 = vadd.xlane.f32.xlu0 %v1722
      %v1724 = vpop.xlane.xlu0 %1723
      %v1725 = vsel %vm711, %v1701, 0.0
      %1726 = vadd.xlane.f32.xlu0 %v1725
      %v1727 = vpop.xlane.xlu0 %1726
      %v1728 = vsel %vm711, %v1702, 0.0
      %1729 = vadd.xlane.f32.xlu0 %v1728
      %v1730 = vpop.xlane.xlu0 %1729
      %v1731 = vsel %vm711, %v1703, 0.0
      %1732 = vadd.xlane.f32.xlu0 %v1731
      %v1733 = vpop.xlane.xlu0 %1732
      %v1734 = vmul.f32 %v1706, %v778
      %v1735 = vmul.f32 %v1709, %v778
      %v1736 = vmul.f32 %v1712, %v778
      %v1737 = vmul.f32 %v1715, %v778
      %v1738 = vmul.f32 %v1718, %v778
      %v1739 = vmul.f32 %v1721, %v778
      %v1740 = vmul.f32 %v1724, %v778
      %v1741 = vmul.f32 %v1727, %v778
      %v1742 = vmul.f32 %v1730, %v778
      %v1743 = vmul.f32 %v1733, %v778
      %v1744 = vadd.f32 %v1734, 1e-05
      %v1745 = vadd.f32 %v1735, 1e-05
      %v1746 = vadd.f32 %v1736, 1e-05
      %v1747 = vadd.f32 %v1737, 1e-05
      %v1748 = vadd.f32 %v1738, 1e-05
      %v1749 = vadd.f32 %v1739, 1e-05
      %v1750 = vadd.f32 %v1740, 1e-05
      %v1751 = vadd.f32 %v1741, 1e-05
      %v1752 = vadd.f32 %v1742, 1e-05
      %v1753 = vadd.f32 %v1743, 1e-05
      %v1754 = vrsqrt.pop %v1744
      %v1755 = vmul.f32 %v1754, %v1744
      %v1756 = vmul.f32 %v1755, %v1754
      %v1757 = vmul.f32 0.5, %v1756
      %v1758 = vsub.f32 1.5, %v1757
      %v1759 = vmul.f32 %v1754, %v1758
      %vm1760 = vweird.f32 %v1744
      %vm1761 = vweird.f32 %v1754
      %vm1762 = vmor %vm1760, %vm1761
      %v1763 = vsel %vm1762, %v1754, %v1759
      %v1764 = vrsqrt.pop %v1745
      %v1765 = vmul.f32 %v1764, %v1745
      %v1766 = vmul.f32 %v1765, %v1764
      %v1767 = vmul.f32 0.5, %v1766
      %v1768 = vsub.f32 1.5, %v1767
      %v1769 = vmul.f32 %v1764, %v1768
      %vm1770 = vweird.f32 %v1745
      %vm1771 = vweird.f32 %v1764
      %vm1772 = vmor %vm1770, %vm1771
      %v1773 = vsel %vm1772, %v1764, %v1769
      %v1774 = vrsqrt.pop %v1746
      %v1775 = vmul.f32 %v1774, %v1746
      %v1776 = vmul.f32 %v1775, %v1774
      %v1777 = vmul.f32 0.5, %v1776
      %v1778 = vsub.f32 1.5, %v1777
      %v1779 = vmul.f32 %v1774, %v1778
      %vm1780 = vweird.f32 %v1746
      %vm1781 = vweird.f32 %v1774
      %vm1782 = vmor %vm1780, %vm1781
      %v1783 = vsel %vm1782, %v1774, %v1779
      %v1784 = vrsqrt.pop %v1747
      %v1785 = vmul.f32 %v1784, %v1747
      %v1786 = vmul.f32 %v1785, %v1784
      %v1787 = vmul.f32 0.5, %v1786
      %v1788 = vsub.f32 1.5, %v1787
      %v1789 = vmul.f32 %v1784, %v1788
      %vm1790 = vweird.f32 %v1747
      %vm1791 = vweird.f32 %v1784
      %vm1792 = vmor %vm1790, %vm1791
      %v1793 = vsel %vm1792, %v1784, %v1789
      %v1794 = vrsqrt.pop %v1748
      %v1795 = vmul.f32 %v1794, %v1748
      %v1796 = vmul.f32 %v1795, %v1794
      %v1797 = vmul.f32 0.5, %v1796
      %v1798 = vsub.f32 1.5, %v1797
      %v1799 = vmul.f32 %v1794, %v1798
      %vm1800 = vweird.f32 %v1748
      %vm1801 = vweird.f32 %v1794
      %vm1802 = vmor %vm1800, %vm1801
      %v1803 = vsel %vm1802, %v1794, %v1799
      %v1804 = vrsqrt.pop %v1749
      %v1805 = vmul.f32 %v1804, %v1749
      %v1806 = vmul.f32 %v1805, %v1804
      %v1807 = vmul.f32 0.5, %v1806
      %v1808 = vsub.f32 1.5, %v1807
      %v1809 = vmul.f32 %v1804, %v1808
      %vm1810 = vweird.f32 %v1749
      %vm1811 = vweird.f32 %v1804
      %vm1812 = vmor %vm1810, %vm1811
      %v1813 = vsel %vm1812, %v1804, %v1809
      %v1814 = vrsqrt.pop %v1750
      %v1815 = vmul.f32 %v1814, %v1750
      %v1816 = vmul.f32 %v1815, %v1814
      %v1817 = vmul.f32 0.5, %v1816
      %v1818 = vsub.f32 1.5, %v1817
      %v1819 = vmul.f32 %v1814, %v1818
      %vm1820 = vweird.f32 %v1750
      %vm1821 = vweird.f32 %v1814
      %vm1822 = vmor %vm1820, %vm1821
      %v1823 = vsel %vm1822, %v1814, %v1819
      %v1824 = vrsqrt.pop %v1751
      %v1825 = vmul.f32 %v1824, %v1751
      %v1826 = vmul.f32 %v1825, %v1824
      %v1827 = vmul.f32 0.5, %v1826
      %v1828 = vsub.f32 1.5, %v1827
      %v1829 = vmul.f32 %v1824, %v1828
      %vm1830 = vweird.f32 %v1751
      %vm1831 = vweird.f32 %v1824
      %vm1832 = vmor %vm1830, %vm1831
      %v1833 = vsel %vm1832, %v1824, %v1829
      %v1834 = vrsqrt.pop %v1752
      %v1835 = vmul.f32 %v1834, %v1752
      %v1836 = vmul.f32 %v1835, %v1834
      %v1837 = vmul.f32 0.5, %v1836
      %v1838 = vsub.f32 1.5, %v1837
      %v1839 = vmul.f32 %v1834, %v1838
      %vm1840 = vweird.f32 %v1752
      %vm1841 = vweird.f32 %v1834
      %vm1842 = vmor %vm1840, %vm1841
      %v1843 = vsel %vm1842, %v1834, %v1839
      %v1844 = vrsqrt.pop %v1753
      %v1845 = vmul.f32 %v1844, %v1753
      %v1846 = vmul.f32 %v1845, %v1844
      %v1847 = vmul.f32 0.5, %v1846
      %v1848 = vsub.f32 1.5, %v1847
      %v1849 = vmul.f32 %v1844, %v1848
      %vm1850 = vweird.f32 %v1753
      %vm1851 = vweird.f32 %v1844
      %vm1852 = vmor %vm1850, %vm1851
      %v1853 = vsel %vm1852, %v1844, %v1849
      %v1854 = vmul.f32 %v1684, %v1763
      %v1855 = vmul.f32 %v1685, %v1773
      %v1856 = vmul.f32 %v1686, %v1783
      %v1857 = vmul.f32 %v1687, %v1793
      %v1858 = vmul.f32 %v1688, %v1803
      %v1859 = vmul.f32 %v1689, %v1813
      %v1860 = vmul.f32 %v1690, %v1823
      %v1861 = vmul.f32 %v1691, %v1833
      %v1862 = vmul.f32 %v1692, %v1843
      %v1863 = vmul.f32 %v1693, %v1853
      %v1865 = vperm.slane %v1642, 0
      %v1867 = vmul.f32 %v1854, %v1865
      %v1868 = vmul.f32 %v1855, %v1865
      %v1869 = vmul.f32 %v1856, %v1865
      %v1870 = vmul.f32 %v1857, %v1865
      %v1871 = vmul.f32 %v1858, %v1865
      %v1872 = vmul.f32 %v1859, %v1865
      %v1873 = vmul.f32 %v1860, %v1865
      %v1874 = vmul.f32 %v1861, %v1865
      %v1875 = vmul.f32 %v1862, %v1865
      %v1876 = vmul.f32 %v1863, %v1865
      %v1878 = vperm.slane %v1643, 0
      %v1880 = vadd.f32 %v1867, %v1878
      %v1881 = vadd.f32 %v1868, %v1878
      %v1882 = vadd.f32 %v1869, %v1878
      %v1883 = vadd.f32 %v1870, %v1878
      %v1884 = vadd.f32 %v1871, %v1878
      %v1885 = vadd.f32 %v1872, %v1878
      %v1886 = vadd.f32 %v1873, %v1878
      %v1887 = vadd.f32 %v1874, %v1878
      %v1888 = vadd.f32 %v1875, %v1878
      %v1889 = vadd.f32 %v1876, %v1878
      %v1890 = vmul.f32 %v1880, %v1880
      %v1891 = vmul.f32 %v1881, %v1881
      %v1892 = vmul.f32 %v1882, %v1882
      %v1893 = vmul.f32 %v1883, %v1883
      %v1894 = vmul.f32 %v1884, %v1884
      %v1895 = vmul.f32 %v1885, %v1885
      %v1896 = vmul.f32 %v1886, %v1886
      %v1897 = vmul.f32 %v1887, %v1887
      %v1898 = vmul.f32 %v1888, %v1888
      %v1899 = vmul.f32 %v1889, %v1889
      %v1900 = vmul.f32 %v1880, %v1890
      %v1901 = vmul.f32 %v1881, %v1891
      %v1902 = vmul.f32 %v1882, %v1892
      %v1903 = vmul.f32 %v1883, %v1893
      %v1904 = vmul.f32 %v1884, %v1894
      %v1905 = vmul.f32 %v1885, %v1895
      %v1906 = vmul.f32 %v1886, %v1896
      %v1907 = vmul.f32 %v1887, %v1897
      %v1908 = vmul.f32 %v1888, %v1898
      %v1909 = vmul.f32 %v1889, %v1899
      %v1910 = vmul.f32 %v1900, 0.044715
      %v1911 = vmul.f32 %v1901, 0.044715
      %v1912 = vmul.f32 %v1902, 0.044715
      %v1913 = vmul.f32 %v1903, 0.044715
      %v1914 = vmul.f32 %v1904, 0.044715
      %v1915 = vmul.f32 %v1905, 0.044715
      %v1916 = vmul.f32 %v1906, 0.044715
      %v1917 = vmul.f32 %v1907, 0.044715
      %v1918 = vmul.f32 %v1908, 0.044715
      %v1919 = vmul.f32 %v1909, 0.044715
      %v1920 = vadd.f32 %v1880, %v1910
      %v1921 = vadd.f32 %v1881, %v1911
      %v1922 = vadd.f32 %v1882, %v1912
      %v1923 = vadd.f32 %v1883, %v1913
      %v1924 = vadd.f32 %v1884, %v1914
      %v1925 = vadd.f32 %v1885, %v1915
      %v1926 = vadd.f32 %v1886, %v1916
      %v1927 = vadd.f32 %v1887, %v1917
      %v1928 = vadd.f32 %v1888, %v1918
      %v1929 = vadd.f32 %v1889, %v1919
      %v1930 = vmul.f32 %v1920, 0.7978846
      %v1931 = vmul.f32 %v1921, 0.7978846
      %v1932 = vmul.f32 %v1922, 0.7978846
      %v1933 = vmul.f32 %v1923, 0.7978846
      %v1934 = vmul.f32 %v1924, 0.7978846
      %v1935 = vmul.f32 %v1925, 0.7978846
      %v1936 = vmul.f32 %v1926, 0.7978846
      %v1937 = vmul.f32 %v1927, 0.7978846
      %v1938 = vmul.f32 %v1928, 0.7978846
      %v1939 = vmul.f32 %v1929, 0.7978846
      %v1940 = vtanh.pop %v1930
      %v1941 = vtanh.pop %v1931
      %v1942 = vtanh.pop %v1932
      %v1943 = vtanh.pop %v1933
      %v1944 = vtanh.pop %v1934
      %v1945 = vtanh.pop %v1935
      %v1946 = vtanh.pop %v1936
      %v1947 = vtanh.pop %v1937
      %v1948 = vtanh.pop %v1938
      %v1949 = vtanh.pop %v1939
      %v1950 = vadd.f32 %v1940, 1.0
      %v1951 = vadd.f32 %v1941, 1.0
      %v1952 = vadd.f32 %v1942, 1.0
      %v1953 = vadd.f32 %v1943, 1.0
      %v1954 = vadd.f32 %v1944, 1.0
      %v1955 = vadd.f32 %v1945, 1.0
      %v1956 = vadd.f32 %v1946, 1.0
      %v1957 = vadd.f32 %v1947, 1.0
      %v1958 = vadd.f32 %v1948, 1.0
      %v1959 = vadd.f32 %v1949, 1.0
      %v1960 = vmul.f32 %v1950, 0.5
      %v1961 = vmul.f32 %v1951, 0.5
      %v1962 = vmul.f32 %v1952, 0.5
      %v1963 = vmul.f32 %v1953, 0.5
      %v1964 = vmul.f32 %v1954, 0.5
      %v1965 = vmul.f32 %v1955, 0.5
      %v1966 = vmul.f32 %v1956, 0.5
      %v1967 = vmul.f32 %v1957, 0.5
      %v1968 = vmul.f32 %v1958, 0.5
      %v1969 = vmul.f32 %v1959, 0.5
      %v1970 = vmul.f32 %v1880, %v1960
      %v1971 = vmul.f32 %v1881, %v1961
      %v1972 = vmul.f32 %v1882, %v1962
      %v1973 = vmul.f32 %v1883, %v1963
      %v1974 = vmul.f32 %v1884, %v1964
      %v1975 = vmul.f32 %v1885, %v1965
      %v1976 = vmul.f32 %v1886, %v1966
      %v1977 = vmul.f32 %v1887, %v1967
      %v1978 = vmul.f32 %v1888, %v1968
      %v1979 = vmul.f32 %v1889, %v1969
      %v1980 = vld [vmem:[%s9] sm:$0x1]
      %v1981 = vld [vmem:[%s10] sm:$0x1]
      %v1982 = vsel %vm711, %v1970, 0.0
      %1983 = vadd.xlane.f32.xlu0 %v1982
      %v1984 = vpop.xlane.xlu0 %1983
      %v1985 = vsel %vm711, %v1971, 0.0
      %1986 = vadd.xlane.f32.xlu0 %v1985
      %v1987 = vpop.xlane.xlu0 %1986
      %v1988 = vsel %vm711, %v1972, 0.0
      %1989 = vadd.xlane.f32.xlu0 %v1988
      %v1990 = vpop.xlane.xlu0 %1989
      %v1991 = vsel %vm711, %v1973, 0.0
      %1992 = vadd.xlane.f32.xlu0 %v1991
      %v1993 = vpop.xlane.xlu0 %1992
      %v1994 = vsel %vm711, %v1974, 0.0
      %1995 = vadd.xlane.f32.xlu0 %v1994
      %v1996 = vpop.xlane.xlu0 %1995
      %v1997 = vsel %vm711, %v1975, 0.0
      %1998 = vadd.xlane.f32.xlu0 %v1997
      %v1999 = vpop.xlane.xlu0 %1998
      %v2000 = vsel %vm711, %v1976, 0.0
      %2001 = vadd.xlane.f32.xlu0 %v2000
      %v2002 = vpop.xlane.xlu0 %2001
      %v2003 = vsel %vm711, %v1977, 0.0
      %2004 = vadd.xlane.f32.xlu0 %v2003
      %v2005 = vpop.xlane.xlu0 %2004
      %v2006 = vsel %vm711, %v1978, 0.0
      %2007 = vadd.xlane.f32.xlu0 %v2006
      %v2008 = vpop.xlane.xlu0 %2007
      %v2009 = vsel %vm711, %v1979, 0.0
      %2010 = vadd.xlane.f32.xlu0 %v2009
      %v2011 = vpop.xlane.xlu0 %2010
      %v2012 = vmul.f32 %v1984, %v778
      %v2013 = vmul.f32 %v1987, %v778
      %v2014 = vmul.f32 %v1990, %v778
      %v2015 = vmul.f32 %v1993, %v778
      %v2016 = vmul.f32 %v1996, %v778
      %v2017 = vmul.f32 %v1999, %v778
      %v2018 = vmul.f32 %v2002, %v778
      %v2019 = vmul.f32 %v2005, %v778
      %v2020 = vmul.f32 %v2008, %v778
      %v2021 = vmul.f32 %v2011, %v778
      %v2022 = vsub.f32 %v1970, %v2012
      %v2023 = vsub.f32 %v1971, %v2013
      %v2024 = vsub.f32 %v1972, %v2014
      %v2025 = vsub.f32 %v1973, %v2015
      %v2026 = vsub.f32 %v1974, %v2016
      %v2027 = vsub.f32 %v1975, %v2017
      %v2028 = vsub.f32 %v1976, %v2018
      %v2029 = vsub.f32 %v1977, %v2019
      %v2030 = vsub.f32 %v1978, %v2020
      %v2031 = vsub.f32 %v1979, %v2021
      %v2032 = vmul.f32 %v2022, %v2022
      %v2033 = vmul.f32 %v2023, %v2023
      %v2034 = vmul.f32 %v2024, %v2024
      %v2035 = vmul.f32 %v2025, %v2025
      %v2036 = vmul.f32 %v2026, %v2026
      %v2037 = vmul.f32 %v2027, %v2027
      %v2038 = vmul.f32 %v2028, %v2028
      %v2039 = vmul.f32 %v2029, %v2029
      %v2040 = vmul.f32 %v2030, %v2030
      %v2041 = vmul.f32 %v2031, %v2031
      %v2042 = vsel %vm711, %v2032, 0.0
      %2043 = vadd.xlane.f32.xlu0 %v2042
      %v2044 = vpop.xlane.xlu0 %2043
      %v2045 = vsel %vm711, %v2033, 0.0
      %2046 = vadd.xlane.f32.xlu0 %v2045
      %v2047 = vpop.xlane.xlu0 %2046
      %v2048 = vsel %vm711, %v2034, 0.0
      %2049 = vadd.xlane.f32.xlu0 %v2048
      %v2050 = vpop.xlane.xlu0 %2049
      %v2051 = vsel %vm711, %v2035, 0.0
      %2052 = vadd.xlane.f32.xlu0 %v2051
      %v2053 = vpop.xlane.xlu0 %2052
      %v2054 = vsel %vm711, %v2036, 0.0
      %2055 = vadd.xlane.f32.xlu0 %v2054
      %v2056 = vpop.xlane.xlu0 %2055
      %v2057 = vsel %vm711, %v2037, 0.0
      %2058 = vadd.xlane.f32.xlu0 %v2057
      %v2059 = vpop.xlane.xlu0 %2058
      %v2060 = vsel %vm711, %v2038, 0.0
      %2061 = vadd.xlane.f32.xlu0 %v2060
      %v2062 = vpop.xlane.xlu0 %2061
      %v2063 = vsel %vm711, %v2039, 0.0
      %2064 = vadd.xlane.f32.xlu0 %v2063
      %v2065 = vpop.xlane.xlu0 %2064
      %v2066 = vsel %vm711, %v2040, 0.0
      %2067 = vadd.xlane.f32.xlu0 %v2066
      %v2068 = vpop.xlane.xlu0 %2067
      %v2069 = vsel %vm711, %v2041, 0.0
      %2070 = vadd.xlane.f32.xlu0 %v2069
      %v2071 = vpop.xlane.xlu0 %2070
      %v2072 = vmul.f32 %v2044, %v778
      %v2073 = vmul.f32 %v2047, %v778
      %v2074 = vmul.f32 %v2050, %v778
      %v2075 = vmul.f32 %v2053, %v778
      %v2076 = vmul.f32 %v2056, %v778
      %v2077 = vmul.f32 %v2059, %v778
      %v2078 = vmul.f32 %v2062, %v778
      %v2079 = vmul.f32 %v2065, %v778
      %v2080 = vmul.f32 %v2068, %v778
      %v2081 = vmul.f32 %v2071, %v778
      %v2082 = vadd.f32 %v2072, 1e-05
      %v2083 = vadd.f32 %v2073, 1e-05
      %v2084 = vadd.f32 %v2074, 1e-05
      %v2085 = vadd.f32 %v2075, 1e-05
      %v2086 = vadd.f32 %v2076, 1e-05
      %v2087 = vadd.f32 %v2077, 1e-05
      %v2088 = vadd.f32 %v2078, 1e-05
      %v2089 = vadd.f32 %v2079, 1e-05
      %v2090 = vadd.f32 %v2080, 1e-05
      %v2091 = vadd.f32 %v2081, 1e-05
      %v2092 = vrsqrt.pop %v2082
      %v2093 = vmul.f32 %v2092, %v2082
      %v2094 = vmul.f32 %v2093, %v2092
      %v2095 = vmul.f32 0.5, %v2094
      %v2096 = vsub.f32 1.5, %v2095
      %v2097 = vmul.f32 %v2092, %v2096
      %vm2098 = vweird.f32 %v2082
      %vm2099 = vweird.f32 %v2092
      %vm2100 = vmor %vm2098, %vm2099
      %v2101 = vsel %vm2100, %v2092, %v2097
      %v2102 = vrsqrt.pop %v2083
      %v2103 = vmul.f32 %v2102, %v2083
      %v2104 = vmul.f32 %v2103, %v2102
      %v2105 = vmul.f32 0.5, %v2104
      %v2106 = vsub.f32 1.5, %v2105
      %v2107 = vmul.f32 %v2102, %v2106
      %vm2108 = vweird.f32 %v2083
      %vm2109 = vweird.f32 %v2102
      %vm2110 = vmor %vm2108, %vm2109
      %v2111 = vsel %vm2110, %v2102, %v2107
      %v2112 = vrsqrt.pop %v2084
      %v2113 = vmul.f32 %v2112, %v2084
      %v2114 = vmul.f32 %v2113, %v2112
      %v2115 = vmul.f32 0.5, %v2114
      %v2116 = vsub.f32 1.5, %v2115
      %v2117 = vmul.f32 %v2112, %v2116
      %vm2118 = vweird.f32 %v2084
      %vm2119 = vweird.f32 %v2112
      %vm2120 = vmor %vm2118, %vm2119
      %v2121 = vsel %vm2120, %v2112, %v2117
      %v2122 = vrsqrt.pop %v2085
      %v2123 = vmul.f32 %v2122, %v2085
      %v2124 = vmul.f32 %v2123, %v2122
      %v2125 = vmul.f32 0.5, %v2124
      %v2126 = vsub.f32 1.5, %v2125
      %v2127 = vmul.f32 %v2122, %v2126
      %vm2128 = vweird.f32 %v2085
      %vm2129 = vweird.f32 %v2122
      %vm2130 = vmor %vm2128, %vm2129
      %v2131 = vsel %vm2130, %v2122, %v2127
      %v2132 = vrsqrt.pop %v2086
      %v2133 = vmul.f32 %v2132, %v2086
      %v2134 = vmul.f32 %v2133, %v2132
      %v2135 = vmul.f32 0.5, %v2134
      %v2136 = vsub.f32 1.5, %v2135
      %v2137 = vmul.f32 %v2132, %v2136
      %vm2138 = vweird.f32 %v2086
      %vm2139 = vweird.f32 %v2132
      %vm2140 = vmor %vm2138, %vm2139
      %v2141 = vsel %vm2140, %v2132, %v2137
      %v2142 = vrsqrt.pop %v2087
      %v2143 = vmul.f32 %v2142, %v2087
      %v2144 = vmul.f32 %v2143, %v2142
      %v2145 = vmul.f32 0.5, %v2144
      %v2146 = vsub.f32 1.5, %v2145
      %v2147 = vmul.f32 %v2142, %v2146
      %vm2148 = vweird.f32 %v2087
      %vm2149 = vweird.f32 %v2142
      %vm2150 = vmor %vm2148, %vm2149
      %v2151 = vsel %vm2150, %v2142, %v2147
      %v2152 = vrsqrt.pop %v2088
      %v2153 = vmul.f32 %v2152, %v2088
      %v2154 = vmul.f32 %v2153, %v2152
      %v2155 = vmul.f32 0.5, %v2154
      %v2156 = vsub.f32 1.5, %v2155
      %v2157 = vmul.f32 %v2152, %v2156
      %vm2158 = vweird.f32 %v2088
      %vm2159 = vweird.f32 %v2152
      %vm2160 = vmor %vm2158, %vm2159
      %v2161 = vsel %vm2160, %v2152, %v2157
      %v2162 = vrsqrt.pop %v2089
      %v2163 = vmul.f32 %v2162, %v2089
      %v2164 = vmul.f32 %v2163, %v2162
      %v2165 = vmul.f32 0.5, %v2164
      %v2166 = vsub.f32 1.5, %v2165
      %v2167 = vmul.f32 %v2162, %v2166
      %vm2168 = vweird.f32 %v2089
      %vm2169 = vweird.f32 %v2162
      %vm2170 = vmor %vm2168, %vm2169
      %v2171 = vsel %vm2170, %v2162, %v2167
      %v2172 = vrsqrt.pop %v2090
      %v2173 = vmul.f32 %v2172, %v2090
      %v2174 = vmul.f32 %v2173, %v2172
      %v2175 = vmul.f32 0.5, %v2174
      %v2176 = vsub.f32 1.5, %v2175
      %v2177 = vmul.f32 %v2172, %v2176
      %vm2178 = vweird.f32 %v2090
      %vm2179 = vweird.f32 %v2172
      %vm2180 = vmor %vm2178, %vm2179
      %v2181 = vsel %vm2180, %v2172, %v2177
      %v2182 = vrsqrt.pop %v2091
      %v2183 = vmul.f32 %v2182, %v2091
      %v2184 = vmul.f32 %v2183, %v2182
      %v2185 = vmul.f32 0.5, %v2184
      %v2186 = vsub.f32 1.5, %v2185
      %v2187 = vmul.f32 %v2182, %v2186
      %vm2188 = vweird.f32 %v2091
      %vm2189 = vweird.f32 %v2182
      %vm2190 = vmor %vm2188, %vm2189
      %v2191 = vsel %vm2190, %v2182, %v2187
      %v2192 = vmul.f32 %v2022, %v2101
      %v2193 = vmul.f32 %v2023, %v2111
      %v2194 = vmul.f32 %v2024, %v2121
      %v2195 = vmul.f32 %v2025, %v2131
      %v2196 = vmul.f32 %v2026, %v2141
      %v2197 = vmul.f32 %v2027, %v2151
      %v2198 = vmul.f32 %v2028, %v2161
      %v2199 = vmul.f32 %v2029, %v2171
      %v2200 = vmul.f32 %v2030, %v2181
      %v2201 = vmul.f32 %v2031, %v2191
      %v2203 = vperm.slane %v1980, 0
      %v2205 = vmul.f32 %v2192, %v2203
      %v2206 = vmul.f32 %v2193, %v2203
      %v2207 = vmul.f32 %v2194, %v2203
      %v2208 = vmul.f32 %v2195, %v2203
      %v2209 = vmul.f32 %v2196, %v2203
      %v2210 = vmul.f32 %v2197, %v2203
      %v2211 = vmul.f32 %v2198, %v2203
      %v2212 = vmul.f32 %v2199, %v2203
      %v2213 = vmul.f32 %v2200, %v2203
      %v2214 = vmul.f32 %v2201, %v2203
      %v2216 = vperm.slane %v1981, 0
      %v2218 = vadd.f32 %v2205, %v2216
      %v2219 = vadd.f32 %v2206, %v2216
      %v2220 = vadd.f32 %v2207, %v2216
      %v2221 = vadd.f32 %v2208, %v2216
      %v2222 = vadd.f32 %v2209, %v2216
      %v2223 = vadd.f32 %v2210, %v2216
      %v2224 = vadd.f32 %v2211, %v2216
      %v2225 = vadd.f32 %v2212, %v2216
      %v2226 = vadd.f32 %v2213, %v2216
      %v2227 = vadd.f32 %v2214, %v2216
      %v2228 = vpack.c.bf16 %v2219, %v2218
      %v2229 = vpack.c.bf16 %v2221, %v2220
      %v2230 = vpack.c.bf16 %v2223, %v2222
      %v2231 = vpack.c.bf16 %v2225, %v2224
      %v2232 = vpack.c.bf16 %v2227, %v2226
      %v2233 = vld [vmem:[%s11] sm:$0xf]
      %v2234 = vld [vmem:[%s11 + $0x4] sm:$0xf]
      %v2235 = vld [vmem:[%s11 + $0x8] sm:$0xf]
      %v2236 = vld [vmem:[%s11 + $0xc] sm:$0xf]
      %v2237 = vld [vmem:[%s12] sm:$0x1]
      %v2239 = vperm.slane %v2237, 0
      %v2245 = vunpack.c.l.b16 %v2233
      %v2246 = vunpack.c.l.b16 %v2234
      %v2247 = vunpack.c.l.b16 %v2235
      %v2248 = vunpack.c.l.b16 %v2236
      %v2249 = vpack.c.b16 %v2246, %v2245
      %v2250 = vpack.c.b16 %v2248, %v2247
      %v2254 = vsel %vm711, %v2228, 0
      %v2257 = vsel %vm711, %v2229, 0
      %v2260 = vsel %vm711, %v2230, 0
      %v2263 = vsel %vm711, %v2231, 0
      %v2266 = vsel %vm711, %v2232, 0
      %2268 = vmatpush.bf16.msra.mxu0 0
      %2269 = vmatpush.bf16.msra.mxu0 0
      %2270 = vmatpush.bf16.msra.mxu0 0
      %2271 = vmatpush.bf16.msra.mxu0 0
      %2272 = vmatpush.bf16.msra.mxu0 0
      %2273 = vmatpush.bf16.msra.mxu0 0
      %2274 = vmatpush.bf16.msra.mxu0 %v2250
      %2275 = vmatpush.bf16.msra.mxu0 %v2249
      %2276 = vmatmul.bf16.gmra.mxu0 %v2254
      %v2277 = vpop.f32.mrf.mxu0
      %v2278 = vadd.f32 %v2239, %v2277
      %v2279 = vpop.f32.mrf.mxu0
      %v2280 = vadd.f32 %v2239, %v2279
      %2281 = vmatmul.bf16.gmra.mxu0 %v2257
      %v2282 = vpop.f32.mrf.mxu0
      %v2283 = vadd.f32 %v2239, %v2282
      %v2284 = vpop.f32.mrf.mxu0
      %v2285 = vadd.f32 %v2239, %v2284
      %2286 = vmatmul.bf16.gmra.mxu0 %v2260
      %v2287 = vpop.f32.mrf.mxu0
      %v2288 = vadd.f32 %v2239, %v2287
      %v2289 = vpop.f32.mrf.mxu0
      %v2290 = vadd.f32 %v2239, %v2289
      %2291 = vmatmul.bf16.gmra.mxu0 %v2263
      %v2292 = vpop.f32.mrf.mxu0
      %v2293 = vadd.f32 %v2239, %v2292
      %v2294 = vpop.f32.mrf.mxu0
      %v2295 = vadd.f32 %v2239, %v2294
      %2296 = vmatmul.bf16.gmra.mxu0 %v2266
      %v2297 = vpop.f32.mrf.mxu0
      %v2298 = vadd.f32 %v2239, %v2297
      %v2299 = vpop.f32.mrf.mxu0
      %v2300 = vadd.f32 %v2239, %v2299
      %2301 = vdwg.mxu0
      %v2302 = vld [vmem:[%s17] sm:$0xff]
      %v2303 = vld [vmem:[%s17 + $0x8] sm:$0xff]
      %v2304 = vld [vmem:[%s17 + $0x10] sm:$0xff]
      %v2305 = vld [vmem:[%s17 + $0x18] sm:$0xff]
      %v2306 = vld [vmem:[%s17 + $0x20] sm:$0xff]
      %v2307 = vld [vmem:[%s17 + $0x28] sm:$0xff]
      %v2308 = vld [vmem:[%s17 + $0x30] sm:$0xff]
      %v2309 = vld [vmem:[%s17 + $0x38] sm:$0xff]
      %v2310 = vld [vmem:[%s17 + $0x40] sm:$0xff]
      %v2311 = vld [vmem:[%s17 + $0x48] sm:$0xff]
      %2313 = vset.pattern.permute.xlu0 0
      %2314 = vperm.xlu0 %2313, %v2302
      %v2315 = vpop.permute.xlu0 %2314
      %2318 = vset.pattern.permute.xlu0 0
      %2319 = vperm.xlu0 %2318, %v2303
      %v2320 = vpop.permute.xlu0 %2319
      %2323 = vset.pattern.permute.xlu0 0
      %2324 = vperm.xlu0 %2323, %v2304
      %v2325 = vpop.permute.xlu0 %2324
      %2328 = vset.pattern.permute.xlu0 0
      %2329 = vperm.xlu0 %2328, %v2305
      %v2330 = vpop.permute.xlu0 %2329
      %2333 = vset.pattern.permute.xlu0 0
      %2334 = vperm.xlu0 %2333, %v2306
      %v2335 = vpop.permute.xlu0 %2334
      %2338 = vset.pattern.permute.xlu0 0
      %2339 = vperm.xlu0 %2338, %v2307
      %v2340 = vpop.permute.xlu0 %2339
      %2343 = vset.pattern.permute.xlu0 0
      %2344 = vperm.xlu0 %2343, %v2308
      %v2345 = vpop.permute.xlu0 %2344
      %2348 = vset.pattern.permute.xlu0 0
      %2349 = vperm.xlu0 %2348, %v2309
      %v2350 = vpop.permute.xlu0 %2349
      %2353 = vset.pattern.permute.xlu0 0
      %2354 = vperm.xlu0 %2353, %v2310
      %v2355 = vpop.permute.xlu0 %2354
      %2358 = vset.pattern.permute.xlu0 0
      %2359 = vperm.xlu0 %2358, %v2311
      %v2360 = vpop.permute.xlu0 %2359
      %v2362 = vmul.f32 %v2278, %v2315
      %v2363 = vmul.f32 %v2280, %v2320
      %v2364 = vmul.f32 %v2283, %v2325
      %v2365 = vmul.f32 %v2285, %v2330
      %v2366 = vmul.f32 %v2288, %v2335
      %v2367 = vmul.f32 %v2290, %v2340
      %v2368 = vmul.f32 %v2293, %v2345
      %v2369 = vmul.f32 %v2295, %v2350
      %v2370 = vmul.f32 %v2298, %v2355
      %v2371 = vmul.f32 %v2300, %v2360
      %v2372 = vrot.slane %v2362, 7
      %v2373 = vrot.slane %v2363, 7
      %v2374 = vrot.slane %v2364, 7
      %v2375 = vrot.slane %v2365, 7
      %v2376 = vrot.slane %v2366, 7
      %v2377 = vrot.slane %v2367, 7
      %v2378 = vrot.slane %v2368, 7
      %v2379 = vrot.slane %v2369, 7
      %v2380 = vrot.slane %v2370, 7
      %v2381 = vrot.slane %v2371, 7
      %vm2382 = vcmp.lt.s32.totalorder %v1396, 1
      %v2383 = vsel %vm2382, %v2380, %v2381
      %v2384 = vsel %vm2382, %v2379, %v2380
      %v2385 = vsel %vm2382, %v2378, %v2379
      %v2386 = vsel %vm2382, %v2377, %v2378
      %v2387 = vsel %vm2382, %v2376, %v2377
      %v2388 = vsel %vm2382, %v2375, %v2376
      %v2389 = vsel %vm2382, %v2374, %v2375
      %v2390 = vsel %vm2382, %v2373, %v2374
      %v2391 = vsel %vm2382, %v2372, %v2373
      %v2392 = vsel %vm2382, %v2381, %v2372
      %v2393 = vrot.slane %v2362, 1
      %v2394 = vrot.slane %v2363, 1
      %v2395 = vrot.slane %v2364, 1
      %v2396 = vrot.slane %v2365, 1
      %v2397 = vrot.slane %v2366, 1
      %v2398 = vrot.slane %v2367, 1
      %v2399 = vrot.slane %v2368, 1
      %v2400 = vrot.slane %v2369, 1
      %v2401 = vrot.slane %v2370, 1
      %v2402 = vrot.slane %v2371, 1
      %v2403 = vsel %vm1397, %v2401, %v2402
      %v2404 = vsel %vm1397, %v2400, %v2401
      %v2405 = vsel %vm1397, %v2399, %v2400
      %v2406 = vsel %vm1397, %v2398, %v2399
      %v2407 = vsel %vm1397, %v2397, %v2398
      %v2408 = vsel %vm1397, %v2396, %v2397
      %v2409 = vsel %vm1397, %v2395, %v2396
      %v2410 = vsel %vm1397, %v2394, %v2395
      %v2411 = vsel %vm1397, %v2393, %v2394
      %v2412 = vsel %vm1397, %v2402, %v2393
      %v2413 = vld [vmem:[%s13] sm:$0xf]
      %v2414 = vld [vmem:[%s13 + $0x4] sm:$0xf]
      %v2415 = vld [vmem:[%s13 + $0x8] sm:$0xf]
      %v2416 = vld [vmem:[%s13 + $0xc] sm:$0xf]
      %v2417 = vld [vmem:[%s13 + $0x10] sm:$0xf]
      %v2418 = vld [vmem:[%s13 + $0x14] sm:$0xf]
      %v2419 = vld [vmem:[%s13 + $0x18] sm:$0xf]
      %v2420 = vld [vmem:[%s13 + $0x1c] sm:$0xf]
      %v2421 = vld [vmem:[%s13 + $0x20] sm:$0xf]
      %v2422 = vld [vmem:[%s13 + $0x24] sm:$0xf]
      %v2423 = vld [vmem:[%s13 + $0x28] sm:$0xf]
      %v2424 = vld [vmem:[%s13 + $0x2c] sm:$0xf]
      %v2425 = vpack.c.bf16 %v2391, %v2392
      %v2426 = vpack.c.bf16 %v2389, %v2390
      %v2427 = vpack.c.bf16 %v2387, %v2388
      %v2428 = vpack.c.bf16 %v2385, %v2386
      %v2429 = vpack.c.bf16 %v2383, %v2384
      %v2430 = vpack.c.bf16 %v2363, %v2362
      %v2431 = vpack.c.bf16 %v2365, %v2364
      %v2432 = vpack.c.bf16 %v2367, %v2366
      %v2433 = vpack.c.bf16 %v2369, %v2368
      %v2434 = vpack.c.bf16 %v2371, %v2370
      %v2439 = vunpack.c.l.b16 %v2417
      %v2440 = vunpack.c.l.b16 %v2418
      %v2441 = vunpack.c.l.b16 %v2419
      %v2442 = vunpack.c.l.b16 %v2420
      %v2443 = vpack.c.b16 %v2440, %v2439
      %v2444 = vpack.c.b16 %v2442, %v2441
      %v2448 = vsel %vm711, %v2430, 0
      %v2451 = vsel %vm711, %v2431, 0
      %v2454 = vsel %vm711, %v2432, 0
      %v2457 = vsel %vm711, %v2433, 0
      %v2460 = vsel %vm711, %v2434, 0
      %2462 = vmatpush.bf16.msra.mxu0 0
      %2463 = vmatpush.bf16.msra.mxu0 0
      %2464 = vmatpush.bf16.msra.mxu0 0
      %2465 = vmatpush.bf16.msra.mxu0 0
      %2466 = vmatpush.bf16.msra.mxu0 0
      %2467 = vmatpush.bf16.msra.mxu0 0
      %2468 = vmatpush.bf16.msra.mxu0 %v2444
      %2469 = vmatpush.bf16.msra.mxu0 %v2443
      %2470 = vmatmul.bf16.gmra.mxu0 %v2448
      %v2471 = vpop.f32.mrf.mxu0
      %v2472 = vadd.f32 0.0, %v2471
      %v2473 = vpop.f32.mrf.mxu0
      %v2474 = vadd.f32 0.0, %v2473
      %2475 = vmatmul.bf16.gmra.mxu0 %v2451
      %v2476 = vpop.f32.mrf.mxu0
      %v2477 = vadd.f32 0.0, %v2476
      %v2478 = vpop.f32.mrf.mxu0
      %v2479 = vadd.f32 0.0, %v2478
      %2480 = vmatmul.bf16.gmra.mxu0 %v2454
      %v2481 = vpop.f32.mrf.mxu0
      %v2482 = vadd.f32 0.0, %v2481
      %v2483 = vpop.f32.mrf.mxu0
      %v2484 = vadd.f32 0.0, %v2483
      %2485 = vmatmul.bf16.gmra.mxu0 %v2457
      %v2486 = vpop.f32.mrf.mxu0
      %v2487 = vadd.f32 0.0, %v2486
      %v2488 = vpop.f32.mrf.mxu0
      %v2489 = vadd.f32 0.0, %v2488
      %2490 = vmatmul.bf16.gmra.mxu0 %v2460
      %v2491 = vpop.f32.mrf.mxu0
      %v2492 = vadd.f32 0.0, %v2491
      %v2493 = vpop.f32.mrf.mxu0
      %v2494 = vadd.f32 0.0, %v2493
      %2495 = vdwg.mxu0
      %v2500 = vunpack.c.l.b16 %v2413
      %v2501 = vunpack.c.l.b16 %v2414
      %v2502 = vunpack.c.l.b16 %v2415
      %v2503 = vunpack.c.l.b16 %v2416
      %v2504 = vpack.c.b16 %v2501, %v2500
      %v2505 = vpack.c.b16 %v2503, %v2502
      %v2509 = vsel %vm711, %v2425, 0
      %v2512 = vsel %vm711, %v2426, 0
      %v2515 = vsel %vm711, %v2427, 0
      %v2518 = vsel %vm711, %v2428, 0
      %v2521 = vsel %vm711, %v2429, 0
      %2523 = vmatpush.bf16.msra.mxu0 0
      %2524 = vmatpush.bf16.msra.mxu0 0
      %2525 = vmatpush.bf16.msra.mxu0 0
      %2526 = vmatpush.bf16.msra.mxu0 0
      %2527 = vmatpush.bf16.msra.mxu0 0
      %2528 = vmatpush.bf16.msra.mxu0 0
      %2529 = vmatpush.bf16.msra.mxu0 %v2505
      %2530 = vmatpush.bf16.msra.mxu0 %v2504
      %2531 = vmatmul.bf16.gmra.mxu0 %v2509
      %v2532 = vpop.f32.mrf.mxu0
      %v2533 = vadd.f32 %v2472, %v2532
      %v2534 = vpop.f32.mrf.mxu0
      %v2535 = vadd.f32 %v2474, %v2534
      %2536 = vmatmul.bf16.gmra.mxu0 %v2512
      %v2537 = vpop.f32.mrf.mxu0
      %v2538 = vadd.f32 %v2477, %v2537
      %v2539 = vpop.f32.mrf.mxu0
      %v2540 = vadd.f32 %v2479, %v2539
      %2541 = vmatmul.bf16.gmra.mxu0 %v2515
      %v2542 = vpop.f32.mrf.mxu0
      %v2543 = vadd.f32 %v2482, %v2542
      %v2544 = vpop.f32.mrf.mxu0
      %v2545 = vadd.f32 %v2484, %v2544
      %2546 = vmatmul.bf16.gmra.mxu0 %v2518
      %v2547 = vpop.f32.mrf.mxu0
      %v2548 = vadd.f32 %v2487, %v2547
      %v2549 = vpop.f32.mrf.mxu0
      %v2550 = vadd.f32 %v2489, %v2549
      %2551 = vmatmul.bf16.gmra.mxu0 %v2521
      %v2552 = vpop.f32.mrf.mxu0
      %v2553 = vadd.f32 %v2492, %v2552
      %v2554 = vpop.f32.mrf.mxu0
      %v2555 = vadd.f32 %v2494, %v2554
      %2556 = vdwg.mxu0
      %v2557 = vpack.c.bf16 %v2410, %v2411
      %v2558 = vpack.c.bf16 %v2408, %v2409
      %v2559 = vpack.c.bf16 %v2406, %v2407
      %v2560 = vpack.c.bf16 %v2404, %v2405
      %v2561 = vpack.c.bf16 %v2412, %v2403
      %v2566 = vunpack.c.l.b16 %v2421
      %v2567 = vunpack.c.l.b16 %v2422
      %v2568 = vunpack.c.l.b16 %v2423
      %v2569 = vunpack.c.l.b16 %v2424
      %v2570 = vpack.c.b16 %v2567, %v2566
      %v2571 = vpack.c.b16 %v2569, %v2568
      %v2575 = vsel %vm711, %v2557, 0
      %v2578 = vsel %vm711, %v2558, 0
      %v2581 = vsel %vm711, %v2559, 0
      %v2584 = vsel %vm711, %v2560, 0
      %v2587 = vsel %vm711, %v2561, 0
      %2589 = vmatpush.bf16.msra.mxu0 0
      %2590 = vmatpush.bf16.msra.mxu0 0
      %2591 = vmatpush.bf16.msra.mxu0 0
      %2592 = vmatpush.bf16.msra.mxu0 0
      %2593 = vmatpush.bf16.msra.mxu0 0
      %2594 = vmatpush.bf16.msra.mxu0 0
      %2595 = vmatpush.bf16.msra.mxu0 %v2571
      %2596 = vmatpush.bf16.msra.mxu0 %v2570
      %2597 = vmatmul.bf16.gmra.mxu0 %v2575
      %v2598 = vpop.f32.mrf.mxu0
      %v2599 = vadd.f32 0.0, %v2598
      %v2600 = vpop.f32.mrf.mxu0
      %v2601 = vadd.f32 0.0, %v2600
      %2602 = vmatmul.bf16.gmra.mxu0 %v2578
      %v2603 = vpop.f32.mrf.mxu0
      %v2604 = vadd.f32 0.0, %v2603
      %v2605 = vpop.f32.mrf.mxu0
      %v2606 = vadd.f32 0.0, %v2605
      %2607 = vmatmul.bf16.gmra.mxu0 %v2581
      %v2608 = vpop.f32.mrf.mxu0
      %v2609 = vadd.f32 0.0, %v2608
      %v2610 = vpop.f32.mrf.mxu0
      %v2611 = vadd.f32 0.0, %v2610
      %2612 = vmatmul.bf16.gmra.mxu0 %v2584
      %v2613 = vpop.f32.mrf.mxu0
      %v2614 = vadd.f32 0.0, %v2613
      %v2615 = vpop.f32.mrf.mxu0
      %v2616 = vadd.f32 0.0, %v2615
      %2617 = vmatmul.bf16.gmra.mxu0 %v2587
      %v2618 = vpop.f32.mrf.mxu0
      %v2619 = vadd.f32 0.0, %v2618
      %v2620 = vpop.f32.mrf.mxu0
      %v2621 = vadd.f32 0.0, %v2620
      %2622 = vdwg.mxu0
      %v2623 = vadd.f32 %v2533, %v2599
      %v2624 = vadd.f32 %v2535, %v2601
      %v2625 = vadd.f32 %v2538, %v2604
      %v2626 = vadd.f32 %v2540, %v2606
      %v2627 = vadd.f32 %v2543, %v2609
      %v2628 = vadd.f32 %v2545, %v2611
      %v2629 = vadd.f32 %v2548, %v2614
      %v2630 = vadd.f32 %v2550, %v2616
      %v2631 = vadd.f32 %v2553, %v2619
      %v2632 = vadd.f32 %v2555, %v2621
      %v2633 = vld [vmem:[%s14] sm:$0x1]
      %v2635 = vperm.slane %v2633, 0
      %v2637 = vadd.f32 %v2623, %v2635
      %v2638 = vadd.f32 %v2624, %v2635
      %v2639 = vadd.f32 %v2625, %v2635
      %v2640 = vadd.f32 %v2626, %v2635
      %v2641 = vadd.f32 %v2627, %v2635
      %v2642 = vadd.f32 %v2628, %v2635
      %v2643 = vadd.f32 %v2629, %v2635
      %v2644 = vadd.f32 %v2630, %v2635
      %v2645 = vadd.f32 %v2631, %v2635
      %v2646 = vadd.f32 %v2632, %v2635
      %v2647 = vmul.f32 %v2637, %v2637
      %v2648 = vmul.f32 %v2638, %v2638
      %v2649 = vmul.f32 %v2639, %v2639
      %v2650 = vmul.f32 %v2640, %v2640
      %v2651 = vmul.f32 %v2641, %v2641
      %v2652 = vmul.f32 %v2642, %v2642
      %v2653 = vmul.f32 %v2643, %v2643
      %v2654 = vmul.f32 %v2644, %v2644
      %v2655 = vmul.f32 %v2645, %v2645
      %v2656 = vmul.f32 %v2646, %v2646
      %v2657 = vmul.f32 %v2637, %v2647
      %v2658 = vmul.f32 %v2638, %v2648
      %v2659 = vmul.f32 %v2639, %v2649
      %v2660 = vmul.f32 %v2640, %v2650
      %v2661 = vmul.f32 %v2641, %v2651
      %v2662 = vmul.f32 %v2642, %v2652
      %v2663 = vmul.f32 %v2643, %v2653
      %v2664 = vmul.f32 %v2644, %v2654
      %v2665 = vmul.f32 %v2645, %v2655
      %v2666 = vmul.f32 %v2646, %v2656
      %v2667 = vmul.f32 %v2657, 0.044715
      %v2668 = vmul.f32 %v2658, 0.044715
      %v2669 = vmul.f32 %v2659, 0.044715
      %v2670 = vmul.f32 %v2660, 0.044715
      %v2671 = vmul.f32 %v2661, 0.044715
      %v2672 = vmul.f32 %v2662, 0.044715
      %v2673 = vmul.f32 %v2663, 0.044715
      %v2674 = vmul.f32 %v2664, 0.044715
      %v2675 = vmul.f32 %v2665, 0.044715
      %v2676 = vmul.f32 %v2666, 0.044715
      %v2677 = vadd.f32 %v2637, %v2667
      %v2678 = vadd.f32 %v2638, %v2668
      %v2679 = vadd.f32 %v2639, %v2669
      %v2680 = vadd.f32 %v2640, %v2670
      %v2681 = vadd.f32 %v2641, %v2671
      %v2682 = vadd.f32 %v2642, %v2672
      %v2683 = vadd.f32 %v2643, %v2673
      %v2684 = vadd.f32 %v2644, %v2674
      %v2685 = vadd.f32 %v2645, %v2675
      %v2686 = vadd.f32 %v2646, %v2676
      %v2687 = vmul.f32 %v2677, 0.7978846
      %v2688 = vmul.f32 %v2678, 0.7978846
      %v2689 = vmul.f32 %v2679, 0.7978846
      %v2690 = vmul.f32 %v2680, 0.7978846
      %v2691 = vmul.f32 %v2681, 0.7978846
      %v2692 = vmul.f32 %v2682, 0.7978846
      %v2693 = vmul.f32 %v2683, 0.7978846
      %v2694 = vmul.f32 %v2684, 0.7978846
      %v2695 = vmul.f32 %v2685, 0.7978846
      %v2696 = vmul.f32 %v2686, 0.7978846
      %v2697 = vtanh.pop %v2687
      %v2698 = vtanh.pop %v2688
      %v2699 = vtanh.pop %v2689
      %v2700 = vtanh.pop %v2690
      %v2701 = vtanh.pop %v2691
      %v2702 = vtanh.pop %v2692
      %v2703 = vtanh.pop %v2693
      %v2704 = vtanh.pop %v2694
      %v2705 = vtanh.pop %v2695
      %v2706 = vtanh.pop %v2696
      %v2707 = vadd.f32 %v2697, 1.0
      %v2708 = vadd.f32 %v2698, 1.0
      %v2709 = vadd.f32 %v2699, 1.0
      %v2710 = vadd.f32 %v2700, 1.0
      %v2711 = vadd.f32 %v2701, 1.0
      %v2712 = vadd.f32 %v2702, 1.0
      %v2713 = vadd.f32 %v2703, 1.0
      %v2714 = vadd.f32 %v2704, 1.0
      %v2715 = vadd.f32 %v2705, 1.0
      %v2716 = vadd.f32 %v2706, 1.0
      %v2717 = vmul.f32 %v2707, 0.5
      %v2718 = vmul.f32 %v2708, 0.5
      %v2719 = vmul.f32 %v2709, 0.5
      %v2720 = vmul.f32 %v2710, 0.5
      %v2721 = vmul.f32 %v2711, 0.5
      %v2722 = vmul.f32 %v2712, 0.5
      %v2723 = vmul.f32 %v2713, 0.5
      %v2724 = vmul.f32 %v2714, 0.5
      %v2725 = vmul.f32 %v2715, 0.5
      %v2726 = vmul.f32 %v2716, 0.5
      %v2727 = vmul.f32 %v2637, %v2717
      %v2728 = vmul.f32 %v2638, %v2718
      %v2729 = vmul.f32 %v2639, %v2719
      %v2730 = vmul.f32 %v2640, %v2720
      %v2731 = vmul.f32 %v2641, %v2721
      %v2732 = vmul.f32 %v2642, %v2722
      %v2733 = vmul.f32 %v2643, %v2723
      %v2734 = vmul.f32 %v2644, %v2724
      %v2735 = vmul.f32 %v2645, %v2725
      %v2736 = vmul.f32 %v2646, %v2726
      %v2737 = vadd.f32 %v2727, %v2362
      %v2738 = vadd.f32 %v2728, %v2363
      %v2739 = vadd.f32 %v2729, %v2364
      %v2740 = vadd.f32 %v2730, %v2365
      %v2741 = vadd.f32 %v2731, %v2366
      %v2742 = vadd.f32 %v2732, %v2367
      %v2743 = vadd.f32 %v2733, %v2368
      %v2744 = vadd.f32 %v2734, %v2369
      %v2745 = vadd.f32 %v2735, %v2370
      %v2746 = vadd.f32 %v2736, %v2371
      %v2747 = vld [vmem:[%s15] sm:$0x1]
      %v2748 = vld [vmem:[%s16] sm:$0x1]
      %v2749 = vsel %vm711, %v2737, 0.0
      %2750 = vadd.xlane.f32.xlu0 %v2749
      %v2751 = vpop.xlane.xlu0 %2750
      %v2752 = vsel %vm711, %v2738, 0.0
      %2753 = vadd.xlane.f32.xlu0 %v2752
      %v2754 = vpop.xlane.xlu0 %2753
      %v2755 = vsel %vm711, %v2739, 0.0
      %2756 = vadd.xlane.f32.xlu0 %v2755
      %v2757 = vpop.xlane.xlu0 %2756
      %v2758 = vsel %vm711, %v2740, 0.0
      %2759 = vadd.xlane.f32.xlu0 %v2758
      %v2760 = vpop.xlane.xlu0 %2759
      %v2761 = vsel %vm711, %v2741, 0.0
      %2762 = vadd.xlane.f32.xlu0 %v2761
      %v2763 = vpop.xlane.xlu0 %2762
      %v2764 = vsel %vm711, %v2742, 0.0
      %2765 = vadd.xlane.f32.xlu0 %v2764
      %v2766 = vpop.xlane.xlu0 %2765
      %v2767 = vsel %vm711, %v2743, 0.0
      %2768 = vadd.xlane.f32.xlu0 %v2767
      %v2769 = vpop.xlane.xlu0 %2768
      %v2770 = vsel %vm711, %v2744, 0.0
      %2771 = vadd.xlane.f32.xlu0 %v2770
      %v2772 = vpop.xlane.xlu0 %2771
      %v2773 = vsel %vm711, %v2745, 0.0
      %2774 = vadd.xlane.f32.xlu0 %v2773
      %v2775 = vpop.xlane.xlu0 %2774
      %v2776 = vsel %vm711, %v2746, 0.0
      %2777 = vadd.xlane.f32.xlu0 %v2776
      %v2778 = vpop.xlane.xlu0 %2777
      %v2779 = vmul.f32 %v2751, %v778
      %v2780 = vmul.f32 %v2754, %v778
      %v2781 = vmul.f32 %v2757, %v778
      %v2782 = vmul.f32 %v2760, %v778
      %v2783 = vmul.f32 %v2763, %v778
      %v2784 = vmul.f32 %v2766, %v778
      %v2785 = vmul.f32 %v2769, %v778
      %v2786 = vmul.f32 %v2772, %v778
      %v2787 = vmul.f32 %v2775, %v778
      %v2788 = vmul.f32 %v2778, %v778
      %v2789 = vsub.f32 %v2737, %v2779
      %v2790 = vsub.f32 %v2738, %v2780
      %v2791 = vsub.f32 %v2739, %v2781
      %v2792 = vsub.f32 %v2740, %v2782
      %v2793 = vsub.f32 %v2741, %v2783
      %v2794 = vsub.f32 %v2742, %v2784
      %v2795 = vsub.f32 %v2743, %v2785
      %v2796 = vsub.f32 %v2744, %v2786
      %v2797 = vsub.f32 %v2745, %v2787
      %v2798 = vsub.f32 %v2746, %v2788
      %v2799 = vmul.f32 %v2789, %v2789
      %v2800 = vmul.f32 %v2790, %v2790
      %v2801 = vmul.f32 %v2791, %v2791
      %v2802 = vmul.f32 %v2792, %v2792
      %v2803 = vmul.f32 %v2793, %v2793
      %v2804 = vmul.f32 %v2794, %v2794
      %v2805 = vmul.f32 %v2795, %v2795
      %v2806 = vmul.f32 %v2796, %v2796
      %v2807 = vmul.f32 %v2797, %v2797
      %v2808 = vmul.f32 %v2798, %v2798
      %v2809 = vsel %vm711, %v2799, 0.0
      %2810 = vadd.xlane.f32.xlu0 %v2809
      %v2811 = vpop.xlane.xlu0 %2810
      %v2812 = vsel %vm711, %v2800, 0.0
      %2813 = vadd.xlane.f32.xlu0 %v2812
      %v2814 = vpop.xlane.xlu0 %2813
      %v2815 = vsel %vm711, %v2801, 0.0
      %2816 = vadd.xlane.f32.xlu0 %v2815
      %v2817 = vpop.xlane.xlu0 %2816
      %v2818 = vsel %vm711, %v2802, 0.0
      %2819 = vadd.xlane.f32.xlu0 %v2818
      %v2820 = vpop.xlane.xlu0 %2819
      %v2821 = vsel %vm711, %v2803, 0.0
      %2822 = vadd.xlane.f32.xlu0 %v2821
      %v2823 = vpop.xlane.xlu0 %2822
      %v2824 = vsel %vm711, %v2804, 0.0
      %2825 = vadd.xlane.f32.xlu0 %v2824
      %v2826 = vpop.xlane.xlu0 %2825
      %v2827 = vsel %vm711, %v2805, 0.0
      %2828 = vadd.xlane.f32.xlu0 %v2827
      %v2829 = vpop.xlane.xlu0 %2828
      %v2830 = vsel %vm711, %v2806, 0.0
      %2831 = vadd.xlane.f32.xlu0 %v2830
      %v2832 = vpop.xlane.xlu0 %2831
      %v2833 = vsel %vm711, %v2807, 0.0
      %2834 = vadd.xlane.f32.xlu0 %v2833
      %v2835 = vpop.xlane.xlu0 %2834
      %v2836 = vsel %vm711, %v2808, 0.0
      %2837 = vadd.xlane.f32.xlu0 %v2836
      %v2838 = vpop.xlane.xlu0 %2837
      %v2839 = vmul.f32 %v2811, %v778
      %v2840 = vmul.f32 %v2814, %v778
      %v2841 = vmul.f32 %v2817, %v778
      %v2842 = vmul.f32 %v2820, %v778
      %v2843 = vmul.f32 %v2823, %v778
      %v2844 = vmul.f32 %v2826, %v778
      %v2845 = vmul.f32 %v2829, %v778
      %v2846 = vmul.f32 %v2832, %v778
      %v2847 = vmul.f32 %v2835, %v778
      %v2848 = vmul.f32 %v2838, %v778
      %v2849 = vadd.f32 %v2839, 1e-05
      %v2850 = vadd.f32 %v2840, 1e-05
      %v2851 = vadd.f32 %v2841, 1e-05
      %v2852 = vadd.f32 %v2842, 1e-05
      %v2853 = vadd.f32 %v2843, 1e-05
      %v2854 = vadd.f32 %v2844, 1e-05
      %v2855 = vadd.f32 %v2845, 1e-05
      %v2856 = vadd.f32 %v2846, 1e-05
      %v2857 = vadd.f32 %v2847, 1e-05
      %v2858 = vadd.f32 %v2848, 1e-05
      %v2859 = vrsqrt.pop %v2849
      %v2860 = vmul.f32 %v2859, %v2849
      %v2861 = vmul.f32 %v2860, %v2859
      %v2862 = vmul.f32 0.5, %v2861
      %v2863 = vsub.f32 1.5, %v2862
      %v2864 = vmul.f32 %v2859, %v2863
      %vm2865 = vweird.f32 %v2849
      %vm2866 = vweird.f32 %v2859
      %vm2867 = vmor %vm2865, %vm2866
      %v2868 = vsel %vm2867, %v2859, %v2864
      %v2869 = vrsqrt.pop %v2850
      %v2870 = vmul.f32 %v2869, %v2850
      %v2871 = vmul.f32 %v2870, %v2869
      %v2872 = vmul.f32 0.5, %v2871
      %v2873 = vsub.f32 1.5, %v2872
      %v2874 = vmul.f32 %v2869, %v2873
      %vm2875 = vweird.f32 %v2850
      %vm2876 = vweird.f32 %v2869
      %vm2877 = vmor %vm2875, %vm2876
      %v2878 = vsel %vm2877, %v2869, %v2874
      %v2879 = vrsqrt.pop %v2851
      %v2880 = vmul.f32 %v2879, %v2851
      %v2881 = vmul.f32 %v2880, %v2879
      %v2882 = vmul.f32 0.5, %v2881
      %v2883 = vsub.f32 1.5, %v2882
      %v2884 = vmul.f32 %v2879, %v2883
      %vm2885 = vweird.f32 %v2851
      %vm2886 = vweird.f32 %v2879
      %vm2887 = vmor %vm2885, %vm2886
      %v2888 = vsel %vm2887, %v2879, %v2884
      %v2889 = vrsqrt.pop %v2852
      %v2890 = vmul.f32 %v2889, %v2852
      %v2891 = vmul.f32 %v2890, %v2889
      %v2892 = vmul.f32 0.5, %v2891
      %v2893 = vsub.f32 1.5, %v2892
      %v2894 = vmul.f32 %v2889, %v2893
      %vm2895 = vweird.f32 %v2852
      %vm2896 = vweird.f32 %v2889
      %vm2897 = vmor %vm2895, %vm2896
      %v2898 = vsel %vm2897, %v2889, %v2894
      %v2899 = vrsqrt.pop %v2853
      %v2900 = vmul.f32 %v2899, %v2853
      %v2901 = vmul.f32 %v2900, %v2899
      %v2902 = vmul.f32 0.5, %v2901
      %v2903 = vsub.f32 1.5, %v2902
      %v2904 = vmul.f32 %v2899, %v2903
      %vm2905 = vweird.f32 %v2853
      %vm2906 = vweird.f32 %v2899
      %vm2907 = vmor %vm2905, %vm2906
      %v2908 = vsel %vm2907, %v2899, %v2904
      %v2909 = vrsqrt.pop %v2854
      %v2910 = vmul.f32 %v2909, %v2854
      %v2911 = vmul.f32 %v2910, %v2909
      %v2912 = vmul.f32 0.5, %v2911
      %v2913 = vsub.f32 1.5, %v2912
      %v2914 = vmul.f32 %v2909, %v2913
      %vm2915 = vweird.f32 %v2854
      %vm2916 = vweird.f32 %v2909
      %vm2917 = vmor %vm2915, %vm2916
      %v2918 = vsel %vm2917, %v2909, %v2914
      %v2919 = vrsqrt.pop %v2855
      %v2920 = vmul.f32 %v2919, %v2855
      %v2921 = vmul.f32 %v2920, %v2919
      %v2922 = vmul.f32 0.5, %v2921
      %v2923 = vsub.f32 1.5, %v2922
      %v2924 = vmul.f32 %v2919, %v2923
      %vm2925 = vweird.f32 %v2855
      %vm2926 = vweird.f32 %v2919
      %vm2927 = vmor %vm2925, %vm2926
      %v2928 = vsel %vm2927, %v2919, %v2924
      %v2929 = vrsqrt.pop %v2856
      %v2930 = vmul.f32 %v2929, %v2856
      %v2931 = vmul.f32 %v2930, %v2929
      %v2932 = vmul.f32 0.5, %v2931
      %v2933 = vsub.f32 1.5, %v2932
      %v2934 = vmul.f32 %v2929, %v2933
      %vm2935 = vweird.f32 %v2856
      %vm2936 = vweird.f32 %v2929
      %vm2937 = vmor %vm2935, %vm2936
      %v2938 = vsel %vm2937, %v2929, %v2934
      %v2939 = vrsqrt.pop %v2857
      %v2940 = vmul.f32 %v2939, %v2857
      %v2941 = vmul.f32 %v2940, %v2939
      %v2942 = vmul.f32 0.5, %v2941
      %v2943 = vsub.f32 1.5, %v2942
      %v2944 = vmul.f32 %v2939, %v2943
      %vm2945 = vweird.f32 %v2857
      %vm2946 = vweird.f32 %v2939
      %vm2947 = vmor %vm2945, %vm2946
      %v2948 = vsel %vm2947, %v2939, %v2944
      %v2949 = vrsqrt.pop %v2858
      %v2950 = vmul.f32 %v2949, %v2858
      %v2951 = vmul.f32 %v2950, %v2949
      %v2952 = vmul.f32 0.5, %v2951
      %v2953 = vsub.f32 1.5, %v2952
      %v2954 = vmul.f32 %v2949, %v2953
      %vm2955 = vweird.f32 %v2858
      %vm2956 = vweird.f32 %v2949
      %vm2957 = vmor %vm2955, %vm2956
      %v2958 = vsel %vm2957, %v2949, %v2954
      %v2959 = vmul.f32 %v2789, %v2868
      %v2960 = vmul.f32 %v2790, %v2878
      %v2961 = vmul.f32 %v2791, %v2888
      %v2962 = vmul.f32 %v2792, %v2898
      %v2963 = vmul.f32 %v2793, %v2908
      %v2964 = vmul.f32 %v2794, %v2918
      %v2965 = vmul.f32 %v2795, %v2928
      %v2966 = vmul.f32 %v2796, %v2938
      %v2967 = vmul.f32 %v2797, %v2948
      %v2968 = vmul.f32 %v2798, %v2958
      %v2970 = vperm.slane %v2747, 0
      %v2972 = vmul.f32 %v2959, %v2970
      %v2973 = vmul.f32 %v2960, %v2970
      %v2974 = vmul.f32 %v2961, %v2970
      %v2975 = vmul.f32 %v2962, %v2970
      %v2976 = vmul.f32 %v2963, %v2970
      %v2977 = vmul.f32 %v2964, %v2970
      %v2978 = vmul.f32 %v2965, %v2970
      %v2979 = vmul.f32 %v2966, %v2970
      %v2980 = vmul.f32 %v2967, %v2970
      %v2981 = vmul.f32 %v2968, %v2970
      %v2983 = vperm.slane %v2748, 0
      %v2985 = vadd.f32 %v2972, %v2983
      %v2986 = vadd.f32 %v2973, %v2983
      %v2987 = vadd.f32 %v2974, %v2983
      %v2988 = vadd.f32 %v2975, %v2983
      %v2989 = vadd.f32 %v2976, %v2983
      %v2990 = vadd.f32 %v2977, %v2983
      %v2991 = vadd.f32 %v2978, %v2983
      %v2992 = vadd.f32 %v2979, %v2983
      %v2993 = vadd.f32 %v2980, %v2983
      %v2994 = vadd.f32 %v2981, %v2983
      %2995 = vst.msk [vmem:[%s575] sm:$0xff] %vm711, %v2985
      %2996 = vst.msk [vmem:[%s575 + $0x8] sm:$0xff] %vm711, %v2986
      %2997 = vst.msk [vmem:[%s575 + $0x10] sm:$0xff] %vm711, %v2987
      %2998 = vst.msk [vmem:[%s575 + $0x18] sm:$0xff] %vm711, %v2988
      %2999 = vst.msk [vmem:[%s575 + $0x20] sm:$0xff] %vm711, %v2989
      %3000 = vst.msk [vmem:[%s575 + $0x28] sm:$0xff] %vm711, %v2990
      %3001 = vst.msk [vmem:[%s575 + $0x30] sm:$0xff] %vm711, %v2991
      %3002 = vst.msk [vmem:[%s575 + $0x38] sm:$0xff] %vm711, %v2992
      %3003 = vst.msk [vmem:[%s575 + $0x40] sm:$0xff] %vm711, %v2993
      %3004 = vst.msk [vmem:[%s575 + $0x48] sm:$0xff] %vm711, %v2994
      %p3005 = scmp.lt.s32.totalorder %s29, 1
      %s3006 = scalar_select %p3005, %s29, 1
      %s3007 = smul.addr %s3006, 10
      %s3008 = smul.addr %s3007, 8
      %s3009 = scalar_lea.vmem %s18, %s3008
      // Predicated region
      $region93: #{speech_recognition_forward.2} parent=91 // pred_check
        %p3010 = pneg %p430
      $region94: #{speech_recognition_forward.2} parent=91 // pred_check_branch
        %3012 = sbr.rel (%p3010) target = $region96
      $region95: #{speech_recognition_forward.2} parent=91 // pred_region
        _
      $region96: #{speech_recognition_forward.2} parent=91 // pred_fallthru
        _
    $region92: #{speech_recognition_forward.2} parent=5 // pred_fallthru
      _
    %p3013 = scmp.le.s32.totalorder 2, %s24
    // Predicated region
    $region97: #{speech_recognition_forward.2} parent=5 // pred_check
      %p3014 = pneg %p3013
    $region98: #{speech_recognition_forward.2} parent=5 // pred_check_branch
      %3016 = sbr.rel (%p3014) target = $region100
    $region99: #{speech_recognition_forward.2} parent=5 // pred_region
      %s3017 = ssub.s32 %s24, 2
      // Predicated region
      $region101: #{speech_recognition_forward.2} parent=99 // pred_check
        %p3018 = pneg %p436
      $region102: #{speech_recognition_forward.2} parent=99 // pred_check_branch
        %3020 = sbr.rel (%p3018) target = $region104
      $region103: #{speech_recognition_forward.2} parent=99 // pred_region
        %p3021 = scmp.lt.s32.totalorder %s30, 1
        %s3022 = scalar_select %p3021, %s30, 1
        %s3023 = smul.addr %s3022, 10
        %s3024 = smul.addr %s3023, 8
        %s3025 = scalar_lea.vmem %s18, %s3024
      $region104: #{speech_recognition_forward.2} parent=99 // pred_fallthru
        _
    $region100: #{speech_recognition_forward.2} parent=5 // pred_fallthru
      _
  $region6: #{speech_recognition_forward.2} parent=0 // loop_footer
    %s28 = sadd.s32 1, %s24
  $region7: #{speech_recognition_forward.2} parent=0 // loop_footer_branch
    %23 = sbr.rel target = $region3
  $region8: #{speech_recognition_forward.2} parent=0 // loop_exit
    _

</llo_original>
